<compile_context>
chip_gen: v5e
topology: v5e:2x2
jax: 0.10.0
libtpu: 0.0.40
codegen_flags: <defaults>
</compile_context>

<pallas_src>
import functools

import numpy as np

import jax
import jax.numpy as jnp
from jax import lax
from jax.experimental import pallas as pl
from jax.experimental.pallas import tpu as pltpu

LANE = 128
SUBLANE = 8


def _round_up(x, m):
    return ((x + m - 1) // m) * m


def _const_index_map(ndim):
    return lambda b, i: (0,) * ndim


def _vmem_capacity_bytes():
    try:
        return int(pltpu.get_tpu_info().vmem_capacity_bytes)
    except Exception:
        return 64 * 1024 * 1024  # conservative default (v7x per-core VMEM)


def _choose_l_tile(L, min_tile, target, fits):
    """Largest L tile that divides L, is a multiple of 8, >= min_tile, <= target, and
    fits the VMEM byte budget."""
    target = max(target, min_tile)
    if L <= target and fits(L):
        return L
    t = (min(L, target) // SUBLANE) * SUBLANE
    while t >= max(SUBLANE, min_tile):
        if L % t == 0 and fits(t):
            return t
        t -= SUBLANE
    # TODO(synk): ragged / prime L falls back to a single full-length tile.
    return L


# ----------------------------------------------------------------------------
# Fused whole-TCN kernel: one (batch b, L-tile i) grid step.
# ----------------------------------------------------------------------------
def _tcn_fused_kernel(*refs, block_cfg, K, TL, Cp, Cout_p, compute_dtype, precision):
    n_blocks = len(block_cfg)

    # ---- unpack refs: x, per-block fused weights, output, per-block carry scratch ----
    it = iter(refs)
    x_ref = next(it)
    wrefs = [[next(it) for _ in range(4)] for _ in range(n_blocks)]
    o_ref = next(it)
    scratch = [(next(it), next(it)) for _ in range(n_blocks)]

    i = pl.program_id(1)

    # ---- reset carries at the first L tile of every batch row ----------------------
    # (this IS the causal zero padding of every conv's input)
    @pl.when(i == 0)
    def _():
        for (xw, hw), cfg in zip(scratch, block_cfg):
            HP = cfg["HP"]
            if HP > 0:
                xw[0:HP, :] = jnp.zeros((HP, Cp), xw.dtype)
                hw[0:HP, :] = jnp.zeros((HP, Cp), hw.dtype)

    def gather_taps(cur, work_ref, d, HP):
        # im2col over the K dilation taps -> (TL, K*Cp).  Tap 0 is the in-register
        # current tile; deeper taps are static slices of the staged history buffer
        # (current tile behind its carried halo).  One cast feeds the single MXU dot.
        parts = [cur]
        for j in range(1, K):
            s = HP - j * d                      # static offset into the work buffer
            parts.append(work_ref[s:s + TL, :])
        cat = parts[0] if len(parts) == 1 else jnp.concatenate(parts, axis=-1)
        return cat.astype(compute_dtype)

    h = x_ref[...].astype(jnp.float32)          # (TL, Cp) block input, f32 in registers
    out = h

    for (xw, hw), (w1c, b1c, w2c, b2c), cfg in zip(scratch, wrefs, block_cfg):
        d, HP, has_down = cfg["dilation"], cfg["HP"], cfg["has_down"]

        if HP > 0:
            xw[HP:HP + TL, :] = h               # stage current tile behind its halo

        # conv1 (+ fused 1x1 downsample when present): one dot, K*Cp-deep contraction,
        # (1 or 2)*Cp output lanes.  Bias (incl. downsample bias) added to the f32 acc.
        a1 = jnp.dot(gather_taps(h, xw, d, HP), w1c[...],
                     preferred_element_type=jnp.float32, precision=precision)
        a1 = a1 + b1c[...]
        if has_down:
            h1 = jnp.maximum(a1[:, :Cp], 0.0)
            res = a1[:, Cp:]
        else:
            h1 = jnp.maximum(a1, 0.0)
            res = h

        if HP > 0:
            hw[HP:HP + TL, :] = h1

        # conv2 -> ReLU (before the residual add; standard Bai et al. TemporalBlock)
        a2 = jnp.dot(gather_taps(h1, hw, d, HP), w2c[...],
                     preferred_element_type=jnp.float32, precision=precision)
        h2 = jnp.maximum(a2 + b2c[...], 0.0)

        # Sublane-aligned cross-tile carry: keep the last HP rows (HP is a multiple of 8)
        # of this block's input / h1 for the next L tile.  Placed after both convs'
        # history reads so the old halo has already been consumed.
        if HP > 0:
            xw[0:HP, :] = h[TL - HP:TL, :]
            hw[0:HP, :] = h1[TL - HP:TL, :]

        out = jnp.maximum(h2 + res, 0.0)
        h = out

    o_ref[...] = out[:, :Cout_p]                # only the real-output lane groups hit HBM


# ----------------------------------------------------------------------------
# Wrapper: layout plumbing, fused weight construction, tiling, pallas_call
# ----------------------------------------------------------------------------
def tcn_forward(x_ncl, params, *, kernel_size, l_tile_target=None,
                compute_dtype=jnp.bfloat16, vmem_limit_bytes=None):
    """x_ncl: (B, C0, L) f32.  params: list of per-block (w1, b1, w2, b2, wd, bd);
    conv weights are stored as (K, Cin, Cout) with tap j applied to x[t - j*dilation];
    wd/bd are None when Cin == Cout.  weight_norm is assumed pre-folded."""
    B, C0, L = x_ncl.shape
    K = kernel_size

    couts = [p[0].shape[2] for p in params]
    C_last = couts[-1] if couts else C0
    Cp = _round_up(max([C0] + couts), LANE)       # lane-dense padded channel width
    Cout_p = _round_up(C_last, LANE)              # output lane width actually written

    block_cfg = []
    for bi, p in enumerate(params):
        d = 2 ** bi
        pad = (K - 1) * d
        block_cfg.append(dict(dilation=d, pad=pad,
                              HP=_round_up(pad, SUBLANE) if pad > 0 else 0,
                              has_down=p[4] is not None))

    # ---- fused, padded, PRE-CAST weights (done once, wrapper side) -------------------
    def pad_w(w):                                  # (K', ci, co) -> (K', Cp, Cp)
        _, ci, co = w.shape
        return jnp.pad(w.astype(jnp.float32), ((0, 0), (0, Cp - ci), (0, Cp - co)))

    def pad_b(b):                                  # (1, 1, co) -> (1, Cp) f32
        b2 = jnp.reshape(b, (1, -1)).astype(jnp.float32)
        return jnp.pad(b2, ((0, 0), (0, Cp - b2.shape[1])))

    weight_arrays = []
    for p, cfg in zip(params, block_cfg):
        w1, b1, w2, b2, wd, bd = p
        W1 = pad_w(w1).reshape(K * Cp, Cp)         # taps stacked along the contraction
        B1 = pad_b(b1)
        if cfg["has_down"]:
            dcol = pad_w(wd)[0]                    # (Cp, Cp), 1x1 downsample
            if K > 1:
                dcol = jnp.concatenate(
                    [dcol, jnp.zeros(((K - 1) * Cp, Cp), jnp.float32)], axis=0)
            W1 = jnp.concatenate([W1, dcol], axis=1)        # (K*Cp, 2*Cp)
            B1 = jnp.concatenate([B1, pad_b(bd)], axis=1)   # (1, 2*Cp)
        W2 = pad_w(w2).reshape(K * Cp, Cp)
        # Conv weights in compute_dtype (MXU-native); biases stay f32 (added to f32 acc).
        weight_arrays.append([W1.astype(compute_dtype), B1,
                              W2.astype(compute_dtype), pad_b(b2)])

    weight_bytes = sum(int(a.size) * np.dtype(a.dtype).itemsize
                       for blk in weight_arrays for a in blk)

    # ---- device-derived tile size / VMEM limit ----------------------------------------
    cap = _vmem_capacity_bytes()
    budget = (cap * 3) // 4                        # leave compiler headroom
    if l_tile_target is None:
        l_tile_target = 2048 if cap >= (96 << 20) else 1024
    in_elt = np.dtype(compute_dtype).itemsize

    # TODO(synk): weights are double-buffered by the default pipeline (counted 2x here);
    #             scratch stays f32 (see kernel header) so it is counted at 4 B/elt.
    def est_bytes(tl):
        io = 2 * tl * Cp * in_elt + 2 * tl * Cout_p * 4          # double-buffered tiles
        scr = sum(2 * (c["HP"] + tl) * Cp * 4 for c in block_cfg)
        return io + scr + 2 * weight_bytes

    max_hp = max([c["HP"] for c in block_cfg], default=0)
    TL = _choose_l_tile(L, max_hp, l_tile_target, lambda t: est_bytes(t) <= budget)
    assert L % TL == 0 and TL >= max_hp, (L, TL, max_hp)
    nL = L // TL

    if vmem_limit_bytes is None:
        vmem_limit_bytes = int(min(budget, max(2 * est_bytes(TL), 32 << 20)))

    # ---- lane-dense input layout: NCL -> (B, L, Cp) in compute_dtype -------------------
    x = jnp.transpose(x_ncl, (0, 2, 1)).astype(compute_dtype)
    x = jnp.pad(x, ((0, 0), (0, 0), (0, Cp - C0)))

    in_arrays = [x]
    in_specs = [pl.BlockSpec((None, TL, Cp), lambda b, i: (b, i, 0))]
    for blk in weight_arrays:
        for arr in blk:
            in_arrays.append(arr)
            # constant index map -> weights stay resident in VMEM across the grid
            in_specs.append(pl.BlockSpec(arr.shape, _const_index_map(arr.ndim)))

    out_spec = pl.BlockSpec((None, TL, Cout_p), lambda b, i: (b, i, 0))

    scratch_shapes = []
    for cfg in block_cfg:
        rows = cfg["HP"] + TL
        scratch_shapes += [pltpu.VMEM((rows, Cp), jnp.float32),   # input-side carry+stage
                           pltpu.VMEM((rows, Cp), jnp.float32)]   # h1-side carry+stage

    # f32 correctness path keeps exact MXU passes without relying on the global
    # jax_default_matmul_precision; bf16 path uses the native single-pass rate.
    precision = (lax.Precision.HIGHEST
                 if np.dtype(compute_dtype) == np.dtype(jnp.float32) else None)

    mm_flops_row = sum(2 * (K * Cp) * ((2 if c["has_down"] else 1) * Cp)
                       + 2 * (K * Cp) * Cp for c in block_cfg)
    flops = int(B * L * mm_flops_row)
    bytes_accessed = int(x.size * in_elt + B * L * Cout_p * 4 + weight_bytes)

    kernel = functools.partial(_tcn_fused_kernel, block_cfg=block_cfg, K=K, TL=TL,
                               Cp=Cp, Cout_p=Cout_p, compute_dtype=compute_dtype,
                               precision=precision)

    out_padded = pl.pallas_call(
        kernel,
        out_shape=jax.ShapeDtypeStruct((B, L, Cout_p), jnp.float32),
        grid=(B, nL),
        in_specs=in_specs,
        out_specs=out_spec,
        scratch_shapes=scratch_shapes,
        compiler_params=pltpu.CompilerParams(
            # batch tiles are independent (megacore); L tiles carry causal state.
            dimension_semantics=("parallel", "arbitrary"),
            vmem_limit_bytes=int(vmem_limit_bytes)),
        cost_estimate=pl.CostEstimate(flops=flops, transcendentals=0,
                                      bytes_accessed=bytes_accessed),
    )(*in_arrays)

    # slice off the channel padding, back to NCL
    return jnp.transpose(out_padded[:, :, :C_last], (0, 2, 1))


# ----------------------------------------------------------------------------
# Pure-JAX reference (same conventions) for the correctness check
# ----------------------------------------------------------------------------
def _causal_conv_ref(h, w, b, dilation):
    K = w.shape[0]
    L = h.shape[1]
    pad = (K - 1) * dilation
    hp = jnp.pad(h, ((0, 0), (pad, 0), (0, 0)))
    out = jnp.reshape(b, (1, 1, -1))
    for j in range(K):
        s = pad - j * dilation                 # tap j sees x[t - j*dilation]
        out = out + jnp.einsum("blc,cd->bld", hp[:, s:s + L, :], w[j],
                               precision=lax.Precision.HIGHEST)
    return out


def tcn_forward_ref(x_ncl, params, *, kernel_size):
    h = jnp.transpose(x_ncl, (0, 2, 1)).astype(jnp.float32)
    for i, (w1, b1, w2, b2, wd, bd) in enumerate(params):
        d = 2 ** i
        h1 = jax.nn.relu(_causal_conv_ref(h, w1, b1, d))
        h2 = jax.nn.relu(_causal_conv_ref(h1, w2, b2, d))
        if wd is not None:
            res = (jnp.einsum("blc,cd->bld", h, wd[0],
                              precision=lax.Precision.HIGHEST)
                   + jnp.reshape(bd, (1, 1, -1)))
        else:
            res = h
        h = jax.nn.relu(h2 + res)
    return jnp.transpose(h, (0, 2, 1))


# ----------------------------------------------------------------------------
# Deterministic parameter construction (weight_norm already folded)
# ----------------------------------------------------------------------------
def init_params(key, level_embedding_sizes, kernel_size):
    """Per-block (w1, b1, w2, b2, wd, bd); conv weights stored as (K, Cin, Cout)
    (tap j applied to x[t - j*dilation]); wd/bd are None when Cin == Cout."""
    params = []
    n_levels = len(level_embedding_sizes)
    for i in range(n_levels - 1):
        cin = level_embedding_sizes[i]
        cout = level_embedding_sizes[i + 1]
        key, k1, k2, k3, k4, k5, k6 = jax.random.split(key, 7)
        w1 = 0.2 * jax.random.normal(k1, (kernel_size, cin, cout), jnp.float32)
        b1 = 0.1 * jax.random.normal(k2, (1, 1, cout), jnp.float32)
        w2 = 0.2 * jax.random.normal(k3, (kernel_size, cout, cout), jnp.float32)
        b2 = 0.1 * jax.random.normal(k4, (1, 1, cout), jnp.float32)
        if cin != cout:
            wd = 0.2 * jax.random.normal(k5, (1, cin, cout), jnp.float32)
            bd = 0.1 * jax.random.normal(k6, (1, 1, cout), jnp.float32)
        else:
            wd, bd = None, None
        params.append((w1, b1, w2, b2, wd, bd))
    return params


# ----------------------------------------------------------------------------
if __name__ == "__main__":
    # Small, module-consistent shapes: batch=2, sequence length=32,
    # level_embedding_sizes=[4, 8, 8, 16] -> three residual blocks (dilations 1, 2, 4);
    # the middle block exercises the identity-residual path.  l_tile_target=16 forces
    # two L tiles so the cross-tile causal carry is exercised too.
    level_embedding_sizes = [4, 8, 8, 16]
    kernel_size = 2
    B, L = 2, 32

    key = jax.random.PRNGKey(0)
    key, kx = jax.random.split(key)
    x = jax.random.normal(kx, (B, level_embedding_sizes[0], L), jnp.float32)  # NCL

    params = init_params(key, level_embedding_sizes, kernel_size)

    ref = jax.block_until_ready(tcn_forward_ref(x, params, kernel_size=kernel_size))

    # 1) f32 compute path: tight correctness check of taps / halos / residuals.
    fwd_f32 = jax.jit(lambda xx, pp: tcn_forward(xx, pp, kernel_size=kernel_size,
                                                 l_tile_target=16,
                                                 compute_dtype=jnp.float32))
    out_f32 = jax.block_until_ready(fwd_f32(x, params))
    assert out_f32.shape == (B, level_embedding_sizes[-1], L), out_f32.shape
    err32 = float(jnp.max(jnp.abs(out_f32 - ref)))
    assert jnp.allclose(out_f32, ref, rtol=2e-3, atol=2e-3), err32

    # 2) default bf16 compute path (MXU-native rate, pre-cast weights): loose tolerance.
    fwd_bf16 = jax.jit(lambda xx, pp: tcn_forward(xx, pp, kernel_size=kernel_size,
                                                  l_tile_target=16))
    out_bf16 = jax.block_until_ready(fwd_bf16(x, params))
    assert out_bf16.shape == (B, level_embedding_sizes[-1], L), out_bf16.shape
    err16 = float(jnp.max(jnp.abs(out_bf16 - ref)))
    assert jnp.allclose(out_bf16, ref, rtol=1e-1, atol=1e-1), err16

    print("KERNEL_OK")
</pallas_src>

<mosaic_0001>
module attributes {stable_mosaic.version = 11 : i64} {
  func.func @_tcn_fused_kernel(%arg0: i32, %arg1: i32, %arg2: memref<1x16x128xf32, #tpu.memory_space<vmem>>, %arg3: memref<256x256xf32, #tpu.memory_space<vmem>>, %arg4: memref<1x256xf32, #tpu.memory_space<vmem>>, %arg5: memref<256x128xf32, #tpu.memory_space<vmem>>, %arg6: memref<1x128xf32, #tpu.memory_space<vmem>>, %arg7: memref<256x128xf32, #tpu.memory_space<vmem>>, %arg8: memref<1x128xf32, #tpu.memory_space<vmem>>, %arg9: memref<256x128xf32, #tpu.memory_space<vmem>>, %arg10: memref<1x128xf32, #tpu.memory_space<vmem>>, %arg11: memref<256x256xf32, #tpu.memory_space<vmem>>, %arg12: memref<1x256xf32, #tpu.memory_space<vmem>>, %arg13: memref<256x128xf32, #tpu.memory_space<vmem>>, %arg14: memref<1x128xf32, #tpu.memory_space<vmem>>, %arg15: memref<1x16x128xf32, #tpu.memory_space<vmem>>, %arg16: memref<24x128xf32, #tpu.memory_space<vmem>>, %arg17: memref<24x128xf32, #tpu.memory_space<vmem>>, %arg18: memref<24x128xf32, #tpu.memory_space<vmem>>, %arg19: memref<24x128xf32, #tpu.memory_space<vmem>>, %arg20: memref<24x128xf32, #tpu.memory_space<vmem>>, %arg21: memref<24x128xf32, #tpu.memory_space<vmem>>) attributes {dimension_semantics = [#tpu.dimension_semantics<parallel>, #tpu.dimension_semantics<arbitrary>], iteration_bounds = array<i64: 2, 2>, scalar_prefetch = 0 : i64, scratch_operands = 6 : i64, tpu.core_type = #tpu.core_type<tc>, window_params = [{transform_indices = @transform_0, window_bounds = array<i64: 1, 16, 128>}, {pipeline_mode = #tpu.pipeline_mode<synchronous>, transform_indices = @transform_1, window_bounds = array<i64: 256, 256>}, {pipeline_mode = #tpu.pipeline_mode<synchronous>, transform_indices = @transform_2, window_bounds = array<i64: 1, 256>}, {pipeline_mode = #tpu.pipeline_mode<synchronous>, transform_indices = @transform_3, window_bounds = array<i64: 256, 128>}, {pipeline_mode = #tpu.pipeline_mode<synchronous>, transform_indices = @transform_4, window_bounds = array<i64: 1, 128>}, {pipeline_mode = #tpu.pipeline_mode<synchronous>, transform_indices = @transform_5, window_bounds = array<i64: 256, 128>}, {pipeline_mode = #tpu.pipeline_mode<synchronous>, transform_indices = @transform_6, window_bounds = array<i64: 1, 128>}, {pipeline_mode = #tpu.pipeline_mode<synchronous>, transform_indices = @transform_7, window_bounds = array<i64: 256, 128>}, {pipeline_mode = #tpu.pipeline_mode<synchronous>, transform_indices = @transform_8, window_bounds = array<i64: 1, 128>}, {pipeline_mode = #tpu.pipeline_mode<synchronous>, transform_indices = @transform_9, window_bounds = array<i64: 256, 256>}, {pipeline_mode = #tpu.pipeline_mode<synchronous>, transform_indices = @transform_10, window_bounds = array<i64: 1, 256>}, {pipeline_mode = #tpu.pipeline_mode<synchronous>, transform_indices = @transform_11, window_bounds = array<i64: 256, 128>}, {pipeline_mode = #tpu.pipeline_mode<synchronous>, transform_indices = @transform_12, window_bounds = array<i64: 1, 128>}, {transform_indices = @transform_13, window_bounds = array<i64: 1, 16, 128>}]} {
    %c0_i32 = arith.constant 0 : i32
    %0 = arith.cmpi eq, %arg1, %c0_i32 : i32
    %1 = arith.extui %0 : i1 to i32
    %c0_i32_0 = arith.constant 0 : i32
    %2 = arith.cmpi ne, %1, %c0_i32_0 : i32
    scf.if %2 {
      %cst_76 = arith.constant 0.000000e+00 : f32
      %93 = vector.broadcast %cst_76 : f32 to vector<8x128xf32>
      %c0_77 = arith.constant 0 : index
      %c0_78 = arith.constant 0 : index
      %94 = vector.load %arg16[%c0_77, %c0_78] : memref<24x128xf32, #tpu.memory_space<vmem>>, vector<8x128xf32>
      tpu.vector_store %arg16[%c0_77, %c0_78], %93 {strides = array<i32>} : memref<24x128xf32, #tpu.memory_space<vmem>>, vector<8x128xf32>,
      %cst_79 = arith.constant 0.000000e+00 : f32
      %95 = vector.broadcast %cst_79 : f32 to vector<8x128xf32>
      %c0_80 = arith.constant 0 : index
      %c0_81 = arith.constant 0 : index
      %96 = vector.load %arg17[%c0_80, %c0_81] : memref<24x128xf32, #tpu.memory_space<vmem>>, vector<8x128xf32>
      tpu.vector_store %arg17[%c0_80, %c0_81], %95 {strides = array<i32>} : memref<24x128xf32, #tpu.memory_space<vmem>>, vector<8x128xf32>,
      %cst_82 = arith.constant 0.000000e+00 : f32
      %97 = vector.broadcast %cst_82 : f32 to vector<8x128xf32>
      %c0_83 = arith.constant 0 : index
      %c0_84 = arith.constant 0 : index
      %98 = vector.load %arg18[%c0_83, %c0_84] : memref<24x128xf32, #tpu.memory_space<vmem>>, vector<8x128xf32>
      tpu.vector_store %arg18[%c0_83, %c0_84], %97 {strides = array<i32>} : memref<24x128xf32, #tpu.memory_space<vmem>>, vector<8x128xf32>,
      %cst_85 = arith.constant 0.000000e+00 : f32
      %99 = vector.broadcast %cst_85 : f32 to vector<8x128xf32>
      %c0_86 = arith.constant 0 : index
      %c0_87 = arith.constant 0 : index
      %100 = vector.load %arg19[%c0_86, %c0_87] : memref<24x128xf32, #tpu.memory_space<vmem>>, vector<8x128xf32>
      tpu.vector_store %arg19[%c0_86, %c0_87], %99 {strides = array<i32>} : memref<24x128xf32, #tpu.memory_space<vmem>>, vector<8x128xf32>,
      %cst_88 = arith.constant 0.000000e+00 : f32
      %101 = vector.broadcast %cst_88 : f32 to vector<8x128xf32>
      %c0_89 = arith.constant 0 : index
      %c0_90 = arith.constant 0 : index
      %102 = vector.load %arg20[%c0_89, %c0_90] : memref<24x128xf32, #tpu.memory_space<vmem>>, vector<8x128xf32>
      tpu.vector_store %arg20[%c0_89, %c0_90], %101 {strides = array<i32>} : memref<24x128xf32, #tpu.memory_space<vmem>>, vector<8x128xf32>,
      %cst_91 = arith.constant 0.000000e+00 : f32
      %103 = vector.broadcast %cst_91 : f32 to vector<8x128xf32>
      %c0_92 = arith.constant 0 : index
      %c0_93 = arith.constant 0 : index
      %104 = vector.load %arg21[%c0_92, %c0_93] : memref<24x128xf32, #tpu.memory_space<vmem>>, vector<8x128xf32>
      tpu.vector_store %arg21[%c0_92, %c0_93], %103 {strides = array<i32>} : memref<24x128xf32, #tpu.memory_space<vmem>>, vector<8x128xf32>,
    } else {
    }
    %c0 = arith.constant 0 : index
    %c0_1 = arith.constant 0 : index
    %c0_2 = arith.constant 0 : index
    %3 = vector.load %arg2[%c0, %c0_1, %c0_2] : memref<1x16x128xf32, #tpu.memory_space<vmem>>, vector<1x16x128xf32>
    %4 = vector.shape_cast %3 : vector<1x16x128xf32> to vector<16x128xf32>
    %c8 = arith.constant 8 : index
    %c0_3 = arith.constant 0 : index
    %5 = vector.load %arg16[%c8, %c0_3] : memref<24x128xf32, #tpu.memory_space<vmem>>, vector<16x128xf32>
    tpu.vector_store %arg16[%c8, %c0_3], %4 {strides = array<i32>} : memref<24x128xf32, #tpu.memory_space<vmem>>, vector<16x128xf32>,
    %c7 = arith.constant 7 : index
    %c0_4 = arith.constant 0 : index
    %6 = vector.load %arg16[%c7, %c0_4] : memref<24x128xf32, #tpu.memory_space<vmem>>, vector<16x128xf32>
    %7 = tpu.concatenate %4, %6 in 1 : vector<16x128xf32>, vector<16x128xf32> -> vector<16x256xf32>
    %c0_5 = arith.constant 0 : index
    %c0_6 = arith.constant 0 : index
    %8 = vector.load %arg3[%c0_5, %c0_6] : memref<256x256xf32, #tpu.memory_space<vmem>>, vector<256x256xf32>
    %cst = arith.constant dense<0.000000e+00> : vector<16x256xf32>
    %9 = tpu.matmul %7, %8, %cst {dimension_numbers = #tpu.dot_dimension_numbers<[1], [0], [0], [1], [0, 0, 1, 1], [], []>, precision = #tpu.contract_precision<fp32>} : vector<16x256xf32>, vector<256x256xf32>, vector<16x256xf32> -> vector<16x256xf32>
    %c0_7 = arith.constant 0 : index
    %c0_8 = arith.constant 0 : index
    %10 = vector.load %arg4[%c0_7, %c0_8] : memref<1x256xf32, #tpu.memory_space<vmem>>, vector<1x256xf32>
    %11 = vector.broadcast %10 : vector<1x256xf32> to vector<16x256xf32>
    %12 = arith.addf %9, %11 : vector<16x256xf32>
    %13 = vector.extract_strided_slice %12 {offsets = [0, 0], sizes = [16, 128], strides = [1, 1]} : vector<16x256xf32> to vector<16x128xf32>
    %cst_9 = arith.constant 0.000000e+00 : f32
    %14 = vector.broadcast %cst_9 : f32 to vector<16x128xf32>
    %15 = arith.maximumf %13, %14 : vector<16x128xf32>
    %16 = vector.extract_strided_slice %12 {offsets = [0, 128], sizes = [16, 128], strides = [1, 1]} : vector<16x256xf32> to vector<16x128xf32>
    %c8_10 = arith.constant 8 : index
    %c0_11 = arith.constant 0 : index
    %17 = vector.load %arg17[%c8_10, %c0_11] : memref<24x128xf32, #tpu.memory_space<vmem>>, vector<16x128xf32>
    tpu.vector_store %arg17[%c8_10, %c0_11], %15 {strides = array<i32>} : memref<24x128xf32, #tpu.memory_space<vmem>>, vector<16x128xf32>,
    %c7_12 = arith.constant 7 : index
    %c0_13 = arith.constant 0 : index
    %18 = vector.load %arg17[%c7_12, %c0_13] : memref<24x128xf32, #tpu.memory_space<vmem>>, vector<16x128xf32>
    %19 = tpu.concatenate %15, %18 in 1 : vector<16x128xf32>, vector<16x128xf32> -> vector<16x256xf32>
    %c0_14 = arith.constant 0 : index
    %c0_15 = arith.constant 0 : index
    %20 = vector.load %arg5[%c0_14, %c0_15] : memref<256x128xf32, #tpu.memory_space<vmem>>, vector<256x128xf32>
    %cst_16 = arith.constant dense<0.000000e+00> : vector<16x128xf32>
    %21 = tpu.matmul %19, %20, %cst_16 {dimension_numbers = #tpu.dot_dimension_numbers<[1], [0], [0], [1], [0, 0, 1, 1], [], []>, precision = #tpu.contract_precision<fp32>} : vector<16x256xf32>, vector<256x128xf32>, vector<16x128xf32> -> vector<16x128xf32>
    %c0_17 = arith.constant 0 : index
    %c0_18 = arith.constant 0 : index
    %22 = vector.load %arg6[%c0_17, %c0_18] : memref<1x128xf32, #tpu.memory_space<vmem>>, vector<1x128xf32>
    %23 = vector.broadcast %22 : vector<1x128xf32> to vector<16x128xf32>
    %24 = arith.addf %21, %23 : vector<16x128xf32>
    %cst_19 = arith.constant 0.000000e+00 : f32
    %25 = vector.broadcast %cst_19 : f32 to vector<16x128xf32>
    %26 = arith.maximumf %24, %25 : vector<16x128xf32>
    %27 = vector.extract_strided_slice %4 {offsets = [8, 0], sizes = [8, 128], strides = [1, 1]} : vector<16x128xf32> to vector<8x128xf32>
    %c0_20 = arith.constant 0 : index
    %c0_21 = arith.constant 0 : index
    %28 = vector.load %arg16[%c0_20, %c0_21] : memref<24x128xf32, #tpu.memory_space<vmem>>, vector<8x128xf32>
    tpu.vector_store %arg16[%c0_20, %c0_21], %27 {strides = array<i32>} : memref<24x128xf32, #tpu.memory_space<vmem>>, vector<8x128xf32>,
    %29 = vector.extract_strided_slice %15 {offsets = [8, 0], sizes = [8, 128], strides = [1, 1]} : vector<16x128xf32> to vector<8x128xf32>
    %c0_22 = arith.constant 0 : index
    %c0_23 = arith.constant 0 : index
    %30 = vector.load %arg17[%c0_22, %c0_23] : memref<24x128xf32, #tpu.memory_space<vmem>>, vector<8x128xf32>
    tpu.vector_store %arg17[%c0_22, %c0_23], %29 {strides = array<i32>} : memref<24x128xf32, #tpu.memory_space<vmem>>, vector<8x128xf32>,
    %31 = arith.addf %26, %16 : vector<16x128xf32>
    %cst_24 = arith.constant 0.000000e+00 : f32
    %32 = vector.broadcast %cst_24 : f32 to vector<16x128xf32>
    %33 = arith.maximumf %31, %32 : vector<16x128xf32>
    %c8_25 = arith.constant 8 : index
    %c0_26 = arith.constant 0 : index
    %34 = vector.load %arg18[%c8_25, %c0_26] : memref<24x128xf32, #tpu.memory_space<vmem>>, vector<16x128xf32>
    tpu.vector_store %arg18[%c8_25, %c0_26], %33 {strides = array<i32>} : memref<24x128xf32, #tpu.memory_space<vmem>>, vector<16x128xf32>,
    %c6 = arith.constant 6 : index
    %c0_27 = arith.constant 0 : index
    %35 = vector.load %arg18[%c6, %c0_27] : memref<24x128xf32, #tpu.memory_space<vmem>>, vector<16x128xf32>
    %36 = tpu.concatenate %33, %35 in 1 : vector<16x128xf32>, vector<16x128xf32> -> vector<16x256xf32>
    %c0_28 = arith.constant 0 : index
    %c0_29 = arith.constant 0 : index
    %37 = vector.load %arg7[%c0_28, %c0_29] : memref<256x128xf32, #tpu.memory_space<vmem>>, vector<256x128xf32>
    %cst_30 = arith.constant dense<0.000000e+00> : vector<16x128xf32>
    %38 = tpu.matmul %36, %37, %cst_30 {dimension_numbers = #tpu.dot_dimension_numbers<[1], [0], [0], [1], [0, 0, 1, 1], [], []>, precision = #tpu.contract_precision<fp32>} : vector<16x256xf32>, vector<256x128xf32>, vector<16x128xf32> -> vector<16x128xf32>
    %c0_31 = arith.constant 0 : index
    %c0_32 = arith.constant 0 : index
    %39 = vector.load %arg8[%c0_31, %c0_32] : memref<1x128xf32, #tpu.memory_space<vmem>>, vector<1x128xf32>
    %40 = vector.broadcast %39 : vector<1x128xf32> to vector<16x128xf32>
    %41 = arith.addf %38, %40 : vector<16x128xf32>
    %cst_33 = arith.constant 0.000000e+00 : f32
    %42 = vector.broadcast %cst_33 : f32 to vector<16x128xf32>
    %43 = arith.maximumf %41, %42 : vector<16x128xf32>
    %c8_34 = arith.constant 8 : index
    %c0_35 = arith.constant 0 : index
    %44 = vector.load %arg19[%c8_34, %c0_35] : memref<24x128xf32, #tpu.memory_space<vmem>>, vector<16x128xf32>
    tpu.vector_store %arg19[%c8_34, %c0_35], %43 {strides = array<i32>} : memref<24x128xf32, #tpu.memory_space<vmem>>, vector<16x128xf32>,
    %c6_36 = arith.constant 6 : index
    %c0_37 = arith.constant 0 : index
    %45 = vector.load %arg19[%c6_36, %c0_37] : memref<24x128xf32, #tpu.memory_space<vmem>>, vector<16x128xf32>
    %46 = tpu.concatenate %43, %45 in 1 : vector<16x128xf32>, vector<16x128xf32> -> vector<16x256xf32>
    %c0_38 = arith.constant 0 : index
    %c0_39 = arith.constant 0 : index
    %47 = vector.load %arg9[%c0_38, %c0_39] : memref<256x128xf32, #tpu.memory_space<vmem>>, vector<256x128xf32>
    %cst_40 = arith.constant dense<0.000000e+00> : vector<16x128xf32>
    %48 = tpu.matmul %46, %47, %cst_40 {dimension_numbers = #tpu.dot_dimension_numbers<[1], [0], [0], [1], [0, 0, 1, 1], [], []>, precision = #tpu.contract_precision<fp32>} : vector<16x256xf32>, vector<256x128xf32>, vector<16x128xf32> -> vector<16x128xf32>
    %c0_41 = arith.constant 0 : index
    %c0_42 = arith.constant 0 : index
    %49 = vector.load %arg10[%c0_41, %c0_42] : memref<1x128xf32, #tpu.memory_space<vmem>>, vector<1x128xf32>
    %50 = vector.broadcast %49 : vector<1x128xf32> to vector<16x128xf32>
    %51 = arith.addf %48, %50 : vector<16x128xf32>
    %cst_43 = arith.constant 0.000000e+00 : f32
    %52 = vector.broadcast %cst_43 : f32 to vector<16x128xf32>
    %53 = arith.maximumf %51, %52 : vector<16x128xf32>
    %54 = vector.extract_strided_slice %33 {offsets = [8, 0], sizes = [8, 128], strides = [1, 1]} : vector<16x128xf32> to vector<8x128xf32>
    %c0_44 = arith.constant 0 : index
    %c0_45 = arith.constant 0 : index
    %55 = vector.load %arg18[%c0_44, %c0_45] : memref<24x128xf32, #tpu.memory_space<vmem>>, vector<8x128xf32>
    tpu.vector_store %arg18[%c0_44, %c0_45], %54 {strides = array<i32>} : memref<24x128xf32, #tpu.memory_space<vmem>>, vector<8x128xf32>,
    %56 = vector.extract_strided_slice %43 {offsets = [8, 0], sizes = [8, 128], strides = [1, 1]} : vector<16x128xf32> to vector<8x128xf32>
    %c0_46 = arith.constant 0 : index
    %c0_47 = arith.constant 0 : index
    %57 = vector.load %arg19[%c0_46, %c0_47] : memref<24x128xf32, #tpu.memory_space<vmem>>, vector<8x128xf32>
    tpu.vector_store %arg19[%c0_46, %c0_47], %56 {strides = array<i32>} : memref<24x128xf32, #tpu.memory_space<vmem>>, vector<8x128xf32>,
    %58 = arith.addf %53, %33 : vector<16x128xf32>
    %cst_48 = arith.constant 0.000000e+00 : f32
    %59 = vector.broadcast %cst_48 : f32 to vector<16x128xf32>
    %60 = arith.maximumf %58, %59 : vector<16x128xf32>
    %c8_49 = arith.constant 8 : index
    %c0_50 = arith.constant 0 : index
    %61 = vector.load %arg20[%c8_49, %c0_50] : memref<24x128xf32, #tpu.memory_space<vmem>>, vector<16x128xf32>
    tpu.vector_store %arg20[%c8_49, %c0_50], %60 {strides = array<i32>} : memref<24x128xf32, #tpu.memory_space<vmem>>, vector<16x128xf32>,
    %c4 = arith.constant 4 : index
    %c0_51 = arith.constant 0 : index
    %62 = vector.load %arg20[%c4, %c0_51] : memref<24x128xf32, #tpu.memory_space<vmem>>, vector<16x128xf32>
    %63 = tpu.concatenate %60, %62 in 1 : vector<16x128xf32>, vector<16x128xf32> -> vector<16x256xf32>
    %c0_52 = arith.constant 0 : index
    %c0_53 = arith.constant 0 : index
    %64 = vector.load %arg11[%c0_52, %c0_53] : memref<256x256xf32, #tpu.memory_space<vmem>>, vector<256x256xf32>
    %cst_54 = arith.constant dense<0.000000e+00> : vector<16x256xf32>
    %65 = tpu.matmul %63, %64, %cst_54 {dimension_numbers = #tpu.dot_dimension_numbers<[1], [0], [0], [1], [0, 0, 1, 1], [], []>, precision = #tpu.contract_precision<fp32>} : vector<16x256xf32>, vector<256x256xf32>, vector<16x256xf32> -> vector<16x256xf32>
    %c0_55 = arith.constant 0 : index
    %c0_56 = arith.constant 0 : index
    %66 = vector.load %arg12[%c0_55, %c0_56] : memref<1x256xf32, #tpu.memory_space<vmem>>, vector<1x256xf32>
    %67 = vector.broadcast %66 : vector<1x256xf32> to vector<16x256xf32>
    %68 = arith.addf %65, %67 : vector<16x256xf32>
    %69 = vector.extract_strided_slice %68 {offsets = [0, 0], sizes = [16, 128], strides = [1, 1]} : vector<16x256xf32> to vector<16x128xf32>
    %cst_57 = arith.constant 0.000000e+00 : f32
    %70 = vector.broadcast %cst_57 : f32 to vector<16x128xf32>
    %71 = arith.maximumf %69, %70 : vector<16x128xf32>
    %72 = vector.extract_strided_slice %68 {offsets = [0, 128], sizes = [16, 128], strides = [1, 1]} : vector<16x256xf32> to vector<16x128xf32>
    %c8_58 = arith.constant 8 : index
    %c0_59 = arith.constant 0 : index
    %73 = vector.load %arg21[%c8_58, %c0_59] : memref<24x128xf32, #tpu.memory_space<vmem>>, vector<16x128xf32>
    tpu.vector_store %arg21[%c8_58, %c0_59], %71 {strides = array<i32>} : memref<24x128xf32, #tpu.memory_space<vmem>>, vector<16x128xf32>,
    %c4_60 = arith.constant 4 : index
    %c0_61 = arith.constant 0 : index
    %74 = vector.load %arg21[%c4_60, %c0_61] : memref<24x128xf32, #tpu.memory_space<vmem>>, vector<16x128xf32>
    %75 = tpu.concatenate %71, %74 in 1 : vector<16x128xf32>, vector<16x128xf32> -> vector<16x256xf32>
    %c0_62 = arith.constant 0 : index
    %c0_63 = arith.constant 0 : index
    %76 = vector.load %arg13[%c0_62, %c0_63] : memref<256x128xf32, #tpu.memory_space<vmem>>, vector<256x128xf32>
    %cst_64 = arith.constant dense<0.000000e+00> : vector<16x128xf32>
    %77 = tpu.matmul %75, %76, %cst_64 {dimension_numbers = #tpu.dot_dimension_numbers<[1], [0], [0], [1], [0, 0, 1, 1], [], []>, precision = #tpu.contract_precision<fp32>} : vector<16x256xf32>, vector<256x128xf32>, vector<16x128xf32> -> vector<16x128xf32>
    %c0_65 = arith.constant 0 : index
    %c0_66 = arith.constant 0 : index
    %78 = vector.load %arg14[%c0_65, %c0_66] : memref<1x128xf32, #tpu.memory_space<vmem>>, vector<1x128xf32>
    %79 = vector.broadcast %78 : vector<1x128xf32> to vector<16x128xf32>
    %80 = arith.addf %77, %79 : vector<16x128xf32>
    %cst_67 = arith.constant 0.000000e+00 : f32
    %81 = vector.broadcast %cst_67 : f32 to vector<16x128xf32>
    %82 = arith.maximumf %80, %81 : vector<16x128xf32>
    %83 = vector.extract_strided_slice %60 {offsets = [8, 0], sizes = [8, 128], strides = [1, 1]} : vector<16x128xf32> to vector<8x128xf32>
    %c0_68 = arith.constant 0 : index
    %c0_69 = arith.constant 0 : index
    %84 = vector.load %arg20[%c0_68, %c0_69] : memref<24x128xf32, #tpu.memory_space<vmem>>, vector<8x128xf32>
    tpu.vector_store %arg20[%c0_68, %c0_69], %83 {strides = array<i32>} : memref<24x128xf32, #tpu.memory_space<vmem>>, vector<8x128xf32>,
    %85 = vector.extract_strided_slice %71 {offsets = [8, 0], sizes = [8, 128], strides = [1, 1]} : vector<16x128xf32> to vector<8x128xf32>
    %c0_70 = arith.constant 0 : index
    %c0_71 = arith.constant 0 : index
    %86 = vector.load %arg21[%c0_70, %c0_71] : memref<24x128xf32, #tpu.memory_space<vmem>>, vector<8x128xf32>
    tpu.vector_store %arg21[%c0_70, %c0_71], %85 {strides = array<i32>} : memref<24x128xf32, #tpu.memory_space<vmem>>, vector<8x128xf32>,
    %87 = arith.addf %82, %72 : vector<16x128xf32>
    %cst_72 = arith.constant 0.000000e+00 : f32
    %88 = vector.broadcast %cst_72 : f32 to vector<16x128xf32>
    %89 = arith.maximumf %87, %88 : vector<16x128xf32>
    %c0_73 = arith.constant 0 : index
    %c0_74 = arith.constant 0 : index
    %c0_75 = arith.constant 0 : index
    %90 = vector.load %arg15[%c0_73, %c0_74, %c0_75] : memref<1x16x128xf32, #tpu.memory_space<vmem>>, vector<1x16x128xf32>
    %91 = vector.shape_cast %90 : vector<1x16x128xf32> to vector<16x128xf32>
    %92 = vector.shape_cast %89 : vector<16x128xf32> to vector<1x16x128xf32>
    tpu.vector_store %arg15[%c0_73, %c0_74, %c0_75], %92 {strides = array<i32>} : memref<1x16x128xf32, #tpu.memory_space<vmem>>, vector<1x16x128xf32>,
    return
  }
  func.func @transform_0(%arg0: i32, %arg1: i32) -> (i32, i32, i32) {
    %c0_i32 = arith.constant 0 : i32
    %c0_i32_0 = arith.constant 0 : i32
    return %arg0, %arg1, %c0_i32 : i32, i32, i32
  }
  func.func @transform_1(%arg0: i32, %arg1: i32) -> (i32, i32) {
    %c0_i32 = arith.constant 0 : i32
    %c0_i32_0 = arith.constant 0 : i32
    %c0_i32_1 = arith.constant 0 : i32
    return %c0_i32, %c0_i32_0 : i32, i32
  }
  func.func @transform_2(%arg0: i32, %arg1: i32) -> (i32, i32) {
    %c0_i32 = arith.constant 0 : i32
    %c0_i32_0 = arith.constant 0 : i32
    %c0_i32_1 = arith.constant 0 : i32
    return %c0_i32, %c0_i32_0 : i32, i32
  }
  func.func @transform_3(%arg0: i32, %arg1: i32) -> (i32, i32) {
    %c0_i32 = arith.constant 0 : i32
    %c0_i32_0 = arith.constant 0 : i32
    %c0_i32_1 = arith.constant 0 : i32
    return %c0_i32, %c0_i32_0 : i32, i32
  }
  func.func @transform_4(%arg0: i32, %arg1: i32) -> (i32, i32) {
    %c0_i32 = arith.constant 0 : i32
    %c0_i32_0 = arith.constant 0 : i32
    %c0_i32_1 = arith.constant 0 : i32
    return %c0_i32, %c0_i32_0 : i32, i32
  }
  func.func @transform_5(%arg0: i32, %arg1: i32) -> (i32, i32) {
    %c0_i32 = arith.constant 0 : i32
    %c0_i32_0 = arith.constant 0 : i32
    %c0_i32_1 = arith.constant 0 : i32
    return %c0_i32, %c0_i32_0 : i32, i32
  }
  func.func @transform_6(%arg0: i32, %arg1: i32) -> (i32, i32) {
    %c0_i32 = arith.constant 0 : i32
    %c0_i32_0 = arith.constant 0 : i32
    %c0_i32_1 = arith.constant 0 : i32
    return %c0_i32, %c0_i32_0 : i32, i32
  }
  func.func @transform_7(%arg0: i32, %arg1: i32) -> (i32, i32) {
    %c0_i32 = arith.constant 0 : i32
    %c0_i32_0 = arith.constant 0 : i32
    %c0_i32_1 = arith.constant 0 : i32
    return %c0_i32, %c0_i32_0 : i32, i32
  }
  func.func @transform_8(%arg0: i32, %arg1: i32) -> (i32, i32) {
    %c0_i32 = arith.constant 0 : i32
    %c0_i32_0 = arith.constant 0 : i32
    %c0_i32_1 = arith.constant 0 : i32
    return %c0_i32, %c0_i32_0 : i32, i32
  }
  func.func @transform_9(%arg0: i32, %arg1: i32) -> (i32, i32) {
    %c0_i32 = arith.constant 0 : i32
    %c0_i32_0 = arith.constant 0 : i32
    %c0_i32_1 = arith.constant 0 : i32
    return %c0_i32, %c0_i32_0 : i32, i32
  }
  func.func @transform_10(%arg0: i32, %arg1: i32) -> (i32, i32) {
    %c0_i32 = arith.constant 0 : i32
    %c0_i32_0 = arith.constant 0 : i32
    %c0_i32_1 = arith.constant 0 : i32
    return %c0_i32, %c0_i32_0 : i32, i32
  }
  func.func @transform_11(%arg0: i32, %arg1: i32) -> (i32, i32) {
    %c0_i32 = arith.constant 0 : i32
    %c0_i32_0 = arith.constant 0 : i32
    %c0_i32_1 = arith.constant 0 : i32
    return %c0_i32, %c0_i32_0 : i32, i32
  }
  func.func @transform_12(%arg0: i32, %arg1: i32) -> (i32, i32) {
    %c0_i32 = arith.constant 0 : i32
    %c0_i32_0 = arith.constant 0 : i32
    %c0_i32_1 = arith.constant 0 : i32
    return %c0_i32, %c0_i32_0 : i32, i32
  }
  func.func @transform_13(%arg0: i32, %arg1: i32) -> (i32, i32, i32) {
    %c0_i32 = arith.constant 0 : i32
    %c0_i32_0 = arith.constant 0 : i32
    return %arg0, %arg1, %c0_i32 : i32, i32, i32
  }
}

</mosaic_0001>

<llo_original>
// kernel: _lambda_.1
$region0: #{_lambda_.1}
  #allocation0 [shape = 'u32[]', space=smem, size = 0x4, offset = 0x4, fixed_abs, tag = 'smem constant byte address 0x4 - core index']
  #allocation1 [shape = 'u32[72,128]{1,0:T(1,128)}', space=vmem, size = 0x9000, scoped, tag = 'internal scratch']
  #allocation2 [shape = 'f32[24,128]{1,0:T(8,128)}', space=vmem, size = 0x3000, scoped, tag = 'scratch operand']
  #allocation3 [shape = 'f32[24,128]{1,0:T(8,128)}', space=vmem, size = 0x3000, scoped, tag = 'scratch operand']
  #allocation4 [shape = 'f32[24,128]{1,0:T(8,128)}', space=vmem, size = 0x3000, scoped, tag = 'scratch operand']
  #allocation5 [shape = 'f32[24,128]{1,0:T(8,128)}', space=vmem, size = 0x3000, scoped, tag = 'scratch operand']
  #allocation6 [shape = 'f32[24,128]{1,0:T(8,128)}', space=vmem, size = 0x3000, scoped, tag = 'scratch operand']
  #allocation7 [shape = 'f32[24,128]{1,0:T(8,128)}', space=vmem, size = 0x3000, scoped, tag = 'scratch operand']
  %s0 = inlined_call_operand.vmem [shape: f32[2,32,128], index: 0, kind: input, shape index: {}]
  %s1 = inlined_call_operand.vmem [shape: f32[256,256], index: 1, kind: input, shape index: {}]
  %s2 = inlined_call_operand.vmem [shape: f32[1,256], index: 2, kind: input, shape index: {}]
  %s3 = inlined_call_operand.vmem [shape: f32[256,128], index: 3, kind: input, shape index: {}]
  %s4 = inlined_call_operand.vmem [shape: f32[1,128], index: 4, kind: input, shape index: {}]
  %s5 = inlined_call_operand.vmem [shape: f32[256,128], index: 5, kind: input, shape index: {}]
  %s6 = inlined_call_operand.vmem [shape: f32[1,128], index: 6, kind: input, shape index: {}]
  %s7 = inlined_call_operand.vmem [shape: f32[256,128], index: 7, kind: input, shape index: {}]
  %s8 = inlined_call_operand.vmem [shape: f32[1,128], index: 8, kind: input, shape index: {}]
  %s9 = inlined_call_operand.vmem [shape: f32[256,256], index: 9, kind: input, shape index: {}]
  %s10 = inlined_call_operand.vmem [shape: f32[1,256], index: 10, kind: input, shape index: {}]
  %s11 = inlined_call_operand.vmem [shape: f32[256,128], index: 11, kind: input, shape index: {}]
  %s12 = inlined_call_operand.vmem [shape: f32[1,128], index: 12, kind: input, shape index: {}]
  %s13 = inlined_call_operand.vmem [shape: f32[2,32,128], index: 13, kind: output, shape index: {}]
  %s14 = sld [smem:[#allocation0]]
  $region89: #{_lambda_.1} parent=0
    _
  %s16 = ssub.s32 1, %s14
  %s17 = scalar_select 0, %s16, %s14
  loop: start=0, step=1, limit=6
  $region2: #{_lambda_.1} parent=0 // loop_pre_header
    _
  $region3: #{_lambda_.1} parent=0 // loop_header
    %s19 = sphi 0, %s23
    %p20 = scmp.ge.s32.totalorder %s19, 6
    %s26 = sphi 0, %s38
    %s27 = sphi 0, %s34
    %s28 = sphi 0, %s26
    %s29 = sphi 0, %s27
    %s30 = sphi 0, %s28
    %s31 = sphi 0, %s29
    %s43 = sphi 0, %s45
    %s46 = sphi 0, %s43
    %s47 = sphi 0, %s46
    %s63 = sphi 0, %s47
    %s67 = sphi 0, %s67
    %s69 = sphi 0, %s67
    %s70 = sphi 0, %s69
    %s84 = sphi 0, %s70
    %s88 = sphi 0, %s88
    %s90 = sphi 0, %s88
    %s91 = sphi 0, %s90
    %s105 = sphi 0, %s91
    %s109 = sphi 0, %s109
    %s111 = sphi 0, %s109
    %s112 = sphi 0, %s111
    %s126 = sphi 0, %s112
    %s130 = sphi 0, %s130
    %s132 = sphi 0, %s130
    %s133 = sphi 0, %s132
    %s147 = sphi 0, %s133
    %s151 = sphi 0, %s151
    %s153 = sphi 0, %s151
    %s154 = sphi 0, %s153
    %s168 = sphi 0, %s154
    %s172 = sphi 0, %s172
    %s174 = sphi 0, %s172
    %s175 = sphi 0, %s174
    %s189 = sphi 0, %s175
    %s193 = sphi 0, %s193
    %s195 = sphi 0, %s193
    %s196 = sphi 0, %s195
    %s210 = sphi 0, %s196
    %s214 = sphi 0, %s214
    %s216 = sphi 0, %s214
    %s217 = sphi 0, %s216
    %s231 = sphi 0, %s217
    %s235 = sphi 0, %s235
    %s237 = sphi 0, %s235
    %s238 = sphi 0, %s237
    %s252 = sphi 0, %s238
    %s256 = sphi 0, %s256
    %s258 = sphi 0, %s256
    %s259 = sphi 0, %s258
    %s273 = sphi 0, %s259
    %s277 = sphi 0, %s277
    %s279 = sphi 0, %s277
    %s280 = sphi 0, %s279
    %s294 = sphi 0, %s280
    %s298 = sphi 0, %s298
    %s300 = sphi 0, %s298
    %s301 = sphi 0, %s300
    %s315 = sphi 0, %s301
    %s323 = sphi 0, %s325
    %s326 = sphi 0, %s323
    %s327 = sphi 0, %s326
    %s343 = sphi 0, %s327
  $region4: #{_lambda_.1} parent=0 // loop_header_branch
    %22 = sbr.rel (%p20) target = $region8
  $region5: #{_lambda_.1} parent=0 // loop_body
    %s24 = ssub.s32 %s19, 1
    %s25 = ssub.s32 %s19, 2
    %s32 = sadd.s32 1, %s27
    %p33 = scmp.ge.s32.totalorder %s32, 2
    %s34 = scalar_select %p33, 0, %s32
    %s35 = sadd.s32 1, %s26
    %s36 = scalar_select %p33, %s35, %s26
    %p37 = scmp.ge.s32.totalorder %s36, 2
    %s38 = scalar_select %p37, 0, %s36
    %s39 = ssub.s32 %s26, %s38
    %s40 = ssub.s32 %s27, %s34
    %s41 = sor.u32 %s39, %s40
    %p42 = scmp.eq.s32.totalorder %s41, 0
    %s44 = sadd.s32 %s43, 1
    %s45 = scalar_select %p42, %s43, %s44
    %p48 = pneg %p42
    %p49 = scmp.eq.s32.totalorder %s19, 3
    %p50 = por %p48, %p49
    %p51 = scmp.ne.s32.totalorder %s43, %s46
    %p52 = scmp.eq.s32.totalorder %s19, 0
    %p53 = por %p51, %p52
    %p54 = scmp.ne.s32.totalorder %s43, %s46
    %p55 = scmp.eq.s32.totalorder %s24, 3
    %p56 = por %p54, %p55
    %p57 = scmp.ne.s32.totalorder %s46, %s47
    %p58 = scmp.eq.s32.totalorder %s24, 0
    %p59 = por %p57, %p58
    %p60 = scmp.ne.s32.totalorder %s46, %s47
    %p61 = scmp.eq.s32.totalorder %s25, 3
    %p62 = por %p60, %p61
    %p64 = scmp.ne.s32.totalorder %s47, %s63
    %p65 = scmp.eq.s32.totalorder %s25, 0
    %p66 = por %p64, %p65
    %s68 = sadd.s32 %s67, 1
    %p71 = scmp.eq.s32.totalorder %s19, 3
    %p72 = scmp.ne.s32.totalorder %s67, %s69
    %p73 = scmp.eq.s32.totalorder %s19, 0
    %p74 = por %p72, %p73
    %p75 = scmp.ne.s32.totalorder %s67, %s69
    %p76 = scmp.eq.s32.totalorder %s24, 3
    %p77 = por %p75, %p76
    %p78 = scmp.ne.s32.totalorder %s69, %s70
    %p79 = scmp.eq.s32.totalorder %s24, 0
    %p80 = por %p78, %p79
    %p81 = scmp.ne.s32.totalorder %s69, %s70
    %p82 = scmp.eq.s32.totalorder %s25, 3
    %p83 = por %p81, %p82
    %p85 = scmp.ne.s32.totalorder %s70, %s84
    %p86 = scmp.eq.s32.totalorder %s25, 0
    %p87 = por %p85, %p86
    %s89 = sadd.s32 %s88, 1
    %p92 = scmp.eq.s32.totalorder %s19, 3
    %p93 = scmp.ne.s32.totalorder %s88, %s90
    %p94 = scmp.eq.s32.totalorder %s19, 0
    %p95 = por %p93, %p94
    %p96 = scmp.ne.s32.totalorder %s88, %s90
    %p97 = scmp.eq.s32.totalorder %s24, 3
    %p98 = por %p96, %p97
    %p99 = scmp.ne.s32.totalorder %s90, %s91
    %p100 = scmp.eq.s32.totalorder %s24, 0
    %p101 = por %p99, %p100
    %p102 = scmp.ne.s32.totalorder %s90, %s91
    %p103 = scmp.eq.s32.totalorder %s25, 3
    %p104 = por %p102, %p103
    %p106 = scmp.ne.s32.totalorder %s91, %s105
    %p107 = scmp.eq.s32.totalorder %s25, 0
    %p108 = por %p106, %p107
    %s110 = sadd.s32 %s109, 1
    %p113 = scmp.eq.s32.totalorder %s19, 3
    %p114 = scmp.ne.s32.totalorder %s109, %s111
    %p115 = scmp.eq.s32.totalorder %s19, 0
    %p116 = por %p114, %p115
    %p117 = scmp.ne.s32.totalorder %s109, %s111
    %p118 = scmp.eq.s32.totalorder %s24, 3
    %p119 = por %p117, %p118
    %p120 = scmp.ne.s32.totalorder %s111, %s112
    %p121 = scmp.eq.s32.totalorder %s24, 0
    %p122 = por %p120, %p121
    %p123 = scmp.ne.s32.totalorder %s111, %s112
    %p124 = scmp.eq.s32.totalorder %s25, 3
    %p125 = por %p123, %p124
    %p127 = scmp.ne.s32.totalorder %s112, %s126
    %p128 = scmp.eq.s32.totalorder %s25, 0
    %p129 = por %p127, %p128
    %s131 = sadd.s32 %s130, 1
    %p134 = scmp.eq.s32.totalorder %s19, 3
    %p135 = scmp.ne.s32.totalorder %s130, %s132
    %p136 = scmp.eq.s32.totalorder %s19, 0
    %p137 = por %p135, %p136
    %p138 = scmp.ne.s32.totalorder %s130, %s132
    %p139 = scmp.eq.s32.totalorder %s24, 3
    %p140 = por %p138, %p139
    %p141 = scmp.ne.s32.totalorder %s132, %s133
    %p142 = scmp.eq.s32.totalorder %s24, 0
    %p143 = por %p141, %p142
    %p144 = scmp.ne.s32.totalorder %s132, %s133
    %p145 = scmp.eq.s32.totalorder %s25, 3
    %p146 = por %p144, %p145
    %p148 = scmp.ne.s32.totalorder %s133, %s147
    %p149 = scmp.eq.s32.totalorder %s25, 0
    %p150 = por %p148, %p149
    %s152 = sadd.s32 %s151, 1
    %p155 = scmp.eq.s32.totalorder %s19, 3
    %p156 = scmp.ne.s32.totalorder %s151, %s153
    %p157 = scmp.eq.s32.totalorder %s19, 0
    %p158 = por %p156, %p157
    %p159 = scmp.ne.s32.totalorder %s151, %s153
    %p160 = scmp.eq.s32.totalorder %s24, 3
    %p161 = por %p159, %p160
    %p162 = scmp.ne.s32.totalorder %s153, %s154
    %p163 = scmp.eq.s32.totalorder %s24, 0
    %p164 = por %p162, %p163
    %p165 = scmp.ne.s32.totalorder %s153, %s154
    %p166 = scmp.eq.s32.totalorder %s25, 3
    %p167 = por %p165, %p166
    %p169 = scmp.ne.s32.totalorder %s154, %s168
    %p170 = scmp.eq.s32.totalorder %s25, 0
    %p171 = por %p169, %p170
    %s173 = sadd.s32 %s172, 1
    %p176 = scmp.eq.s32.totalorder %s19, 3
    %p177 = scmp.ne.s32.totalorder %s172, %s174
    %p178 = scmp.eq.s32.totalorder %s19, 0
    %p179 = por %p177, %p178
    %p180 = scmp.ne.s32.totalorder %s172, %s174
    %p181 = scmp.eq.s32.totalorder %s24, 3
    %p182 = por %p180, %p181
    %p183 = scmp.ne.s32.totalorder %s174, %s175
    %p184 = scmp.eq.s32.totalorder %s24, 0
    %p185 = por %p183, %p184
    %p186 = scmp.ne.s32.totalorder %s174, %s175
    %p187 = scmp.eq.s32.totalorder %s25, 3
    %p188 = por %p186, %p187
    %p190 = scmp.ne.s32.totalorder %s175, %s189
    %p191 = scmp.eq.s32.totalorder %s25, 0
    %p192 = por %p190, %p191
    %s194 = sadd.s32 %s193, 1
    %p197 = scmp.eq.s32.totalorder %s19, 3
    %p198 = scmp.ne.s32.totalorder %s193, %s195
    %p199 = scmp.eq.s32.totalorder %s19, 0
    %p200 = por %p198, %p199
    %p201 = scmp.ne.s32.totalorder %s193, %s195
    %p202 = scmp.eq.s32.totalorder %s24, 3
    %p203 = por %p201, %p202
    %p204 = scmp.ne.s32.totalorder %s195, %s196
    %p205 = scmp.eq.s32.totalorder %s24, 0
    %p206 = por %p204, %p205
    %p207 = scmp.ne.s32.totalorder %s195, %s196
    %p208 = scmp.eq.s32.totalorder %s25, 3
    %p209 = por %p207, %p208
    %p211 = scmp.ne.s32.totalorder %s196, %s210
    %p212 = scmp.eq.s32.totalorder %s25, 0
    %p213 = por %p211, %p212
    %s215 = sadd.s32 %s214, 1
    %p218 = scmp.eq.s32.totalorder %s19, 3
    %p219 = scmp.ne.s32.totalorder %s214, %s216
    %p220 = scmp.eq.s32.totalorder %s19, 0
    %p221 = por %p219, %p220
    %p222 = scmp.ne.s32.totalorder %s214, %s216
    %p223 = scmp.eq.s32.totalorder %s24, 3
    %p224 = por %p222, %p223
    %p225 = scmp.ne.s32.totalorder %s216, %s217
    %p226 = scmp.eq.s32.totalorder %s24, 0
    %p227 = por %p225, %p226
    %p228 = scmp.ne.s32.totalorder %s216, %s217
    %p229 = scmp.eq.s32.totalorder %s25, 3
    %p230 = por %p228, %p229
    %p232 = scmp.ne.s32.totalorder %s217, %s231
    %p233 = scmp.eq.s32.totalorder %s25, 0
    %p234 = por %p232, %p233
    %s236 = sadd.s32 %s235, 1
    %p239 = scmp.eq.s32.totalorder %s19, 3
    %p240 = scmp.ne.s32.totalorder %s235, %s237
    %p241 = scmp.eq.s32.totalorder %s19, 0
    %p242 = por %p240, %p241
    %p243 = scmp.ne.s32.totalorder %s235, %s237
    %p244 = scmp.eq.s32.totalorder %s24, 3
    %p245 = por %p243, %p244
    %p246 = scmp.ne.s32.totalorder %s237, %s238
    %p247 = scmp.eq.s32.totalorder %s24, 0
    %p248 = por %p246, %p247
    %p249 = scmp.ne.s32.totalorder %s237, %s238
    %p250 = scmp.eq.s32.totalorder %s25, 3
    %p251 = por %p249, %p250
    %p253 = scmp.ne.s32.totalorder %s238, %s252
    %p254 = scmp.eq.s32.totalorder %s25, 0
    %p255 = por %p253, %p254
    %s257 = sadd.s32 %s256, 1
    %p260 = scmp.eq.s32.totalorder %s19, 3
    %p261 = scmp.ne.s32.totalorder %s256, %s258
    %p262 = scmp.eq.s32.totalorder %s19, 0
    %p263 = por %p261, %p262
    %p264 = scmp.ne.s32.totalorder %s256, %s258
    %p265 = scmp.eq.s32.totalorder %s24, 3
    %p266 = por %p264, %p265
    %p267 = scmp.ne.s32.totalorder %s258, %s259
    %p268 = scmp.eq.s32.totalorder %s24, 0
    %p269 = por %p267, %p268
    %p270 = scmp.ne.s32.totalorder %s258, %s259
    %p271 = scmp.eq.s32.totalorder %s25, 3
    %p272 = por %p270, %p271
    %p274 = scmp.ne.s32.totalorder %s259, %s273
    %p275 = scmp.eq.s32.totalorder %s25, 0
    %p276 = por %p274, %p275
    %s278 = sadd.s32 %s277, 1
    %p281 = scmp.eq.s32.totalorder %s19, 3
    %p282 = scmp.ne.s32.totalorder %s277, %s279
    %p283 = scmp.eq.s32.totalorder %s19, 0
    %p284 = por %p282, %p283
    %p285 = scmp.ne.s32.totalorder %s277, %s279
    %p286 = scmp.eq.s32.totalorder %s24, 3
    %p287 = por %p285, %p286
    %p288 = scmp.ne.s32.totalorder %s279, %s280
    %p289 = scmp.eq.s32.totalorder %s24, 0
    %p290 = por %p288, %p289
    %p291 = scmp.ne.s32.totalorder %s279, %s280
    %p292 = scmp.eq.s32.totalorder %s25, 3
    %p293 = por %p291, %p292
    %p295 = scmp.ne.s32.totalorder %s280, %s294
    %p296 = scmp.eq.s32.totalorder %s25, 0
    %p297 = por %p295, %p296
    %s299 = sadd.s32 %s298, 1
    %p302 = scmp.eq.s32.totalorder %s19, 3
    %p303 = scmp.ne.s32.totalorder %s298, %s300
    %p304 = scmp.eq.s32.totalorder %s19, 0
    %p305 = por %p303, %p304
    %p306 = scmp.ne.s32.totalorder %s298, %s300
    %p307 = scmp.eq.s32.totalorder %s24, 3
    %p308 = por %p306, %p307
    %p309 = scmp.ne.s32.totalorder %s300, %s301
    %p310 = scmp.eq.s32.totalorder %s24, 0
    %p311 = por %p309, %p310
    %p312 = scmp.ne.s32.totalorder %s300, %s301
    %p313 = scmp.eq.s32.totalorder %s25, 3
    %p314 = por %p312, %p313
    %p316 = scmp.ne.s32.totalorder %s301, %s315
    %p317 = scmp.eq.s32.totalorder %s25, 0
    %p318 = por %p316, %p317
    %s319 = ssub.s32 %s26, %s38
    %s320 = ssub.s32 %s27, %s34
    %s321 = sor.u32 %s319, %s320
    %p322 = scmp.eq.s32.totalorder %s321, 0
    %s324 = sadd.s32 %s323, 1
    %s325 = scalar_select %p322, %s323, %s324
    %p328 = pneg %p322
    %p329 = scmp.eq.s32.totalorder %s19, 3
    %p330 = por %p328, %p329
    %p331 = scmp.ne.s32.totalorder %s323, %s326
    %p332 = scmp.eq.s32.totalorder %s19, 0
    %p333 = por %p331, %p332
    %p334 = scmp.ne.s32.totalorder %s323, %s326
    %p335 = scmp.eq.s32.totalorder %s24, 3
    %p336 = por %p334, %p335
    %p337 = scmp.ne.s32.totalorder %s326, %s327
    %p338 = scmp.eq.s32.totalorder %s24, 0
    %p339 = por %p337, %p338
    %p340 = scmp.ne.s32.totalorder %s326, %s327
    %p341 = scmp.eq.s32.totalorder %s25, 3
    %p342 = por %p340, %p341
    %p344 = scmp.ne.s32.totalorder %s327, %s343
    %p345 = scmp.eq.s32.totalorder %s25, 0
    %p346 = por %p344, %p345
    %p347 = scmp.le.s32.totalorder 1, %s19
    %p348 = scmp.lt.s32.totalorder %s19, 5
    %p349 = pnand %p347, %p348
    %p350 = pneg %p349
    // Predicated region
    $region9: #{_lambda_.1} parent=5 // pred_check
      _
    $region10: #{_lambda_.1} parent=5 // pred_check_branch
      %352 = sbr.rel (%p349) target = $region12
    $region11: #{_lambda_.1} parent=5 // pred_region
      %s353 = ssub.s32 %s19, 1
      // Predicated region
      $region13: #{_lambda_.1} parent=11 // pred_check
        %p354 = pneg %p80
      $region14: #{_lambda_.1} parent=11 // pred_check_branch
        %356 = sbr.rel (%p354) target = $region16
      $region15: #{_lambda_.1} parent=11 // pred_region
        _
      $region16: #{_lambda_.1} parent=11 // pred_fallthru
        _
      // Predicated region
      $region17: #{_lambda_.1} parent=11 // pred_check
        %p357 = pneg %p101
      $region18: #{_lambda_.1} parent=11 // pred_check_branch
        %359 = sbr.rel (%p357) target = $region20
      $region19: #{_lambda_.1} parent=11 // pred_region
        _
      $region20: #{_lambda_.1} parent=11 // pred_fallthru
        _
      // Predicated region
      $region21: #{_lambda_.1} parent=11 // pred_check
        %p360 = pneg %p122
      $region22: #{_lambda_.1} parent=11 // pred_check_branch
        %362 = sbr.rel (%p360) target = $region24
      $region23: #{_lambda_.1} parent=11 // pred_region
        _
      $region24: #{_lambda_.1} parent=11 // pred_fallthru
        _
      // Predicated region
      $region25: #{_lambda_.1} parent=11 // pred_check
        %p363 = pneg %p143
      $region26: #{_lambda_.1} parent=11 // pred_check_branch
        %365 = sbr.rel (%p363) target = $region28
      $region27: #{_lambda_.1} parent=11 // pred_region
        _
      $region28: #{_lambda_.1} parent=11 // pred_fallthru
        _
      // Predicated region
      $region29: #{_lambda_.1} parent=11 // pred_check
        %p366 = pneg %p164
      $region30: #{_lambda_.1} parent=11 // pred_check_branch
        %368 = sbr.rel (%p366) target = $region32
      $region31: #{_lambda_.1} parent=11 // pred_region
        _
      $region32: #{_lambda_.1} parent=11 // pred_fallthru
        _
      // Predicated region
      $region33: #{_lambda_.1} parent=11 // pred_check
        %p369 = pneg %p185
      $region34: #{_lambda_.1} parent=11 // pred_check_branch
        %371 = sbr.rel (%p369) target = $region36
      $region35: #{_lambda_.1} parent=11 // pred_region
        _
      $region36: #{_lambda_.1} parent=11 // pred_fallthru
        _
      // Predicated region
      $region37: #{_lambda_.1} parent=11 // pred_check
        %p372 = pneg %p206
      $region38: #{_lambda_.1} parent=11 // pred_check_branch
        %374 = sbr.rel (%p372) target = $region40
      $region39: #{_lambda_.1} parent=11 // pred_region
        _
      $region40: #{_lambda_.1} parent=11 // pred_fallthru
        _
      // Predicated region
      $region41: #{_lambda_.1} parent=11 // pred_check
        %p375 = pneg %p227
      $region42: #{_lambda_.1} parent=11 // pred_check_branch
        %377 = sbr.rel (%p375) target = $region44
      $region43: #{_lambda_.1} parent=11 // pred_region
        _
      $region44: #{_lambda_.1} parent=11 // pred_fallthru
        _
      // Predicated region
      $region45: #{_lambda_.1} parent=11 // pred_check
        %p378 = pneg %p248
      $region46: #{_lambda_.1} parent=11 // pred_check_branch
        %380 = sbr.rel (%p378) target = $region48
      $region47: #{_lambda_.1} parent=11 // pred_region
        _
      $region48: #{_lambda_.1} parent=11 // pred_fallthru
        _
      // Predicated region
      $region49: #{_lambda_.1} parent=11 // pred_check
        %p381 = pneg %p269
      $region50: #{_lambda_.1} parent=11 // pred_check_branch
        %383 = sbr.rel (%p381) target = $region52
      $region51: #{_lambda_.1} parent=11 // pred_region
        _
      $region52: #{_lambda_.1} parent=11 // pred_fallthru
        _
      // Predicated region
      $region53: #{_lambda_.1} parent=11 // pred_check
        %p384 = pneg %p290
      $region54: #{_lambda_.1} parent=11 // pred_check_branch
        %386 = sbr.rel (%p384) target = $region56
      $region55: #{_lambda_.1} parent=11 // pred_region
        _
      $region56: #{_lambda_.1} parent=11 // pred_fallthru
        _
      // Predicated region
      $region57: #{_lambda_.1} parent=11 // pred_check
        %p387 = pneg %p311
      $region58: #{_lambda_.1} parent=11 // pred_check_branch
        %389 = sbr.rel (%p387) target = $region60
      $region59: #{_lambda_.1} parent=11 // pred_region
        _
      $region60: #{_lambda_.1} parent=11 // pred_fallthru
        _
    $region12: #{_lambda_.1} parent=5 // pred_fallthru
      _
    %p390 = scmp.lt.s32.totalorder %s19, 4
    // Predicated region
    $region61: #{_lambda_.1} parent=5 // pred_check
      %p391 = pneg %p390
    $region62: #{_lambda_.1} parent=5 // pred_check_branch
      %393 = sbr.rel (%p391) target = $region64
    $region63: #{_lambda_.1} parent=5 // pred_region
      // Predicated region
      $region65: #{_lambda_.1} parent=63 // pred_check
        %p394 = pneg %p53
      $region66: #{_lambda_.1} parent=63 // pred_check_branch
        %396 = sbr.rel (%p394) target = $region68
      $region67: #{_lambda_.1} parent=63 // pred_region
        %s397 = smul.u32 2, %s27
        %p398 = scmp.lt.s32.totalorder %s26, 1
        %s399 = scalar_select %p398, %s26, 1
        %p400 = scmp.lt.s32.totalorder %s397, 3
        %s401 = scalar_select %p400, %s397, 3
        %s402 = smul.addr %s399, 4
        %s403 = sadd.s32 %s401, %s402
        %s404 = smul.addr %s403, 8
        %s405 = scalar_lea.vmem %s0, %s404
        %s406 = smul.u32 2, %s27
      $region68: #{_lambda_.1} parent=63 // pred_fallthru
        _
    $region64: #{_lambda_.1} parent=5 // pred_fallthru
      _
    %p407 = scmp.le.s32.totalorder 1, %s19
    %p408 = scmp.lt.s32.totalorder %s19, 5
    %p409 = pnand %p407, %p408
    %p410 = pneg %p409
    // Predicated region
    $region69: #{_lambda_.1} parent=5 // pred_check
      _
    $region70: #{_lambda_.1} parent=5 // pred_check_branch
      %412 = sbr.rel (%p409) target = $region72
    $region71: #{_lambda_.1} parent=5 // pred_region
      %s413 = ssub.s32 %s19, 1
      %s414 = smul.u32 2, %s29
      %p415 = scmp.lt.s32.totalorder %s28, 1
      %s416 = scalar_select %p415, %s28, 1
      %p417 = scmp.lt.s32.totalorder %s414, 3
      %s418 = scalar_select %p417, %s414, 3
      %s419 = smul.addr %s416, 4
      %s420 = sadd.s32 %s418, %s419
      %s421 = smul.addr %s420, 8
      %s422 = scalar_lea.vmem %s0, %s421
      %p423 = pneg %p59
      %p424 = pneg %p56
      %p425 = pneg %p80
      %p426 = pneg %p77
      %p427 = pneg %p101
      %p428 = pneg %p98
      %p429 = pneg %p122
      %p430 = pneg %p119
      %p431 = pneg %p143
      %p432 = pneg %p140
      %p433 = pneg %p164
      %p434 = pneg %p161
      %p435 = pneg %p185
      %p436 = pneg %p182
      %p437 = pneg %p206
      %p438 = pneg %p203
      %p439 = pneg %p227
      %p440 = pneg %p224
      %p441 = pneg %p248
      %p442 = pneg %p245
      %p443 = pneg %p269
      %p444 = pneg %p266
      %p445 = pneg %p290
      %p446 = pneg %p287
      %p447 = pneg %p311
      %p448 = pneg %p308
      %p449 = pneg %p339
      %p450 = pneg %p336
      %s451 = smul.u32 2, %s29
      %p452 = scmp.lt.s32.totalorder %s28, 1
      %s453 = scalar_select %p452, %s28, 1
      %p454 = scmp.lt.s32.totalorder %s451, 3
      %s455 = scalar_select %p454, %s451, 3
      %s456 = smul.addr %s453, 4
      %s457 = sadd.s32 %s455, %s456
      %s458 = smul.addr %s457, 8
      %s459 = scalar_lea.vmem %s13, %s458
      %s460 = smul.u32 2, %s29
      %p461 = scmp.lt.s32.totalorder %s28, 1
      %s462 = scalar_select %p461, %s28, 1
      %p463 = scmp.lt.s32.totalorder %s460, 3
      %s464 = scalar_select %p463, %s460, 3
      %s465 = smul.addr %s462, 4
      %s466 = sadd.s32 %s464, %s465
      %s467 = smul.addr %s466, 8
      %s468 = scalar_lea.vmem %s0, %s467
      %s469 = smul.u32 2, %s29
      %s470 = smul.u32 2, %s29
      %p471 = scmp.lt.s32.totalorder %s28, 1
      %s472 = scalar_select %p471, %s28, 1
      %p473 = scmp.lt.s32.totalorder %s470, 3
      %s474 = scalar_select %p473, %s470, 3
      %s475 = smul.addr %s472, 4
      %s476 = sadd.s32 %s474, %s475
      %s477 = smul.addr %s476, 8
      %s478 = scalar_lea.vmem %s13, %s477
      %s479 = smul.u32 2, %s29
      %p480 = scmp.eq.s32.totalorder %s29, 0
      // Predicated region
      $region73: #{_lambda_.1} parent=71 // pred_check
        %p481 = pneg %p480
      $region74: #{_lambda_.1} parent=71 // pred_check_branch
        %483 = sbr.rel (%p481) target = $region76
      $region75: #{_lambda_.1} parent=71 // pred_region
        %484 = vst [vmem:[#allocation2] sm:$0xff] 0.0
        %485 = vst [vmem:[#allocation3] sm:$0xff] 0.0
        %486 = vst [vmem:[#allocation4] sm:$0xff] 0.0
        %487 = vst [vmem:[#allocation5] sm:$0xff] 0.0
        %488 = vst [vmem:[#allocation6] sm:$0xff] 0.0
        %489 = vst [vmem:[#allocation7] sm:$0xff] 0.0
      $region76: #{_lambda_.1} parent=71 // pred_fallthru
        _
      %v490 = vld [vmem:[%s468] sm:$0xff]
      %v491 = vld [vmem:[%s468 + $0x8] sm:$0xff]
      %492 = vst [vmem:[#allocation2 + $0x8] sm:$0xff] %v490
      %493 = vst [vmem:[#allocation2 + $0x10] sm:$0xff] %v491
      %v494 = vld [vmem:[#allocation2 + $0x7] sm:$0xff]
      %v495 = vld [vmem:[#allocation2 + $0xf] sm:$0xff]
      %v496 = vld [vmem:[%s1] sm:$0xff]
      %v497 = vld [vmem:[%s1 + $0x8] sm:$0xff]
      %v498 = vld [vmem:[%s1 + $0x10] sm:$0xff]
      %v499 = vld [vmem:[%s1 + $0x18] sm:$0xff]
      %v500 = vld [vmem:[%s1 + $0x20] sm:$0xff]
      %v501 = vld [vmem:[%s1 + $0x28] sm:$0xff]
      %v502 = vld [vmem:[%s1 + $0x30] sm:$0xff]
      %v503 = vld [vmem:[%s1 + $0x38] sm:$0xff]
      %v504 = vld [vmem:[%s1 + $0x40] sm:$0xff]
      %v505 = vld [vmem:[%s1 + $0x48] sm:$0xff]
      %v506 = vld [vmem:[%s1 + $0x50] sm:$0xff]
      %v507 = vld [vmem:[%s1 + $0x58] sm:$0xff]
      %v508 = vld [vmem:[%s1 + $0x60] sm:$0xff]
      %v509 = vld [vmem:[%s1 + $0x68] sm:$0xff]
      %v510 = vld [vmem:[%s1 + $0x70] sm:$0xff]
      %v511 = vld [vmem:[%s1 + $0x78] sm:$0xff]
      %v512 = vld [vmem:[%s1 + $0x80] sm:$0xff]
      %v513 = vld [vmem:[%s1 + $0x88] sm:$0xff]
      %v514 = vld [vmem:[%s1 + $0x90] sm:$0xff]
      %v515 = vld [vmem:[%s1 + $0x98] sm:$0xff]
      %v516 = vld [vmem:[%s1 + $0xa0] sm:$0xff]
      %v517 = vld [vmem:[%s1 + $0xa8] sm:$0xff]
      %v518 = vld [vmem:[%s1 + $0xb0] sm:$0xff]
      %v519 = vld [vmem:[%s1 + $0xb8] sm:$0xff]
      %v520 = vld [vmem:[%s1 + $0xc0] sm:$0xff]
      %v521 = vld [vmem:[%s1 + $0xc8] sm:$0xff]
      %v522 = vld [vmem:[%s1 + $0xd0] sm:$0xff]
      %v523 = vld [vmem:[%s1 + $0xd8] sm:$0xff]
      %v524 = vld [vmem:[%s1 + $0xe0] sm:$0xff]
      %v525 = vld [vmem:[%s1 + $0xe8] sm:$0xff]
      %v526 = vld [vmem:[%s1 + $0xf0] sm:$0xff]
      %v527 = vld [vmem:[%s1 + $0xf8] sm:$0xff]
      %v528 = vld [vmem:[%s1 + $0x100] sm:$0xff]
      %v529 = vld [vmem:[%s1 + $0x108] sm:$0xff]
      %v530 = vld [vmem:[%s1 + $0x110] sm:$0xff]
      %v531 = vld [vmem:[%s1 + $0x118] sm:$0xff]
      %v532 = vld [vmem:[%s1 + $0x120] sm:$0xff]
      %v533 = vld [vmem:[%s1 + $0x128] sm:$0xff]
      %v534 = vld [vmem:[%s1 + $0x130] sm:$0xff]
      %v535 = vld [vmem:[%s1 + $0x138] sm:$0xff]
      %v536 = vld [vmem:[%s1 + $0x140] sm:$0xff]
      %v537 = vld [vmem:[%s1 + $0x148] sm:$0xff]
      %v538 = vld [vmem:[%s1 + $0x150] sm:$0xff]
      %v539 = vld [vmem:[%s1 + $0x158] sm:$0xff]
      %v540 = vld [vmem:[%s1 + $0x160] sm:$0xff]
      %v541 = vld [vmem:[%s1 + $0x168] sm:$0xff]
      %v542 = vld [vmem:[%s1 + $0x170] sm:$0xff]
      %v543 = vld [vmem:[%s1 + $0x178] sm:$0xff]
      %v544 = vld [vmem:[%s1 + $0x180] sm:$0xff]
      %v545 = vld [vmem:[%s1 + $0x188] sm:$0xff]
      %v546 = vld [vmem:[%s1 + $0x190] sm:$0xff]
      %v547 = vld [vmem:[%s1 + $0x198] sm:$0xff]
      %v548 = vld [vmem:[%s1 + $0x1a0] sm:$0xff]
      %v549 = vld [vmem:[%s1 + $0x1a8] sm:$0xff]
      %v550 = vld [vmem:[%s1 + $0x1b0] sm:$0xff]
      %v551 = vld [vmem:[%s1 + $0x1b8] sm:$0xff]
      %v552 = vld [vmem:[%s1 + $0x1c0] sm:$0xff]
      %v553 = vld [vmem:[%s1 + $0x1c8] sm:$0xff]
      %v554 = vld [vmem:[%s1 + $0x1d0] sm:$0xff]
      %v555 = vld [vmem:[%s1 + $0x1d8] sm:$0xff]
      %v556 = vld [vmem:[%s1 + $0x1e0] sm:$0xff]
      %v557 = vld [vmem:[%s1 + $0x1e8] sm:$0xff]
      %v558 = vld [vmem:[%s1 + $0x1f0] sm:$0xff]
      %v559 = vld [vmem:[%s1 + $0x1f8] sm:$0xff]
      %v560 = vld [vmem:[%s2] sm:$0x3]
      %v562 = vperm.slane %v560, 0
      %v563 = vperm.slane %v560, 1
      %v566 = vand.u32 %v526, 4294901760
      %567 = vmatpush.msra.mxu0 %v566
      %v568 = vand.u32 %v524, 4294901760
      %569 = vmatpush.msra.mxu0 %v568
      %v570 = vand.u32 %v522, 4294901760
      %571 = vmatpush.msra.mxu0 %v570
      %v572 = vand.u32 %v520, 4294901760
      %573 = vmatpush.msra.mxu0 %v572
      %v574 = vand.u32 %v518, 4294901760
      %575 = vmatpush.msra.mxu0 %v574
      %v576 = vand.u32 %v516, 4294901760
      %577 = vmatpush.msra.mxu0 %v576
      %v578 = vand.u32 %v514, 4294901760
      %579 = vmatpush.msra.mxu0 %v578
      %v580 = vand.u32 %v512, 4294901760
      %581 = vmatpush.msra.mxu0 %v580
      %v582 = vand.u32 %v510, 4294901760
      %583 = vmatpush.msra.mxu0 %v582
      %v584 = vand.u32 %v508, 4294901760
      %585 = vmatpush.msra.mxu0 %v584
      %v586 = vand.u32 %v506, 4294901760
      %587 = vmatpush.msra.mxu0 %v586
      %v588 = vand.u32 %v504, 4294901760
      %589 = vmatpush.msra.mxu0 %v588
      %v590 = vand.u32 %v502, 4294901760
      %591 = vmatpush.msra.mxu0 %v590
      %v592 = vand.u32 %v500, 4294901760
      %593 = vmatpush.msra.mxu0 %v592
      %v594 = vand.u32 %v498, 4294901760
      %595 = vmatpush.msra.mxu0 %v594
      %v596 = vand.u32 %v496, 4294901760
      %597 = vmatpush.msra.mxu0 %v596
      %v598 = vand.u32 %v490, 4294901760
      %v599 = vsub.f32 %v490, %v598
      %v600 = vand.u32 %v599, 4294901760
      %v601 = vsub.f32 %v599, %v600
      %v602 = vand.u32 %v601, 4294901760
      %603 = vmatmul.f32.gmra.mxu0 %v602
      %v604 = vpop.f32.mrf.mxu0
      %v605 = vadd.f32 %v562, %v604
      %v606 = vand.u32 %v491, 4294901760
      %v607 = vsub.f32 %v491, %v606
      %v608 = vand.u32 %v607, 4294901760
      %v609 = vsub.f32 %v607, %v608
      %v610 = vand.u32 %v609, 4294901760
      %611 = vmatmul.f32.gmra.mxu0 %v610
      %v612 = vpop.f32.mrf.mxu0
      %v613 = vadd.f32 %v562, %v612
      %614 = vdwg.mxu0
      %v615 = vand.u32 %v526, 4294901760
      %v616 = vsub.f32 %v526, %v615
      %v617 = vand.u32 %v616, 4294901760
      %v618 = vsub.f32 %v616, %v617
      %v619 = vand.u32 %v618, 4294901760
      %620 = vmatpush.msra.mxu0 %v619
      %v621 = vand.u32 %v524, 4294901760
      %v622 = vsub.f32 %v524, %v621
      %v623 = vand.u32 %v622, 4294901760
      %v624 = vsub.f32 %v622, %v623
      %v625 = vand.u32 %v624, 4294901760
      %626 = vmatpush.msra.mxu0 %v625
      %v627 = vand.u32 %v522, 4294901760
      %v628 = vsub.f32 %v522, %v627
      %v629 = vand.u32 %v628, 4294901760
      %v630 = vsub.f32 %v628, %v629
      %v631 = vand.u32 %v630, 4294901760
      %632 = vmatpush.msra.mxu0 %v631
      %v633 = vand.u32 %v520, 4294901760
      %v634 = vsub.f32 %v520, %v633
      %v635 = vand.u32 %v634, 4294901760
      %v636 = vsub.f32 %v634, %v635
      %v637 = vand.u32 %v636, 4294901760
      %638 = vmatpush.msra.mxu0 %v637
      %v639 = vand.u32 %v518, 4294901760
      %v640 = vsub.f32 %v518, %v639
      %v641 = vand.u32 %v640, 4294901760
      %v642 = vsub.f32 %v640, %v641
      %v643 = vand.u32 %v642, 4294901760
      %644 = vmatpush.msra.mxu0 %v643
      %v645 = vand.u32 %v516, 4294901760
      %v646 = vsub.f32 %v516, %v645
      %v647 = vand.u32 %v646, 4294901760
      %v648 = vsub.f32 %v646, %v647
      %v649 = vand.u32 %v648, 4294901760
      %650 = vmatpush.msra.mxu0 %v649
      %v651 = vand.u32 %v514, 4294901760
      %v652 = vsub.f32 %v514, %v651
      %v653 = vand.u32 %v652, 4294901760
      %v654 = vsub.f32 %v652, %v653
      %v655 = vand.u32 %v654, 4294901760
      %656 = vmatpush.msra.mxu0 %v655
      %v657 = vand.u32 %v512, 4294901760
      %v658 = vsub.f32 %v512, %v657
      %v659 = vand.u32 %v658, 4294901760
      %v660 = vsub.f32 %v658, %v659
      %v661 = vand.u32 %v660, 4294901760
      %662 = vmatpush.msra.mxu0 %v661
      %v663 = vand.u32 %v510, 4294901760
      %v664 = vsub.f32 %v510, %v663
      %v665 = vand.u32 %v664, 4294901760
      %v666 = vsub.f32 %v664, %v665
      %v667 = vand.u32 %v666, 4294901760
      %668 = vmatpush.msra.mxu0 %v667
      %v669 = vand.u32 %v508, 4294901760
      %v670 = vsub.f32 %v508, %v669
      %v671 = vand.u32 %v670, 4294901760
      %v672 = vsub.f32 %v670, %v671
      %v673 = vand.u32 %v672, 4294901760
      %674 = vmatpush.msra.mxu0 %v673
      %v675 = vand.u32 %v506, 4294901760
      %v676 = vsub.f32 %v506, %v675
      %v677 = vand.u32 %v676, 4294901760
      %v678 = vsub.f32 %v676, %v677
      %v679 = vand.u32 %v678, 4294901760
      %680 = vmatpush.msra.mxu0 %v679
      %v681 = vand.u32 %v504, 4294901760
      %v682 = vsub.f32 %v504, %v681
      %v683 = vand.u32 %v682, 4294901760
      %v684 = vsub.f32 %v682, %v683
      %v685 = vand.u32 %v684, 4294901760
      %686 = vmatpush.msra.mxu0 %v685
      %v687 = vand.u32 %v502, 4294901760
      %v688 = vsub.f32 %v502, %v687
      %v689 = vand.u32 %v688, 4294901760
      %v690 = vsub.f32 %v688, %v689
      %v691 = vand.u32 %v690, 4294901760
      %692 = vmatpush.msra.mxu0 %v691
      %v693 = vand.u32 %v500, 4294901760
      %v694 = vsub.f32 %v500, %v693
      %v695 = vand.u32 %v694, 4294901760
      %v696 = vsub.f32 %v694, %v695
      %v697 = vand.u32 %v696, 4294901760
      %698 = vmatpush.msra.mxu0 %v697
      %v699 = vand.u32 %v498, 4294901760
      %v700 = vsub.f32 %v498, %v699
      %v701 = vand.u32 %v700, 4294901760
      %v702 = vsub.f32 %v700, %v701
      %v703 = vand.u32 %v702, 4294901760
      %704 = vmatpush.msra.mxu0 %v703
      %v705 = vand.u32 %v496, 4294901760
      %v706 = vsub.f32 %v496, %v705
      %v707 = vand.u32 %v706, 4294901760
      %v708 = vsub.f32 %v706, %v707
      %v709 = vand.u32 %v708, 4294901760
      %710 = vmatpush.msra.mxu0 %v709
      %v711 = vand.u32 %v490, 4294901760
      %712 = vmatmul.f32.gmra.mxu0 %v711
      %v713 = vpop.f32.mrf.mxu0
      %v714 = vadd.f32 %v605, %v713
      %v715 = vand.u32 %v491, 4294901760
      %716 = vmatmul.f32.gmra.mxu0 %v715
      %v717 = vpop.f32.mrf.mxu0
      %v718 = vadd.f32 %v613, %v717
      %719 = vdwg.mxu0
      %v720 = vand.u32 %v526, 4294901760
      %v721 = vsub.f32 %v526, %v720
      %722 = vmatpush.msra.mxu0 %v721
      %v723 = vand.u32 %v524, 4294901760
      %v724 = vsub.f32 %v524, %v723
      %725 = vmatpush.msra.mxu0 %v724
      %v726 = vand.u32 %v522, 4294901760
      %v727 = vsub.f32 %v522, %v726
      %728 = vmatpush.msra.mxu0 %v727
      %v729 = vand.u32 %v520, 4294901760
      %v730 = vsub.f32 %v520, %v729
      %731 = vmatpush.msra.mxu0 %v730
      %v732 = vand.u32 %v518, 4294901760
      %v733 = vsub.f32 %v518, %v732
      %734 = vmatpush.msra.mxu0 %v733
      %v735 = vand.u32 %v516, 4294901760
      %v736 = vsub.f32 %v516, %v735
      %737 = vmatpush.msra.mxu0 %v736
      %v738 = vand.u32 %v514, 4294901760
      %v739 = vsub.f32 %v514, %v738
      %740 = vmatpush.msra.mxu0 %v739
      %v741 = vand.u32 %v512, 4294901760
      %v742 = vsub.f32 %v512, %v741
      %743 = vmatpush.msra.mxu0 %v742
      %v744 = vand.u32 %v510, 4294901760
      %v745 = vsub.f32 %v510, %v744
      %746 = vmatpush.msra.mxu0 %v745
      %v747 = vand.u32 %v508, 4294901760
      %v748 = vsub.f32 %v508, %v747
      %749 = vmatpush.msra.mxu0 %v748
      %v750 = vand.u32 %v506, 4294901760
      %v751 = vsub.f32 %v506, %v750
      %752 = vmatpush.msra.mxu0 %v751
      %v753 = vand.u32 %v504, 4294901760
      %v754 = vsub.f32 %v504, %v753
      %755 = vmatpush.msra.mxu0 %v754
      %v756 = vand.u32 %v502, 4294901760
      %v757 = vsub.f32 %v502, %v756
      %758 = vmatpush.msra.mxu0 %v757
      %v759 = vand.u32 %v500, 4294901760
      %v760 = vsub.f32 %v500, %v759
      %761 = vmatpush.msra.mxu0 %v760
      %v762 = vand.u32 %v498, 4294901760
      %v763 = vsub.f32 %v498, %v762
      %764 = vmatpush.msra.mxu0 %v763
      %v765 = vand.u32 %v496, 4294901760
      %v766 = vsub.f32 %v496, %v765
      %767 = vmatpush.msra.mxu0 %v766
      %v768 = vand.u32 %v490, 4294901760
      %v769 = vsub.f32 %v490, %v768
      %770 = vmatmul.f32.gmra.mxu0 %v769
      %v771 = vpop.f32.mrf.mxu0
      %v772 = vadd.f32 %v714, %v771
      %v773 = vand.u32 %v491, 4294901760
      %v774 = vsub.f32 %v491, %v773
      %775 = vmatmul.f32.gmra.mxu0 %v774
      %v776 = vpop.f32.mrf.mxu0
      %v777 = vadd.f32 %v718, %v776
      %778 = vdwg.mxu0
      %v779 = vand.u32 %v526, 4294901760
      %780 = vmatpush.msra.mxu0 %v779
      %v781 = vand.u32 %v524, 4294901760
      %782 = vmatpush.msra.mxu0 %v781
      %v783 = vand.u32 %v522, 4294901760
      %784 = vmatpush.msra.mxu0 %v783
      %v785 = vand.u32 %v520, 4294901760
      %786 = vmatpush.msra.mxu0 %v785
      %v787 = vand.u32 %v518, 4294901760
      %788 = vmatpush.msra.mxu0 %v787
      %v789 = vand.u32 %v516, 4294901760
      %790 = vmatpush.msra.mxu0 %v789
      %v791 = vand.u32 %v514, 4294901760
      %792 = vmatpush.msra.mxu0 %v791
      %v793 = vand.u32 %v512, 4294901760
      %794 = vmatpush.msra.mxu0 %v793
      %v795 = vand.u32 %v510, 4294901760
      %796 = vmatpush.msra.mxu0 %v795
      %v797 = vand.u32 %v508, 4294901760
      %798 = vmatpush.msra.mxu0 %v797
      %v799 = vand.u32 %v506, 4294901760
      %800 = vmatpush.msra.mxu0 %v799
      %v801 = vand.u32 %v504, 4294901760
      %802 = vmatpush.msra.mxu0 %v801
      %v803 = vand.u32 %v502, 4294901760
      %804 = vmatpush.msra.mxu0 %v803
      %v805 = vand.u32 %v500, 4294901760
      %806 = vmatpush.msra.mxu0 %v805
      %v807 = vand.u32 %v498, 4294901760
      %808 = vmatpush.msra.mxu0 %v807
      %v809 = vand.u32 %v496, 4294901760
      %810 = vmatpush.msra.mxu0 %v809
      %v811 = vand.u32 %v490, 4294901760
      %v812 = vsub.f32 %v490, %v811
      %v813 = vand.u32 %v812, 4294901760
      %814 = vmatmul.f32.gmra.mxu0 %v813
      %v815 = vpop.f32.mrf.mxu0
      %v816 = vadd.f32 %v772, %v815
      %v817 = vand.u32 %v491, 4294901760
      %v818 = vsub.f32 %v491, %v817
      %v819 = vand.u32 %v818, 4294901760
      %820 = vmatmul.f32.gmra.mxu0 %v819
      %v821 = vpop.f32.mrf.mxu0
      %v822 = vadd.f32 %v777, %v821
      %823 = vdwg.mxu0
      %v824 = vand.u32 %v526, 4294901760
      %v825 = vsub.f32 %v526, %v824
      %v826 = vand.u32 %v825, 4294901760
      %827 = vmatpush.msra.mxu0 %v826
      %v828 = vand.u32 %v524, 4294901760
      %v829 = vsub.f32 %v524, %v828
      %v830 = vand.u32 %v829, 4294901760
      %831 = vmatpush.msra.mxu0 %v830
      %v832 = vand.u32 %v522, 4294901760
      %v833 = vsub.f32 %v522, %v832
      %v834 = vand.u32 %v833, 4294901760
      %835 = vmatpush.msra.mxu0 %v834
      %v836 = vand.u32 %v520, 4294901760
      %v837 = vsub.f32 %v520, %v836
      %v838 = vand.u32 %v837, 4294901760
      %839 = vmatpush.msra.mxu0 %v838
      %v840 = vand.u32 %v518, 4294901760
      %v841 = vsub.f32 %v518, %v840
      %v842 = vand.u32 %v841, 4294901760
      %843 = vmatpush.msra.mxu0 %v842
      %v844 = vand.u32 %v516, 4294901760
      %v845 = vsub.f32 %v516, %v844
      %v846 = vand.u32 %v845, 4294901760
      %847 = vmatpush.msra.mxu0 %v846
      %v848 = vand.u32 %v514, 4294901760
      %v849 = vsub.f32 %v514, %v848
      %v850 = vand.u32 %v849, 4294901760
      %851 = vmatpush.msra.mxu0 %v850
      %v852 = vand.u32 %v512, 4294901760
      %v853 = vsub.f32 %v512, %v852
      %v854 = vand.u32 %v853, 4294901760
      %855 = vmatpush.msra.mxu0 %v854
      %v856 = vand.u32 %v510, 4294901760
      %v857 = vsub.f32 %v510, %v856
      %v858 = vand.u32 %v857, 4294901760
      %859 = vmatpush.msra.mxu0 %v858
      %v860 = vand.u32 %v508, 4294901760
      %v861 = vsub.f32 %v508, %v860
      %v862 = vand.u32 %v861, 4294901760
      %863 = vmatpush.msra.mxu0 %v862
      %v864 = vand.u32 %v506, 4294901760
      %v865 = vsub.f32 %v506, %v864
      %v866 = vand.u32 %v865, 4294901760
      %867 = vmatpush.msra.mxu0 %v866
      %v868 = vand.u32 %v504, 4294901760
      %v869 = vsub.f32 %v504, %v868
      %v870 = vand.u32 %v869, 4294901760
      %871 = vmatpush.msra.mxu0 %v870
      %v872 = vand.u32 %v502, 4294901760
      %v873 = vsub.f32 %v502, %v872
      %v874 = vand.u32 %v873, 4294901760
      %875 = vmatpush.msra.mxu0 %v874
      %v876 = vand.u32 %v500, 4294901760
      %v877 = vsub.f32 %v500, %v876
      %v878 = vand.u32 %v877, 4294901760
      %879 = vmatpush.msra.mxu0 %v878
      %v880 = vand.u32 %v498, 4294901760
      %v881 = vsub.f32 %v498, %v880
      %v882 = vand.u32 %v881, 4294901760
      %883 = vmatpush.msra.mxu0 %v882
      %v884 = vand.u32 %v496, 4294901760
      %v885 = vsub.f32 %v496, %v884
      %v886 = vand.u32 %v885, 4294901760
      %887 = vmatpush.msra.mxu0 %v886
      %v888 = vand.u32 %v490, 4294901760
      %889 = vmatmul.f32.gmra.mxu0 %v888
      %v890 = vpop.f32.mrf.mxu0
      %v891 = vadd.f32 %v816, %v890
      %v892 = vand.u32 %v491, 4294901760
      %893 = vmatmul.f32.gmra.mxu0 %v892
      %v894 = vpop.f32.mrf.mxu0
      %v895 = vadd.f32 %v822, %v894
      %896 = vdwg.mxu0
      %v897 = vand.u32 %v526, 4294901760
      %898 = vmatpush.msra.mxu0 %v897
      %v899 = vand.u32 %v524, 4294901760
      %900 = vmatpush.msra.mxu0 %v899
      %v901 = vand.u32 %v522, 4294901760
      %902 = vmatpush.msra.mxu0 %v901
      %v903 = vand.u32 %v520, 4294901760
      %904 = vmatpush.msra.mxu0 %v903
      %v905 = vand.u32 %v518, 4294901760
      %906 = vmatpush.msra.mxu0 %v905
      %v907 = vand.u32 %v516, 4294901760
      %908 = vmatpush.msra.mxu0 %v907
      %v909 = vand.u32 %v514, 4294901760
      %910 = vmatpush.msra.mxu0 %v909
      %v911 = vand.u32 %v512, 4294901760
      %912 = vmatpush.msra.mxu0 %v911
      %v913 = vand.u32 %v510, 4294901760
      %914 = vmatpush.msra.mxu0 %v913
      %v915 = vand.u32 %v508, 4294901760
      %916 = vmatpush.msra.mxu0 %v915
      %v917 = vand.u32 %v506, 4294901760
      %918 = vmatpush.msra.mxu0 %v917
      %v919 = vand.u32 %v504, 4294901760
      %920 = vmatpush.msra.mxu0 %v919
      %v921 = vand.u32 %v502, 4294901760
      %922 = vmatpush.msra.mxu0 %v921
      %v923 = vand.u32 %v500, 4294901760
      %924 = vmatpush.msra.mxu0 %v923
      %v925 = vand.u32 %v498, 4294901760
      %926 = vmatpush.msra.mxu0 %v925
      %v927 = vand.u32 %v496, 4294901760
      %928 = vmatpush.msra.mxu0 %v927
      %v929 = vand.u32 %v490, 4294901760
      %930 = vmatmul.f32.gmra.mxu0 %v929
      %v931 = vpop.f32.mrf.mxu0
      %v932 = vadd.f32 %v891, %v931
      %v933 = vand.u32 %v491, 4294901760
      %934 = vmatmul.f32.gmra.mxu0 %v933
      %v935 = vpop.f32.mrf.mxu0
      %v936 = vadd.f32 %v895, %v935
      %937 = vdwg.mxu0
      %v938 = vand.u32 %v558, 4294901760
      %939 = vmatpush.msra.mxu0 %v938
      %v940 = vand.u32 %v556, 4294901760
      %941 = vmatpush.msra.mxu0 %v940
      %v942 = vand.u32 %v554, 4294901760
      %943 = vmatpush.msra.mxu0 %v942
      %v944 = vand.u32 %v552, 4294901760
      %945 = vmatpush.msra.mxu0 %v944
      %v946 = vand.u32 %v550, 4294901760
      %947 = vmatpush.msra.mxu0 %v946
      %v948 = vand.u32 %v548, 4294901760
      %949 = vmatpush.msra.mxu0 %v948
      %v950 = vand.u32 %v546, 4294901760
      %951 = vmatpush.msra.mxu0 %v950
      %v952 = vand.u32 %v544, 4294901760
      %953 = vmatpush.msra.mxu0 %v952
      %v954 = vand.u32 %v542, 4294901760
      %955 = vmatpush.msra.mxu0 %v954
      %v956 = vand.u32 %v540, 4294901760
      %957 = vmatpush.msra.mxu0 %v956
      %v958 = vand.u32 %v538, 4294901760
      %959 = vmatpush.msra.mxu0 %v958
      %v960 = vand.u32 %v536, 4294901760
      %961 = vmatpush.msra.mxu0 %v960
      %v962 = vand.u32 %v534, 4294901760
      %963 = vmatpush.msra.mxu0 %v962
      %v964 = vand.u32 %v532, 4294901760
      %965 = vmatpush.msra.mxu0 %v964
      %v966 = vand.u32 %v530, 4294901760
      %967 = vmatpush.msra.mxu0 %v966
      %v968 = vand.u32 %v528, 4294901760
      %969 = vmatpush.msra.mxu0 %v968
      %v970 = vand.u32 %v494, 4294901760
      %v971 = vsub.f32 %v494, %v970
      %v972 = vand.u32 %v971, 4294901760
      %v973 = vsub.f32 %v971, %v972
      %v974 = vand.u32 %v973, 4294901760
      %975 = vmatmul.f32.gmra.mxu0 %v974
      %v976 = vpop.f32.mrf.mxu0
      %v977 = vadd.f32 %v932, %v976
      %v978 = vand.u32 %v495, 4294901760
      %v979 = vsub.f32 %v495, %v978
      %v980 = vand.u32 %v979, 4294901760
      %v981 = vsub.f32 %v979, %v980
      %v982 = vand.u32 %v981, 4294901760
      %983 = vmatmul.f32.gmra.mxu0 %v982
      %v984 = vpop.f32.mrf.mxu0
      %v985 = vadd.f32 %v936, %v984
      %986 = vdwg.mxu0
      %v987 = vand.u32 %v558, 4294901760
      %v988 = vsub.f32 %v558, %v987
      %v989 = vand.u32 %v988, 4294901760
      %v990 = vsub.f32 %v988, %v989
      %v991 = vand.u32 %v990, 4294901760
      %992 = vmatpush.msra.mxu0 %v991
      %v993 = vand.u32 %v556, 4294901760
      %v994 = vsub.f32 %v556, %v993
      %v995 = vand.u32 %v994, 4294901760
      %v996 = vsub.f32 %v994, %v995
      %v997 = vand.u32 %v996, 4294901760
      %998 = vmatpush.msra.mxu0 %v997
      %v999 = vand.u32 %v554, 4294901760
      %v1000 = vsub.f32 %v554, %v999
      %v1001 = vand.u32 %v1000, 4294901760
      %v1002 = vsub.f32 %v1000, %v1001
      %v1003 = vand.u32 %v1002, 4294901760
      %1004 = vmatpush.msra.mxu0 %v1003
      %v1005 = vand.u32 %v552, 4294901760
      %v1006 = vsub.f32 %v552, %v1005
      %v1007 = vand.u32 %v1006, 4294901760
      %v1008 = vsub.f32 %v1006, %v1007
      %v1009 = vand.u32 %v1008, 4294901760
      %1010 = vmatpush.msra.mxu0 %v1009
      %v1011 = vand.u32 %v550, 4294901760
      %v1012 = vsub.f32 %v550, %v1011
      %v1013 = vand.u32 %v1012, 4294901760
      %v1014 = vsub.f32 %v1012, %v1013
      %v1015 = vand.u32 %v1014, 4294901760
      %1016 = vmatpush.msra.mxu0 %v1015
      %v1017 = vand.u32 %v548, 4294901760
      %v1018 = vsub.f32 %v548, %v1017
      %v1019 = vand.u32 %v1018, 4294901760
      %v1020 = vsub.f32 %v1018, %v1019
      %v1021 = vand.u32 %v1020, 4294901760
      %1022 = vmatpush.msra.mxu0 %v1021
      %v1023 = vand.u32 %v546, 4294901760
      %v1024 = vsub.f32 %v546, %v1023
      %v1025 = vand.u32 %v1024, 4294901760
      %v1026 = vsub.f32 %v1024, %v1025
      %v1027 = vand.u32 %v1026, 4294901760
      %1028 = vmatpush.msra.mxu0 %v1027
      %v1029 = vand.u32 %v544, 4294901760
      %v1030 = vsub.f32 %v544, %v1029
      %v1031 = vand.u32 %v1030, 4294901760
      %v1032 = vsub.f32 %v1030, %v1031
      %v1033 = vand.u32 %v1032, 4294901760
      %1034 = vmatpush.msra.mxu0 %v1033
      %v1035 = vand.u32 %v542, 4294901760
      %v1036 = vsub.f32 %v542, %v1035
      %v1037 = vand.u32 %v1036, 4294901760
      %v1038 = vsub.f32 %v1036, %v1037
      %v1039 = vand.u32 %v1038, 4294901760
      %1040 = vmatpush.msra.mxu0 %v1039
      %v1041 = vand.u32 %v540, 4294901760
      %v1042 = vsub.f32 %v540, %v1041
      %v1043 = vand.u32 %v1042, 4294901760
      %v1044 = vsub.f32 %v1042, %v1043
      %v1045 = vand.u32 %v1044, 4294901760
      %1046 = vmatpush.msra.mxu0 %v1045
      %v1047 = vand.u32 %v538, 4294901760
      %v1048 = vsub.f32 %v538, %v1047
      %v1049 = vand.u32 %v1048, 4294901760
      %v1050 = vsub.f32 %v1048, %v1049
      %v1051 = vand.u32 %v1050, 4294901760
      %1052 = vmatpush.msra.mxu0 %v1051
      %v1053 = vand.u32 %v536, 4294901760
      %v1054 = vsub.f32 %v536, %v1053
      %v1055 = vand.u32 %v1054, 4294901760
      %v1056 = vsub.f32 %v1054, %v1055
      %v1057 = vand.u32 %v1056, 4294901760
      %1058 = vmatpush.msra.mxu0 %v1057
      %v1059 = vand.u32 %v534, 4294901760
      %v1060 = vsub.f32 %v534, %v1059
      %v1061 = vand.u32 %v1060, 4294901760
      %v1062 = vsub.f32 %v1060, %v1061
      %v1063 = vand.u32 %v1062, 4294901760
      %1064 = vmatpush.msra.mxu0 %v1063
      %v1065 = vand.u32 %v532, 4294901760
      %v1066 = vsub.f32 %v532, %v1065
      %v1067 = vand.u32 %v1066, 4294901760
      %v1068 = vsub.f32 %v1066, %v1067
      %v1069 = vand.u32 %v1068, 4294901760
      %1070 = vmatpush.msra.mxu0 %v1069
      %v1071 = vand.u32 %v530, 4294901760
      %v1072 = vsub.f32 %v530, %v1071
      %v1073 = vand.u32 %v1072, 4294901760
      %v1074 = vsub.f32 %v1072, %v1073
      %v1075 = vand.u32 %v1074, 4294901760
      %1076 = vmatpush.msra.mxu0 %v1075
      %v1077 = vand.u32 %v528, 4294901760
      %v1078 = vsub.f32 %v528, %v1077
      %v1079 = vand.u32 %v1078, 4294901760
      %v1080 = vsub.f32 %v1078, %v1079
      %v1081 = vand.u32 %v1080, 4294901760
      %1082 = vmatpush.msra.mxu0 %v1081
      %v1083 = vand.u32 %v494, 4294901760
      %1084 = vmatmul.f32.gmra.mxu0 %v1083
      %v1085 = vpop.f32.mrf.mxu0
      %v1086 = vadd.f32 %v977, %v1085
      %v1087 = vand.u32 %v495, 4294901760
      %1088 = vmatmul.f32.gmra.mxu0 %v1087
      %v1089 = vpop.f32.mrf.mxu0
      %v1090 = vadd.f32 %v985, %v1089
      %1091 = vdwg.mxu0
      %v1092 = vand.u32 %v558, 4294901760
      %v1093 = vsub.f32 %v558, %v1092
      %1094 = vmatpush.msra.mxu0 %v1093
      %v1095 = vand.u32 %v556, 4294901760
      %v1096 = vsub.f32 %v556, %v1095
      %1097 = vmatpush.msra.mxu0 %v1096
      %v1098 = vand.u32 %v554, 4294901760
      %v1099 = vsub.f32 %v554, %v1098
      %1100 = vmatpush.msra.mxu0 %v1099
      %v1101 = vand.u32 %v552, 4294901760
      %v1102 = vsub.f32 %v552, %v1101
      %1103 = vmatpush.msra.mxu0 %v1102
      %v1104 = vand.u32 %v550, 4294901760
      %v1105 = vsub.f32 %v550, %v1104
      %1106 = vmatpush.msra.mxu0 %v1105
      %v1107 = vand.u32 %v548, 4294901760
      %v1108 = vsub.f32 %v548, %v1107
      %1109 = vmatpush.msra.mxu0 %v1108
      %v1110 = vand.u32 %v546, 4294901760
      %v1111 = vsub.f32 %v546, %v1110
      %1112 = vmatpush.msra.mxu0 %v1111
      %v1113 = vand.u32 %v544, 4294901760
      %v1114 = vsub.f32 %v544, %v1113
      %1115 = vmatpush.msra.mxu0 %v1114
      %v1116 = vand.u32 %v542, 4294901760
      %v1117 = vsub.f32 %v542, %v1116
      %1118 = vmatpush.msra.mxu0 %v1117
      %v1119 = vand.u32 %v540, 4294901760
      %v1120 = vsub.f32 %v540, %v1119
      %1121 = vmatpush.msra.mxu0 %v1120
      %v1122 = vand.u32 %v538, 4294901760
      %v1123 = vsub.f32 %v538, %v1122
      %1124 = vmatpush.msra.mxu0 %v1123
      %v1125 = vand.u32 %v536, 4294901760
      %v1126 = vsub.f32 %v536, %v1125
      %1127 = vmatpush.msra.mxu0 %v1126
      %v1128 = vand.u32 %v534, 4294901760
      %v1129 = vsub.f32 %v534, %v1128
      %1130 = vmatpush.msra.mxu0 %v1129
      %v1131 = vand.u32 %v532, 4294901760
      %v1132 = vsub.f32 %v532, %v1131
      %1133 = vmatpush.msra.mxu0 %v1132
      %v1134 = vand.u32 %v530, 4294901760
      %v1135 = vsub.f32 %v530, %v1134
      %1136 = vmatpush.msra.mxu0 %v1135
      %v1137 = vand.u32 %v528, 4294901760
      %v1138 = vsub.f32 %v528, %v1137
      %1139 = vmatpush.msra.mxu0 %v1138
      %v1140 = vand.u32 %v494, 4294901760
      %v1141 = vsub.f32 %v494, %v1140
      %1142 = vmatmul.f32.gmra.mxu0 %v1141
      %v1143 = vpop.f32.mrf.mxu0
      %v1144 = vadd.f32 %v1086, %v1143
      %v1145 = vand.u32 %v495, 4294901760
      %v1146 = vsub.f32 %v495, %v1145
      %1147 = vmatmul.f32.gmra.mxu0 %v1146
      %v1148 = vpop.f32.mrf.mxu0
      %v1149 = vadd.f32 %v1090, %v1148
      %1150 = vdwg.mxu0
      %v1151 = vand.u32 %v558, 4294901760
      %1152 = vmatpush.msra.mxu0 %v1151
      %v1153 = vand.u32 %v556, 4294901760
      %1154 = vmatpush.msra.mxu0 %v1153
      %v1155 = vand.u32 %v554, 4294901760
      %1156 = vmatpush.msra.mxu0 %v1155
      %v1157 = vand.u32 %v552, 4294901760
      %1158 = vmatpush.msra.mxu0 %v1157
      %v1159 = vand.u32 %v550, 4294901760
      %1160 = vmatpush.msra.mxu0 %v1159
      %v1161 = vand.u32 %v548, 4294901760
      %1162 = vmatpush.msra.mxu0 %v1161
      %v1163 = vand.u32 %v546, 4294901760
      %1164 = vmatpush.msra.mxu0 %v1163
      %v1165 = vand.u32 %v544, 4294901760
      %1166 = vmatpush.msra.mxu0 %v1165
      %v1167 = vand.u32 %v542, 4294901760
      %1168 = vmatpush.msra.mxu0 %v1167
      %v1169 = vand.u32 %v540, 4294901760
      %1170 = vmatpush.msra.mxu0 %v1169
      %v1171 = vand.u32 %v538, 4294901760
      %1172 = vmatpush.msra.mxu0 %v1171
      %v1173 = vand.u32 %v536, 4294901760
      %1174 = vmatpush.msra.mxu0 %v1173
      %v1175 = vand.u32 %v534, 4294901760
      %1176 = vmatpush.msra.mxu0 %v1175
      %v1177 = vand.u32 %v532, 4294901760
      %1178 = vmatpush.msra.mxu0 %v1177
      %v1179 = vand.u32 %v530, 4294901760
      %1180 = vmatpush.msra.mxu0 %v1179
      %v1181 = vand.u32 %v528, 4294901760
      %1182 = vmatpush.msra.mxu0 %v1181
      %v1183 = vand.u32 %v494, 4294901760
      %v1184 = vsub.f32 %v494, %v1183
      %v1185 = vand.u32 %v1184, 4294901760
      %1186 = vmatmul.f32.gmra.mxu0 %v1185
      %v1187 = vpop.f32.mrf.mxu0
      %v1188 = vadd.f32 %v1144, %v1187
      %v1189 = vand.u32 %v495, 4294901760
      %v1190 = vsub.f32 %v495, %v1189
      %v1191 = vand.u32 %v1190, 4294901760
      %1192 = vmatmul.f32.gmra.mxu0 %v1191
      %v1193 = vpop.f32.mrf.mxu0
      %v1194 = vadd.f32 %v1149, %v1193
      %1195 = vdwg.mxu0
      %v1196 = vand.u32 %v558, 4294901760
      %v1197 = vsub.f32 %v558, %v1196
      %v1198 = vand.u32 %v1197, 4294901760
      %1199 = vmatpush.msra.mxu0 %v1198
      %v1200 = vand.u32 %v556, 4294901760
      %v1201 = vsub.f32 %v556, %v1200
      %v1202 = vand.u32 %v1201, 4294901760
      %1203 = vmatpush.msra.mxu0 %v1202
      %v1204 = vand.u32 %v554, 4294901760
      %v1205 = vsub.f32 %v554, %v1204
      %v1206 = vand.u32 %v1205, 4294901760
      %1207 = vmatpush.msra.mxu0 %v1206
      %v1208 = vand.u32 %v552, 4294901760
      %v1209 = vsub.f32 %v552, %v1208
      %v1210 = vand.u32 %v1209, 4294901760
      %1211 = vmatpush.msra.mxu0 %v1210
      %v1212 = vand.u32 %v550, 4294901760
      %v1213 = vsub.f32 %v550, %v1212
      %v1214 = vand.u32 %v1213, 4294901760
      %1215 = vmatpush.msra.mxu0 %v1214
      %v1216 = vand.u32 %v548, 4294901760
      %v1217 = vsub.f32 %v548, %v1216
      %v1218 = vand.u32 %v1217, 4294901760
      %1219 = vmatpush.msra.mxu0 %v1218
      %v1220 = vand.u32 %v546, 4294901760
      %v1221 = vsub.f32 %v546, %v1220
      %v1222 = vand.u32 %v1221, 4294901760
      %1223 = vmatpush.msra.mxu0 %v1222
      %v1224 = vand.u32 %v544, 4294901760
      %v1225 = vsub.f32 %v544, %v1224
      %v1226 = vand.u32 %v1225, 4294901760
      %1227 = vmatpush.msra.mxu0 %v1226
      %v1228 = vand.u32 %v542, 4294901760
      %v1229 = vsub.f32 %v542, %v1228
      %v1230 = vand.u32 %v1229, 4294901760
      %1231 = vmatpush.msra.mxu0 %v1230
      %v1232 = vand.u32 %v540, 4294901760
      %v1233 = vsub.f32 %v540, %v1232
      %v1234 = vand.u32 %v1233, 4294901760
      %1235 = vmatpush.msra.mxu0 %v1234
      %v1236 = vand.u32 %v538, 4294901760
      %v1237 = vsub.f32 %v538, %v1236
      %v1238 = vand.u32 %v1237, 4294901760
      %1239 = vmatpush.msra.mxu0 %v1238
      %v1240 = vand.u32 %v536, 4294901760
      %v1241 = vsub.f32 %v536, %v1240
      %v1242 = vand.u32 %v1241, 4294901760
      %1243 = vmatpush.msra.mxu0 %v1242
      %v1244 = vand.u32 %v534, 4294901760
      %v1245 = vsub.f32 %v534, %v1244
      %v1246 = vand.u32 %v1245, 4294901760
      %1247 = vmatpush.msra.mxu0 %v1246
      %v1248 = vand.u32 %v532, 4294901760
      %v1249 = vsub.f32 %v532, %v1248
      %v1250 = vand.u32 %v1249, 4294901760
      %1251 = vmatpush.msra.mxu0 %v1250
      %v1252 = vand.u32 %v530, 4294901760
      %v1253 = vsub.f32 %v530, %v1252
      %v1254 = vand.u32 %v1253, 4294901760
      %1255 = vmatpush.msra.mxu0 %v1254
      %v1256 = vand.u32 %v528, 4294901760
      %v1257 = vsub.f32 %v528, %v1256
      %v1258 = vand.u32 %v1257, 4294901760
      %1259 = vmatpush.msra.mxu0 %v1258
      %v1260 = vand.u32 %v494, 4294901760
      %1261 = vmatmul.f32.gmra.mxu0 %v1260
      %v1262 = vpop.f32.mrf.mxu0
      %v1263 = vadd.f32 %v1188, %v1262
      %v1264 = vand.u32 %v495, 4294901760
      %1265 = vmatmul.f32.gmra.mxu0 %v1264
      %v1266 = vpop.f32.mrf.mxu0
      %v1267 = vadd.f32 %v1194, %v1266
      %1268 = vdwg.mxu0
      %v1269 = vand.u32 %v558, 4294901760
      %1270 = vmatpush.msra.mxu0 %v1269
      %v1271 = vand.u32 %v556, 4294901760
      %1272 = vmatpush.msra.mxu0 %v1271
      %v1273 = vand.u32 %v554, 4294901760
      %1274 = vmatpush.msra.mxu0 %v1273
      %v1275 = vand.u32 %v552, 4294901760
      %1276 = vmatpush.msra.mxu0 %v1275
      %v1277 = vand.u32 %v550, 4294901760
      %1278 = vmatpush.msra.mxu0 %v1277
      %v1279 = vand.u32 %v548, 4294901760
      %1280 = vmatpush.msra.mxu0 %v1279
      %v1281 = vand.u32 %v546, 4294901760
      %1282 = vmatpush.msra.mxu0 %v1281
      %v1283 = vand.u32 %v544, 4294901760
      %1284 = vmatpush.msra.mxu0 %v1283
      %v1285 = vand.u32 %v542, 4294901760
      %1286 = vmatpush.msra.mxu0 %v1285
      %v1287 = vand.u32 %v540, 4294901760
      %1288 = vmatpush.msra.mxu0 %v1287
      %v1289 = vand.u32 %v538, 4294901760
      %1290 = vmatpush.msra.mxu0 %v1289
      %v1291 = vand.u32 %v536, 4294901760
      %1292 = vmatpush.msra.mxu0 %v1291
      %v1293 = vand.u32 %v534, 4294901760
      %1294 = vmatpush.msra.mxu0 %v1293
      %v1295 = vand.u32 %v532, 4294901760
      %1296 = vmatpush.msra.mxu0 %v1295
      %v1297 = vand.u32 %v530, 4294901760
      %1298 = vmatpush.msra.mxu0 %v1297
      %v1299 = vand.u32 %v528, 4294901760
      %1300 = vmatpush.msra.mxu0 %v1299
      %v1301 = vand.u32 %v494, 4294901760
      %1302 = vmatmul.f32.gmra.mxu0 %v1301
      %v1303 = vpop.f32.mrf.mxu0
      %v1304 = vadd.f32 %v1263, %v1303
      %v1305 = vand.u32 %v495, 4294901760
      %1306 = vmatmul.f32.gmra.mxu0 %v1305
      %v1307 = vpop.f32.mrf.mxu0
      %v1308 = vadd.f32 %v1267, %v1307
      %1309 = vdwg.mxu0
      %v1310 = vand.u32 %v527, 4294901760
      %1311 = vmatpush.msra.mxu0 %v1310
      %v1312 = vand.u32 %v525, 4294901760
      %1313 = vmatpush.msra.mxu0 %v1312
      %v1314 = vand.u32 %v523, 4294901760
      %1315 = vmatpush.msra.mxu0 %v1314
      %v1316 = vand.u32 %v521, 4294901760
      %1317 = vmatpush.msra.mxu0 %v1316
      %v1318 = vand.u32 %v519, 4294901760
      %1319 = vmatpush.msra.mxu0 %v1318
      %v1320 = vand.u32 %v517, 4294901760
      %1321 = vmatpush.msra.mxu0 %v1320
      %v1322 = vand.u32 %v515, 4294901760
      %1323 = vmatpush.msra.mxu0 %v1322
      %v1324 = vand.u32 %v513, 4294901760
      %1325 = vmatpush.msra.mxu0 %v1324
      %v1326 = vand.u32 %v511, 4294901760
      %1327 = vmatpush.msra.mxu0 %v1326
      %v1328 = vand.u32 %v509, 4294901760
      %1329 = vmatpush.msra.mxu0 %v1328
      %v1330 = vand.u32 %v507, 4294901760
      %1331 = vmatpush.msra.mxu0 %v1330
      %v1332 = vand.u32 %v505, 4294901760
      %1333 = vmatpush.msra.mxu0 %v1332
      %v1334 = vand.u32 %v503, 4294901760
      %1335 = vmatpush.msra.mxu0 %v1334
      %v1336 = vand.u32 %v501, 4294901760
      %1337 = vmatpush.msra.mxu0 %v1336
      %v1338 = vand.u32 %v499, 4294901760
      %1339 = vmatpush.msra.mxu0 %v1338
      %v1340 = vand.u32 %v497, 4294901760
      %1341 = vmatpush.msra.mxu0 %v1340
      %v1342 = vand.u32 %v490, 4294901760
      %v1343 = vsub.f32 %v490, %v1342
      %v1344 = vand.u32 %v1343, 4294901760
      %v1345 = vsub.f32 %v1343, %v1344
      %v1346 = vand.u32 %v1345, 4294901760
      %1347 = vmatmul.f32.gmra.mxu0 %v1346
      %v1348 = vpop.f32.mrf.mxu0
      %v1349 = vadd.f32 %v563, %v1348
      %v1350 = vand.u32 %v491, 4294901760
      %v1351 = vsub.f32 %v491, %v1350
      %v1352 = vand.u32 %v1351, 4294901760
      %v1353 = vsub.f32 %v1351, %v1352
      %v1354 = vand.u32 %v1353, 4294901760
      %1355 = vmatmul.f32.gmra.mxu0 %v1354
      %v1356 = vpop.f32.mrf.mxu0
      %v1357 = vadd.f32 %v563, %v1356
      %1358 = vdwg.mxu0
      %v1359 = vand.u32 %v527, 4294901760
      %v1360 = vsub.f32 %v527, %v1359
      %v1361 = vand.u32 %v1360, 4294901760
      %v1362 = vsub.f32 %v1360, %v1361
      %v1363 = vand.u32 %v1362, 4294901760
      %1364 = vmatpush.msra.mxu0 %v1363
      %v1365 = vand.u32 %v525, 4294901760
      %v1366 = vsub.f32 %v525, %v1365
      %v1367 = vand.u32 %v1366, 4294901760
      %v1368 = vsub.f32 %v1366, %v1367
      %v1369 = vand.u32 %v1368, 4294901760
      %1370 = vmatpush.msra.mxu0 %v1369
      %v1371 = vand.u32 %v523, 4294901760
      %v1372 = vsub.f32 %v523, %v1371
      %v1373 = vand.u32 %v1372, 4294901760
      %v1374 = vsub.f32 %v1372, %v1373
      %v1375 = vand.u32 %v1374, 4294901760
      %1376 = vmatpush.msra.mxu0 %v1375
      %v1377 = vand.u32 %v521, 4294901760
      %v1378 = vsub.f32 %v521, %v1377
      %v1379 = vand.u32 %v1378, 4294901760
      %v1380 = vsub.f32 %v1378, %v1379
      %v1381 = vand.u32 %v1380, 4294901760
      %1382 = vmatpush.msra.mxu0 %v1381
      %v1383 = vand.u32 %v519, 4294901760
      %v1384 = vsub.f32 %v519, %v1383
      %v1385 = vand.u32 %v1384, 4294901760
      %v1386 = vsub.f32 %v1384, %v1385
      %v1387 = vand.u32 %v1386, 4294901760
      %1388 = vmatpush.msra.mxu0 %v1387
      %v1389 = vand.u32 %v517, 4294901760
      %v1390 = vsub.f32 %v517, %v1389
      %v1391 = vand.u32 %v1390, 4294901760
      %v1392 = vsub.f32 %v1390, %v1391
      %v1393 = vand.u32 %v1392, 4294901760
      %1394 = vmatpush.msra.mxu0 %v1393
      %v1395 = vand.u32 %v515, 4294901760
      %v1396 = vsub.f32 %v515, %v1395
      %v1397 = vand.u32 %v1396, 4294901760
      %v1398 = vsub.f32 %v1396, %v1397
      %v1399 = vand.u32 %v1398, 4294901760
      %1400 = vmatpush.msra.mxu0 %v1399
      %v1401 = vand.u32 %v513, 4294901760
      %v1402 = vsub.f32 %v513, %v1401
      %v1403 = vand.u32 %v1402, 4294901760
      %v1404 = vsub.f32 %v1402, %v1403
      %v1405 = vand.u32 %v1404, 4294901760
      %1406 = vmatpush.msra.mxu0 %v1405
      %v1407 = vand.u32 %v511, 4294901760
      %v1408 = vsub.f32 %v511, %v1407
      %v1409 = vand.u32 %v1408, 4294901760
      %v1410 = vsub.f32 %v1408, %v1409
      %v1411 = vand.u32 %v1410, 4294901760
      %1412 = vmatpush.msra.mxu0 %v1411
      %v1413 = vand.u32 %v509, 4294901760
      %v1414 = vsub.f32 %v509, %v1413
      %v1415 = vand.u32 %v1414, 4294901760
      %v1416 = vsub.f32 %v1414, %v1415
      %v1417 = vand.u32 %v1416, 4294901760
      %1418 = vmatpush.msra.mxu0 %v1417
      %v1419 = vand.u32 %v507, 4294901760
      %v1420 = vsub.f32 %v507, %v1419
      %v1421 = vand.u32 %v1420, 4294901760
      %v1422 = vsub.f32 %v1420, %v1421
      %v1423 = vand.u32 %v1422, 4294901760
      %1424 = vmatpush.msra.mxu0 %v1423
      %v1425 = vand.u32 %v505, 4294901760
      %v1426 = vsub.f32 %v505, %v1425
      %v1427 = vand.u32 %v1426, 4294901760
      %v1428 = vsub.f32 %v1426, %v1427
      %v1429 = vand.u32 %v1428, 4294901760
      %1430 = vmatpush.msra.mxu0 %v1429
      %v1431 = vand.u32 %v503, 4294901760
      %v1432 = vsub.f32 %v503, %v1431
      %v1433 = vand.u32 %v1432, 4294901760
      %v1434 = vsub.f32 %v1432, %v1433
      %v1435 = vand.u32 %v1434, 4294901760
      %1436 = vmatpush.msra.mxu0 %v1435
      %v1437 = vand.u32 %v501, 4294901760
      %v1438 = vsub.f32 %v501, %v1437
      %v1439 = vand.u32 %v1438, 4294901760
      %v1440 = vsub.f32 %v1438, %v1439
      %v1441 = vand.u32 %v1440, 4294901760
      %1442 = vmatpush.msra.mxu0 %v1441
      %v1443 = vand.u32 %v499, 4294901760
      %v1444 = vsub.f32 %v499, %v1443
      %v1445 = vand.u32 %v1444, 4294901760
      %v1446 = vsub.f32 %v1444, %v1445
      %v1447 = vand.u32 %v1446, 4294901760
      %1448 = vmatpush.msra.mxu0 %v1447
      %v1449 = vand.u32 %v497, 4294901760
      %v1450 = vsub.f32 %v497, %v1449
      %v1451 = vand.u32 %v1450, 4294901760
      %v1452 = vsub.f32 %v1450, %v1451
      %v1453 = vand.u32 %v1452, 4294901760
      %1454 = vmatpush.msra.mxu0 %v1453
      %v1455 = vand.u32 %v490, 4294901760
      %1456 = vmatmul.f32.gmra.mxu0 %v1455
      %v1457 = vpop.f32.mrf.mxu0
      %v1458 = vadd.f32 %v1349, %v1457
      %v1459 = vand.u32 %v491, 4294901760
      %1460 = vmatmul.f32.gmra.mxu0 %v1459
      %v1461 = vpop.f32.mrf.mxu0
      %v1462 = vadd.f32 %v1357, %v1461
      %1463 = vdwg.mxu0
      %v1464 = vand.u32 %v527, 4294901760
      %v1465 = vsub.f32 %v527, %v1464
      %1466 = vmatpush.msra.mxu0 %v1465
      %v1467 = vand.u32 %v525, 4294901760
      %v1468 = vsub.f32 %v525, %v1467
      %1469 = vmatpush.msra.mxu0 %v1468
      %v1470 = vand.u32 %v523, 4294901760
      %v1471 = vsub.f32 %v523, %v1470
      %1472 = vmatpush.msra.mxu0 %v1471
      %v1473 = vand.u32 %v521, 4294901760
      %v1474 = vsub.f32 %v521, %v1473
      %1475 = vmatpush.msra.mxu0 %v1474
      %v1476 = vand.u32 %v519, 4294901760
      %v1477 = vsub.f32 %v519, %v1476
      %1478 = vmatpush.msra.mxu0 %v1477
      %v1479 = vand.u32 %v517, 4294901760
      %v1480 = vsub.f32 %v517, %v1479
      %1481 = vmatpush.msra.mxu0 %v1480
      %v1482 = vand.u32 %v515, 4294901760
      %v1483 = vsub.f32 %v515, %v1482
      %1484 = vmatpush.msra.mxu0 %v1483
      %v1485 = vand.u32 %v513, 4294901760
      %v1486 = vsub.f32 %v513, %v1485
      %1487 = vmatpush.msra.mxu0 %v1486
      %v1488 = vand.u32 %v511, 4294901760
      %v1489 = vsub.f32 %v511, %v1488
      %1490 = vmatpush.msra.mxu0 %v1489
      %v1491 = vand.u32 %v509, 4294901760
      %v1492 = vsub.f32 %v509, %v1491
      %1493 = vmatpush.msra.mxu0 %v1492
      %v1494 = vand.u32 %v507, 4294901760
      %v1495 = vsub.f32 %v507, %v1494
      %1496 = vmatpush.msra.mxu0 %v1495
      %v1497 = vand.u32 %v505, 4294901760
      %v1498 = vsub.f32 %v505, %v1497
      %1499 = vmatpush.msra.mxu0 %v1498
      %v1500 = vand.u32 %v503, 4294901760
      %v1501 = vsub.f32 %v503, %v1500
      %1502 = vmatpush.msra.mxu0 %v1501
      %v1503 = vand.u32 %v501, 4294901760
      %v1504 = vsub.f32 %v501, %v1503
      %1505 = vmatpush.msra.mxu0 %v1504
      %v1506 = vand.u32 %v499, 4294901760
      %v1507 = vsub.f32 %v499, %v1506
      %1508 = vmatpush.msra.mxu0 %v1507
      %v1509 = vand.u32 %v497, 4294901760
      %v1510 = vsub.f32 %v497, %v1509
      %1511 = vmatpush.msra.mxu0 %v1510
      %v1512 = vand.u32 %v490, 4294901760
      %v1513 = vsub.f32 %v490, %v1512
      %1514 = vmatmul.f32.gmra.mxu0 %v1513
      %v1515 = vpop.f32.mrf.mxu0
      %v1516 = vadd.f32 %v1458, %v1515
      %v1517 = vand.u32 %v491, 4294901760
      %v1518 = vsub.f32 %v491, %v1517
      %1519 = vmatmul.f32.gmra.mxu0 %v1518
      %v1520 = vpop.f32.mrf.mxu0
      %v1521 = vadd.f32 %v1462, %v1520
      %1522 = vdwg.mxu0
      %v1523 = vand.u32 %v527, 4294901760
      %1524 = vmatpush.msra.mxu0 %v1523
      %v1525 = vand.u32 %v525, 4294901760
      %1526 = vmatpush.msra.mxu0 %v1525
      %v1527 = vand.u32 %v523, 4294901760
      %1528 = vmatpush.msra.mxu0 %v1527
      %v1529 = vand.u32 %v521, 4294901760
      %1530 = vmatpush.msra.mxu0 %v1529
      %v1531 = vand.u32 %v519, 4294901760
      %1532 = vmatpush.msra.mxu0 %v1531
      %v1533 = vand.u32 %v517, 4294901760
      %1534 = vmatpush.msra.mxu0 %v1533
      %v1535 = vand.u32 %v515, 4294901760
      %1536 = vmatpush.msra.mxu0 %v1535
      %v1537 = vand.u32 %v513, 4294901760
      %1538 = vmatpush.msra.mxu0 %v1537
      %v1539 = vand.u32 %v511, 4294901760
      %1540 = vmatpush.msra.mxu0 %v1539
      %v1541 = vand.u32 %v509, 4294901760
      %1542 = vmatpush.msra.mxu0 %v1541
      %v1543 = vand.u32 %v507, 4294901760
      %1544 = vmatpush.msra.mxu0 %v1543
      %v1545 = vand.u32 %v505, 4294901760
      %1546 = vmatpush.msra.mxu0 %v1545
      %v1547 = vand.u32 %v503, 4294901760
      %1548 = vmatpush.msra.mxu0 %v1547
      %v1549 = vand.u32 %v501, 4294901760
      %1550 = vmatpush.msra.mxu0 %v1549
      %v1551 = vand.u32 %v499, 4294901760
      %1552 = vmatpush.msra.mxu0 %v1551
      %v1553 = vand.u32 %v497, 4294901760
      %1554 = vmatpush.msra.mxu0 %v1553
      %v1555 = vand.u32 %v490, 4294901760
      %v1556 = vsub.f32 %v490, %v1555
      %v1557 = vand.u32 %v1556, 4294901760
      %1558 = vmatmul.f32.gmra.mxu0 %v1557
      %v1559 = vpop.f32.mrf.mxu0
      %v1560 = vadd.f32 %v1516, %v1559
      %v1561 = vand.u32 %v491, 4294901760
      %v1562 = vsub.f32 %v491, %v1561
      %v1563 = vand.u32 %v1562, 4294901760
      %1564 = vmatmul.f32.gmra.mxu0 %v1563
      %v1565 = vpop.f32.mrf.mxu0
      %v1566 = vadd.f32 %v1521, %v1565
      %1567 = vdwg.mxu0
      %v1568 = vand.u32 %v527, 4294901760
      %v1569 = vsub.f32 %v527, %v1568
      %v1570 = vand.u32 %v1569, 4294901760
      %1571 = vmatpush.msra.mxu0 %v1570
      %v1572 = vand.u32 %v525, 4294901760
      %v1573 = vsub.f32 %v525, %v1572
      %v1574 = vand.u32 %v1573, 4294901760
      %1575 = vmatpush.msra.mxu0 %v1574
      %v1576 = vand.u32 %v523, 4294901760
      %v1577 = vsub.f32 %v523, %v1576
      %v1578 = vand.u32 %v1577, 4294901760
      %1579 = vmatpush.msra.mxu0 %v1578
      %v1580 = vand.u32 %v521, 4294901760
      %v1581 = vsub.f32 %v521, %v1580
      %v1582 = vand.u32 %v1581, 4294901760
      %1583 = vmatpush.msra.mxu0 %v1582
      %v1584 = vand.u32 %v519, 4294901760
      %v1585 = vsub.f32 %v519, %v1584
      %v1586 = vand.u32 %v1585, 4294901760
      %1587 = vmatpush.msra.mxu0 %v1586
      %v1588 = vand.u32 %v517, 4294901760
      %v1589 = vsub.f32 %v517, %v1588
      %v1590 = vand.u32 %v1589, 4294901760
      %1591 = vmatpush.msra.mxu0 %v1590
      %v1592 = vand.u32 %v515, 4294901760
      %v1593 = vsub.f32 %v515, %v1592
      %v1594 = vand.u32 %v1593, 4294901760
      %1595 = vmatpush.msra.mxu0 %v1594
      %v1596 = vand.u32 %v513, 4294901760
      %v1597 = vsub.f32 %v513, %v1596
      %v1598 = vand.u32 %v1597, 4294901760
      %1599 = vmatpush.msra.mxu0 %v1598
      %v1600 = vand.u32 %v511, 4294901760
      %v1601 = vsub.f32 %v511, %v1600
      %v1602 = vand.u32 %v1601, 4294901760
      %1603 = vmatpush.msra.mxu0 %v1602
      %v1604 = vand.u32 %v509, 4294901760
      %v1605 = vsub.f32 %v509, %v1604
      %v1606 = vand.u32 %v1605, 4294901760
      %1607 = vmatpush.msra.mxu0 %v1606
      %v1608 = vand.u32 %v507, 4294901760
      %v1609 = vsub.f32 %v507, %v1608
      %v1610 = vand.u32 %v1609, 4294901760
      %1611 = vmatpush.msra.mxu0 %v1610
      %v1612 = vand.u32 %v505, 4294901760
      %v1613 = vsub.f32 %v505, %v1612
      %v1614 = vand.u32 %v1613, 4294901760
      %1615 = vmatpush.msra.mxu0 %v1614
      %v1616 = vand.u32 %v503, 4294901760
      %v1617 = vsub.f32 %v503, %v1616
      %v1618 = vand.u32 %v1617, 4294901760
      %1619 = vmatpush.msra.mxu0 %v1618
      %v1620 = vand.u32 %v501, 4294901760
      %v1621 = vsub.f32 %v501, %v1620
      %v1622 = vand.u32 %v1621, 4294901760
      %1623 = vmatpush.msra.mxu0 %v1622
      %v1624 = vand.u32 %v499, 4294901760
      %v1625 = vsub.f32 %v499, %v1624
      %v1626 = vand.u32 %v1625, 4294901760
      %1627 = vmatpush.msra.mxu0 %v1626
      %v1628 = vand.u32 %v497, 4294901760
      %v1629 = vsub.f32 %v497, %v1628
      %v1630 = vand.u32 %v1629, 4294901760
      %1631 = vmatpush.msra.mxu0 %v1630
      %v1632 = vand.u32 %v490, 4294901760
      %1633 = vmatmul.f32.gmra.mxu0 %v1632
      %v1634 = vpop.f32.mrf.mxu0
      %v1635 = vadd.f32 %v1560, %v1634
      %v1636 = vand.u32 %v491, 4294901760
      %1637 = vmatmul.f32.gmra.mxu0 %v1636
      %v1638 = vpop.f32.mrf.mxu0
      %v1639 = vadd.f32 %v1566, %v1638
      %1640 = vdwg.mxu0
      %v1641 = vand.u32 %v527, 4294901760
      %1642 = vmatpush.msra.mxu0 %v1641
      %v1643 = vand.u32 %v525, 4294901760
      %1644 = vmatpush.msra.mxu0 %v1643
      %v1645 = vand.u32 %v523, 4294901760
      %1646 = vmatpush.msra.mxu0 %v1645
      %v1647 = vand.u32 %v521, 4294901760
      %1648 = vmatpush.msra.mxu0 %v1647
      %v1649 = vand.u32 %v519, 4294901760
      %1650 = vmatpush.msra.mxu0 %v1649
      %v1651 = vand.u32 %v517, 4294901760
      %1652 = vmatpush.msra.mxu0 %v1651
      %v1653 = vand.u32 %v515, 4294901760
      %1654 = vmatpush.msra.mxu0 %v1653
      %v1655 = vand.u32 %v513, 4294901760
      %1656 = vmatpush.msra.mxu0 %v1655
      %v1657 = vand.u32 %v511, 4294901760
      %1658 = vmatpush.msra.mxu0 %v1657
      %v1659 = vand.u32 %v509, 4294901760
      %1660 = vmatpush.msra.mxu0 %v1659
      %v1661 = vand.u32 %v507, 4294901760
      %1662 = vmatpush.msra.mxu0 %v1661
      %v1663 = vand.u32 %v505, 4294901760
      %1664 = vmatpush.msra.mxu0 %v1663
      %v1665 = vand.u32 %v503, 4294901760
      %1666 = vmatpush.msra.mxu0 %v1665
      %v1667 = vand.u32 %v501, 4294901760
      %1668 = vmatpush.msra.mxu0 %v1667
      %v1669 = vand.u32 %v499, 4294901760
      %1670 = vmatpush.msra.mxu0 %v1669
      %v1671 = vand.u32 %v497, 4294901760
      %1672 = vmatpush.msra.mxu0 %v1671
      %v1673 = vand.u32 %v490, 4294901760
      %1674 = vmatmul.f32.gmra.mxu0 %v1673
      %v1675 = vpop.f32.mrf.mxu0
      %v1676 = vadd.f32 %v1635, %v1675
      %v1677 = vand.u32 %v491, 4294901760
      %1678 = vmatmul.f32.gmra.mxu0 %v1677
      %v1679 = vpop.f32.mrf.mxu0
      %v1680 = vadd.f32 %v1639, %v1679
      %1681 = vdwg.mxu0
      %v1682 = vand.u32 %v559, 4294901760
      %1683 = vmatpush.msra.mxu0 %v1682
      %v1684 = vand.u32 %v557, 4294901760
      %1685 = vmatpush.msra.mxu0 %v1684
      %v1686 = vand.u32 %v555, 4294901760
      %1687 = vmatpush.msra.mxu0 %v1686
      %v1688 = vand.u32 %v553, 4294901760
      %1689 = vmatpush.msra.mxu0 %v1688
      %v1690 = vand.u32 %v551, 4294901760
      %1691 = vmatpush.msra.mxu0 %v1690
      %v1692 = vand.u32 %v549, 4294901760
      %1693 = vmatpush.msra.mxu0 %v1692
      %v1694 = vand.u32 %v547, 4294901760
      %1695 = vmatpush.msra.mxu0 %v1694
      %v1696 = vand.u32 %v545, 4294901760
      %1697 = vmatpush.msra.mxu0 %v1696
      %v1698 = vand.u32 %v543, 4294901760
      %1699 = vmatpush.msra.mxu0 %v1698
      %v1700 = vand.u32 %v541, 4294901760
      %1701 = vmatpush.msra.mxu0 %v1700
      %v1702 = vand.u32 %v539, 4294901760
      %1703 = vmatpush.msra.mxu0 %v1702
      %v1704 = vand.u32 %v537, 4294901760
      %1705 = vmatpush.msra.mxu0 %v1704
      %v1706 = vand.u32 %v535, 4294901760
      %1707 = vmatpush.msra.mxu0 %v1706
      %v1708 = vand.u32 %v533, 4294901760
      %1709 = vmatpush.msra.mxu0 %v1708
      %v1710 = vand.u32 %v531, 4294901760
      %1711 = vmatpush.msra.mxu0 %v1710
      %v1712 = vand.u32 %v529, 4294901760
      %1713 = vmatpush.msra.mxu0 %v1712
      %v1714 = vand.u32 %v494, 4294901760
      %v1715 = vsub.f32 %v494, %v1714
      %v1716 = vand.u32 %v1715, 4294901760
      %v1717 = vsub.f32 %v1715, %v1716
      %v1718 = vand.u32 %v1717, 4294901760
      %1719 = vmatmul.f32.gmra.mxu0 %v1718
      %v1720 = vpop.f32.mrf.mxu0
      %v1721 = vadd.f32 %v1676, %v1720
      %v1722 = vand.u32 %v495, 4294901760
      %v1723 = vsub.f32 %v495, %v1722
      %v1724 = vand.u32 %v1723, 4294901760
      %v1725 = vsub.f32 %v1723, %v1724
      %v1726 = vand.u32 %v1725, 4294901760
      %1727 = vmatmul.f32.gmra.mxu0 %v1726
      %v1728 = vpop.f32.mrf.mxu0
      %v1729 = vadd.f32 %v1680, %v1728
      %1730 = vdwg.mxu0
      %v1731 = vand.u32 %v559, 4294901760
      %v1732 = vsub.f32 %v559, %v1731
      %v1733 = vand.u32 %v1732, 4294901760
      %v1734 = vsub.f32 %v1732, %v1733
      %v1735 = vand.u32 %v1734, 4294901760
      %1736 = vmatpush.msra.mxu0 %v1735
      %v1737 = vand.u32 %v557, 4294901760
      %v1738 = vsub.f32 %v557, %v1737
      %v1739 = vand.u32 %v1738, 4294901760
      %v1740 = vsub.f32 %v1738, %v1739
      %v1741 = vand.u32 %v1740, 4294901760
      %1742 = vmatpush.msra.mxu0 %v1741
      %v1743 = vand.u32 %v555, 4294901760
      %v1744 = vsub.f32 %v555, %v1743
      %v1745 = vand.u32 %v1744, 4294901760
      %v1746 = vsub.f32 %v1744, %v1745
      %v1747 = vand.u32 %v1746, 4294901760
      %1748 = vmatpush.msra.mxu0 %v1747
      %v1749 = vand.u32 %v553, 4294901760
      %v1750 = vsub.f32 %v553, %v1749
      %v1751 = vand.u32 %v1750, 4294901760
      %v1752 = vsub.f32 %v1750, %v1751
      %v1753 = vand.u32 %v1752, 4294901760
      %1754 = vmatpush.msra.mxu0 %v1753
      %v1755 = vand.u32 %v551, 4294901760
      %v1756 = vsub.f32 %v551, %v1755
      %v1757 = vand.u32 %v1756, 4294901760
      %v1758 = vsub.f32 %v1756, %v1757
      %v1759 = vand.u32 %v1758, 4294901760
      %1760 = vmatpush.msra.mxu0 %v1759
      %v1761 = vand.u32 %v549, 4294901760
      %v1762 = vsub.f32 %v549, %v1761
      %v1763 = vand.u32 %v1762, 4294901760
      %v1764 = vsub.f32 %v1762, %v1763
      %v1765 = vand.u32 %v1764, 4294901760
      %1766 = vmatpush.msra.mxu0 %v1765
      %v1767 = vand.u32 %v547, 4294901760
      %v1768 = vsub.f32 %v547, %v1767
      %v1769 = vand.u32 %v1768, 4294901760
      %v1770 = vsub.f32 %v1768, %v1769
      %v1771 = vand.u32 %v1770, 4294901760
      %1772 = vmatpush.msra.mxu0 %v1771
      %v1773 = vand.u32 %v545, 4294901760
      %v1774 = vsub.f32 %v545, %v1773
      %v1775 = vand.u32 %v1774, 4294901760
      %v1776 = vsub.f32 %v1774, %v1775
      %v1777 = vand.u32 %v1776, 4294901760
      %1778 = vmatpush.msra.mxu0 %v1777
      %v1779 = vand.u32 %v543, 4294901760
      %v1780 = vsub.f32 %v543, %v1779
      %v1781 = vand.u32 %v1780, 4294901760
      %v1782 = vsub.f32 %v1780, %v1781
      %v1783 = vand.u32 %v1782, 4294901760
      %1784 = vmatpush.msra.mxu0 %v1783
      %v1785 = vand.u32 %v541, 4294901760
      %v1786 = vsub.f32 %v541, %v1785
      %v1787 = vand.u32 %v1786, 4294901760
      %v1788 = vsub.f32 %v1786, %v1787
      %v1789 = vand.u32 %v1788, 4294901760
      %1790 = vmatpush.msra.mxu0 %v1789
      %v1791 = vand.u32 %v539, 4294901760
      %v1792 = vsub.f32 %v539, %v1791
      %v1793 = vand.u32 %v1792, 4294901760
      %v1794 = vsub.f32 %v1792, %v1793
      %v1795 = vand.u32 %v1794, 4294901760
      %1796 = vmatpush.msra.mxu0 %v1795
      %v1797 = vand.u32 %v537, 4294901760
      %v1798 = vsub.f32 %v537, %v1797
      %v1799 = vand.u32 %v1798, 4294901760
      %v1800 = vsub.f32 %v1798, %v1799
      %v1801 = vand.u32 %v1800, 4294901760
      %1802 = vmatpush.msra.mxu0 %v1801
      %v1803 = vand.u32 %v535, 4294901760
      %v1804 = vsub.f32 %v535, %v1803
      %v1805 = vand.u32 %v1804, 4294901760
      %v1806 = vsub.f32 %v1804, %v1805
      %v1807 = vand.u32 %v1806, 4294901760
      %1808 = vmatpush.msra.mxu0 %v1807
      %v1809 = vand.u32 %v533, 4294901760
      %v1810 = vsub.f32 %v533, %v1809
      %v1811 = vand.u32 %v1810, 4294901760
      %v1812 = vsub.f32 %v1810, %v1811
      %v1813 = vand.u32 %v1812, 4294901760
      %1814 = vmatpush.msra.mxu0 %v1813
      %v1815 = vand.u32 %v531, 4294901760
      %v1816 = vsub.f32 %v531, %v1815
      %v1817 = vand.u32 %v1816, 4294901760
      %v1818 = vsub.f32 %v1816, %v1817
      %v1819 = vand.u32 %v1818, 4294901760
      %1820 = vmatpush.msra.mxu0 %v1819
      %v1821 = vand.u32 %v529, 4294901760
      %v1822 = vsub.f32 %v529, %v1821
      %v1823 = vand.u32 %v1822, 4294901760
      %v1824 = vsub.f32 %v1822, %v1823
      %v1825 = vand.u32 %v1824, 4294901760
      %1826 = vmatpush.msra.mxu0 %v1825
      %v1827 = vand.u32 %v494, 4294901760
      %1828 = vmatmul.f32.gmra.mxu0 %v1827
      %v1829 = vpop.f32.mrf.mxu0
      %v1830 = vadd.f32 %v1721, %v1829
      %v1831 = vand.u32 %v495, 4294901760
      %1832 = vmatmul.f32.gmra.mxu0 %v1831
      %v1833 = vpop.f32.mrf.mxu0
      %v1834 = vadd.f32 %v1729, %v1833
      %1835 = vdwg.mxu0
      %v1836 = vand.u32 %v559, 4294901760
      %v1837 = vsub.f32 %v559, %v1836
      %1838 = vmatpush.msra.mxu0 %v1837
      %v1839 = vand.u32 %v557, 4294901760
      %v1840 = vsub.f32 %v557, %v1839
      %1841 = vmatpush.msra.mxu0 %v1840
      %v1842 = vand.u32 %v555, 4294901760
      %v1843 = vsub.f32 %v555, %v1842
      %1844 = vmatpush.msra.mxu0 %v1843
      %v1845 = vand.u32 %v553, 4294901760
      %v1846 = vsub.f32 %v553, %v1845
      %1847 = vmatpush.msra.mxu0 %v1846
      %v1848 = vand.u32 %v551, 4294901760
      %v1849 = vsub.f32 %v551, %v1848
      %1850 = vmatpush.msra.mxu0 %v1849
      %v1851 = vand.u32 %v549, 4294901760
      %v1852 = vsub.f32 %v549, %v1851
      %1853 = vmatpush.msra.mxu0 %v1852
      %v1854 = vand.u32 %v547, 4294901760
      %v1855 = vsub.f32 %v547, %v1854
      %1856 = vmatpush.msra.mxu0 %v1855
      %v1857 = vand.u32 %v545, 4294901760
      %v1858 = vsub.f32 %v545, %v1857
      %1859 = vmatpush.msra.mxu0 %v1858
      %v1860 = vand.u32 %v543, 4294901760
      %v1861 = vsub.f32 %v543, %v1860
      %1862 = vmatpush.msra.mxu0 %v1861
      %v1863 = vand.u32 %v541, 4294901760
      %v1864 = vsub.f32 %v541, %v1863
      %1865 = vmatpush.msra.mxu0 %v1864
      %v1866 = vand.u32 %v539, 4294901760
      %v1867 = vsub.f32 %v539, %v1866
      %1868 = vmatpush.msra.mxu0 %v1867
      %v1869 = vand.u32 %v537, 4294901760
      %v1870 = vsub.f32 %v537, %v1869
      %1871 = vmatpush.msra.mxu0 %v1870
      %v1872 = vand.u32 %v535, 4294901760
      %v1873 = vsub.f32 %v535, %v1872
      %1874 = vmatpush.msra.mxu0 %v1873
      %v1875 = vand.u32 %v533, 4294901760
      %v1876 = vsub.f32 %v533, %v1875
      %1877 = vmatpush.msra.mxu0 %v1876
      %v1878 = vand.u32 %v531, 4294901760
      %v1879 = vsub.f32 %v531, %v1878
      %1880 = vmatpush.msra.mxu0 %v1879
      %v1881 = vand.u32 %v529, 4294901760
      %v1882 = vsub.f32 %v529, %v1881
      %1883 = vmatpush.msra.mxu0 %v1882
      %v1884 = vand.u32 %v494, 4294901760
      %v1885 = vsub.f32 %v494, %v1884
      %1886 = vmatmul.f32.gmra.mxu0 %v1885
      %v1887 = vpop.f32.mrf.mxu0
      %v1888 = vadd.f32 %v1830, %v1887
      %v1889 = vand.u32 %v495, 4294901760
      %v1890 = vsub.f32 %v495, %v1889
      %1891 = vmatmul.f32.gmra.mxu0 %v1890
      %v1892 = vpop.f32.mrf.mxu0
      %v1893 = vadd.f32 %v1834, %v1892
      %1894 = vdwg.mxu0
      %v1895 = vand.u32 %v559, 4294901760
      %1896 = vmatpush.msra.mxu0 %v1895
      %v1897 = vand.u32 %v557, 4294901760
      %1898 = vmatpush.msra.mxu0 %v1897
      %v1899 = vand.u32 %v555, 4294901760
      %1900 = vmatpush.msra.mxu0 %v1899
      %v1901 = vand.u32 %v553, 4294901760
      %1902 = vmatpush.msra.mxu0 %v1901
      %v1903 = vand.u32 %v551, 4294901760
      %1904 = vmatpush.msra.mxu0 %v1903
      %v1905 = vand.u32 %v549, 4294901760
      %1906 = vmatpush.msra.mxu0 %v1905
      %v1907 = vand.u32 %v547, 4294901760
      %1908 = vmatpush.msra.mxu0 %v1907
      %v1909 = vand.u32 %v545, 4294901760
      %1910 = vmatpush.msra.mxu0 %v1909
      %v1911 = vand.u32 %v543, 4294901760
      %1912 = vmatpush.msra.mxu0 %v1911
      %v1913 = vand.u32 %v541, 4294901760
      %1914 = vmatpush.msra.mxu0 %v1913
      %v1915 = vand.u32 %v539, 4294901760
      %1916 = vmatpush.msra.mxu0 %v1915
      %v1917 = vand.u32 %v537, 4294901760
      %1918 = vmatpush.msra.mxu0 %v1917
      %v1919 = vand.u32 %v535, 4294901760
      %1920 = vmatpush.msra.mxu0 %v1919
      %v1921 = vand.u32 %v533, 4294901760
      %1922 = vmatpush.msra.mxu0 %v1921
      %v1923 = vand.u32 %v531, 4294901760
      %1924 = vmatpush.msra.mxu0 %v1923
      %v1925 = vand.u32 %v529, 4294901760
      %1926 = vmatpush.msra.mxu0 %v1925
      %v1927 = vand.u32 %v494, 4294901760
      %v1928 = vsub.f32 %v494, %v1927
      %v1929 = vand.u32 %v1928, 4294901760
      %1930 = vmatmul.f32.gmra.mxu0 %v1929
      %v1931 = vpop.f32.mrf.mxu0
      %v1932 = vadd.f32 %v1888, %v1931
      %v1933 = vand.u32 %v495, 4294901760
      %v1934 = vsub.f32 %v495, %v1933
      %v1935 = vand.u32 %v1934, 4294901760
      %1936 = vmatmul.f32.gmra.mxu0 %v1935
      %v1937 = vpop.f32.mrf.mxu0
      %v1938 = vadd.f32 %v1893, %v1937
      %1939 = vdwg.mxu0
      %v1940 = vand.u32 %v559, 4294901760
      %v1941 = vsub.f32 %v559, %v1940
      %v1942 = vand.u32 %v1941, 4294901760
      %1943 = vmatpush.msra.mxu0 %v1942
      %v1944 = vand.u32 %v557, 4294901760
      %v1945 = vsub.f32 %v557, %v1944
      %v1946 = vand.u32 %v1945, 4294901760
      %1947 = vmatpush.msra.mxu0 %v1946
      %v1948 = vand.u32 %v555, 4294901760
      %v1949 = vsub.f32 %v555, %v1948
      %v1950 = vand.u32 %v1949, 4294901760
      %1951 = vmatpush.msra.mxu0 %v1950
      %v1952 = vand.u32 %v553, 4294901760
      %v1953 = vsub.f32 %v553, %v1952
      %v1954 = vand.u32 %v1953, 4294901760
      %1955 = vmatpush.msra.mxu0 %v1954
      %v1956 = vand.u32 %v551, 4294901760
      %v1957 = vsub.f32 %v551, %v1956
      %v1958 = vand.u32 %v1957, 4294901760
      %1959 = vmatpush.msra.mxu0 %v1958
      %v1960 = vand.u32 %v549, 4294901760
      %v1961 = vsub.f32 %v549, %v1960
      %v1962 = vand.u32 %v1961, 4294901760
      %1963 = vmatpush.msra.mxu0 %v1962
      %v1964 = vand.u32 %v547, 4294901760
      %v1965 = vsub.f32 %v547, %v1964
      %v1966 = vand.u32 %v1965, 4294901760
      %1967 = vmatpush.msra.mxu0 %v1966
      %v1968 = vand.u32 %v545, 4294901760
      %v1969 = vsub.f32 %v545, %v1968
      %v1970 = vand.u32 %v1969, 4294901760
      %1971 = vmatpush.msra.mxu0 %v1970
      %v1972 = vand.u32 %v543, 4294901760
      %v1973 = vsub.f32 %v543, %v1972
      %v1974 = vand.u32 %v1973, 4294901760
      %1975 = vmatpush.msra.mxu0 %v1974
      %v1976 = vand.u32 %v541, 4294901760
      %v1977 = vsub.f32 %v541, %v1976
      %v1978 = vand.u32 %v1977, 4294901760
      %1979 = vmatpush.msra.mxu0 %v1978
      %v1980 = vand.u32 %v539, 4294901760
      %v1981 = vsub.f32 %v539, %v1980
      %v1982 = vand.u32 %v1981, 4294901760
      %1983 = vmatpush.msra.mxu0 %v1982
      %v1984 = vand.u32 %v537, 4294901760
      %v1985 = vsub.f32 %v537, %v1984
      %v1986 = vand.u32 %v1985, 4294901760
      %1987 = vmatpush.msra.mxu0 %v1986
      %v1988 = vand.u32 %v535, 4294901760
      %v1989 = vsub.f32 %v535, %v1988
      %v1990 = vand.u32 %v1989, 4294901760
      %1991 = vmatpush.msra.mxu0 %v1990
      %v1992 = vand.u32 %v533, 4294901760
      %v1993 = vsub.f32 %v533, %v1992
      %v1994 = vand.u32 %v1993, 4294901760
      %1995 = vmatpush.msra.mxu0 %v1994
      %v1996 = vand.u32 %v531, 4294901760
      %v1997 = vsub.f32 %v531, %v1996
      %v1998 = vand.u32 %v1997, 4294901760
      %1999 = vmatpush.msra.mxu0 %v1998
      %v2000 = vand.u32 %v529, 4294901760
      %v2001 = vsub.f32 %v529, %v2000
      %v2002 = vand.u32 %v2001, 4294901760
      %2003 = vmatpush.msra.mxu0 %v2002
      %v2004 = vand.u32 %v494, 4294901760
      %2005 = vmatmul.f32.gmra.mxu0 %v2004
      %v2006 = vpop.f32.mrf.mxu0
      %v2007 = vadd.f32 %v1932, %v2006
      %v2008 = vand.u32 %v495, 4294901760
      %2009 = vmatmul.f32.gmra.mxu0 %v2008
      %v2010 = vpop.f32.mrf.mxu0
      %v2011 = vadd.f32 %v1938, %v2010
      %2012 = vdwg.mxu0
      %v2013 = vand.u32 %v559, 4294901760
      %2014 = vmatpush.msra.mxu0 %v2013
      %v2015 = vand.u32 %v557, 4294901760
      %2016 = vmatpush.msra.mxu0 %v2015
      %v2017 = vand.u32 %v555, 4294901760
      %2018 = vmatpush.msra.mxu0 %v2017
      %v2019 = vand.u32 %v553, 4294901760
      %2020 = vmatpush.msra.mxu0 %v2019
      %v2021 = vand.u32 %v551, 4294901760
      %2022 = vmatpush.msra.mxu0 %v2021
      %v2023 = vand.u32 %v549, 4294901760
      %2024 = vmatpush.msra.mxu0 %v2023
      %v2025 = vand.u32 %v547, 4294901760
      %2026 = vmatpush.msra.mxu0 %v2025
      %v2027 = vand.u32 %v545, 4294901760
      %2028 = vmatpush.msra.mxu0 %v2027
      %v2029 = vand.u32 %v543, 4294901760
      %2030 = vmatpush.msra.mxu0 %v2029
      %v2031 = vand.u32 %v541, 4294901760
      %2032 = vmatpush.msra.mxu0 %v2031
      %v2033 = vand.u32 %v539, 4294901760
      %2034 = vmatpush.msra.mxu0 %v2033
      %v2035 = vand.u32 %v537, 4294901760
      %2036 = vmatpush.msra.mxu0 %v2035
      %v2037 = vand.u32 %v535, 4294901760
      %2038 = vmatpush.msra.mxu0 %v2037
      %v2039 = vand.u32 %v533, 4294901760
      %2040 = vmatpush.msra.mxu0 %v2039
      %v2041 = vand.u32 %v531, 4294901760
      %2042 = vmatpush.msra.mxu0 %v2041
      %v2043 = vand.u32 %v529, 4294901760
      %2044 = vmatpush.msra.mxu0 %v2043
      %v2045 = vand.u32 %v494, 4294901760
      %2046 = vmatmul.f32.gmra.mxu0 %v2045
      %v2047 = vpop.f32.mrf.mxu0
      %v2048 = vadd.f32 %v2007, %v2047
      %v2049 = vand.u32 %v495, 4294901760
      %2050 = vmatmul.f32.gmra.mxu0 %v2049
      %v2051 = vpop.f32.mrf.mxu0
      %v2052 = vadd.f32 %v2011, %v2051
      %2053 = vdwg.mxu0
      %v2054 = vmax.f32 %v1304, 0.0
      %v2055 = vmax.f32 %v1308, 0.0
      %2056 = vst [vmem:[#allocation3 + $0x8] sm:$0xff] %v2054
      %2057 = vst [vmem:[#allocation3 + $0x10] sm:$0xff] %v2055
      %v2058 = vld [vmem:[#allocation3 + $0x7] sm:$0xff]
      %v2059 = vld [vmem:[#allocation3 + $0xf] sm:$0xff]
      %v2060 = vld [vmem:[%s3] sm:$0xff]
      %v2061 = vld [vmem:[%s3 + $0x8] sm:$0xff]
      %v2062 = vld [vmem:[%s3 + $0x10] sm:$0xff]
      %v2063 = vld [vmem:[%s3 + $0x18] sm:$0xff]
      %v2064 = vld [vmem:[%s3 + $0x20] sm:$0xff]
      %v2065 = vld [vmem:[%s3 + $0x28] sm:$0xff]
      %v2066 = vld [vmem:[%s3 + $0x30] sm:$0xff]
      %v2067 = vld [vmem:[%s3 + $0x38] sm:$0xff]
      %v2068 = vld [vmem:[%s3 + $0x40] sm:$0xff]
      %v2069 = vld [vmem:[%s3 + $0x48] sm:$0xff]
      %v2070 = vld [vmem:[%s3 + $0x50] sm:$0xff]
      %v2071 = vld [vmem:[%s3 + $0x58] sm:$0xff]
      %v2072 = vld [vmem:[%s3 + $0x60] sm:$0xff]
      %v2073 = vld [vmem:[%s3 + $0x68] sm:$0xff]
      %v2074 = vld [vmem:[%s3 + $0x70] sm:$0xff]
      %v2075 = vld [vmem:[%s3 + $0x78] sm:$0xff]
      %v2076 = vld [vmem:[%s3 + $0x80] sm:$0xff]
      %v2077 = vld [vmem:[%s3 + $0x88] sm:$0xff]
      %v2078 = vld [vmem:[%s3 + $0x90] sm:$0xff]
      %v2079 = vld [vmem:[%s3 + $0x98] sm:$0xff]
      %v2080 = vld [vmem:[%s3 + $0xa0] sm:$0xff]
      %v2081 = vld [vmem:[%s3 + $0xa8] sm:$0xff]
      %v2082 = vld [vmem:[%s3 + $0xb0] sm:$0xff]
      %v2083 = vld [vmem:[%s3 + $0xb8] sm:$0xff]
      %v2084 = vld [vmem:[%s3 + $0xc0] sm:$0xff]
      %v2085 = vld [vmem:[%s3 + $0xc8] sm:$0xff]
      %v2086 = vld [vmem:[%s3 + $0xd0] sm:$0xff]
      %v2087 = vld [vmem:[%s3 + $0xd8] sm:$0xff]
      %v2088 = vld [vmem:[%s3 + $0xe0] sm:$0xff]
      %v2089 = vld [vmem:[%s3 + $0xe8] sm:$0xff]
      %v2090 = vld [vmem:[%s3 + $0xf0] sm:$0xff]
      %v2091 = vld [vmem:[%s3 + $0xf8] sm:$0xff]
      %v2092 = vld [vmem:[%s4] sm:$0x1]
      %v2094 = vperm.slane %v2092, 0
      %v2096 = vand.u32 %v2075, 4294901760
      %2097 = vmatpush.msra.mxu0 %v2096
      %v2098 = vand.u32 %v2074, 4294901760
      %2099 = vmatpush.msra.mxu0 %v2098
      %v2100 = vand.u32 %v2073, 4294901760
      %2101 = vmatpush.msra.mxu0 %v2100
      %v2102 = vand.u32 %v2072, 4294901760
      %2103 = vmatpush.msra.mxu0 %v2102
      %v2104 = vand.u32 %v2071, 4294901760
      %2105 = vmatpush.msra.mxu0 %v2104
      %v2106 = vand.u32 %v2070, 4294901760
      %2107 = vmatpush.msra.mxu0 %v2106
      %v2108 = vand.u32 %v2069, 4294901760
      %2109 = vmatpush.msra.mxu0 %v2108
      %v2110 = vand.u32 %v2068, 4294901760
      %2111 = vmatpush.msra.mxu0 %v2110
      %v2112 = vand.u32 %v2067, 4294901760
      %2113 = vmatpush.msra.mxu0 %v2112
      %v2114 = vand.u32 %v2066, 4294901760
      %2115 = vmatpush.msra.mxu0 %v2114
      %v2116 = vand.u32 %v2065, 4294901760
      %2117 = vmatpush.msra.mxu0 %v2116
      %v2118 = vand.u32 %v2064, 4294901760
      %2119 = vmatpush.msra.mxu0 %v2118
      %v2120 = vand.u32 %v2063, 4294901760
      %2121 = vmatpush.msra.mxu0 %v2120
      %v2122 = vand.u32 %v2062, 4294901760
      %2123 = vmatpush.msra.mxu0 %v2122
      %v2124 = vand.u32 %v2061, 4294901760
      %2125 = vmatpush.msra.mxu0 %v2124
      %v2126 = vand.u32 %v2060, 4294901760
      %2127 = vmatpush.msra.mxu0 %v2126
      %v2128 = vand.u32 %v2054, 4294901760
      %v2129 = vsub.f32 %v2054, %v2128
      %v2130 = vand.u32 %v2129, 4294901760
      %v2131 = vsub.f32 %v2129, %v2130
      %v2132 = vand.u32 %v2131, 4294901760
      %2133 = vmatmul.f32.gmra.mxu0 %v2132
      %v2134 = vpop.f32.mrf.mxu0
      %v2135 = vadd.f32 %v2094, %v2134
      %v2136 = vand.u32 %v2055, 4294901760
      %v2137 = vsub.f32 %v2055, %v2136
      %v2138 = vand.u32 %v2137, 4294901760
      %v2139 = vsub.f32 %v2137, %v2138
      %v2140 = vand.u32 %v2139, 4294901760
      %2141 = vmatmul.f32.gmra.mxu0 %v2140
      %v2142 = vpop.f32.mrf.mxu0
      %v2143 = vadd.f32 %v2094, %v2142
      %2144 = vdwg.mxu0
      %v2145 = vand.u32 %v2075, 4294901760
      %v2146 = vsub.f32 %v2075, %v2145
      %v2147 = vand.u32 %v2146, 4294901760
      %v2148 = vsub.f32 %v2146, %v2147
      %v2149 = vand.u32 %v2148, 4294901760
      %2150 = vmatpush.msra.mxu0 %v2149
      %v2151 = vand.u32 %v2074, 4294901760
      %v2152 = vsub.f32 %v2074, %v2151
      %v2153 = vand.u32 %v2152, 4294901760
      %v2154 = vsub.f32 %v2152, %v2153
      %v2155 = vand.u32 %v2154, 4294901760
      %2156 = vmatpush.msra.mxu0 %v2155
      %v2157 = vand.u32 %v2073, 4294901760
      %v2158 = vsub.f32 %v2073, %v2157
      %v2159 = vand.u32 %v2158, 4294901760
      %v2160 = vsub.f32 %v2158, %v2159
      %v2161 = vand.u32 %v2160, 4294901760
      %2162 = vmatpush.msra.mxu0 %v2161
      %v2163 = vand.u32 %v2072, 4294901760
      %v2164 = vsub.f32 %v2072, %v2163
      %v2165 = vand.u32 %v2164, 4294901760
      %v2166 = vsub.f32 %v2164, %v2165
      %v2167 = vand.u32 %v2166, 4294901760
      %2168 = vmatpush.msra.mxu0 %v2167
      %v2169 = vand.u32 %v2071, 4294901760
      %v2170 = vsub.f32 %v2071, %v2169
      %v2171 = vand.u32 %v2170, 4294901760
      %v2172 = vsub.f32 %v2170, %v2171
      %v2173 = vand.u32 %v2172, 4294901760
      %2174 = vmatpush.msra.mxu0 %v2173
      %v2175 = vand.u32 %v2070, 4294901760
      %v2176 = vsub.f32 %v2070, %v2175
      %v2177 = vand.u32 %v2176, 4294901760
      %v2178 = vsub.f32 %v2176, %v2177
      %v2179 = vand.u32 %v2178, 4294901760
      %2180 = vmatpush.msra.mxu0 %v2179
      %v2181 = vand.u32 %v2069, 4294901760
      %v2182 = vsub.f32 %v2069, %v2181
      %v2183 = vand.u32 %v2182, 4294901760
      %v2184 = vsub.f32 %v2182, %v2183
      %v2185 = vand.u32 %v2184, 4294901760
      %2186 = vmatpush.msra.mxu0 %v2185
      %v2187 = vand.u32 %v2068, 4294901760
      %v2188 = vsub.f32 %v2068, %v2187
      %v2189 = vand.u32 %v2188, 4294901760
      %v2190 = vsub.f32 %v2188, %v2189
      %v2191 = vand.u32 %v2190, 4294901760
      %2192 = vmatpush.msra.mxu0 %v2191
      %v2193 = vand.u32 %v2067, 4294901760
      %v2194 = vsub.f32 %v2067, %v2193
      %v2195 = vand.u32 %v2194, 4294901760
      %v2196 = vsub.f32 %v2194, %v2195
      %v2197 = vand.u32 %v2196, 4294901760
      %2198 = vmatpush.msra.mxu0 %v2197
      %v2199 = vand.u32 %v2066, 4294901760
      %v2200 = vsub.f32 %v2066, %v2199
      %v2201 = vand.u32 %v2200, 4294901760
      %v2202 = vsub.f32 %v2200, %v2201
      %v2203 = vand.u32 %v2202, 4294901760
      %2204 = vmatpush.msra.mxu0 %v2203
      %v2205 = vand.u32 %v2065, 4294901760
      %v2206 = vsub.f32 %v2065, %v2205
      %v2207 = vand.u32 %v2206, 4294901760
      %v2208 = vsub.f32 %v2206, %v2207
      %v2209 = vand.u32 %v2208, 4294901760
      %2210 = vmatpush.msra.mxu0 %v2209
      %v2211 = vand.u32 %v2064, 4294901760
      %v2212 = vsub.f32 %v2064, %v2211
      %v2213 = vand.u32 %v2212, 4294901760
      %v2214 = vsub.f32 %v2212, %v2213
      %v2215 = vand.u32 %v2214, 4294901760
      %2216 = vmatpush.msra.mxu0 %v2215
      %v2217 = vand.u32 %v2063, 4294901760
      %v2218 = vsub.f32 %v2063, %v2217
      %v2219 = vand.u32 %v2218, 4294901760
      %v2220 = vsub.f32 %v2218, %v2219
      %v2221 = vand.u32 %v2220, 4294901760
      %2222 = vmatpush.msra.mxu0 %v2221
      %v2223 = vand.u32 %v2062, 4294901760
      %v2224 = vsub.f32 %v2062, %v2223
      %v2225 = vand.u32 %v2224, 4294901760
      %v2226 = vsub.f32 %v2224, %v2225
      %v2227 = vand.u32 %v2226, 4294901760
      %2228 = vmatpush.msra.mxu0 %v2227
      %v2229 = vand.u32 %v2061, 4294901760
      %v2230 = vsub.f32 %v2061, %v2229
      %v2231 = vand.u32 %v2230, 4294901760
      %v2232 = vsub.f32 %v2230, %v2231
      %v2233 = vand.u32 %v2232, 4294901760
      %2234 = vmatpush.msra.mxu0 %v2233
      %v2235 = vand.u32 %v2060, 4294901760
      %v2236 = vsub.f32 %v2060, %v2235
      %v2237 = vand.u32 %v2236, 4294901760
      %v2238 = vsub.f32 %v2236, %v2237
      %v2239 = vand.u32 %v2238, 4294901760
      %2240 = vmatpush.msra.mxu0 %v2239
      %v2241 = vand.u32 %v2054, 4294901760
      %2242 = vmatmul.f32.gmra.mxu0 %v2241
      %v2243 = vpop.f32.mrf.mxu0
      %v2244 = vadd.f32 %v2135, %v2243
      %v2245 = vand.u32 %v2055, 4294901760
      %2246 = vmatmul.f32.gmra.mxu0 %v2245
      %v2247 = vpop.f32.mrf.mxu0
      %v2248 = vadd.f32 %v2143, %v2247
      %2249 = vdwg.mxu0
      %v2250 = vand.u32 %v2075, 4294901760
      %v2251 = vsub.f32 %v2075, %v2250
      %2252 = vmatpush.msra.mxu0 %v2251
      %v2253 = vand.u32 %v2074, 4294901760
      %v2254 = vsub.f32 %v2074, %v2253
      %2255 = vmatpush.msra.mxu0 %v2254
      %v2256 = vand.u32 %v2073, 4294901760
      %v2257 = vsub.f32 %v2073, %v2256
      %2258 = vmatpush.msra.mxu0 %v2257
      %v2259 = vand.u32 %v2072, 4294901760
      %v2260 = vsub.f32 %v2072, %v2259
      %2261 = vmatpush.msra.mxu0 %v2260
      %v2262 = vand.u32 %v2071, 4294901760
      %v2263 = vsub.f32 %v2071, %v2262
      %2264 = vmatpush.msra.mxu0 %v2263
      %v2265 = vand.u32 %v2070, 4294901760
      %v2266 = vsub.f32 %v2070, %v2265
      %2267 = vmatpush.msra.mxu0 %v2266
      %v2268 = vand.u32 %v2069, 4294901760
      %v2269 = vsub.f32 %v2069, %v2268
      %2270 = vmatpush.msra.mxu0 %v2269
      %v2271 = vand.u32 %v2068, 4294901760
      %v2272 = vsub.f32 %v2068, %v2271
      %2273 = vmatpush.msra.mxu0 %v2272
      %v2274 = vand.u32 %v2067, 4294901760
      %v2275 = vsub.f32 %v2067, %v2274
      %2276 = vmatpush.msra.mxu0 %v2275
      %v2277 = vand.u32 %v2066, 4294901760
      %v2278 = vsub.f32 %v2066, %v2277
      %2279 = vmatpush.msra.mxu0 %v2278
      %v2280 = vand.u32 %v2065, 4294901760
      %v2281 = vsub.f32 %v2065, %v2280
      %2282 = vmatpush.msra.mxu0 %v2281
      %v2283 = vand.u32 %v2064, 4294901760
      %v2284 = vsub.f32 %v2064, %v2283
      %2285 = vmatpush.msra.mxu0 %v2284
      %v2286 = vand.u32 %v2063, 4294901760
      %v2287 = vsub.f32 %v2063, %v2286
      %2288 = vmatpush.msra.mxu0 %v2287
      %v2289 = vand.u32 %v2062, 4294901760
      %v2290 = vsub.f32 %v2062, %v2289
      %2291 = vmatpush.msra.mxu0 %v2290
      %v2292 = vand.u32 %v2061, 4294901760
      %v2293 = vsub.f32 %v2061, %v2292
      %2294 = vmatpush.msra.mxu0 %v2293
      %v2295 = vand.u32 %v2060, 4294901760
      %v2296 = vsub.f32 %v2060, %v2295
      %2297 = vmatpush.msra.mxu0 %v2296
      %v2298 = vand.u32 %v2054, 4294901760
      %v2299 = vsub.f32 %v2054, %v2298
      %2300 = vmatmul.f32.gmra.mxu0 %v2299
      %v2301 = vpop.f32.mrf.mxu0
      %v2302 = vadd.f32 %v2244, %v2301
      %v2303 = vand.u32 %v2055, 4294901760
      %v2304 = vsub.f32 %v2055, %v2303
      %2305 = vmatmul.f32.gmra.mxu0 %v2304
      %v2306 = vpop.f32.mrf.mxu0
      %v2307 = vadd.f32 %v2248, %v2306
      %2308 = vdwg.mxu0
      %v2309 = vand.u32 %v2075, 4294901760
      %2310 = vmatpush.msra.mxu0 %v2309
      %v2311 = vand.u32 %v2074, 4294901760
      %2312 = vmatpush.msra.mxu0 %v2311
      %v2313 = vand.u32 %v2073, 4294901760
      %2314 = vmatpush.msra.mxu0 %v2313
      %v2315 = vand.u32 %v2072, 4294901760
      %2316 = vmatpush.msra.mxu0 %v2315
      %v2317 = vand.u32 %v2071, 4294901760
      %2318 = vmatpush.msra.mxu0 %v2317
      %v2319 = vand.u32 %v2070, 4294901760
      %2320 = vmatpush.msra.mxu0 %v2319
      %v2321 = vand.u32 %v2069, 4294901760
      %2322 = vmatpush.msra.mxu0 %v2321
      %v2323 = vand.u32 %v2068, 4294901760
      %2324 = vmatpush.msra.mxu0 %v2323
      %v2325 = vand.u32 %v2067, 4294901760
      %2326 = vmatpush.msra.mxu0 %v2325
      %v2327 = vand.u32 %v2066, 4294901760
      %2328 = vmatpush.msra.mxu0 %v2327
      %v2329 = vand.u32 %v2065, 4294901760
      %2330 = vmatpush.msra.mxu0 %v2329
      %v2331 = vand.u32 %v2064, 4294901760
      %2332 = vmatpush.msra.mxu0 %v2331
      %v2333 = vand.u32 %v2063, 4294901760
      %2334 = vmatpush.msra.mxu0 %v2333
      %v2335 = vand.u32 %v2062, 4294901760
      %2336 = vmatpush.msra.mxu0 %v2335
      %v2337 = vand.u32 %v2061, 4294901760
      %2338 = vmatpush.msra.mxu0 %v2337
      %v2339 = vand.u32 %v2060, 4294901760
      %2340 = vmatpush.msra.mxu0 %v2339
      %v2341 = vand.u32 %v2054, 4294901760
      %v2342 = vsub.f32 %v2054, %v2341
      %v2343 = vand.u32 %v2342, 4294901760
      %2344 = vmatmul.f32.gmra.mxu0 %v2343
      %v2345 = vpop.f32.mrf.mxu0
      %v2346 = vadd.f32 %v2302, %v2345
      %v2347 = vand.u32 %v2055, 4294901760
      %v2348 = vsub.f32 %v2055, %v2347
      %v2349 = vand.u32 %v2348, 4294901760
      %2350 = vmatmul.f32.gmra.mxu0 %v2349
      %v2351 = vpop.f32.mrf.mxu0
      %v2352 = vadd.f32 %v2307, %v2351
      %2353 = vdwg.mxu0
      %v2354 = vand.u32 %v2075, 4294901760
      %v2355 = vsub.f32 %v2075, %v2354
      %v2356 = vand.u32 %v2355, 4294901760
      %2357 = vmatpush.msra.mxu0 %v2356
      %v2358 = vand.u32 %v2074, 4294901760
      %v2359 = vsub.f32 %v2074, %v2358
      %v2360 = vand.u32 %v2359, 4294901760
      %2361 = vmatpush.msra.mxu0 %v2360
      %v2362 = vand.u32 %v2073, 4294901760
      %v2363 = vsub.f32 %v2073, %v2362
      %v2364 = vand.u32 %v2363, 4294901760
      %2365 = vmatpush.msra.mxu0 %v2364
      %v2366 = vand.u32 %v2072, 4294901760
      %v2367 = vsub.f32 %v2072, %v2366
      %v2368 = vand.u32 %v2367, 4294901760
      %2369 = vmatpush.msra.mxu0 %v2368
      %v2370 = vand.u32 %v2071, 4294901760
      %v2371 = vsub.f32 %v2071, %v2370
      %v2372 = vand.u32 %v2371, 4294901760
      %2373 = vmatpush.msra.mxu0 %v2372
      %v2374 = vand.u32 %v2070, 4294901760
      %v2375 = vsub.f32 %v2070, %v2374
      %v2376 = vand.u32 %v2375, 4294901760
      %2377 = vmatpush.msra.mxu0 %v2376
      %v2378 = vand.u32 %v2069, 4294901760
      %v2379 = vsub.f32 %v2069, %v2378
      %v2380 = vand.u32 %v2379, 4294901760
      %2381 = vmatpush.msra.mxu0 %v2380
      %v2382 = vand.u32 %v2068, 4294901760
      %v2383 = vsub.f32 %v2068, %v2382
      %v2384 = vand.u32 %v2383, 4294901760
      %2385 = vmatpush.msra.mxu0 %v2384
      %v2386 = vand.u32 %v2067, 4294901760
      %v2387 = vsub.f32 %v2067, %v2386
      %v2388 = vand.u32 %v2387, 4294901760
      %2389 = vmatpush.msra.mxu0 %v2388
      %v2390 = vand.u32 %v2066, 4294901760
      %v2391 = vsub.f32 %v2066, %v2390
      %v2392 = vand.u32 %v2391, 4294901760
      %2393 = vmatpush.msra.mxu0 %v2392
      %v2394 = vand.u32 %v2065, 4294901760
      %v2395 = vsub.f32 %v2065, %v2394
      %v2396 = vand.u32 %v2395, 4294901760
      %2397 = vmatpush.msra.mxu0 %v2396
      %v2398 = vand.u32 %v2064, 4294901760
      %v2399 = vsub.f32 %v2064, %v2398
      %v2400 = vand.u32 %v2399, 4294901760
      %2401 = vmatpush.msra.mxu0 %v2400
      %v2402 = vand.u32 %v2063, 4294901760
      %v2403 = vsub.f32 %v2063, %v2402
      %v2404 = vand.u32 %v2403, 4294901760
      %2405 = vmatpush.msra.mxu0 %v2404
      %v2406 = vand.u32 %v2062, 4294901760
      %v2407 = vsub.f32 %v2062, %v2406
      %v2408 = vand.u32 %v2407, 4294901760
      %2409 = vmatpush.msra.mxu0 %v2408
      %v2410 = vand.u32 %v2061, 4294901760
      %v2411 = vsub.f32 %v2061, %v2410
      %v2412 = vand.u32 %v2411, 4294901760
      %2413 = vmatpush.msra.mxu0 %v2412
      %v2414 = vand.u32 %v2060, 4294901760
      %v2415 = vsub.f32 %v2060, %v2414
      %v2416 = vand.u32 %v2415, 4294901760
      %2417 = vmatpush.msra.mxu0 %v2416
      %v2418 = vand.u32 %v2054, 4294901760
      %2419 = vmatmul.f32.gmra.mxu0 %v2418
      %v2420 = vpop.f32.mrf.mxu0
      %v2421 = vadd.f32 %v2346, %v2420
      %v2422 = vand.u32 %v2055, 4294901760
      %2423 = vmatmul.f32.gmra.mxu0 %v2422
      %v2424 = vpop.f32.mrf.mxu0
      %v2425 = vadd.f32 %v2352, %v2424
      %2426 = vdwg.mxu0
      %v2427 = vand.u32 %v2075, 4294901760
      %2428 = vmatpush.msra.mxu0 %v2427
      %v2429 = vand.u32 %v2074, 4294901760
      %2430 = vmatpush.msra.mxu0 %v2429
      %v2431 = vand.u32 %v2073, 4294901760
      %2432 = vmatpush.msra.mxu0 %v2431
      %v2433 = vand.u32 %v2072, 4294901760
      %2434 = vmatpush.msra.mxu0 %v2433
      %v2435 = vand.u32 %v2071, 4294901760
      %2436 = vmatpush.msra.mxu0 %v2435
      %v2437 = vand.u32 %v2070, 4294901760
      %2438 = vmatpush.msra.mxu0 %v2437
      %v2439 = vand.u32 %v2069, 4294901760
      %2440 = vmatpush.msra.mxu0 %v2439
      %v2441 = vand.u32 %v2068, 4294901760
      %2442 = vmatpush.msra.mxu0 %v2441
      %v2443 = vand.u32 %v2067, 4294901760
      %2444 = vmatpush.msra.mxu0 %v2443
      %v2445 = vand.u32 %v2066, 4294901760
      %2446 = vmatpush.msra.mxu0 %v2445
      %v2447 = vand.u32 %v2065, 4294901760
      %2448 = vmatpush.msra.mxu0 %v2447
      %v2449 = vand.u32 %v2064, 4294901760
      %2450 = vmatpush.msra.mxu0 %v2449
      %v2451 = vand.u32 %v2063, 4294901760
      %2452 = vmatpush.msra.mxu0 %v2451
      %v2453 = vand.u32 %v2062, 4294901760
      %2454 = vmatpush.msra.mxu0 %v2453
      %v2455 = vand.u32 %v2061, 4294901760
      %2456 = vmatpush.msra.mxu0 %v2455
      %v2457 = vand.u32 %v2060, 4294901760
      %2458 = vmatpush.msra.mxu0 %v2457
      %v2459 = vand.u32 %v2054, 4294901760
      %2460 = vmatmul.f32.gmra.mxu0 %v2459
      %v2461 = vpop.f32.mrf.mxu0
      %v2462 = vadd.f32 %v2421, %v2461
      %v2463 = vand.u32 %v2055, 4294901760
      %2464 = vmatmul.f32.gmra.mxu0 %v2463
      %v2465 = vpop.f32.mrf.mxu0
      %v2466 = vadd.f32 %v2425, %v2465
      %2467 = vdwg.mxu0
      %v2468 = vand.u32 %v2091, 4294901760
      %2469 = vmatpush.msra.mxu0 %v2468
      %v2470 = vand.u32 %v2090, 4294901760
      %2471 = vmatpush.msra.mxu0 %v2470
      %v2472 = vand.u32 %v2089, 4294901760
      %2473 = vmatpush.msra.mxu0 %v2472
      %v2474 = vand.u32 %v2088, 4294901760
      %2475 = vmatpush.msra.mxu0 %v2474
      %v2476 = vand.u32 %v2087, 4294901760
      %2477 = vmatpush.msra.mxu0 %v2476
      %v2478 = vand.u32 %v2086, 4294901760
      %2479 = vmatpush.msra.mxu0 %v2478
      %v2480 = vand.u32 %v2085, 4294901760
      %2481 = vmatpush.msra.mxu0 %v2480
      %v2482 = vand.u32 %v2084, 4294901760
      %2483 = vmatpush.msra.mxu0 %v2482
      %v2484 = vand.u32 %v2083, 4294901760
      %2485 = vmatpush.msra.mxu0 %v2484
      %v2486 = vand.u32 %v2082, 4294901760
      %2487 = vmatpush.msra.mxu0 %v2486
      %v2488 = vand.u32 %v2081, 4294901760
      %2489 = vmatpush.msra.mxu0 %v2488
      %v2490 = vand.u32 %v2080, 4294901760
      %2491 = vmatpush.msra.mxu0 %v2490
      %v2492 = vand.u32 %v2079, 4294901760
      %2493 = vmatpush.msra.mxu0 %v2492
      %v2494 = vand.u32 %v2078, 4294901760
      %2495 = vmatpush.msra.mxu0 %v2494
      %v2496 = vand.u32 %v2077, 4294901760
      %2497 = vmatpush.msra.mxu0 %v2496
      %v2498 = vand.u32 %v2076, 4294901760
      %2499 = vmatpush.msra.mxu0 %v2498
      %v2500 = vand.u32 %v2058, 4294901760
      %v2501 = vsub.f32 %v2058, %v2500
      %v2502 = vand.u32 %v2501, 4294901760
      %v2503 = vsub.f32 %v2501, %v2502
      %v2504 = vand.u32 %v2503, 4294901760
      %2505 = vmatmul.f32.gmra.mxu0 %v2504
      %v2506 = vpop.f32.mrf.mxu0
      %v2507 = vadd.f32 %v2462, %v2506
      %v2508 = vand.u32 %v2059, 4294901760
      %v2509 = vsub.f32 %v2059, %v2508
      %v2510 = vand.u32 %v2509, 4294901760
      %v2511 = vsub.f32 %v2509, %v2510
      %v2512 = vand.u32 %v2511, 4294901760
      %2513 = vmatmul.f32.gmra.mxu0 %v2512
      %v2514 = vpop.f32.mrf.mxu0
      %v2515 = vadd.f32 %v2466, %v2514
      %2516 = vdwg.mxu0
      %v2517 = vand.u32 %v2091, 4294901760
      %v2518 = vsub.f32 %v2091, %v2517
      %v2519 = vand.u32 %v2518, 4294901760
      %v2520 = vsub.f32 %v2518, %v2519
      %v2521 = vand.u32 %v2520, 4294901760
      %2522 = vmatpush.msra.mxu0 %v2521
      %v2523 = vand.u32 %v2090, 4294901760
      %v2524 = vsub.f32 %v2090, %v2523
      %v2525 = vand.u32 %v2524, 4294901760
      %v2526 = vsub.f32 %v2524, %v2525
      %v2527 = vand.u32 %v2526, 4294901760
      %2528 = vmatpush.msra.mxu0 %v2527
      %v2529 = vand.u32 %v2089, 4294901760
      %v2530 = vsub.f32 %v2089, %v2529
      %v2531 = vand.u32 %v2530, 4294901760
      %v2532 = vsub.f32 %v2530, %v2531
      %v2533 = vand.u32 %v2532, 4294901760
      %2534 = vmatpush.msra.mxu0 %v2533
      %v2535 = vand.u32 %v2088, 4294901760
      %v2536 = vsub.f32 %v2088, %v2535
      %v2537 = vand.u32 %v2536, 4294901760
      %v2538 = vsub.f32 %v2536, %v2537
      %v2539 = vand.u32 %v2538, 4294901760
      %2540 = vmatpush.msra.mxu0 %v2539
      %v2541 = vand.u32 %v2087, 4294901760
      %v2542 = vsub.f32 %v2087, %v2541
      %v2543 = vand.u32 %v2542, 4294901760
      %v2544 = vsub.f32 %v2542, %v2543
      %v2545 = vand.u32 %v2544, 4294901760
      %2546 = vmatpush.msra.mxu0 %v2545
      %v2547 = vand.u32 %v2086, 4294901760
      %v2548 = vsub.f32 %v2086, %v2547
      %v2549 = vand.u32 %v2548, 4294901760
      %v2550 = vsub.f32 %v2548, %v2549
      %v2551 = vand.u32 %v2550, 4294901760
      %2552 = vmatpush.msra.mxu0 %v2551
      %v2553 = vand.u32 %v2085, 4294901760
      %v2554 = vsub.f32 %v2085, %v2553
      %v2555 = vand.u32 %v2554, 4294901760
      %v2556 = vsub.f32 %v2554, %v2555
      %v2557 = vand.u32 %v2556, 4294901760
      %2558 = vmatpush.msra.mxu0 %v2557
      %v2559 = vand.u32 %v2084, 4294901760
      %v2560 = vsub.f32 %v2084, %v2559
      %v2561 = vand.u32 %v2560, 4294901760
      %v2562 = vsub.f32 %v2560, %v2561
      %v2563 = vand.u32 %v2562, 4294901760
      %2564 = vmatpush.msra.mxu0 %v2563
      %v2565 = vand.u32 %v2083, 4294901760
      %v2566 = vsub.f32 %v2083, %v2565
      %v2567 = vand.u32 %v2566, 4294901760
      %v2568 = vsub.f32 %v2566, %v2567
      %v2569 = vand.u32 %v2568, 4294901760
      %2570 = vmatpush.msra.mxu0 %v2569
      %v2571 = vand.u32 %v2082, 4294901760
      %v2572 = vsub.f32 %v2082, %v2571
      %v2573 = vand.u32 %v2572, 4294901760
      %v2574 = vsub.f32 %v2572, %v2573
      %v2575 = vand.u32 %v2574, 4294901760
      %2576 = vmatpush.msra.mxu0 %v2575
      %v2577 = vand.u32 %v2081, 4294901760
      %v2578 = vsub.f32 %v2081, %v2577
      %v2579 = vand.u32 %v2578, 4294901760
      %v2580 = vsub.f32 %v2578, %v2579
      %v2581 = vand.u32 %v2580, 4294901760
      %2582 = vmatpush.msra.mxu0 %v2581
      %v2583 = vand.u32 %v2080, 4294901760
      %v2584 = vsub.f32 %v2080, %v2583
      %v2585 = vand.u32 %v2584, 4294901760
      %v2586 = vsub.f32 %v2584, %v2585
      %v2587 = vand.u32 %v2586, 4294901760
      %2588 = vmatpush.msra.mxu0 %v2587
      %v2589 = vand.u32 %v2079, 4294901760
      %v2590 = vsub.f32 %v2079, %v2589
      %v2591 = vand.u32 %v2590, 4294901760
      %v2592 = vsub.f32 %v2590, %v2591
      %v2593 = vand.u32 %v2592, 4294901760
      %2594 = vmatpush.msra.mxu0 %v2593
      %v2595 = vand.u32 %v2078, 4294901760
      %v2596 = vsub.f32 %v2078, %v2595
      %v2597 = vand.u32 %v2596, 4294901760
      %v2598 = vsub.f32 %v2596, %v2597
      %v2599 = vand.u32 %v2598, 4294901760
      %2600 = vmatpush.msra.mxu0 %v2599
      %v2601 = vand.u32 %v2077, 4294901760
      %v2602 = vsub.f32 %v2077, %v2601
      %v2603 = vand.u32 %v2602, 4294901760
      %v2604 = vsub.f32 %v2602, %v2603
      %v2605 = vand.u32 %v2604, 4294901760
      %2606 = vmatpush.msra.mxu0 %v2605
      %v2607 = vand.u32 %v2076, 4294901760
      %v2608 = vsub.f32 %v2076, %v2607
      %v2609 = vand.u32 %v2608, 4294901760
      %v2610 = vsub.f32 %v2608, %v2609
      %v2611 = vand.u32 %v2610, 4294901760
      %2612 = vmatpush.msra.mxu0 %v2611
      %v2613 = vand.u32 %v2058, 4294901760
      %2614 = vmatmul.f32.gmra.mxu0 %v2613
      %v2615 = vpop.f32.mrf.mxu0
      %v2616 = vadd.f32 %v2507, %v2615
      %v2617 = vand.u32 %v2059, 4294901760
      %2618 = vmatmul.f32.gmra.mxu0 %v2617
      %v2619 = vpop.f32.mrf.mxu0
      %v2620 = vadd.f32 %v2515, %v2619
      %2621 = vdwg.mxu0
      %v2622 = vand.u32 %v2091, 4294901760
      %v2623 = vsub.f32 %v2091, %v2622
      %2624 = vmatpush.msra.mxu0 %v2623
      %v2625 = vand.u32 %v2090, 4294901760
      %v2626 = vsub.f32 %v2090, %v2625
      %2627 = vmatpush.msra.mxu0 %v2626
      %v2628 = vand.u32 %v2089, 4294901760
      %v2629 = vsub.f32 %v2089, %v2628
      %2630 = vmatpush.msra.mxu0 %v2629
      %v2631 = vand.u32 %v2088, 4294901760
      %v2632 = vsub.f32 %v2088, %v2631
      %2633 = vmatpush.msra.mxu0 %v2632
      %v2634 = vand.u32 %v2087, 4294901760
      %v2635 = vsub.f32 %v2087, %v2634
      %2636 = vmatpush.msra.mxu0 %v2635
      %v2637 = vand.u32 %v2086, 4294901760
      %v2638 = vsub.f32 %v2086, %v2637
      %2639 = vmatpush.msra.mxu0 %v2638
      %v2640 = vand.u32 %v2085, 4294901760
      %v2641 = vsub.f32 %v2085, %v2640
      %2642 = vmatpush.msra.mxu0 %v2641
      %v2643 = vand.u32 %v2084, 4294901760
      %v2644 = vsub.f32 %v2084, %v2643
      %2645 = vmatpush.msra.mxu0 %v2644
      %v2646 = vand.u32 %v2083, 4294901760
      %v2647 = vsub.f32 %v2083, %v2646
      %2648 = vmatpush.msra.mxu0 %v2647
      %v2649 = vand.u32 %v2082, 4294901760
      %v2650 = vsub.f32 %v2082, %v2649
      %2651 = vmatpush.msra.mxu0 %v2650
      %v2652 = vand.u32 %v2081, 4294901760
      %v2653 = vsub.f32 %v2081, %v2652
      %2654 = vmatpush.msra.mxu0 %v2653
      %v2655 = vand.u32 %v2080, 4294901760
      %v2656 = vsub.f32 %v2080, %v2655
      %2657 = vmatpush.msra.mxu0 %v2656
      %v2658 = vand.u32 %v2079, 4294901760
      %v2659 = vsub.f32 %v2079, %v2658
      %2660 = vmatpush.msra.mxu0 %v2659
      %v2661 = vand.u32 %v2078, 4294901760
      %v2662 = vsub.f32 %v2078, %v2661
      %2663 = vmatpush.msra.mxu0 %v2662
      %v2664 = vand.u32 %v2077, 4294901760
      %v2665 = vsub.f32 %v2077, %v2664
      %2666 = vmatpush.msra.mxu0 %v2665
      %v2667 = vand.u32 %v2076, 4294901760
      %v2668 = vsub.f32 %v2076, %v2667
      %2669 = vmatpush.msra.mxu0 %v2668
      %v2670 = vand.u32 %v2058, 4294901760
      %v2671 = vsub.f32 %v2058, %v2670
      %2672 = vmatmul.f32.gmra.mxu0 %v2671
      %v2673 = vpop.f32.mrf.mxu0
      %v2674 = vadd.f32 %v2616, %v2673
      %v2675 = vand.u32 %v2059, 4294901760
      %v2676 = vsub.f32 %v2059, %v2675
      %2677 = vmatmul.f32.gmra.mxu0 %v2676
      %v2678 = vpop.f32.mrf.mxu0
      %v2679 = vadd.f32 %v2620, %v2678
      %2680 = vdwg.mxu0
      %v2681 = vand.u32 %v2091, 4294901760
      %2682 = vmatpush.msra.mxu0 %v2681
      %v2683 = vand.u32 %v2090, 4294901760
      %2684 = vmatpush.msra.mxu0 %v2683
      %v2685 = vand.u32 %v2089, 4294901760
      %2686 = vmatpush.msra.mxu0 %v2685
      %v2687 = vand.u32 %v2088, 4294901760
      %2688 = vmatpush.msra.mxu0 %v2687
      %v2689 = vand.u32 %v2087, 4294901760
      %2690 = vmatpush.msra.mxu0 %v2689
      %v2691 = vand.u32 %v2086, 4294901760
      %2692 = vmatpush.msra.mxu0 %v2691
      %v2693 = vand.u32 %v2085, 4294901760
      %2694 = vmatpush.msra.mxu0 %v2693
      %v2695 = vand.u32 %v2084, 4294901760
      %2696 = vmatpush.msra.mxu0 %v2695
      %v2697 = vand.u32 %v2083, 4294901760
      %2698 = vmatpush.msra.mxu0 %v2697
      %v2699 = vand.u32 %v2082, 4294901760
      %2700 = vmatpush.msra.mxu0 %v2699
      %v2701 = vand.u32 %v2081, 4294901760
      %2702 = vmatpush.msra.mxu0 %v2701
      %v2703 = vand.u32 %v2080, 4294901760
      %2704 = vmatpush.msra.mxu0 %v2703
      %v2705 = vand.u32 %v2079, 4294901760
      %2706 = vmatpush.msra.mxu0 %v2705
      %v2707 = vand.u32 %v2078, 4294901760
      %2708 = vmatpush.msra.mxu0 %v2707
      %v2709 = vand.u32 %v2077, 4294901760
      %2710 = vmatpush.msra.mxu0 %v2709
      %v2711 = vand.u32 %v2076, 4294901760
      %2712 = vmatpush.msra.mxu0 %v2711
      %v2713 = vand.u32 %v2058, 4294901760
      %v2714 = vsub.f32 %v2058, %v2713
      %v2715 = vand.u32 %v2714, 4294901760
      %2716 = vmatmul.f32.gmra.mxu0 %v2715
      %v2717 = vpop.f32.mrf.mxu0
      %v2718 = vadd.f32 %v2674, %v2717
      %v2719 = vand.u32 %v2059, 4294901760
      %v2720 = vsub.f32 %v2059, %v2719
      %v2721 = vand.u32 %v2720, 4294901760
      %2722 = vmatmul.f32.gmra.mxu0 %v2721
      %v2723 = vpop.f32.mrf.mxu0
      %v2724 = vadd.f32 %v2679, %v2723
      %2725 = vdwg.mxu0
      %v2726 = vand.u32 %v2091, 4294901760
      %v2727 = vsub.f32 %v2091, %v2726
      %v2728 = vand.u32 %v2727, 4294901760
      %2729 = vmatpush.msra.mxu0 %v2728
      %v2730 = vand.u32 %v2090, 4294901760
      %v2731 = vsub.f32 %v2090, %v2730
      %v2732 = vand.u32 %v2731, 4294901760
      %2733 = vmatpush.msra.mxu0 %v2732
      %v2734 = vand.u32 %v2089, 4294901760
      %v2735 = vsub.f32 %v2089, %v2734
      %v2736 = vand.u32 %v2735, 4294901760
      %2737 = vmatpush.msra.mxu0 %v2736
      %v2738 = vand.u32 %v2088, 4294901760
      %v2739 = vsub.f32 %v2088, %v2738
      %v2740 = vand.u32 %v2739, 4294901760
      %2741 = vmatpush.msra.mxu0 %v2740
      %v2742 = vand.u32 %v2087, 4294901760
      %v2743 = vsub.f32 %v2087, %v2742
      %v2744 = vand.u32 %v2743, 4294901760
      %2745 = vmatpush.msra.mxu0 %v2744
      %v2746 = vand.u32 %v2086, 4294901760
      %v2747 = vsub.f32 %v2086, %v2746
      %v2748 = vand.u32 %v2747, 4294901760
      %2749 = vmatpush.msra.mxu0 %v2748
      %v2750 = vand.u32 %v2085, 4294901760
      %v2751 = vsub.f32 %v2085, %v2750
      %v2752 = vand.u32 %v2751, 4294901760
      %2753 = vmatpush.msra.mxu0 %v2752
      %v2754 = vand.u32 %v2084, 4294901760
      %v2755 = vsub.f32 %v2084, %v2754
      %v2756 = vand.u32 %v2755, 4294901760
      %2757 = vmatpush.msra.mxu0 %v2756
      %v2758 = vand.u32 %v2083, 4294901760
      %v2759 = vsub.f32 %v2083, %v2758
      %v2760 = vand.u32 %v2759, 4294901760
      %2761 = vmatpush.msra.mxu0 %v2760
      %v2762 = vand.u32 %v2082, 4294901760
      %v2763 = vsub.f32 %v2082, %v2762
      %v2764 = vand.u32 %v2763, 4294901760
      %2765 = vmatpush.msra.mxu0 %v2764
      %v2766 = vand.u32 %v2081, 4294901760
      %v2767 = vsub.f32 %v2081, %v2766
      %v2768 = vand.u32 %v2767, 4294901760
      %2769 = vmatpush.msra.mxu0 %v2768
      %v2770 = vand.u32 %v2080, 4294901760
      %v2771 = vsub.f32 %v2080, %v2770
      %v2772 = vand.u32 %v2771, 4294901760
      %2773 = vmatpush.msra.mxu0 %v2772
      %v2774 = vand.u32 %v2079, 4294901760
      %v2775 = vsub.f32 %v2079, %v2774
      %v2776 = vand.u32 %v2775, 4294901760
      %2777 = vmatpush.msra.mxu0 %v2776
      %v2778 = vand.u32 %v2078, 4294901760
      %v2779 = vsub.f32 %v2078, %v2778
      %v2780 = vand.u32 %v2779, 4294901760
      %2781 = vmatpush.msra.mxu0 %v2780
      %v2782 = vand.u32 %v2077, 4294901760
      %v2783 = vsub.f32 %v2077, %v2782
      %v2784 = vand.u32 %v2783, 4294901760
      %2785 = vmatpush.msra.mxu0 %v2784
      %v2786 = vand.u32 %v2076, 4294901760
      %v2787 = vsub.f32 %v2076, %v2786
      %v2788 = vand.u32 %v2787, 4294901760
      %2789 = vmatpush.msra.mxu0 %v2788
      %v2790 = vand.u32 %v2058, 4294901760
      %2791 = vmatmul.f32.gmra.mxu0 %v2790
      %v2792 = vpop.f32.mrf.mxu0
      %v2793 = vadd.f32 %v2718, %v2792
      %v2794 = vand.u32 %v2059, 4294901760
      %2795 = vmatmul.f32.gmra.mxu0 %v2794
      %v2796 = vpop.f32.mrf.mxu0
      %v2797 = vadd.f32 %v2724, %v2796
      %2798 = vdwg.mxu0
      %v2799 = vand.u32 %v2091, 4294901760
      %2800 = vmatpush.msra.mxu0 %v2799
      %v2801 = vand.u32 %v2090, 4294901760
      %2802 = vmatpush.msra.mxu0 %v2801
      %v2803 = vand.u32 %v2089, 4294901760
      %2804 = vmatpush.msra.mxu0 %v2803
      %v2805 = vand.u32 %v2088, 4294901760
      %2806 = vmatpush.msra.mxu0 %v2805
      %v2807 = vand.u32 %v2087, 4294901760
      %2808 = vmatpush.msra.mxu0 %v2807
      %v2809 = vand.u32 %v2086, 4294901760
      %2810 = vmatpush.msra.mxu0 %v2809
      %v2811 = vand.u32 %v2085, 4294901760
      %2812 = vmatpush.msra.mxu0 %v2811
      %v2813 = vand.u32 %v2084, 4294901760
      %2814 = vmatpush.msra.mxu0 %v2813
      %v2815 = vand.u32 %v2083, 4294901760
      %2816 = vmatpush.msra.mxu0 %v2815
      %v2817 = vand.u32 %v2082, 4294901760
      %2818 = vmatpush.msra.mxu0 %v2817
      %v2819 = vand.u32 %v2081, 4294901760
      %2820 = vmatpush.msra.mxu0 %v2819
      %v2821 = vand.u32 %v2080, 4294901760
      %2822 = vmatpush.msra.mxu0 %v2821
      %v2823 = vand.u32 %v2079, 4294901760
      %2824 = vmatpush.msra.mxu0 %v2823
      %v2825 = vand.u32 %v2078, 4294901760
      %2826 = vmatpush.msra.mxu0 %v2825
      %v2827 = vand.u32 %v2077, 4294901760
      %2828 = vmatpush.msra.mxu0 %v2827
      %v2829 = vand.u32 %v2076, 4294901760
      %2830 = vmatpush.msra.mxu0 %v2829
      %v2831 = vand.u32 %v2058, 4294901760
      %2832 = vmatmul.f32.gmra.mxu0 %v2831
      %v2833 = vpop.f32.mrf.mxu0
      %v2834 = vadd.f32 %v2793, %v2833
      %v2835 = vand.u32 %v2059, 4294901760
      %2836 = vmatmul.f32.gmra.mxu0 %v2835
      %v2837 = vpop.f32.mrf.mxu0
      %v2838 = vadd.f32 %v2797, %v2837
      %2839 = vdwg.mxu0
      %v2840 = vmax.f32 %v2834, 0.0
      %v2841 = vmax.f32 %v2838, 0.0
      %2842 = vst [vmem:[#allocation2] sm:$0xff] %v491
      %2843 = vst [vmem:[#allocation3] sm:$0xff] %v2055
      %v2844 = vadd.f32 %v2840, %v2048
      %v2845 = vadd.f32 %v2841, %v2052
      %v2846 = vmax.f32 %v2844, 0.0
      %v2847 = vmax.f32 %v2845, 0.0
      %2848 = vst [vmem:[#allocation4 + $0x8] sm:$0xff] %v2846
      %2849 = vst [vmem:[#allocation4 + $0x10] sm:$0xff] %v2847
      %v2850 = vld [vmem:[#allocation4 + $0x6] sm:$0xff]
      %v2851 = vld [vmem:[#allocation4 + $0xe] sm:$0xff]
      %v2852 = vld [vmem:[%s5] sm:$0xff]
      %v2853 = vld [vmem:[%s5 + $0x8] sm:$0xff]
      %v2854 = vld [vmem:[%s5 + $0x10] sm:$0xff]
      %v2855 = vld [vmem:[%s5 + $0x18] sm:$0xff]
      %v2856 = vld [vmem:[%s5 + $0x20] sm:$0xff]
      %v2857 = vld [vmem:[%s5 + $0x28] sm:$0xff]
      %v2858 = vld [vmem:[%s5 + $0x30] sm:$0xff]
      %v2859 = vld [vmem:[%s5 + $0x38] sm:$0xff]
      %v2860 = vld [vmem:[%s5 + $0x40] sm:$0xff]
      %v2861 = vld [vmem:[%s5 + $0x48] sm:$0xff]
      %v2862 = vld [vmem:[%s5 + $0x50] sm:$0xff]
      %v2863 = vld [vmem:[%s5 + $0x58] sm:$0xff]
      %v2864 = vld [vmem:[%s5 + $0x60] sm:$0xff]
      %v2865 = vld [vmem:[%s5 + $0x68] sm:$0xff]
      %v2866 = vld [vmem:[%s5 + $0x70] sm:$0xff]
      %v2867 = vld [vmem:[%s5 + $0x78] sm:$0xff]
      %v2868 = vld [vmem:[%s5 + $0x80] sm:$0xff]
      %v2869 = vld [vmem:[%s5 + $0x88] sm:$0xff]
      %v2870 = vld [vmem:[%s5 + $0x90] sm:$0xff]
      %v2871 = vld [vmem:[%s5 + $0x98] sm:$0xff]
      %v2872 = vld [vmem:[%s5 + $0xa0] sm:$0xff]
      %v2873 = vld [vmem:[%s5 + $0xa8] sm:$0xff]
      %v2874 = vld [vmem:[%s5 + $0xb0] sm:$0xff]
      %v2875 = vld [vmem:[%s5 + $0xb8] sm:$0xff]
      %v2876 = vld [vmem:[%s5 + $0xc0] sm:$0xff]
      %v2877 = vld [vmem:[%s5 + $0xc8] sm:$0xff]
      %v2878 = vld [vmem:[%s5 + $0xd0] sm:$0xff]
      %v2879 = vld [vmem:[%s5 + $0xd8] sm:$0xff]
      %v2880 = vld [vmem:[%s5 + $0xe0] sm:$0xff]
      %v2881 = vld [vmem:[%s5 + $0xe8] sm:$0xff]
      %v2882 = vld [vmem:[%s5 + $0xf0] sm:$0xff]
      %v2883 = vld [vmem:[%s5 + $0xf8] sm:$0xff]
      %v2884 = vld [vmem:[%s6] sm:$0x1]
      %v2886 = vperm.slane %v2884, 0
      %v2888 = vand.u32 %v2867, 4294901760
      %2889 = vmatpush.msra.mxu0 %v2888
      %v2890 = vand.u32 %v2866, 4294901760
      %2891 = vmatpush.msra.mxu0 %v2890
      %v2892 = vand.u32 %v2865, 4294901760
      %2893 = vmatpush.msra.mxu0 %v2892
      %v2894 = vand.u32 %v2864, 4294901760
      %2895 = vmatpush.msra.mxu0 %v2894
      %v2896 = vand.u32 %v2863, 4294901760
      %2897 = vmatpush.msra.mxu0 %v2896
      %v2898 = vand.u32 %v2862, 4294901760
      %2899 = vmatpush.msra.mxu0 %v2898
      %v2900 = vand.u32 %v2861, 4294901760
      %2901 = vmatpush.msra.mxu0 %v2900
      %v2902 = vand.u32 %v2860, 4294901760
      %2903 = vmatpush.msra.mxu0 %v2902
      %v2904 = vand.u32 %v2859, 4294901760
      %2905 = vmatpush.msra.mxu0 %v2904
      %v2906 = vand.u32 %v2858, 4294901760
      %2907 = vmatpush.msra.mxu0 %v2906
      %v2908 = vand.u32 %v2857, 4294901760
      %2909 = vmatpush.msra.mxu0 %v2908
      %v2910 = vand.u32 %v2856, 4294901760
      %2911 = vmatpush.msra.mxu0 %v2910
      %v2912 = vand.u32 %v2855, 4294901760
      %2913 = vmatpush.msra.mxu0 %v2912
      %v2914 = vand.u32 %v2854, 4294901760
      %2915 = vmatpush.msra.mxu0 %v2914
      %v2916 = vand.u32 %v2853, 4294901760
      %2917 = vmatpush.msra.mxu0 %v2916
      %v2918 = vand.u32 %v2852, 4294901760
      %2919 = vmatpush.msra.mxu0 %v2918
      %v2920 = vand.u32 %v2846, 4294901760
      %v2921 = vsub.f32 %v2846, %v2920
      %v2922 = vand.u32 %v2921, 4294901760
      %v2923 = vsub.f32 %v2921, %v2922
      %v2924 = vand.u32 %v2923, 4294901760
      %2925 = vmatmul.f32.gmra.mxu0 %v2924
      %v2926 = vpop.f32.mrf.mxu0
      %v2927 = vadd.f32 %v2886, %v2926
      %v2928 = vand.u32 %v2847, 4294901760
      %v2929 = vsub.f32 %v2847, %v2928
      %v2930 = vand.u32 %v2929, 4294901760
      %v2931 = vsub.f32 %v2929, %v2930
      %v2932 = vand.u32 %v2931, 4294901760
      %2933 = vmatmul.f32.gmra.mxu0 %v2932
      %v2934 = vpop.f32.mrf.mxu0
      %v2935 = vadd.f32 %v2886, %v2934
      %2936 = vdwg.mxu0
      %v2937 = vand.u32 %v2867, 4294901760
      %v2938 = vsub.f32 %v2867, %v2937
      %v2939 = vand.u32 %v2938, 4294901760
      %v2940 = vsub.f32 %v2938, %v2939
      %v2941 = vand.u32 %v2940, 4294901760
      %2942 = vmatpush.msra.mxu0 %v2941
      %v2943 = vand.u32 %v2866, 4294901760
      %v2944 = vsub.f32 %v2866, %v2943
      %v2945 = vand.u32 %v2944, 4294901760
      %v2946 = vsub.f32 %v2944, %v2945
      %v2947 = vand.u32 %v2946, 4294901760
      %2948 = vmatpush.msra.mxu0 %v2947
      %v2949 = vand.u32 %v2865, 4294901760
      %v2950 = vsub.f32 %v2865, %v2949
      %v2951 = vand.u32 %v2950, 4294901760
      %v2952 = vsub.f32 %v2950, %v2951
      %v2953 = vand.u32 %v2952, 4294901760
      %2954 = vmatpush.msra.mxu0 %v2953
      %v2955 = vand.u32 %v2864, 4294901760
      %v2956 = vsub.f32 %v2864, %v2955
      %v2957 = vand.u32 %v2956, 4294901760
      %v2958 = vsub.f32 %v2956, %v2957
      %v2959 = vand.u32 %v2958, 4294901760
      %2960 = vmatpush.msra.mxu0 %v2959
      %v2961 = vand.u32 %v2863, 4294901760
      %v2962 = vsub.f32 %v2863, %v2961
      %v2963 = vand.u32 %v2962, 4294901760
      %v2964 = vsub.f32 %v2962, %v2963
      %v2965 = vand.u32 %v2964, 4294901760
      %2966 = vmatpush.msra.mxu0 %v2965
      %v2967 = vand.u32 %v2862, 4294901760
      %v2968 = vsub.f32 %v2862, %v2967
      %v2969 = vand.u32 %v2968, 4294901760
      %v2970 = vsub.f32 %v2968, %v2969
      %v2971 = vand.u32 %v2970, 4294901760
      %2972 = vmatpush.msra.mxu0 %v2971
      %v2973 = vand.u32 %v2861, 4294901760
      %v2974 = vsub.f32 %v2861, %v2973
      %v2975 = vand.u32 %v2974, 4294901760
      %v2976 = vsub.f32 %v2974, %v2975
      %v2977 = vand.u32 %v2976, 4294901760
      %2978 = vmatpush.msra.mxu0 %v2977
      %v2979 = vand.u32 %v2860, 4294901760
      %v2980 = vsub.f32 %v2860, %v2979
      %v2981 = vand.u32 %v2980, 4294901760
      %v2982 = vsub.f32 %v2980, %v2981
      %v2983 = vand.u32 %v2982, 4294901760
      %2984 = vmatpush.msra.mxu0 %v2983
      %v2985 = vand.u32 %v2859, 4294901760
      %v2986 = vsub.f32 %v2859, %v2985
      %v2987 = vand.u32 %v2986, 4294901760
      %v2988 = vsub.f32 %v2986, %v2987
      %v2989 = vand.u32 %v2988, 4294901760
      %2990 = vmatpush.msra.mxu0 %v2989
      %v2991 = vand.u32 %v2858, 4294901760
      %v2992 = vsub.f32 %v2858, %v2991
      %v2993 = vand.u32 %v2992, 4294901760
      %v2994 = vsub.f32 %v2992, %v2993
      %v2995 = vand.u32 %v2994, 4294901760
      %2996 = vmatpush.msra.mxu0 %v2995
      %v2997 = vand.u32 %v2857, 4294901760
      %v2998 = vsub.f32 %v2857, %v2997
      %v2999 = vand.u32 %v2998, 4294901760
      %v3000 = vsub.f32 %v2998, %v2999
      %v3001 = vand.u32 %v3000, 4294901760
      %3002 = vmatpush.msra.mxu0 %v3001
      %v3003 = vand.u32 %v2856, 4294901760
      %v3004 = vsub.f32 %v2856, %v3003
      %v3005 = vand.u32 %v3004, 4294901760
      %v3006 = vsub.f32 %v3004, %v3005
      %v3007 = vand.u32 %v3006, 4294901760
      %3008 = vmatpush.msra.mxu0 %v3007
      %v3009 = vand.u32 %v2855, 4294901760
      %v3010 = vsub.f32 %v2855, %v3009
      %v3011 = vand.u32 %v3010, 4294901760
      %v3012 = vsub.f32 %v3010, %v3011
      %v3013 = vand.u32 %v3012, 4294901760
      %3014 = vmatpush.msra.mxu0 %v3013
      %v3015 = vand.u32 %v2854, 4294901760
      %v3016 = vsub.f32 %v2854, %v3015
      %v3017 = vand.u32 %v3016, 4294901760
      %v3018 = vsub.f32 %v3016, %v3017
      %v3019 = vand.u32 %v3018, 4294901760
      %3020 = vmatpush.msra.mxu0 %v3019
      %v3021 = vand.u32 %v2853, 4294901760
      %v3022 = vsub.f32 %v2853, %v3021
      %v3023 = vand.u32 %v3022, 4294901760
      %v3024 = vsub.f32 %v3022, %v3023
      %v3025 = vand.u32 %v3024, 4294901760
      %3026 = vmatpush.msra.mxu0 %v3025
      %v3027 = vand.u32 %v2852, 4294901760
      %v3028 = vsub.f32 %v2852, %v3027
      %v3029 = vand.u32 %v3028, 4294901760
      %v3030 = vsub.f32 %v3028, %v3029
      %v3031 = vand.u32 %v3030, 4294901760
      %3032 = vmatpush.msra.mxu0 %v3031
      %v3033 = vand.u32 %v2846, 4294901760
      %3034 = vmatmul.f32.gmra.mxu0 %v3033
      %v3035 = vpop.f32.mrf.mxu0
      %v3036 = vadd.f32 %v2927, %v3035
      %v3037 = vand.u32 %v2847, 4294901760
      %3038 = vmatmul.f32.gmra.mxu0 %v3037
      %v3039 = vpop.f32.mrf.mxu0
      %v3040 = vadd.f32 %v2935, %v3039
      %3041 = vdwg.mxu0
      %v3042 = vand.u32 %v2867, 4294901760
      %v3043 = vsub.f32 %v2867, %v3042
      %3044 = vmatpush.msra.mxu0 %v3043
      %v3045 = vand.u32 %v2866, 4294901760
      %v3046 = vsub.f32 %v2866, %v3045
      %3047 = vmatpush.msra.mxu0 %v3046
      %v3048 = vand.u32 %v2865, 4294901760
      %v3049 = vsub.f32 %v2865, %v3048
      %3050 = vmatpush.msra.mxu0 %v3049
      %v3051 = vand.u32 %v2864, 4294901760
      %v3052 = vsub.f32 %v2864, %v3051
      %3053 = vmatpush.msra.mxu0 %v3052
      %v3054 = vand.u32 %v2863, 4294901760
      %v3055 = vsub.f32 %v2863, %v3054
      %3056 = vmatpush.msra.mxu0 %v3055
      %v3057 = vand.u32 %v2862, 4294901760
      %v3058 = vsub.f32 %v2862, %v3057
      %3059 = vmatpush.msra.mxu0 %v3058
      %v3060 = vand.u32 %v2861, 4294901760
      %v3061 = vsub.f32 %v2861, %v3060
      %3062 = vmatpush.msra.mxu0 %v3061
      %v3063 = vand.u32 %v2860, 4294901760
      %v3064 = vsub.f32 %v2860, %v3063
      %3065 = vmatpush.msra.mxu0 %v3064
      %v3066 = vand.u32 %v2859, 4294901760
      %v3067 = vsub.f32 %v2859, %v3066
      %3068 = vmatpush.msra.mxu0 %v3067
      %v3069 = vand.u32 %v2858, 4294901760
      %v3070 = vsub.f32 %v2858, %v3069
      %3071 = vmatpush.msra.mxu0 %v3070
      %v3072 = vand.u32 %v2857, 4294901760
      %v3073 = vsub.f32 %v2857, %v3072
      %3074 = vmatpush.msra.mxu0 %v3073
      %v3075 = vand.u32 %v2856, 4294901760
      %v3076 = vsub.f32 %v2856, %v3075
      %3077 = vmatpush.msra.mxu0 %v3076
      %v3078 = vand.u32 %v2855, 4294901760
      %v3079 = vsub.f32 %v2855, %v3078
      %3080 = vmatpush.msra.mxu0 %v3079
      %v3081 = vand.u32 %v2854, 4294901760
      %v3082 = vsub.f32 %v2854, %v3081
      %3083 = vmatpush.msra.mxu0 %v3082
      %v3084 = vand.u32 %v2853, 4294901760
      %v3085 = vsub.f32 %v2853, %v3084
      %3086 = vmatpush.msra.mxu0 %v3085
      %v3087 = vand.u32 %v2852, 4294901760
      %v3088 = vsub.f32 %v2852, %v3087
      %3089 = vmatpush.msra.mxu0 %v3088
      %v3090 = vand.u32 %v2846, 4294901760
      %v3091 = vsub.f32 %v2846, %v3090
      %3092 = vmatmul.f32.gmra.mxu0 %v3091
      %v3093 = vpop.f32.mrf.mxu0
      %v3094 = vadd.f32 %v3036, %v3093
      %v3095 = vand.u32 %v2847, 4294901760
      %v3096 = vsub.f32 %v2847, %v3095
      %3097 = vmatmul.f32.gmra.mxu0 %v3096
      %v3098 = vpop.f32.mrf.mxu0
      %v3099 = vadd.f32 %v3040, %v3098
      %3100 = vdwg.mxu0
      %v3101 = vand.u32 %v2867, 4294901760
      %3102 = vmatpush.msra.mxu0 %v3101
      %v3103 = vand.u32 %v2866, 4294901760
      %3104 = vmatpush.msra.mxu0 %v3103
      %v3105 = vand.u32 %v2865, 4294901760
      %3106 = vmatpush.msra.mxu0 %v3105
      %v3107 = vand.u32 %v2864, 4294901760
      %3108 = vmatpush.msra.mxu0 %v3107
      %v3109 = vand.u32 %v2863, 4294901760
      %3110 = vmatpush.msra.mxu0 %v3109
      %v3111 = vand.u32 %v2862, 4294901760
      %3112 = vmatpush.msra.mxu0 %v3111
      %v3113 = vand.u32 %v2861, 4294901760
      %3114 = vmatpush.msra.mxu0 %v3113
      %v3115 = vand.u32 %v2860, 4294901760
      %3116 = vmatpush.msra.mxu0 %v3115
      %v3117 = vand.u32 %v2859, 4294901760
      %3118 = vmatpush.msra.mxu0 %v3117
      %v3119 = vand.u32 %v2858, 4294901760
      %3120 = vmatpush.msra.mxu0 %v3119
      %v3121 = vand.u32 %v2857, 4294901760
      %3122 = vmatpush.msra.mxu0 %v3121
      %v3123 = vand.u32 %v2856, 4294901760
      %3124 = vmatpush.msra.mxu0 %v3123
      %v3125 = vand.u32 %v2855, 4294901760
      %3126 = vmatpush.msra.mxu0 %v3125
      %v3127 = vand.u32 %v2854, 4294901760
      %3128 = vmatpush.msra.mxu0 %v3127
      %v3129 = vand.u32 %v2853, 4294901760
      %3130 = vmatpush.msra.mxu0 %v3129
      %v3131 = vand.u32 %v2852, 4294901760
      %3132 = vmatpush.msra.mxu0 %v3131
      %v3133 = vand.u32 %v2846, 4294901760
      %v3134 = vsub.f32 %v2846, %v3133
      %v3135 = vand.u32 %v3134, 4294901760
      %3136 = vmatmul.f32.gmra.mxu0 %v3135
      %v3137 = vpop.f32.mrf.mxu0
      %v3138 = vadd.f32 %v3094, %v3137
      %v3139 = vand.u32 %v2847, 4294901760
      %v3140 = vsub.f32 %v2847, %v3139
      %v3141 = vand.u32 %v3140, 4294901760
      %3142 = vmatmul.f32.gmra.mxu0 %v3141
      %v3143 = vpop.f32.mrf.mxu0
      %v3144 = vadd.f32 %v3099, %v3143
      %3145 = vdwg.mxu0
      %v3146 = vand.u32 %v2867, 4294901760
      %v3147 = vsub.f32 %v2867, %v3146
      %v3148 = vand.u32 %v3147, 4294901760
      %3149 = vmatpush.msra.mxu0 %v3148
      %v3150 = vand.u32 %v2866, 4294901760
      %v3151 = vsub.f32 %v2866, %v3150
      %v3152 = vand.u32 %v3151, 4294901760
      %3153 = vmatpush.msra.mxu0 %v3152
      %v3154 = vand.u32 %v2865, 4294901760
      %v3155 = vsub.f32 %v2865, %v3154
      %v3156 = vand.u32 %v3155, 4294901760
      %3157 = vmatpush.msra.mxu0 %v3156
      %v3158 = vand.u32 %v2864, 4294901760
      %v3159 = vsub.f32 %v2864, %v3158
      %v3160 = vand.u32 %v3159, 4294901760
      %3161 = vmatpush.msra.mxu0 %v3160
      %v3162 = vand.u32 %v2863, 4294901760
      %v3163 = vsub.f32 %v2863, %v3162
      %v3164 = vand.u32 %v3163, 4294901760
      %3165 = vmatpush.msra.mxu0 %v3164
      %v3166 = vand.u32 %v2862, 4294901760
      %v3167 = vsub.f32 %v2862, %v3166
      %v3168 = vand.u32 %v3167, 4294901760
      %3169 = vmatpush.msra.mxu0 %v3168
      %v3170 = vand.u32 %v2861, 4294901760
      %v3171 = vsub.f32 %v2861, %v3170
      %v3172 = vand.u32 %v3171, 4294901760
      %3173 = vmatpush.msra.mxu0 %v3172
      %v3174 = vand.u32 %v2860, 4294901760
      %v3175 = vsub.f32 %v2860, %v3174
      %v3176 = vand.u32 %v3175, 4294901760
      %3177 = vmatpush.msra.mxu0 %v3176
      %v3178 = vand.u32 %v2859, 4294901760
      %v3179 = vsub.f32 %v2859, %v3178
      %v3180 = vand.u32 %v3179, 4294901760
      %3181 = vmatpush.msra.mxu0 %v3180
      %v3182 = vand.u32 %v2858, 4294901760
      %v3183 = vsub.f32 %v2858, %v3182
      %v3184 = vand.u32 %v3183, 4294901760
      %3185 = vmatpush.msra.mxu0 %v3184
      %v3186 = vand.u32 %v2857, 4294901760
      %v3187 = vsub.f32 %v2857, %v3186
      %v3188 = vand.u32 %v3187, 4294901760
      %3189 = vmatpush.msra.mxu0 %v3188
      %v3190 = vand.u32 %v2856, 4294901760
      %v3191 = vsub.f32 %v2856, %v3190
      %v3192 = vand.u32 %v3191, 4294901760
      %3193 = vmatpush.msra.mxu0 %v3192
      %v3194 = vand.u32 %v2855, 4294901760
      %v3195 = vsub.f32 %v2855, %v3194
      %v3196 = vand.u32 %v3195, 4294901760
      %3197 = vmatpush.msra.mxu0 %v3196
      %v3198 = vand.u32 %v2854, 4294901760
      %v3199 = vsub.f32 %v2854, %v3198
      %v3200 = vand.u32 %v3199, 4294901760
      %3201 = vmatpush.msra.mxu0 %v3200
      %v3202 = vand.u32 %v2853, 4294901760
      %v3203 = vsub.f32 %v2853, %v3202
      %v3204 = vand.u32 %v3203, 4294901760
      %3205 = vmatpush.msra.mxu0 %v3204
      %v3206 = vand.u32 %v2852, 4294901760
      %v3207 = vsub.f32 %v2852, %v3206
      %v3208 = vand.u32 %v3207, 4294901760
      %3209 = vmatpush.msra.mxu0 %v3208
      %v3210 = vand.u32 %v2846, 4294901760
      %3211 = vmatmul.f32.gmra.mxu0 %v3210
      %v3212 = vpop.f32.mrf.mxu0
      %v3213 = vadd.f32 %v3138, %v3212
      %v3214 = vand.u32 %v2847, 4294901760
      %3215 = vmatmul.f32.gmra.mxu0 %v3214
      %v3216 = vpop.f32.mrf.mxu0
      %v3217 = vadd.f32 %v3144, %v3216
      %3218 = vdwg.mxu0
      %v3219 = vand.u32 %v2867, 4294901760
      %3220 = vmatpush.msra.mxu0 %v3219
      %v3221 = vand.u32 %v2866, 4294901760
      %3222 = vmatpush.msra.mxu0 %v3221
      %v3223 = vand.u32 %v2865, 4294901760
      %3224 = vmatpush.msra.mxu0 %v3223
      %v3225 = vand.u32 %v2864, 4294901760
      %3226 = vmatpush.msra.mxu0 %v3225
      %v3227 = vand.u32 %v2863, 4294901760
      %3228 = vmatpush.msra.mxu0 %v3227
      %v3229 = vand.u32 %v2862, 4294901760
      %3230 = vmatpush.msra.mxu0 %v3229
      %v3231 = vand.u32 %v2861, 4294901760
      %3232 = vmatpush.msra.mxu0 %v3231
      %v3233 = vand.u32 %v2860, 4294901760
      %3234 = vmatpush.msra.mxu0 %v3233
      %v3235 = vand.u32 %v2859, 4294901760
      %3236 = vmatpush.msra.mxu0 %v3235
      %v3237 = vand.u32 %v2858, 4294901760
      %3238 = vmatpush.msra.mxu0 %v3237
      %v3239 = vand.u32 %v2857, 4294901760
      %3240 = vmatpush.msra.mxu0 %v3239
      %v3241 = vand.u32 %v2856, 4294901760
      %3242 = vmatpush.msra.mxu0 %v3241
      %v3243 = vand.u32 %v2855, 4294901760
      %3244 = vmatpush.msra.mxu0 %v3243
      %v3245 = vand.u32 %v2854, 4294901760
      %3246 = vmatpush.msra.mxu0 %v3245
      %v3247 = vand.u32 %v2853, 4294901760
      %3248 = vmatpush.msra.mxu0 %v3247
      %v3249 = vand.u32 %v2852, 4294901760
      %3250 = vmatpush.msra.mxu0 %v3249
      %v3251 = vand.u32 %v2846, 4294901760
      %3252 = vmatmul.f32.gmra.mxu0 %v3251
      %v3253 = vpop.f32.mrf.mxu0
      %v3254 = vadd.f32 %v3213, %v3253
      %v3255 = vand.u32 %v2847, 4294901760
      %3256 = vmatmul.f32.gmra.mxu0 %v3255
      %v3257 = vpop.f32.mrf.mxu0
      %v3258 = vadd.f32 %v3217, %v3257
      %3259 = vdwg.mxu0
      %v3260 = vand.u32 %v2883, 4294901760
      %3261 = vmatpush.msra.mxu0 %v3260
      %v3262 = vand.u32 %v2882, 4294901760
      %3263 = vmatpush.msra.mxu0 %v3262
      %v3264 = vand.u32 %v2881, 4294901760
      %3265 = vmatpush.msra.mxu0 %v3264
      %v3266 = vand.u32 %v2880, 4294901760
      %3267 = vmatpush.msra.mxu0 %v3266
      %v3268 = vand.u32 %v2879, 4294901760
      %3269 = vmatpush.msra.mxu0 %v3268
      %v3270 = vand.u32 %v2878, 4294901760
      %3271 = vmatpush.msra.mxu0 %v3270
      %v3272 = vand.u32 %v2877, 4294901760
      %3273 = vmatpush.msra.mxu0 %v3272
      %v3274 = vand.u32 %v2876, 4294901760
      %3275 = vmatpush.msra.mxu0 %v3274
      %v3276 = vand.u32 %v2875, 4294901760
      %3277 = vmatpush.msra.mxu0 %v3276
      %v3278 = vand.u32 %v2874, 4294901760
      %3279 = vmatpush.msra.mxu0 %v3278
      %v3280 = vand.u32 %v2873, 4294901760
      %3281 = vmatpush.msra.mxu0 %v3280
      %v3282 = vand.u32 %v2872, 4294901760
      %3283 = vmatpush.msra.mxu0 %v3282
      %v3284 = vand.u32 %v2871, 4294901760
      %3285 = vmatpush.msra.mxu0 %v3284
      %v3286 = vand.u32 %v2870, 4294901760
      %3287 = vmatpush.msra.mxu0 %v3286
      %v3288 = vand.u32 %v2869, 4294901760
      %3289 = vmatpush.msra.mxu0 %v3288
      %v3290 = vand.u32 %v2868, 4294901760
      %3291 = vmatpush.msra.mxu0 %v3290
      %v3292 = vand.u32 %v2850, 4294901760
      %v3293 = vsub.f32 %v2850, %v3292
      %v3294 = vand.u32 %v3293, 4294901760
      %v3295 = vsub.f32 %v3293, %v3294
      %v3296 = vand.u32 %v3295, 4294901760
      %3297 = vmatmul.f32.gmra.mxu0 %v3296
      %v3298 = vpop.f32.mrf.mxu0
      %v3299 = vadd.f32 %v3254, %v3298
      %v3300 = vand.u32 %v2851, 4294901760
      %v3301 = vsub.f32 %v2851, %v3300
      %v3302 = vand.u32 %v3301, 4294901760
      %v3303 = vsub.f32 %v3301, %v3302
      %v3304 = vand.u32 %v3303, 4294901760
      %3305 = vmatmul.f32.gmra.mxu0 %v3304
      %v3306 = vpop.f32.mrf.mxu0
      %v3307 = vadd.f32 %v3258, %v3306
      %3308 = vdwg.mxu0
      %v3309 = vand.u32 %v2883, 4294901760
      %v3310 = vsub.f32 %v2883, %v3309
      %v3311 = vand.u32 %v3310, 4294901760
      %v3312 = vsub.f32 %v3310, %v3311
      %v3313 = vand.u32 %v3312, 4294901760
      %3314 = vmatpush.msra.mxu0 %v3313
      %v3315 = vand.u32 %v2882, 4294901760
      %v3316 = vsub.f32 %v2882, %v3315
      %v3317 = vand.u32 %v3316, 4294901760
      %v3318 = vsub.f32 %v3316, %v3317
      %v3319 = vand.u32 %v3318, 4294901760
      %3320 = vmatpush.msra.mxu0 %v3319
      %v3321 = vand.u32 %v2881, 4294901760
      %v3322 = vsub.f32 %v2881, %v3321
      %v3323 = vand.u32 %v3322, 4294901760
      %v3324 = vsub.f32 %v3322, %v3323
      %v3325 = vand.u32 %v3324, 4294901760
      %3326 = vmatpush.msra.mxu0 %v3325
      %v3327 = vand.u32 %v2880, 4294901760
      %v3328 = vsub.f32 %v2880, %v3327
      %v3329 = vand.u32 %v3328, 4294901760
      %v3330 = vsub.f32 %v3328, %v3329
      %v3331 = vand.u32 %v3330, 4294901760
      %3332 = vmatpush.msra.mxu0 %v3331
      %v3333 = vand.u32 %v2879, 4294901760
      %v3334 = vsub.f32 %v2879, %v3333
      %v3335 = vand.u32 %v3334, 4294901760
      %v3336 = vsub.f32 %v3334, %v3335
      %v3337 = vand.u32 %v3336, 4294901760
      %3338 = vmatpush.msra.mxu0 %v3337
      %v3339 = vand.u32 %v2878, 4294901760
      %v3340 = vsub.f32 %v2878, %v3339
      %v3341 = vand.u32 %v3340, 4294901760
      %v3342 = vsub.f32 %v3340, %v3341
      %v3343 = vand.u32 %v3342, 4294901760
      %3344 = vmatpush.msra.mxu0 %v3343
      %v3345 = vand.u32 %v2877, 4294901760
      %v3346 = vsub.f32 %v2877, %v3345
      %v3347 = vand.u32 %v3346, 4294901760
      %v3348 = vsub.f32 %v3346, %v3347
      %v3349 = vand.u32 %v3348, 4294901760
      %3350 = vmatpush.msra.mxu0 %v3349
      %v3351 = vand.u32 %v2876, 4294901760
      %v3352 = vsub.f32 %v2876, %v3351
      %v3353 = vand.u32 %v3352, 4294901760
      %v3354 = vsub.f32 %v3352, %v3353
      %v3355 = vand.u32 %v3354, 4294901760
      %3356 = vmatpush.msra.mxu0 %v3355
      %v3357 = vand.u32 %v2875, 4294901760
      %v3358 = vsub.f32 %v2875, %v3357
      %v3359 = vand.u32 %v3358, 4294901760
      %v3360 = vsub.f32 %v3358, %v3359
      %v3361 = vand.u32 %v3360, 4294901760
      %3362 = vmatpush.msra.mxu0 %v3361
      %v3363 = vand.u32 %v2874, 4294901760
      %v3364 = vsub.f32 %v2874, %v3363
      %v3365 = vand.u32 %v3364, 4294901760
      %v3366 = vsub.f32 %v3364, %v3365
      %v3367 = vand.u32 %v3366, 4294901760
      %3368 = vmatpush.msra.mxu0 %v3367
      %v3369 = vand.u32 %v2873, 4294901760
      %v3370 = vsub.f32 %v2873, %v3369
      %v3371 = vand.u32 %v3370, 4294901760
      %v3372 = vsub.f32 %v3370, %v3371
      %v3373 = vand.u32 %v3372, 4294901760
      %3374 = vmatpush.msra.mxu0 %v3373
      %v3375 = vand.u32 %v2872, 4294901760
      %v3376 = vsub.f32 %v2872, %v3375
      %v3377 = vand.u32 %v3376, 4294901760
      %v3378 = vsub.f32 %v3376, %v3377
      %v3379 = vand.u32 %v3378, 4294901760
      %3380 = vmatpush.msra.mxu0 %v3379
      %v3381 = vand.u32 %v2871, 4294901760
      %v3382 = vsub.f32 %v2871, %v3381
      %v3383 = vand.u32 %v3382, 4294901760
      %v3384 = vsub.f32 %v3382, %v3383
      %v3385 = vand.u32 %v3384, 4294901760
      %3386 = vmatpush.msra.mxu0 %v3385
      %v3387 = vand.u32 %v2870, 4294901760
      %v3388 = vsub.f32 %v2870, %v3387
      %v3389 = vand.u32 %v3388, 4294901760
      %v3390 = vsub.f32 %v3388, %v3389
      %v3391 = vand.u32 %v3390, 4294901760
      %3392 = vmatpush.msra.mxu0 %v3391
      %v3393 = vand.u32 %v2869, 4294901760
      %v3394 = vsub.f32 %v2869, %v3393
      %v3395 = vand.u32 %v3394, 4294901760
      %v3396 = vsub.f32 %v3394, %v3395
      %v3397 = vand.u32 %v3396, 4294901760
      %3398 = vmatpush.msra.mxu0 %v3397
      %v3399 = vand.u32 %v2868, 4294901760
      %v3400 = vsub.f32 %v2868, %v3399
      %v3401 = vand.u32 %v3400, 4294901760
      %v3402 = vsub.f32 %v3400, %v3401
      %v3403 = vand.u32 %v3402, 4294901760
      %3404 = vmatpush.msra.mxu0 %v3403
      %v3405 = vand.u32 %v2850, 4294901760
      %3406 = vmatmul.f32.gmra.mxu0 %v3405
      %v3407 = vpop.f32.mrf.mxu0
      %v3408 = vadd.f32 %v3299, %v3407
      %v3409 = vand.u32 %v2851, 4294901760
      %3410 = vmatmul.f32.gmra.mxu0 %v3409
      %v3411 = vpop.f32.mrf.mxu0
      %v3412 = vadd.f32 %v3307, %v3411
      %3413 = vdwg.mxu0
      %v3414 = vand.u32 %v2883, 4294901760
      %v3415 = vsub.f32 %v2883, %v3414
      %3416 = vmatpush.msra.mxu0 %v3415
      %v3417 = vand.u32 %v2882, 4294901760
      %v3418 = vsub.f32 %v2882, %v3417
      %3419 = vmatpush.msra.mxu0 %v3418
      %v3420 = vand.u32 %v2881, 4294901760
      %v3421 = vsub.f32 %v2881, %v3420
      %3422 = vmatpush.msra.mxu0 %v3421
      %v3423 = vand.u32 %v2880, 4294901760
      %v3424 = vsub.f32 %v2880, %v3423
      %3425 = vmatpush.msra.mxu0 %v3424
      %v3426 = vand.u32 %v2879, 4294901760
      %v3427 = vsub.f32 %v2879, %v3426
      %3428 = vmatpush.msra.mxu0 %v3427
      %v3429 = vand.u32 %v2878, 4294901760
      %v3430 = vsub.f32 %v2878, %v3429
      %3431 = vmatpush.msra.mxu0 %v3430
      %v3432 = vand.u32 %v2877, 4294901760
      %v3433 = vsub.f32 %v2877, %v3432
      %3434 = vmatpush.msra.mxu0 %v3433
      %v3435 = vand.u32 %v2876, 4294901760
      %v3436 = vsub.f32 %v2876, %v3435
      %3437 = vmatpush.msra.mxu0 %v3436
      %v3438 = vand.u32 %v2875, 4294901760
      %v3439 = vsub.f32 %v2875, %v3438
      %3440 = vmatpush.msra.mxu0 %v3439
      %v3441 = vand.u32 %v2874, 4294901760
      %v3442 = vsub.f32 %v2874, %v3441
      %3443 = vmatpush.msra.mxu0 %v3442
      %v3444 = vand.u32 %v2873, 4294901760
      %v3445 = vsub.f32 %v2873, %v3444
      %3446 = vmatpush.msra.mxu0 %v3445
      %v3447 = vand.u32 %v2872, 4294901760
      %v3448 = vsub.f32 %v2872, %v3447
      %3449 = vmatpush.msra.mxu0 %v3448
      %v3450 = vand.u32 %v2871, 4294901760
      %v3451 = vsub.f32 %v2871, %v3450
      %3452 = vmatpush.msra.mxu0 %v3451
      %v3453 = vand.u32 %v2870, 4294901760
      %v3454 = vsub.f32 %v2870, %v3453
      %3455 = vmatpush.msra.mxu0 %v3454
      %v3456 = vand.u32 %v2869, 4294901760
      %v3457 = vsub.f32 %v2869, %v3456
      %3458 = vmatpush.msra.mxu0 %v3457
      %v3459 = vand.u32 %v2868, 4294901760
      %v3460 = vsub.f32 %v2868, %v3459
      %3461 = vmatpush.msra.mxu0 %v3460
      %v3462 = vand.u32 %v2850, 4294901760
      %v3463 = vsub.f32 %v2850, %v3462
      %3464 = vmatmul.f32.gmra.mxu0 %v3463
      %v3465 = vpop.f32.mrf.mxu0
      %v3466 = vadd.f32 %v3408, %v3465
      %v3467 = vand.u32 %v2851, 4294901760
      %v3468 = vsub.f32 %v2851, %v3467
      %3469 = vmatmul.f32.gmra.mxu0 %v3468
      %v3470 = vpop.f32.mrf.mxu0
      %v3471 = vadd.f32 %v3412, %v3470
      %3472 = vdwg.mxu0
      %v3473 = vand.u32 %v2883, 4294901760
      %3474 = vmatpush.msra.mxu0 %v3473
      %v3475 = vand.u32 %v2882, 4294901760
      %3476 = vmatpush.msra.mxu0 %v3475
      %v3477 = vand.u32 %v2881, 4294901760
      %3478 = vmatpush.msra.mxu0 %v3477
      %v3479 = vand.u32 %v2880, 4294901760
      %3480 = vmatpush.msra.mxu0 %v3479
      %v3481 = vand.u32 %v2879, 4294901760
      %3482 = vmatpush.msra.mxu0 %v3481
      %v3483 = vand.u32 %v2878, 4294901760
      %3484 = vmatpush.msra.mxu0 %v3483
      %v3485 = vand.u32 %v2877, 4294901760
      %3486 = vmatpush.msra.mxu0 %v3485
      %v3487 = vand.u32 %v2876, 4294901760
      %3488 = vmatpush.msra.mxu0 %v3487
      %v3489 = vand.u32 %v2875, 4294901760
      %3490 = vmatpush.msra.mxu0 %v3489
      %v3491 = vand.u32 %v2874, 4294901760
      %3492 = vmatpush.msra.mxu0 %v3491
      %v3493 = vand.u32 %v2873, 4294901760
      %3494 = vmatpush.msra.mxu0 %v3493
      %v3495 = vand.u32 %v2872, 4294901760
      %3496 = vmatpush.msra.mxu0 %v3495
      %v3497 = vand.u32 %v2871, 4294901760
      %3498 = vmatpush.msra.mxu0 %v3497
      %v3499 = vand.u32 %v2870, 4294901760
      %3500 = vmatpush.msra.mxu0 %v3499
      %v3501 = vand.u32 %v2869, 4294901760
      %3502 = vmatpush.msra.mxu0 %v3501
      %v3503 = vand.u32 %v2868, 4294901760
      %3504 = vmatpush.msra.mxu0 %v3503
      %v3505 = vand.u32 %v2850, 4294901760
      %v3506 = vsub.f32 %v2850, %v3505
      %v3507 = vand.u32 %v3506, 4294901760
      %3508 = vmatmul.f32.gmra.mxu0 %v3507
      %v3509 = vpop.f32.mrf.mxu0
      %v3510 = vadd.f32 %v3466, %v3509
      %v3511 = vand.u32 %v2851, 4294901760
      %v3512 = vsub.f32 %v2851, %v3511
      %v3513 = vand.u32 %v3512, 4294901760
      %3514 = vmatmul.f32.gmra.mxu0 %v3513
      %v3515 = vpop.f32.mrf.mxu0
      %v3516 = vadd.f32 %v3471, %v3515
      %3517 = vdwg.mxu0
      %v3518 = vand.u32 %v2883, 4294901760
      %v3519 = vsub.f32 %v2883, %v3518
      %v3520 = vand.u32 %v3519, 4294901760
      %3521 = vmatpush.msra.mxu0 %v3520
      %v3522 = vand.u32 %v2882, 4294901760
      %v3523 = vsub.f32 %v2882, %v3522
      %v3524 = vand.u32 %v3523, 4294901760
      %3525 = vmatpush.msra.mxu0 %v3524
      %v3526 = vand.u32 %v2881, 4294901760
      %v3527 = vsub.f32 %v2881, %v3526
      %v3528 = vand.u32 %v3527, 4294901760
      %3529 = vmatpush.msra.mxu0 %v3528
      %v3530 = vand.u32 %v2880, 4294901760
      %v3531 = vsub.f32 %v2880, %v3530
      %v3532 = vand.u32 %v3531, 4294901760
      %3533 = vmatpush.msra.mxu0 %v3532
      %v3534 = vand.u32 %v2879, 4294901760
      %v3535 = vsub.f32 %v2879, %v3534
      %v3536 = vand.u32 %v3535, 4294901760
      %3537 = vmatpush.msra.mxu0 %v3536
      %v3538 = vand.u32 %v2878, 4294901760
      %v3539 = vsub.f32 %v2878, %v3538
      %v3540 = vand.u32 %v3539, 4294901760
      %3541 = vmatpush.msra.mxu0 %v3540
      %v3542 = vand.u32 %v2877, 4294901760
      %v3543 = vsub.f32 %v2877, %v3542
      %v3544 = vand.u32 %v3543, 4294901760
      %3545 = vmatpush.msra.mxu0 %v3544
      %v3546 = vand.u32 %v2876, 4294901760
      %v3547 = vsub.f32 %v2876, %v3546
      %v3548 = vand.u32 %v3547, 4294901760
      %3549 = vmatpush.msra.mxu0 %v3548
      %v3550 = vand.u32 %v2875, 4294901760
      %v3551 = vsub.f32 %v2875, %v3550
      %v3552 = vand.u32 %v3551, 4294901760
      %3553 = vmatpush.msra.mxu0 %v3552
      %v3554 = vand.u32 %v2874, 4294901760
      %v3555 = vsub.f32 %v2874, %v3554
      %v3556 = vand.u32 %v3555, 4294901760
      %3557 = vmatpush.msra.mxu0 %v3556
      %v3558 = vand.u32 %v2873, 4294901760
      %v3559 = vsub.f32 %v2873, %v3558
      %v3560 = vand.u32 %v3559, 4294901760
      %3561 = vmatpush.msra.mxu0 %v3560
      %v3562 = vand.u32 %v2872, 4294901760
      %v3563 = vsub.f32 %v2872, %v3562
      %v3564 = vand.u32 %v3563, 4294901760
      %3565 = vmatpush.msra.mxu0 %v3564
      %v3566 = vand.u32 %v2871, 4294901760
      %v3567 = vsub.f32 %v2871, %v3566
      %v3568 = vand.u32 %v3567, 4294901760
      %3569 = vmatpush.msra.mxu0 %v3568
      %v3570 = vand.u32 %v2870, 4294901760
      %v3571 = vsub.f32 %v2870, %v3570
      %v3572 = vand.u32 %v3571, 4294901760
      %3573 = vmatpush.msra.mxu0 %v3572
      %v3574 = vand.u32 %v2869, 4294901760
      %v3575 = vsub.f32 %v2869, %v3574
      %v3576 = vand.u32 %v3575, 4294901760
      %3577 = vmatpush.msra.mxu0 %v3576
      %v3578 = vand.u32 %v2868, 4294901760
      %v3579 = vsub.f32 %v2868, %v3578
      %v3580 = vand.u32 %v3579, 4294901760
      %3581 = vmatpush.msra.mxu0 %v3580
      %v3582 = vand.u32 %v2850, 4294901760
      %3583 = vmatmul.f32.gmra.mxu0 %v3582
      %v3584 = vpop.f32.mrf.mxu0
      %v3585 = vadd.f32 %v3510, %v3584
      %v3586 = vand.u32 %v2851, 4294901760
      %3587 = vmatmul.f32.gmra.mxu0 %v3586
      %v3588 = vpop.f32.mrf.mxu0
      %v3589 = vadd.f32 %v3516, %v3588
      %3590 = vdwg.mxu0
      %v3591 = vand.u32 %v2883, 4294901760
      %3592 = vmatpush.msra.mxu0 %v3591
      %v3593 = vand.u32 %v2882, 4294901760
      %3594 = vmatpush.msra.mxu0 %v3593
      %v3595 = vand.u32 %v2881, 4294901760
      %3596 = vmatpush.msra.mxu0 %v3595
      %v3597 = vand.u32 %v2880, 4294901760
      %3598 = vmatpush.msra.mxu0 %v3597
      %v3599 = vand.u32 %v2879, 4294901760
      %3600 = vmatpush.msra.mxu0 %v3599
      %v3601 = vand.u32 %v2878, 4294901760
      %3602 = vmatpush.msra.mxu0 %v3601
      %v3603 = vand.u32 %v2877, 4294901760
      %3604 = vmatpush.msra.mxu0 %v3603
      %v3605 = vand.u32 %v2876, 4294901760
      %3606 = vmatpush.msra.mxu0 %v3605
      %v3607 = vand.u32 %v2875, 4294901760
      %3608 = vmatpush.msra.mxu0 %v3607
      %v3609 = vand.u32 %v2874, 4294901760
      %3610 = vmatpush.msra.mxu0 %v3609
      %v3611 = vand.u32 %v2873, 4294901760
      %3612 = vmatpush.msra.mxu0 %v3611
      %v3613 = vand.u32 %v2872, 4294901760
      %3614 = vmatpush.msra.mxu0 %v3613
      %v3615 = vand.u32 %v2871, 4294901760
      %3616 = vmatpush.msra.mxu0 %v3615
      %v3617 = vand.u32 %v2870, 4294901760
      %3618 = vmatpush.msra.mxu0 %v3617
      %v3619 = vand.u32 %v2869, 4294901760
      %3620 = vmatpush.msra.mxu0 %v3619
      %v3621 = vand.u32 %v2868, 4294901760
      %3622 = vmatpush.msra.mxu0 %v3621
      %v3623 = vand.u32 %v2850, 4294901760
      %3624 = vmatmul.f32.gmra.mxu0 %v3623
      %v3625 = vpop.f32.mrf.mxu0
      %v3626 = vadd.f32 %v3585, %v3625
      %v3627 = vand.u32 %v2851, 4294901760
      %3628 = vmatmul.f32.gmra.mxu0 %v3627
      %v3629 = vpop.f32.mrf.mxu0
      %v3630 = vadd.f32 %v3589, %v3629
      %3631 = vdwg.mxu0
      %v3632 = vmax.f32 %v3626, 0.0
      %v3633 = vmax.f32 %v3630, 0.0
      %3634 = vst [vmem:[#allocation5 + $0x8] sm:$0xff] %v3632
      %3635 = vst [vmem:[#allocation5 + $0x10] sm:$0xff] %v3633
      %v3636 = vld [vmem:[#allocation5 + $0x6] sm:$0xff]
      %v3637 = vld [vmem:[#allocation5 + $0xe] sm:$0xff]
      %v3638 = vld [vmem:[%s7] sm:$0xff]
      %v3639 = vld [vmem:[%s7 + $0x8] sm:$0xff]
      %v3640 = vld [vmem:[%s7 + $0x10] sm:$0xff]
      %v3641 = vld [vmem:[%s7 + $0x18] sm:$0xff]
      %v3642 = vld [vmem:[%s7 + $0x20] sm:$0xff]
      %v3643 = vld [vmem:[%s7 + $0x28] sm:$0xff]
      %v3644 = vld [vmem:[%s7 + $0x30] sm:$0xff]
      %v3645 = vld [vmem:[%s7 + $0x38] sm:$0xff]
      %v3646 = vld [vmem:[%s7 + $0x40] sm:$0xff]
      %v3647 = vld [vmem:[%s7 + $0x48] sm:$0xff]
      %v3648 = vld [vmem:[%s7 + $0x50] sm:$0xff]
      %v3649 = vld [vmem:[%s7 + $0x58] sm:$0xff]
      %v3650 = vld [vmem:[%s7 + $0x60] sm:$0xff]
      %v3651 = vld [vmem:[%s7 + $0x68] sm:$0xff]
      %v3652 = vld [vmem:[%s7 + $0x70] sm:$0xff]
      %v3653 = vld [vmem:[%s7 + $0x78] sm:$0xff]
      %v3654 = vld [vmem:[%s7 + $0x80] sm:$0xff]
      %v3655 = vld [vmem:[%s7 + $0x88] sm:$0xff]
      %v3656 = vld [vmem:[%s7 + $0x90] sm:$0xff]
      %v3657 = vld [vmem:[%s7 + $0x98] sm:$0xff]
      %v3658 = vld [vmem:[%s7 + $0xa0] sm:$0xff]
      %v3659 = vld [vmem:[%s7 + $0xa8] sm:$0xff]
      %v3660 = vld [vmem:[%s7 + $0xb0] sm:$0xff]
      %v3661 = vld [vmem:[%s7 + $0xb8] sm:$0xff]
      %v3662 = vld [vmem:[%s7 + $0xc0] sm:$0xff]
      %v3663 = vld [vmem:[%s7 + $0xc8] sm:$0xff]
      %v3664 = vld [vmem:[%s7 + $0xd0] sm:$0xff]
      %v3665 = vld [vmem:[%s7 + $0xd8] sm:$0xff]
      %v3666 = vld [vmem:[%s7 + $0xe0] sm:$0xff]
      %v3667 = vld [vmem:[%s7 + $0xe8] sm:$0xff]
      %v3668 = vld [vmem:[%s7 + $0xf0] sm:$0xff]
      %v3669 = vld [vmem:[%s7 + $0xf8] sm:$0xff]
      %v3670 = vld [vmem:[%s8] sm:$0x1]
      %v3672 = vperm.slane %v3670, 0
      %v3674 = vand.u32 %v3653, 4294901760
      %3675 = vmatpush.msra.mxu0 %v3674
      %v3676 = vand.u32 %v3652, 4294901760
      %3677 = vmatpush.msra.mxu0 %v3676
      %v3678 = vand.u32 %v3651, 4294901760
      %3679 = vmatpush.msra.mxu0 %v3678
      %v3680 = vand.u32 %v3650, 4294901760
      %3681 = vmatpush.msra.mxu0 %v3680
      %v3682 = vand.u32 %v3649, 4294901760
      %3683 = vmatpush.msra.mxu0 %v3682
      %v3684 = vand.u32 %v3648, 4294901760
      %3685 = vmatpush.msra.mxu0 %v3684
      %v3686 = vand.u32 %v3647, 4294901760
      %3687 = vmatpush.msra.mxu0 %v3686
      %v3688 = vand.u32 %v3646, 4294901760
      %3689 = vmatpush.msra.mxu0 %v3688
      %v3690 = vand.u32 %v3645, 4294901760
      %3691 = vmatpush.msra.mxu0 %v3690
      %v3692 = vand.u32 %v3644, 4294901760
      %3693 = vmatpush.msra.mxu0 %v3692
      %v3694 = vand.u32 %v3643, 4294901760
      %3695 = vmatpush.msra.mxu0 %v3694
      %v3696 = vand.u32 %v3642, 4294901760
      %3697 = vmatpush.msra.mxu0 %v3696
      %v3698 = vand.u32 %v3641, 4294901760
      %3699 = vmatpush.msra.mxu0 %v3698
      %v3700 = vand.u32 %v3640, 4294901760
      %3701 = vmatpush.msra.mxu0 %v3700
      %v3702 = vand.u32 %v3639, 4294901760
      %3703 = vmatpush.msra.mxu0 %v3702
      %v3704 = vand.u32 %v3638, 4294901760
      %3705 = vmatpush.msra.mxu0 %v3704
      %v3706 = vand.u32 %v3632, 4294901760
      %v3707 = vsub.f32 %v3632, %v3706
      %v3708 = vand.u32 %v3707, 4294901760
      %v3709 = vsub.f32 %v3707, %v3708
      %v3710 = vand.u32 %v3709, 4294901760
      %3711 = vmatmul.f32.gmra.mxu0 %v3710
      %v3712 = vpop.f32.mrf.mxu0
      %v3713 = vadd.f32 %v3672, %v3712
      %v3714 = vand.u32 %v3633, 4294901760
      %v3715 = vsub.f32 %v3633, %v3714
      %v3716 = vand.u32 %v3715, 4294901760
      %v3717 = vsub.f32 %v3715, %v3716
      %v3718 = vand.u32 %v3717, 4294901760
      %3719 = vmatmul.f32.gmra.mxu0 %v3718
      %v3720 = vpop.f32.mrf.mxu0
      %v3721 = vadd.f32 %v3672, %v3720
      %3722 = vdwg.mxu0
      %v3723 = vand.u32 %v3653, 4294901760
      %v3724 = vsub.f32 %v3653, %v3723
      %v3725 = vand.u32 %v3724, 4294901760
      %v3726 = vsub.f32 %v3724, %v3725
      %v3727 = vand.u32 %v3726, 4294901760
      %3728 = vmatpush.msra.mxu0 %v3727
      %v3729 = vand.u32 %v3652, 4294901760
      %v3730 = vsub.f32 %v3652, %v3729
      %v3731 = vand.u32 %v3730, 4294901760
      %v3732 = vsub.f32 %v3730, %v3731
      %v3733 = vand.u32 %v3732, 4294901760
      %3734 = vmatpush.msra.mxu0 %v3733
      %v3735 = vand.u32 %v3651, 4294901760
      %v3736 = vsub.f32 %v3651, %v3735
      %v3737 = vand.u32 %v3736, 4294901760
      %v3738 = vsub.f32 %v3736, %v3737
      %v3739 = vand.u32 %v3738, 4294901760
      %3740 = vmatpush.msra.mxu0 %v3739
      %v3741 = vand.u32 %v3650, 4294901760
      %v3742 = vsub.f32 %v3650, %v3741
      %v3743 = vand.u32 %v3742, 4294901760
      %v3744 = vsub.f32 %v3742, %v3743
      %v3745 = vand.u32 %v3744, 4294901760
      %3746 = vmatpush.msra.mxu0 %v3745
      %v3747 = vand.u32 %v3649, 4294901760
      %v3748 = vsub.f32 %v3649, %v3747
      %v3749 = vand.u32 %v3748, 4294901760
      %v3750 = vsub.f32 %v3748, %v3749
      %v3751 = vand.u32 %v3750, 4294901760
      %3752 = vmatpush.msra.mxu0 %v3751
      %v3753 = vand.u32 %v3648, 4294901760
      %v3754 = vsub.f32 %v3648, %v3753
      %v3755 = vand.u32 %v3754, 4294901760
      %v3756 = vsub.f32 %v3754, %v3755
      %v3757 = vand.u32 %v3756, 4294901760
      %3758 = vmatpush.msra.mxu0 %v3757
      %v3759 = vand.u32 %v3647, 4294901760
      %v3760 = vsub.f32 %v3647, %v3759
      %v3761 = vand.u32 %v3760, 4294901760
      %v3762 = vsub.f32 %v3760, %v3761
      %v3763 = vand.u32 %v3762, 4294901760
      %3764 = vmatpush.msra.mxu0 %v3763
      %v3765 = vand.u32 %v3646, 4294901760
      %v3766 = vsub.f32 %v3646, %v3765
      %v3767 = vand.u32 %v3766, 4294901760
      %v3768 = vsub.f32 %v3766, %v3767
      %v3769 = vand.u32 %v3768, 4294901760
      %3770 = vmatpush.msra.mxu0 %v3769
      %v3771 = vand.u32 %v3645, 4294901760
      %v3772 = vsub.f32 %v3645, %v3771
      %v3773 = vand.u32 %v3772, 4294901760
      %v3774 = vsub.f32 %v3772, %v3773
      %v3775 = vand.u32 %v3774, 4294901760
      %3776 = vmatpush.msra.mxu0 %v3775
      %v3777 = vand.u32 %v3644, 4294901760
      %v3778 = vsub.f32 %v3644, %v3777
      %v3779 = vand.u32 %v3778, 4294901760
      %v3780 = vsub.f32 %v3778, %v3779
      %v3781 = vand.u32 %v3780, 4294901760
      %3782 = vmatpush.msra.mxu0 %v3781
      %v3783 = vand.u32 %v3643, 4294901760
      %v3784 = vsub.f32 %v3643, %v3783
      %v3785 = vand.u32 %v3784, 4294901760
      %v3786 = vsub.f32 %v3784, %v3785
      %v3787 = vand.u32 %v3786, 4294901760
      %3788 = vmatpush.msra.mxu0 %v3787
      %v3789 = vand.u32 %v3642, 4294901760
      %v3790 = vsub.f32 %v3642, %v3789
      %v3791 = vand.u32 %v3790, 4294901760
      %v3792 = vsub.f32 %v3790, %v3791
      %v3793 = vand.u32 %v3792, 4294901760
      %3794 = vmatpush.msra.mxu0 %v3793
      %v3795 = vand.u32 %v3641, 4294901760
      %v3796 = vsub.f32 %v3641, %v3795
      %v3797 = vand.u32 %v3796, 4294901760
      %v3798 = vsub.f32 %v3796, %v3797
      %v3799 = vand.u32 %v3798, 4294901760
      %3800 = vmatpush.msra.mxu0 %v3799
      %v3801 = vand.u32 %v3640, 4294901760
      %v3802 = vsub.f32 %v3640, %v3801
      %v3803 = vand.u32 %v3802, 4294901760
      %v3804 = vsub.f32 %v3802, %v3803
      %v3805 = vand.u32 %v3804, 4294901760
      %3806 = vmatpush.msra.mxu0 %v3805
      %v3807 = vand.u32 %v3639, 4294901760
      %v3808 = vsub.f32 %v3639, %v3807
      %v3809 = vand.u32 %v3808, 4294901760
      %v3810 = vsub.f32 %v3808, %v3809
      %v3811 = vand.u32 %v3810, 4294901760
      %3812 = vmatpush.msra.mxu0 %v3811
      %v3813 = vand.u32 %v3638, 4294901760
      %v3814 = vsub.f32 %v3638, %v3813
      %v3815 = vand.u32 %v3814, 4294901760
      %v3816 = vsub.f32 %v3814, %v3815
      %v3817 = vand.u32 %v3816, 4294901760
      %3818 = vmatpush.msra.mxu0 %v3817
      %v3819 = vand.u32 %v3632, 4294901760
      %3820 = vmatmul.f32.gmra.mxu0 %v3819
      %v3821 = vpop.f32.mrf.mxu0
      %v3822 = vadd.f32 %v3713, %v3821
      %v3823 = vand.u32 %v3633, 4294901760
      %3824 = vmatmul.f32.gmra.mxu0 %v3823
      %v3825 = vpop.f32.mrf.mxu0
      %v3826 = vadd.f32 %v3721, %v3825
      %3827 = vdwg.mxu0
      %v3828 = vand.u32 %v3653, 4294901760
      %v3829 = vsub.f32 %v3653, %v3828
      %3830 = vmatpush.msra.mxu0 %v3829
      %v3831 = vand.u32 %v3652, 4294901760
      %v3832 = vsub.f32 %v3652, %v3831
      %3833 = vmatpush.msra.mxu0 %v3832
      %v3834 = vand.u32 %v3651, 4294901760
      %v3835 = vsub.f32 %v3651, %v3834
      %3836 = vmatpush.msra.mxu0 %v3835
      %v3837 = vand.u32 %v3650, 4294901760
      %v3838 = vsub.f32 %v3650, %v3837
      %3839 = vmatpush.msra.mxu0 %v3838
      %v3840 = vand.u32 %v3649, 4294901760
      %v3841 = vsub.f32 %v3649, %v3840
      %3842 = vmatpush.msra.mxu0 %v3841
      %v3843 = vand.u32 %v3648, 4294901760
      %v3844 = vsub.f32 %v3648, %v3843
      %3845 = vmatpush.msra.mxu0 %v3844
      %v3846 = vand.u32 %v3647, 4294901760
      %v3847 = vsub.f32 %v3647, %v3846
      %3848 = vmatpush.msra.mxu0 %v3847
      %v3849 = vand.u32 %v3646, 4294901760
      %v3850 = vsub.f32 %v3646, %v3849
      %3851 = vmatpush.msra.mxu0 %v3850
      %v3852 = vand.u32 %v3645, 4294901760
      %v3853 = vsub.f32 %v3645, %v3852
      %3854 = vmatpush.msra.mxu0 %v3853
      %v3855 = vand.u32 %v3644, 4294901760
      %v3856 = vsub.f32 %v3644, %v3855
      %3857 = vmatpush.msra.mxu0 %v3856
      %v3858 = vand.u32 %v3643, 4294901760
      %v3859 = vsub.f32 %v3643, %v3858
      %3860 = vmatpush.msra.mxu0 %v3859
      %v3861 = vand.u32 %v3642, 4294901760
      %v3862 = vsub.f32 %v3642, %v3861
      %3863 = vmatpush.msra.mxu0 %v3862
      %v3864 = vand.u32 %v3641, 4294901760
      %v3865 = vsub.f32 %v3641, %v3864
      %3866 = vmatpush.msra.mxu0 %v3865
      %v3867 = vand.u32 %v3640, 4294901760
      %v3868 = vsub.f32 %v3640, %v3867
      %3869 = vmatpush.msra.mxu0 %v3868
      %v3870 = vand.u32 %v3639, 4294901760
      %v3871 = vsub.f32 %v3639, %v3870
      %3872 = vmatpush.msra.mxu0 %v3871
      %v3873 = vand.u32 %v3638, 4294901760
      %v3874 = vsub.f32 %v3638, %v3873
      %3875 = vmatpush.msra.mxu0 %v3874
      %v3876 = vand.u32 %v3632, 4294901760
      %v3877 = vsub.f32 %v3632, %v3876
      %3878 = vmatmul.f32.gmra.mxu0 %v3877
      %v3879 = vpop.f32.mrf.mxu0
      %v3880 = vadd.f32 %v3822, %v3879
      %v3881 = vand.u32 %v3633, 4294901760
      %v3882 = vsub.f32 %v3633, %v3881
      %3883 = vmatmul.f32.gmra.mxu0 %v3882
      %v3884 = vpop.f32.mrf.mxu0
      %v3885 = vadd.f32 %v3826, %v3884
      %3886 = vdwg.mxu0
      %v3887 = vand.u32 %v3653, 4294901760
      %3888 = vmatpush.msra.mxu0 %v3887
      %v3889 = vand.u32 %v3652, 4294901760
      %3890 = vmatpush.msra.mxu0 %v3889
      %v3891 = vand.u32 %v3651, 4294901760
      %3892 = vmatpush.msra.mxu0 %v3891
      %v3893 = vand.u32 %v3650, 4294901760
      %3894 = vmatpush.msra.mxu0 %v3893
      %v3895 = vand.u32 %v3649, 4294901760
      %3896 = vmatpush.msra.mxu0 %v3895
      %v3897 = vand.u32 %v3648, 4294901760
      %3898 = vmatpush.msra.mxu0 %v3897
      %v3899 = vand.u32 %v3647, 4294901760
      %3900 = vmatpush.msra.mxu0 %v3899
      %v3901 = vand.u32 %v3646, 4294901760
      %3902 = vmatpush.msra.mxu0 %v3901
      %v3903 = vand.u32 %v3645, 4294901760
      %3904 = vmatpush.msra.mxu0 %v3903
      %v3905 = vand.u32 %v3644, 4294901760
      %3906 = vmatpush.msra.mxu0 %v3905
      %v3907 = vand.u32 %v3643, 4294901760
      %3908 = vmatpush.msra.mxu0 %v3907
      %v3909 = vand.u32 %v3642, 4294901760
      %3910 = vmatpush.msra.mxu0 %v3909
      %v3911 = vand.u32 %v3641, 4294901760
      %3912 = vmatpush.msra.mxu0 %v3911
      %v3913 = vand.u32 %v3640, 4294901760
      %3914 = vmatpush.msra.mxu0 %v3913
      %v3915 = vand.u32 %v3639, 4294901760
      %3916 = vmatpush.msra.mxu0 %v3915
      %v3917 = vand.u32 %v3638, 4294901760
      %3918 = vmatpush.msra.mxu0 %v3917
      %v3919 = vand.u32 %v3632, 4294901760
      %v3920 = vsub.f32 %v3632, %v3919
      %v3921 = vand.u32 %v3920, 4294901760
      %3922 = vmatmul.f32.gmra.mxu0 %v3921
      %v3923 = vpop.f32.mrf.mxu0
      %v3924 = vadd.f32 %v3880, %v3923
      %v3925 = vand.u32 %v3633, 4294901760
      %v3926 = vsub.f32 %v3633, %v3925
      %v3927 = vand.u32 %v3926, 4294901760
      %3928 = vmatmul.f32.gmra.mxu0 %v3927
      %v3929 = vpop.f32.mrf.mxu0
      %v3930 = vadd.f32 %v3885, %v3929
      %3931 = vdwg.mxu0
      %v3932 = vand.u32 %v3653, 4294901760
      %v3933 = vsub.f32 %v3653, %v3932
      %v3934 = vand.u32 %v3933, 4294901760
      %3935 = vmatpush.msra.mxu0 %v3934
      %v3936 = vand.u32 %v3652, 4294901760
      %v3937 = vsub.f32 %v3652, %v3936
      %v3938 = vand.u32 %v3937, 4294901760
      %3939 = vmatpush.msra.mxu0 %v3938
      %v3940 = vand.u32 %v3651, 4294901760
      %v3941 = vsub.f32 %v3651, %v3940
      %v3942 = vand.u32 %v3941, 4294901760
      %3943 = vmatpush.msra.mxu0 %v3942
      %v3944 = vand.u32 %v3650, 4294901760
      %v3945 = vsub.f32 %v3650, %v3944
      %v3946 = vand.u32 %v3945, 4294901760
      %3947 = vmatpush.msra.mxu0 %v3946
      %v3948 = vand.u32 %v3649, 4294901760
      %v3949 = vsub.f32 %v3649, %v3948
      %v3950 = vand.u32 %v3949, 4294901760
      %3951 = vmatpush.msra.mxu0 %v3950
      %v3952 = vand.u32 %v3648, 4294901760
      %v3953 = vsub.f32 %v3648, %v3952
      %v3954 = vand.u32 %v3953, 4294901760
      %3955 = vmatpush.msra.mxu0 %v3954
      %v3956 = vand.u32 %v3647, 4294901760
      %v3957 = vsub.f32 %v3647, %v3956
      %v3958 = vand.u32 %v3957, 4294901760
      %3959 = vmatpush.msra.mxu0 %v3958
      %v3960 = vand.u32 %v3646, 4294901760
      %v3961 = vsub.f32 %v3646, %v3960
      %v3962 = vand.u32 %v3961, 4294901760
      %3963 = vmatpush.msra.mxu0 %v3962
      %v3964 = vand.u32 %v3645, 4294901760
      %v3965 = vsub.f32 %v3645, %v3964
      %v3966 = vand.u32 %v3965, 4294901760
      %3967 = vmatpush.msra.mxu0 %v3966
      %v3968 = vand.u32 %v3644, 4294901760
      %v3969 = vsub.f32 %v3644, %v3968
      %v3970 = vand.u32 %v3969, 4294901760
      %3971 = vmatpush.msra.mxu0 %v3970
      %v3972 = vand.u32 %v3643, 4294901760
      %v3973 = vsub.f32 %v3643, %v3972
      %v3974 = vand.u32 %v3973, 4294901760
      %3975 = vmatpush.msra.mxu0 %v3974
      %v3976 = vand.u32 %v3642, 4294901760
      %v3977 = vsub.f32 %v3642, %v3976
      %v3978 = vand.u32 %v3977, 4294901760
      %3979 = vmatpush.msra.mxu0 %v3978
      %v3980 = vand.u32 %v3641, 4294901760
      %v3981 = vsub.f32 %v3641, %v3980
      %v3982 = vand.u32 %v3981, 4294901760
      %3983 = vmatpush.msra.mxu0 %v3982
      %v3984 = vand.u32 %v3640, 4294901760
      %v3985 = vsub.f32 %v3640, %v3984
      %v3986 = vand.u32 %v3985, 4294901760
      %3987 = vmatpush.msra.mxu0 %v3986
      %v3988 = vand.u32 %v3639, 4294901760
      %v3989 = vsub.f32 %v3639, %v3988
      %v3990 = vand.u32 %v3989, 4294901760
      %3991 = vmatpush.msra.mxu0 %v3990
      %v3992 = vand.u32 %v3638, 4294901760
      %v3993 = vsub.f32 %v3638, %v3992
      %v3994 = vand.u32 %v3993, 4294901760
      %3995 = vmatpush.msra.mxu0 %v3994
      %v3996 = vand.u32 %v3632, 4294901760
      %3997 = vmatmul.f32.gmra.mxu0 %v3996
      %v3998 = vpop.f32.mrf.mxu0
      %v3999 = vadd.f32 %v3924, %v3998
      %v4000 = vand.u32 %v3633, 4294901760
      %4001 = vmatmul.f32.gmra.mxu0 %v4000
      %v4002 = vpop.f32.mrf.mxu0
      %v4003 = vadd.f32 %v3930, %v4002
      %4004 = vdwg.mxu0
      %v4005 = vand.u32 %v3653, 4294901760
      %4006 = vmatpush.msra.mxu0 %v4005
      %v4007 = vand.u32 %v3652, 4294901760
      %4008 = vmatpush.msra.mxu0 %v4007
      %v4009 = vand.u32 %v3651, 4294901760
      %4010 = vmatpush.msra.mxu0 %v4009
      %v4011 = vand.u32 %v3650, 4294901760
      %4012 = vmatpush.msra.mxu0 %v4011
      %v4013 = vand.u32 %v3649, 4294901760
      %4014 = vmatpush.msra.mxu0 %v4013
      %v4015 = vand.u32 %v3648, 4294901760
      %4016 = vmatpush.msra.mxu0 %v4015
      %v4017 = vand.u32 %v3647, 4294901760
      %4018 = vmatpush.msra.mxu0 %v4017
      %v4019 = vand.u32 %v3646, 4294901760
      %4020 = vmatpush.msra.mxu0 %v4019
      %v4021 = vand.u32 %v3645, 4294901760
      %4022 = vmatpush.msra.mxu0 %v4021
      %v4023 = vand.u32 %v3644, 4294901760
      %4024 = vmatpush.msra.mxu0 %v4023
      %v4025 = vand.u32 %v3643, 4294901760
      %4026 = vmatpush.msra.mxu0 %v4025
      %v4027 = vand.u32 %v3642, 4294901760
      %4028 = vmatpush.msra.mxu0 %v4027
      %v4029 = vand.u32 %v3641, 4294901760
      %4030 = vmatpush.msra.mxu0 %v4029
      %v4031 = vand.u32 %v3640, 4294901760
      %4032 = vmatpush.msra.mxu0 %v4031
      %v4033 = vand.u32 %v3639, 4294901760
      %4034 = vmatpush.msra.mxu0 %v4033
      %v4035 = vand.u32 %v3638, 4294901760
      %4036 = vmatpush.msra.mxu0 %v4035
      %v4037 = vand.u32 %v3632, 4294901760
      %4038 = vmatmul.f32.gmra.mxu0 %v4037
      %v4039 = vpop.f32.mrf.mxu0
      %v4040 = vadd.f32 %v3999, %v4039
      %v4041 = vand.u32 %v3633, 4294901760
      %4042 = vmatmul.f32.gmra.mxu0 %v4041
      %v4043 = vpop.f32.mrf.mxu0
      %v4044 = vadd.f32 %v4003, %v4043
      %4045 = vdwg.mxu0
      %v4046 = vand.u32 %v3669, 4294901760
      %4047 = vmatpush.msra.mxu0 %v4046
      %v4048 = vand.u32 %v3668, 4294901760
      %4049 = vmatpush.msra.mxu0 %v4048
      %v4050 = vand.u32 %v3667, 4294901760
      %4051 = vmatpush.msra.mxu0 %v4050
      %v4052 = vand.u32 %v3666, 4294901760
      %4053 = vmatpush.msra.mxu0 %v4052
      %v4054 = vand.u32 %v3665, 4294901760
      %4055 = vmatpush.msra.mxu0 %v4054
      %v4056 = vand.u32 %v3664, 4294901760
      %4057 = vmatpush.msra.mxu0 %v4056
      %v4058 = vand.u32 %v3663, 4294901760
      %4059 = vmatpush.msra.mxu0 %v4058
      %v4060 = vand.u32 %v3662, 4294901760
      %4061 = vmatpush.msra.mxu0 %v4060
      %v4062 = vand.u32 %v3661, 4294901760
      %4063 = vmatpush.msra.mxu0 %v4062
      %v4064 = vand.u32 %v3660, 4294901760
      %4065 = vmatpush.msra.mxu0 %v4064
      %v4066 = vand.u32 %v3659, 4294901760
      %4067 = vmatpush.msra.mxu0 %v4066
      %v4068 = vand.u32 %v3658, 4294901760
      %4069 = vmatpush.msra.mxu0 %v4068
      %v4070 = vand.u32 %v3657, 4294901760
      %4071 = vmatpush.msra.mxu0 %v4070
      %v4072 = vand.u32 %v3656, 4294901760
      %4073 = vmatpush.msra.mxu0 %v4072
      %v4074 = vand.u32 %v3655, 4294901760
      %4075 = vmatpush.msra.mxu0 %v4074
      %v4076 = vand.u32 %v3654, 4294901760
      %4077 = vmatpush.msra.mxu0 %v4076
      %v4078 = vand.u32 %v3636, 4294901760
      %v4079 = vsub.f32 %v3636, %v4078
      %v4080 = vand.u32 %v4079, 4294901760
      %v4081 = vsub.f32 %v4079, %v4080
      %v4082 = vand.u32 %v4081, 4294901760
      %4083 = vmatmul.f32.gmra.mxu0 %v4082
      %v4084 = vpop.f32.mrf.mxu0
      %v4085 = vadd.f32 %v4040, %v4084
      %v4086 = vand.u32 %v3637, 4294901760
      %v4087 = vsub.f32 %v3637, %v4086
      %v4088 = vand.u32 %v4087, 4294901760
      %v4089 = vsub.f32 %v4087, %v4088
      %v4090 = vand.u32 %v4089, 4294901760
      %4091 = vmatmul.f32.gmra.mxu0 %v4090
      %v4092 = vpop.f32.mrf.mxu0
      %v4093 = vadd.f32 %v4044, %v4092
      %4094 = vdwg.mxu0
      %v4095 = vand.u32 %v3669, 4294901760
      %v4096 = vsub.f32 %v3669, %v4095
      %v4097 = vand.u32 %v4096, 4294901760
      %v4098 = vsub.f32 %v4096, %v4097
      %v4099 = vand.u32 %v4098, 4294901760
      %4100 = vmatpush.msra.mxu0 %v4099
      %v4101 = vand.u32 %v3668, 4294901760
      %v4102 = vsub.f32 %v3668, %v4101
      %v4103 = vand.u32 %v4102, 4294901760
      %v4104 = vsub.f32 %v4102, %v4103
      %v4105 = vand.u32 %v4104, 4294901760
      %4106 = vmatpush.msra.mxu0 %v4105
      %v4107 = vand.u32 %v3667, 4294901760
      %v4108 = vsub.f32 %v3667, %v4107
      %v4109 = vand.u32 %v4108, 4294901760
      %v4110 = vsub.f32 %v4108, %v4109
      %v4111 = vand.u32 %v4110, 4294901760
      %4112 = vmatpush.msra.mxu0 %v4111
      %v4113 = vand.u32 %v3666, 4294901760
      %v4114 = vsub.f32 %v3666, %v4113
      %v4115 = vand.u32 %v4114, 4294901760
      %v4116 = vsub.f32 %v4114, %v4115
      %v4117 = vand.u32 %v4116, 4294901760
      %4118 = vmatpush.msra.mxu0 %v4117
      %v4119 = vand.u32 %v3665, 4294901760
      %v4120 = vsub.f32 %v3665, %v4119
      %v4121 = vand.u32 %v4120, 4294901760
      %v4122 = vsub.f32 %v4120, %v4121
      %v4123 = vand.u32 %v4122, 4294901760
      %4124 = vmatpush.msra.mxu0 %v4123
      %v4125 = vand.u32 %v3664, 4294901760
      %v4126 = vsub.f32 %v3664, %v4125
      %v4127 = vand.u32 %v4126, 4294901760
      %v4128 = vsub.f32 %v4126, %v4127
      %v4129 = vand.u32 %v4128, 4294901760
      %4130 = vmatpush.msra.mxu0 %v4129
      %v4131 = vand.u32 %v3663, 4294901760
      %v4132 = vsub.f32 %v3663, %v4131
      %v4133 = vand.u32 %v4132, 4294901760
      %v4134 = vsub.f32 %v4132, %v4133
      %v4135 = vand.u32 %v4134, 4294901760
      %4136 = vmatpush.msra.mxu0 %v4135
      %v4137 = vand.u32 %v3662, 4294901760
      %v4138 = vsub.f32 %v3662, %v4137
      %v4139 = vand.u32 %v4138, 4294901760
      %v4140 = vsub.f32 %v4138, %v4139
      %v4141 = vand.u32 %v4140, 4294901760
      %4142 = vmatpush.msra.mxu0 %v4141
      %v4143 = vand.u32 %v3661, 4294901760
      %v4144 = vsub.f32 %v3661, %v4143
      %v4145 = vand.u32 %v4144, 4294901760
      %v4146 = vsub.f32 %v4144, %v4145
      %v4147 = vand.u32 %v4146, 4294901760
      %4148 = vmatpush.msra.mxu0 %v4147
      %v4149 = vand.u32 %v3660, 4294901760
      %v4150 = vsub.f32 %v3660, %v4149
      %v4151 = vand.u32 %v4150, 4294901760
      %v4152 = vsub.f32 %v4150, %v4151
      %v4153 = vand.u32 %v4152, 4294901760
      %4154 = vmatpush.msra.mxu0 %v4153
      %v4155 = vand.u32 %v3659, 4294901760
      %v4156 = vsub.f32 %v3659, %v4155
      %v4157 = vand.u32 %v4156, 4294901760
      %v4158 = vsub.f32 %v4156, %v4157
      %v4159 = vand.u32 %v4158, 4294901760
      %4160 = vmatpush.msra.mxu0 %v4159
      %v4161 = vand.u32 %v3658, 4294901760
      %v4162 = vsub.f32 %v3658, %v4161
      %v4163 = vand.u32 %v4162, 4294901760
      %v4164 = vsub.f32 %v4162, %v4163
      %v4165 = vand.u32 %v4164, 4294901760
      %4166 = vmatpush.msra.mxu0 %v4165
      %v4167 = vand.u32 %v3657, 4294901760
      %v4168 = vsub.f32 %v3657, %v4167
      %v4169 = vand.u32 %v4168, 4294901760
      %v4170 = vsub.f32 %v4168, %v4169
      %v4171 = vand.u32 %v4170, 4294901760
      %4172 = vmatpush.msra.mxu0 %v4171
      %v4173 = vand.u32 %v3656, 4294901760
      %v4174 = vsub.f32 %v3656, %v4173
      %v4175 = vand.u32 %v4174, 4294901760
      %v4176 = vsub.f32 %v4174, %v4175
      %v4177 = vand.u32 %v4176, 4294901760
      %4178 = vmatpush.msra.mxu0 %v4177
      %v4179 = vand.u32 %v3655, 4294901760
      %v4180 = vsub.f32 %v3655, %v4179
      %v4181 = vand.u32 %v4180, 4294901760
      %v4182 = vsub.f32 %v4180, %v4181
      %v4183 = vand.u32 %v4182, 4294901760
      %4184 = vmatpush.msra.mxu0 %v4183
      %v4185 = vand.u32 %v3654, 4294901760
      %v4186 = vsub.f32 %v3654, %v4185
      %v4187 = vand.u32 %v4186, 4294901760
      %v4188 = vsub.f32 %v4186, %v4187
      %v4189 = vand.u32 %v4188, 4294901760
      %4190 = vmatpush.msra.mxu0 %v4189
      %v4191 = vand.u32 %v3636, 4294901760
      %4192 = vmatmul.f32.gmra.mxu0 %v4191
      %v4193 = vpop.f32.mrf.mxu0
      %v4194 = vadd.f32 %v4085, %v4193
      %v4195 = vand.u32 %v3637, 4294901760
      %4196 = vmatmul.f32.gmra.mxu0 %v4195
      %v4197 = vpop.f32.mrf.mxu0
      %v4198 = vadd.f32 %v4093, %v4197
      %4199 = vdwg.mxu0
      %v4200 = vand.u32 %v3669, 4294901760
      %v4201 = vsub.f32 %v3669, %v4200
      %4202 = vmatpush.msra.mxu0 %v4201
      %v4203 = vand.u32 %v3668, 4294901760
      %v4204 = vsub.f32 %v3668, %v4203
      %4205 = vmatpush.msra.mxu0 %v4204
      %v4206 = vand.u32 %v3667, 4294901760
      %v4207 = vsub.f32 %v3667, %v4206
      %4208 = vmatpush.msra.mxu0 %v4207
      %v4209 = vand.u32 %v3666, 4294901760
      %v4210 = vsub.f32 %v3666, %v4209
      %4211 = vmatpush.msra.mxu0 %v4210
      %v4212 = vand.u32 %v3665, 4294901760
      %v4213 = vsub.f32 %v3665, %v4212
      %4214 = vmatpush.msra.mxu0 %v4213
      %v4215 = vand.u32 %v3664, 4294901760
      %v4216 = vsub.f32 %v3664, %v4215
      %4217 = vmatpush.msra.mxu0 %v4216
      %v4218 = vand.u32 %v3663, 4294901760
      %v4219 = vsub.f32 %v3663, %v4218
      %4220 = vmatpush.msra.mxu0 %v4219
      %v4221 = vand.u32 %v3662, 4294901760
      %v4222 = vsub.f32 %v3662, %v4221
      %4223 = vmatpush.msra.mxu0 %v4222
      %v4224 = vand.u32 %v3661, 4294901760
      %v4225 = vsub.f32 %v3661, %v4224
      %4226 = vmatpush.msra.mxu0 %v4225
      %v4227 = vand.u32 %v3660, 4294901760
      %v4228 = vsub.f32 %v3660, %v4227
      %4229 = vmatpush.msra.mxu0 %v4228
      %v4230 = vand.u32 %v3659, 4294901760
      %v4231 = vsub.f32 %v3659, %v4230
      %4232 = vmatpush.msra.mxu0 %v4231
      %v4233 = vand.u32 %v3658, 4294901760
      %v4234 = vsub.f32 %v3658, %v4233
      %4235 = vmatpush.msra.mxu0 %v4234
      %v4236 = vand.u32 %v3657, 4294901760
      %v4237 = vsub.f32 %v3657, %v4236
      %4238 = vmatpush.msra.mxu0 %v4237
      %v4239 = vand.u32 %v3656, 4294901760
      %v4240 = vsub.f32 %v3656, %v4239
      %4241 = vmatpush.msra.mxu0 %v4240
      %v4242 = vand.u32 %v3655, 4294901760
      %v4243 = vsub.f32 %v3655, %v4242
      %4244 = vmatpush.msra.mxu0 %v4243
      %v4245 = vand.u32 %v3654, 4294901760
      %v4246 = vsub.f32 %v3654, %v4245
      %4247 = vmatpush.msra.mxu0 %v4246
      %v4248 = vand.u32 %v3636, 4294901760
      %v4249 = vsub.f32 %v3636, %v4248
      %4250 = vmatmul.f32.gmra.mxu0 %v4249
      %v4251 = vpop.f32.mrf.mxu0
      %v4252 = vadd.f32 %v4194, %v4251
      %v4253 = vand.u32 %v3637, 4294901760
      %v4254 = vsub.f32 %v3637, %v4253
      %4255 = vmatmul.f32.gmra.mxu0 %v4254
      %v4256 = vpop.f32.mrf.mxu0
      %v4257 = vadd.f32 %v4198, %v4256
      %4258 = vdwg.mxu0
      %v4259 = vand.u32 %v3669, 4294901760
      %4260 = vmatpush.msra.mxu0 %v4259
      %v4261 = vand.u32 %v3668, 4294901760
      %4262 = vmatpush.msra.mxu0 %v4261
      %v4263 = vand.u32 %v3667, 4294901760
      %4264 = vmatpush.msra.mxu0 %v4263
      %v4265 = vand.u32 %v3666, 4294901760
      %4266 = vmatpush.msra.mxu0 %v4265
      %v4267 = vand.u32 %v3665, 4294901760
      %4268 = vmatpush.msra.mxu0 %v4267
      %v4269 = vand.u32 %v3664, 4294901760
      %4270 = vmatpush.msra.mxu0 %v4269
      %v4271 = vand.u32 %v3663, 4294901760
      %4272 = vmatpush.msra.mxu0 %v4271
      %v4273 = vand.u32 %v3662, 4294901760
      %4274 = vmatpush.msra.mxu0 %v4273
      %v4275 = vand.u32 %v3661, 4294901760
      %4276 = vmatpush.msra.mxu0 %v4275
      %v4277 = vand.u32 %v3660, 4294901760
      %4278 = vmatpush.msra.mxu0 %v4277
      %v4279 = vand.u32 %v3659, 4294901760
      %4280 = vmatpush.msra.mxu0 %v4279
      %v4281 = vand.u32 %v3658, 4294901760
      %4282 = vmatpush.msra.mxu0 %v4281
      %v4283 = vand.u32 %v3657, 4294901760
      %4284 = vmatpush.msra.mxu0 %v4283
      %v4285 = vand.u32 %v3656, 4294901760
      %4286 = vmatpush.msra.mxu0 %v4285
      %v4287 = vand.u32 %v3655, 4294901760
      %4288 = vmatpush.msra.mxu0 %v4287
      %v4289 = vand.u32 %v3654, 4294901760
      %4290 = vmatpush.msra.mxu0 %v4289
      %v4291 = vand.u32 %v3636, 4294901760
      %v4292 = vsub.f32 %v3636, %v4291
      %v4293 = vand.u32 %v4292, 4294901760
      %4294 = vmatmul.f32.gmra.mxu0 %v4293
      %v4295 = vpop.f32.mrf.mxu0
      %v4296 = vadd.f32 %v4252, %v4295
      %v4297 = vand.u32 %v3637, 4294901760
      %v4298 = vsub.f32 %v3637, %v4297
      %v4299 = vand.u32 %v4298, 4294901760
      %4300 = vmatmul.f32.gmra.mxu0 %v4299
      %v4301 = vpop.f32.mrf.mxu0
      %v4302 = vadd.f32 %v4257, %v4301
      %4303 = vdwg.mxu0
      %v4304 = vand.u32 %v3669, 4294901760
      %v4305 = vsub.f32 %v3669, %v4304
      %v4306 = vand.u32 %v4305, 4294901760
      %4307 = vmatpush.msra.mxu0 %v4306
      %v4308 = vand.u32 %v3668, 4294901760
      %v4309 = vsub.f32 %v3668, %v4308
      %v4310 = vand.u32 %v4309, 4294901760
      %4311 = vmatpush.msra.mxu0 %v4310
      %v4312 = vand.u32 %v3667, 4294901760
      %v4313 = vsub.f32 %v3667, %v4312
      %v4314 = vand.u32 %v4313, 4294901760
      %4315 = vmatpush.msra.mxu0 %v4314
      %v4316 = vand.u32 %v3666, 4294901760
      %v4317 = vsub.f32 %v3666, %v4316
      %v4318 = vand.u32 %v4317, 4294901760
      %4319 = vmatpush.msra.mxu0 %v4318
      %v4320 = vand.u32 %v3665, 4294901760
      %v4321 = vsub.f32 %v3665, %v4320
      %v4322 = vand.u32 %v4321, 4294901760
      %4323 = vmatpush.msra.mxu0 %v4322
      %v4324 = vand.u32 %v3664, 4294901760
      %v4325 = vsub.f32 %v3664, %v4324
      %v4326 = vand.u32 %v4325, 4294901760
      %4327 = vmatpush.msra.mxu0 %v4326
      %v4328 = vand.u32 %v3663, 4294901760
      %v4329 = vsub.f32 %v3663, %v4328
      %v4330 = vand.u32 %v4329, 4294901760
      %4331 = vmatpush.msra.mxu0 %v4330
      %v4332 = vand.u32 %v3662, 4294901760
      %v4333 = vsub.f32 %v3662, %v4332
      %v4334 = vand.u32 %v4333, 4294901760
      %4335 = vmatpush.msra.mxu0 %v4334
      %v4336 = vand.u32 %v3661, 4294901760
      %v4337 = vsub.f32 %v3661, %v4336
      %v4338 = vand.u32 %v4337, 4294901760
      %4339 = vmatpush.msra.mxu0 %v4338
      %v4340 = vand.u32 %v3660, 4294901760
      %v4341 = vsub.f32 %v3660, %v4340
      %v4342 = vand.u32 %v4341, 4294901760
      %4343 = vmatpush.msra.mxu0 %v4342
      %v4344 = vand.u32 %v3659, 4294901760
      %v4345 = vsub.f32 %v3659, %v4344
      %v4346 = vand.u32 %v4345, 4294901760
      %4347 = vmatpush.msra.mxu0 %v4346
      %v4348 = vand.u32 %v3658, 4294901760
      %v4349 = vsub.f32 %v3658, %v4348
      %v4350 = vand.u32 %v4349, 4294901760
      %4351 = vmatpush.msra.mxu0 %v4350
      %v4352 = vand.u32 %v3657, 4294901760
      %v4353 = vsub.f32 %v3657, %v4352
      %v4354 = vand.u32 %v4353, 4294901760
      %4355 = vmatpush.msra.mxu0 %v4354
      %v4356 = vand.u32 %v3656, 4294901760
      %v4357 = vsub.f32 %v3656, %v4356
      %v4358 = vand.u32 %v4357, 4294901760
      %4359 = vmatpush.msra.mxu0 %v4358
      %v4360 = vand.u32 %v3655, 4294901760
      %v4361 = vsub.f32 %v3655, %v4360
      %v4362 = vand.u32 %v4361, 4294901760
      %4363 = vmatpush.msra.mxu0 %v4362
      %v4364 = vand.u32 %v3654, 4294901760
      %v4365 = vsub.f32 %v3654, %v4364
      %v4366 = vand.u32 %v4365, 4294901760
      %4367 = vmatpush.msra.mxu0 %v4366
      %v4368 = vand.u32 %v3636, 4294901760
      %4369 = vmatmul.f32.gmra.mxu0 %v4368
      %v4370 = vpop.f32.mrf.mxu0
      %v4371 = vadd.f32 %v4296, %v4370
      %v4372 = vand.u32 %v3637, 4294901760
      %4373 = vmatmul.f32.gmra.mxu0 %v4372
      %v4374 = vpop.f32.mrf.mxu0
      %v4375 = vadd.f32 %v4302, %v4374
      %4376 = vdwg.mxu0
      %v4377 = vand.u32 %v3669, 4294901760
      %4378 = vmatpush.msra.mxu0 %v4377
      %v4379 = vand.u32 %v3668, 4294901760
      %4380 = vmatpush.msra.mxu0 %v4379
      %v4381 = vand.u32 %v3667, 4294901760
      %4382 = vmatpush.msra.mxu0 %v4381
      %v4383 = vand.u32 %v3666, 4294901760
      %4384 = vmatpush.msra.mxu0 %v4383
      %v4385 = vand.u32 %v3665, 4294901760
      %4386 = vmatpush.msra.mxu0 %v4385
      %v4387 = vand.u32 %v3664, 4294901760
      %4388 = vmatpush.msra.mxu0 %v4387
      %v4389 = vand.u32 %v3663, 4294901760
      %4390 = vmatpush.msra.mxu0 %v4389
      %v4391 = vand.u32 %v3662, 4294901760
      %4392 = vmatpush.msra.mxu0 %v4391
      %v4393 = vand.u32 %v3661, 4294901760
      %4394 = vmatpush.msra.mxu0 %v4393
      %v4395 = vand.u32 %v3660, 4294901760
      %4396 = vmatpush.msra.mxu0 %v4395
      %v4397 = vand.u32 %v3659, 4294901760
      %4398 = vmatpush.msra.mxu0 %v4397
      %v4399 = vand.u32 %v3658, 4294901760
      %4400 = vmatpush.msra.mxu0 %v4399
      %v4401 = vand.u32 %v3657, 4294901760
      %4402 = vmatpush.msra.mxu0 %v4401
      %v4403 = vand.u32 %v3656, 4294901760
      %4404 = vmatpush.msra.mxu0 %v4403
      %v4405 = vand.u32 %v3655, 4294901760
      %4406 = vmatpush.msra.mxu0 %v4405
      %v4407 = vand.u32 %v3654, 4294901760
      %4408 = vmatpush.msra.mxu0 %v4407
      %v4409 = vand.u32 %v3636, 4294901760
      %4410 = vmatmul.f32.gmra.mxu0 %v4409
      %v4411 = vpop.f32.mrf.mxu0
      %v4412 = vadd.f32 %v4371, %v4411
      %v4413 = vand.u32 %v3637, 4294901760
      %4414 = vmatmul.f32.gmra.mxu0 %v4413
      %v4415 = vpop.f32.mrf.mxu0
      %v4416 = vadd.f32 %v4375, %v4415
      %4417 = vdwg.mxu0
      %v4418 = vmax.f32 %v4412, 0.0
      %v4419 = vmax.f32 %v4416, 0.0
      %4420 = vst [vmem:[#allocation4] sm:$0xff] %v2847
      %4421 = vst [vmem:[#allocation5] sm:$0xff] %v3633
      %v4422 = vadd.f32 %v4418, %v2846
      %v4423 = vadd.f32 %v4419, %v2847
      %v4424 = vmax.f32 %v4422, 0.0
      %v4425 = vmax.f32 %v4423, 0.0
      %4426 = vst [vmem:[#allocation6 + $0x8] sm:$0xff] %v4424
      %4427 = vst [vmem:[#allocation6 + $0x10] sm:$0xff] %v4425
      %v4428 = vld [vmem:[#allocation6 + $0x4] sm:$0xff]
      %v4429 = vld [vmem:[#allocation6 + $0xc] sm:$0xff]
      %v4430 = vld [vmem:[%s9] sm:$0xff]
      %v4431 = vld [vmem:[%s9 + $0x8] sm:$0xff]
      %v4432 = vld [vmem:[%s9 + $0x10] sm:$0xff]
      %v4433 = vld [vmem:[%s9 + $0x18] sm:$0xff]
      %v4434 = vld [vmem:[%s9 + $0x20] sm:$0xff]
      %v4435 = vld [vmem:[%s9 + $0x28] sm:$0xff]
      %v4436 = vld [vmem:[%s9 + $0x30] sm:$0xff]
      %v4437 = vld [vmem:[%s9 + $0x38] sm:$0xff]
      %v4438 = vld [vmem:[%s9 + $0x40] sm:$0xff]
      %v4439 = vld [vmem:[%s9 + $0x48] sm:$0xff]
      %v4440 = vld [vmem:[%s9 + $0x50] sm:$0xff]
      %v4441 = vld [vmem:[%s9 + $0x58] sm:$0xff]
      %v4442 = vld [vmem:[%s9 + $0x60] sm:$0xff]
      %v4443 = vld [vmem:[%s9 + $0x68] sm:$0xff]
      %v4444 = vld [vmem:[%s9 + $0x70] sm:$0xff]
      %v4445 = vld [vmem:[%s9 + $0x78] sm:$0xff]
      %v4446 = vld [vmem:[%s9 + $0x80] sm:$0xff]
      %v4447 = vld [vmem:[%s9 + $0x88] sm:$0xff]
      %v4448 = vld [vmem:[%s9 + $0x90] sm:$0xff]
      %v4449 = vld [vmem:[%s9 + $0x98] sm:$0xff]
      %v4450 = vld [vmem:[%s9 + $0xa0] sm:$0xff]
      %v4451 = vld [vmem:[%s9 + $0xa8] sm:$0xff]
      %v4452 = vld [vmem:[%s9 + $0xb0] sm:$0xff]
      %v4453 = vld [vmem:[%s9 + $0xb8] sm:$0xff]
      %v4454 = vld [vmem:[%s9 + $0xc0] sm:$0xff]
      %v4455 = vld [vmem:[%s9 + $0xc8] sm:$0xff]
      %v4456 = vld [vmem:[%s9 + $0xd0] sm:$0xff]
      %v4457 = vld [vmem:[%s9 + $0xd8] sm:$0xff]
      %v4458 = vld [vmem:[%s9 + $0xe0] sm:$0xff]
      %v4459 = vld [vmem:[%s9 + $0xe8] sm:$0xff]
      %v4460 = vld [vmem:[%s9 + $0xf0] sm:$0xff]
      %v4461 = vld [vmem:[%s9 + $0xf8] sm:$0xff]
      %v4462 = vld [vmem:[%s9 + $0x100] sm:$0xff]
      %v4463 = vld [vmem:[%s9 + $0x108] sm:$0xff]
      %v4464 = vld [vmem:[%s9 + $0x110] sm:$0xff]
      %v4465 = vld [vmem:[%s9 + $0x118] sm:$0xff]
      %v4466 = vld [vmem:[%s9 + $0x120] sm:$0xff]
      %v4467 = vld [vmem:[%s9 + $0x128] sm:$0xff]
      %v4468 = vld [vmem:[%s9 + $0x130] sm:$0xff]
      %v4469 = vld [vmem:[%s9 + $0x138] sm:$0xff]
      %v4470 = vld [vmem:[%s9 + $0x140] sm:$0xff]
      %v4471 = vld [vmem:[%s9 + $0x148] sm:$0xff]
      %v4472 = vld [vmem:[%s9 + $0x150] sm:$0xff]
      %v4473 = vld [vmem:[%s9 + $0x158] sm:$0xff]
      %v4474 = vld [vmem:[%s9 + $0x160] sm:$0xff]
      %v4475 = vld [vmem:[%s9 + $0x168] sm:$0xff]
      %v4476 = vld [vmem:[%s9 + $0x170] sm:$0xff]
      %v4477 = vld [vmem:[%s9 + $0x178] sm:$0xff]
      %v4478 = vld [vmem:[%s9 + $0x180] sm:$0xff]
      %v4479 = vld [vmem:[%s9 + $0x188] sm:$0xff]
      %v4480 = vld [vmem:[%s9 + $0x190] sm:$0xff]
      %v4481 = vld [vmem:[%s9 + $0x198] sm:$0xff]
      %v4482 = vld [vmem:[%s9 + $0x1a0] sm:$0xff]
      %v4483 = vld [vmem:[%s9 + $0x1a8] sm:$0xff]
      %v4484 = vld [vmem:[%s9 + $0x1b0] sm:$0xff]
      %v4485 = vld [vmem:[%s9 + $0x1b8] sm:$0xff]
      %v4486 = vld [vmem:[%s9 + $0x1c0] sm:$0xff]
      %v4487 = vld [vmem:[%s9 + $0x1c8] sm:$0xff]
      %v4488 = vld [vmem:[%s9 + $0x1d0] sm:$0xff]
      %v4489 = vld [vmem:[%s9 + $0x1d8] sm:$0xff]
      %v4490 = vld [vmem:[%s9 + $0x1e0] sm:$0xff]
      %v4491 = vld [vmem:[%s9 + $0x1e8] sm:$0xff]
      %v4492 = vld [vmem:[%s9 + $0x1f0] sm:$0xff]
      %v4493 = vld [vmem:[%s9 + $0x1f8] sm:$0xff]
      %v4494 = vld [vmem:[%s10] sm:$0x3]
      %v4496 = vperm.slane %v4494, 0
      %v4497 = vperm.slane %v4494, 1
      %v4500 = vand.u32 %v4460, 4294901760
      %4501 = vmatpush.msra.mxu0 %v4500
      %v4502 = vand.u32 %v4458, 4294901760
      %4503 = vmatpush.msra.mxu0 %v4502
      %v4504 = vand.u32 %v4456, 4294901760
      %4505 = vmatpush.msra.mxu0 %v4504
      %v4506 = vand.u32 %v4454, 4294901760
      %4507 = vmatpush.msra.mxu0 %v4506
      %v4508 = vand.u32 %v4452, 4294901760
      %4509 = vmatpush.msra.mxu0 %v4508
      %v4510 = vand.u32 %v4450, 4294901760
      %4511 = vmatpush.msra.mxu0 %v4510
      %v4512 = vand.u32 %v4448, 4294901760
      %4513 = vmatpush.msra.mxu0 %v4512
      %v4514 = vand.u32 %v4446, 4294901760
      %4515 = vmatpush.msra.mxu0 %v4514
      %v4516 = vand.u32 %v4444, 4294901760
      %4517 = vmatpush.msra.mxu0 %v4516
      %v4518 = vand.u32 %v4442, 4294901760
      %4519 = vmatpush.msra.mxu0 %v4518
      %v4520 = vand.u32 %v4440, 4294901760
      %4521 = vmatpush.msra.mxu0 %v4520
      %v4522 = vand.u32 %v4438, 4294901760
      %4523 = vmatpush.msra.mxu0 %v4522
      %v4524 = vand.u32 %v4436, 4294901760
      %4525 = vmatpush.msra.mxu0 %v4524
      %v4526 = vand.u32 %v4434, 4294901760
      %4527 = vmatpush.msra.mxu0 %v4526
      %v4528 = vand.u32 %v4432, 4294901760
      %4529 = vmatpush.msra.mxu0 %v4528
      %v4530 = vand.u32 %v4430, 4294901760
      %4531 = vmatpush.msra.mxu0 %v4530
      %v4532 = vand.u32 %v4424, 4294901760
      %v4533 = vsub.f32 %v4424, %v4532
      %v4534 = vand.u32 %v4533, 4294901760
      %v4535 = vsub.f32 %v4533, %v4534
      %v4536 = vand.u32 %v4535, 4294901760
      %4537 = vmatmul.f32.gmra.mxu0 %v4536
      %v4538 = vpop.f32.mrf.mxu0
      %v4539 = vadd.f32 %v4496, %v4538
      %v4540 = vand.u32 %v4425, 4294901760
      %v4541 = vsub.f32 %v4425, %v4540
      %v4542 = vand.u32 %v4541, 4294901760
      %v4543 = vsub.f32 %v4541, %v4542
      %v4544 = vand.u32 %v4543, 4294901760
      %4545 = vmatmul.f32.gmra.mxu0 %v4544
      %v4546 = vpop.f32.mrf.mxu0
      %v4547 = vadd.f32 %v4496, %v4546
      %4548 = vdwg.mxu0
      %v4549 = vand.u32 %v4460, 4294901760
      %v4550 = vsub.f32 %v4460, %v4549
      %v4551 = vand.u32 %v4550, 4294901760
      %v4552 = vsub.f32 %v4550, %v4551
      %v4553 = vand.u32 %v4552, 4294901760
      %4554 = vmatpush.msra.mxu0 %v4553
      %v4555 = vand.u32 %v4458, 4294901760
      %v4556 = vsub.f32 %v4458, %v4555
      %v4557 = vand.u32 %v4556, 4294901760
      %v4558 = vsub.f32 %v4556, %v4557
      %v4559 = vand.u32 %v4558, 4294901760
      %4560 = vmatpush.msra.mxu0 %v4559
      %v4561 = vand.u32 %v4456, 4294901760
      %v4562 = vsub.f32 %v4456, %v4561
      %v4563 = vand.u32 %v4562, 4294901760
      %v4564 = vsub.f32 %v4562, %v4563
      %v4565 = vand.u32 %v4564, 4294901760
      %4566 = vmatpush.msra.mxu0 %v4565
      %v4567 = vand.u32 %v4454, 4294901760
      %v4568 = vsub.f32 %v4454, %v4567
      %v4569 = vand.u32 %v4568, 4294901760
      %v4570 = vsub.f32 %v4568, %v4569
      %v4571 = vand.u32 %v4570, 4294901760
      %4572 = vmatpush.msra.mxu0 %v4571
      %v4573 = vand.u32 %v4452, 4294901760
      %v4574 = vsub.f32 %v4452, %v4573
      %v4575 = vand.u32 %v4574, 4294901760
      %v4576 = vsub.f32 %v4574, %v4575
      %v4577 = vand.u32 %v4576, 4294901760
      %4578 = vmatpush.msra.mxu0 %v4577
      %v4579 = vand.u32 %v4450, 4294901760
      %v4580 = vsub.f32 %v4450, %v4579
      %v4581 = vand.u32 %v4580, 4294901760
      %v4582 = vsub.f32 %v4580, %v4581
      %v4583 = vand.u32 %v4582, 4294901760
      %4584 = vmatpush.msra.mxu0 %v4583
      %v4585 = vand.u32 %v4448, 4294901760
      %v4586 = vsub.f32 %v4448, %v4585
      %v4587 = vand.u32 %v4586, 4294901760
      %v4588 = vsub.f32 %v4586, %v4587
      %v4589 = vand.u32 %v4588, 4294901760
      %4590 = vmatpush.msra.mxu0 %v4589
      %v4591 = vand.u32 %v4446, 4294901760
      %v4592 = vsub.f32 %v4446, %v4591
      %v4593 = vand.u32 %v4592, 4294901760
      %v4594 = vsub.f32 %v4592, %v4593
      %v4595 = vand.u32 %v4594, 4294901760
      %4596 = vmatpush.msra.mxu0 %v4595
      %v4597 = vand.u32 %v4444, 4294901760
      %v4598 = vsub.f32 %v4444, %v4597
      %v4599 = vand.u32 %v4598, 4294901760
      %v4600 = vsub.f32 %v4598, %v4599
      %v4601 = vand.u32 %v4600, 4294901760
      %4602 = vmatpush.msra.mxu0 %v4601
      %v4603 = vand.u32 %v4442, 4294901760
      %v4604 = vsub.f32 %v4442, %v4603
      %v4605 = vand.u32 %v4604, 4294901760
      %v4606 = vsub.f32 %v4604, %v4605
      %v4607 = vand.u32 %v4606, 4294901760
      %4608 = vmatpush.msra.mxu0 %v4607
      %v4609 = vand.u32 %v4440, 4294901760
      %v4610 = vsub.f32 %v4440, %v4609
      %v4611 = vand.u32 %v4610, 4294901760
      %v4612 = vsub.f32 %v4610, %v4611
      %v4613 = vand.u32 %v4612, 4294901760
      %4614 = vmatpush.msra.mxu0 %v4613
      %v4615 = vand.u32 %v4438, 4294901760
      %v4616 = vsub.f32 %v4438, %v4615
      %v4617 = vand.u32 %v4616, 4294901760
      %v4618 = vsub.f32 %v4616, %v4617
      %v4619 = vand.u32 %v4618, 4294901760
      %4620 = vmatpush.msra.mxu0 %v4619
      %v4621 = vand.u32 %v4436, 4294901760
      %v4622 = vsub.f32 %v4436, %v4621
      %v4623 = vand.u32 %v4622, 4294901760
      %v4624 = vsub.f32 %v4622, %v4623
      %v4625 = vand.u32 %v4624, 4294901760
      %4626 = vmatpush.msra.mxu0 %v4625
      %v4627 = vand.u32 %v4434, 4294901760
      %v4628 = vsub.f32 %v4434, %v4627
      %v4629 = vand.u32 %v4628, 4294901760
      %v4630 = vsub.f32 %v4628, %v4629
      %v4631 = vand.u32 %v4630, 4294901760
      %4632 = vmatpush.msra.mxu0 %v4631
      %v4633 = vand.u32 %v4432, 4294901760
      %v4634 = vsub.f32 %v4432, %v4633
      %v4635 = vand.u32 %v4634, 4294901760
      %v4636 = vsub.f32 %v4634, %v4635
      %v4637 = vand.u32 %v4636, 4294901760
      %4638 = vmatpush.msra.mxu0 %v4637
      %v4639 = vand.u32 %v4430, 4294901760
      %v4640 = vsub.f32 %v4430, %v4639
      %v4641 = vand.u32 %v4640, 4294901760
      %v4642 = vsub.f32 %v4640, %v4641
      %v4643 = vand.u32 %v4642, 4294901760
      %4644 = vmatpush.msra.mxu0 %v4643
      %v4645 = vand.u32 %v4424, 4294901760
      %4646 = vmatmul.f32.gmra.mxu0 %v4645
      %v4647 = vpop.f32.mrf.mxu0
      %v4648 = vadd.f32 %v4539, %v4647
      %v4649 = vand.u32 %v4425, 4294901760
      %4650 = vmatmul.f32.gmra.mxu0 %v4649
      %v4651 = vpop.f32.mrf.mxu0
      %v4652 = vadd.f32 %v4547, %v4651
      %4653 = vdwg.mxu0
      %v4654 = vand.u32 %v4460, 4294901760
      %v4655 = vsub.f32 %v4460, %v4654
      %4656 = vmatpush.msra.mxu0 %v4655
      %v4657 = vand.u32 %v4458, 4294901760
      %v4658 = vsub.f32 %v4458, %v4657
      %4659 = vmatpush.msra.mxu0 %v4658
      %v4660 = vand.u32 %v4456, 4294901760
      %v4661 = vsub.f32 %v4456, %v4660
      %4662 = vmatpush.msra.mxu0 %v4661
      %v4663 = vand.u32 %v4454, 4294901760
      %v4664 = vsub.f32 %v4454, %v4663
      %4665 = vmatpush.msra.mxu0 %v4664
      %v4666 = vand.u32 %v4452, 4294901760
      %v4667 = vsub.f32 %v4452, %v4666
      %4668 = vmatpush.msra.mxu0 %v4667
      %v4669 = vand.u32 %v4450, 4294901760
      %v4670 = vsub.f32 %v4450, %v4669
      %4671 = vmatpush.msra.mxu0 %v4670
      %v4672 = vand.u32 %v4448, 4294901760
      %v4673 = vsub.f32 %v4448, %v4672
      %4674 = vmatpush.msra.mxu0 %v4673
      %v4675 = vand.u32 %v4446, 4294901760
      %v4676 = vsub.f32 %v4446, %v4675
      %4677 = vmatpush.msra.mxu0 %v4676
      %v4678 = vand.u32 %v4444, 4294901760
      %v4679 = vsub.f32 %v4444, %v4678
      %4680 = vmatpush.msra.mxu0 %v4679
      %v4681 = vand.u32 %v4442, 4294901760
      %v4682 = vsub.f32 %v4442, %v4681
      %4683 = vmatpush.msra.mxu0 %v4682
      %v4684 = vand.u32 %v4440, 4294901760
      %v4685 = vsub.f32 %v4440, %v4684
      %4686 = vmatpush.msra.mxu0 %v4685
      %v4687 = vand.u32 %v4438, 4294901760
      %v4688 = vsub.f32 %v4438, %v4687
      %4689 = vmatpush.msra.mxu0 %v4688
      %v4690 = vand.u32 %v4436, 4294901760
      %v4691 = vsub.f32 %v4436, %v4690
      %4692 = vmatpush.msra.mxu0 %v4691
      %v4693 = vand.u32 %v4434, 4294901760
      %v4694 = vsub.f32 %v4434, %v4693
      %4695 = vmatpush.msra.mxu0 %v4694
      %v4696 = vand.u32 %v4432, 4294901760
      %v4697 = vsub.f32 %v4432, %v4696
      %4698 = vmatpush.msra.mxu0 %v4697
      %v4699 = vand.u32 %v4430, 4294901760
      %v4700 = vsub.f32 %v4430, %v4699
      %4701 = vmatpush.msra.mxu0 %v4700
      %v4702 = vand.u32 %v4424, 4294901760
      %v4703 = vsub.f32 %v4424, %v4702
      %4704 = vmatmul.f32.gmra.mxu0 %v4703
      %v4705 = vpop.f32.mrf.mxu0
      %v4706 = vadd.f32 %v4648, %v4705
      %v4707 = vand.u32 %v4425, 4294901760
      %v4708 = vsub.f32 %v4425, %v4707
      %4709 = vmatmul.f32.gmra.mxu0 %v4708
      %v4710 = vpop.f32.mrf.mxu0
      %v4711 = vadd.f32 %v4652, %v4710
      %4712 = vdwg.mxu0
      %v4713 = vand.u32 %v4460, 4294901760
      %4714 = vmatpush.msra.mxu0 %v4713
      %v4715 = vand.u32 %v4458, 4294901760
      %4716 = vmatpush.msra.mxu0 %v4715
      %v4717 = vand.u32 %v4456, 4294901760
      %4718 = vmatpush.msra.mxu0 %v4717
      %v4719 = vand.u32 %v4454, 4294901760
      %4720 = vmatpush.msra.mxu0 %v4719
      %v4721 = vand.u32 %v4452, 4294901760
      %4722 = vmatpush.msra.mxu0 %v4721
      %v4723 = vand.u32 %v4450, 4294901760
      %4724 = vmatpush.msra.mxu0 %v4723
      %v4725 = vand.u32 %v4448, 4294901760
      %4726 = vmatpush.msra.mxu0 %v4725
      %v4727 = vand.u32 %v4446, 4294901760
      %4728 = vmatpush.msra.mxu0 %v4727
      %v4729 = vand.u32 %v4444, 4294901760
      %4730 = vmatpush.msra.mxu0 %v4729
      %v4731 = vand.u32 %v4442, 4294901760
      %4732 = vmatpush.msra.mxu0 %v4731
      %v4733 = vand.u32 %v4440, 4294901760
      %4734 = vmatpush.msra.mxu0 %v4733
      %v4735 = vand.u32 %v4438, 4294901760
      %4736 = vmatpush.msra.mxu0 %v4735
      %v4737 = vand.u32 %v4436, 4294901760
      %4738 = vmatpush.msra.mxu0 %v4737
      %v4739 = vand.u32 %v4434, 4294901760
      %4740 = vmatpush.msra.mxu0 %v4739
      %v4741 = vand.u32 %v4432, 4294901760
      %4742 = vmatpush.msra.mxu0 %v4741
      %v4743 = vand.u32 %v4430, 4294901760
      %4744 = vmatpush.msra.mxu0 %v4743
      %v4745 = vand.u32 %v4424, 4294901760
      %v4746 = vsub.f32 %v4424, %v4745
      %v4747 = vand.u32 %v4746, 4294901760
      %4748 = vmatmul.f32.gmra.mxu0 %v4747
      %v4749 = vpop.f32.mrf.mxu0
      %v4750 = vadd.f32 %v4706, %v4749
      %v4751 = vand.u32 %v4425, 4294901760
      %v4752 = vsub.f32 %v4425, %v4751
      %v4753 = vand.u32 %v4752, 4294901760
      %4754 = vmatmul.f32.gmra.mxu0 %v4753
      %v4755 = vpop.f32.mrf.mxu0
      %v4756 = vadd.f32 %v4711, %v4755
      %4757 = vdwg.mxu0
      %v4758 = vand.u32 %v4460, 4294901760
      %v4759 = vsub.f32 %v4460, %v4758
      %v4760 = vand.u32 %v4759, 4294901760
      %4761 = vmatpush.msra.mxu0 %v4760
      %v4762 = vand.u32 %v4458, 4294901760
      %v4763 = vsub.f32 %v4458, %v4762
      %v4764 = vand.u32 %v4763, 4294901760
      %4765 = vmatpush.msra.mxu0 %v4764
      %v4766 = vand.u32 %v4456, 4294901760
      %v4767 = vsub.f32 %v4456, %v4766
      %v4768 = vand.u32 %v4767, 4294901760
      %4769 = vmatpush.msra.mxu0 %v4768
      %v4770 = vand.u32 %v4454, 4294901760
      %v4771 = vsub.f32 %v4454, %v4770
      %v4772 = vand.u32 %v4771, 4294901760
      %4773 = vmatpush.msra.mxu0 %v4772
      %v4774 = vand.u32 %v4452, 4294901760
      %v4775 = vsub.f32 %v4452, %v4774
      %v4776 = vand.u32 %v4775, 4294901760
      %4777 = vmatpush.msra.mxu0 %v4776
      %v4778 = vand.u32 %v4450, 4294901760
      %v4779 = vsub.f32 %v4450, %v4778
      %v4780 = vand.u32 %v4779, 4294901760
      %4781 = vmatpush.msra.mxu0 %v4780
      %v4782 = vand.u32 %v4448, 4294901760
      %v4783 = vsub.f32 %v4448, %v4782
      %v4784 = vand.u32 %v4783, 4294901760
      %4785 = vmatpush.msra.mxu0 %v4784
      %v4786 = vand.u32 %v4446, 4294901760
      %v4787 = vsub.f32 %v4446, %v4786
      %v4788 = vand.u32 %v4787, 4294901760
      %4789 = vmatpush.msra.mxu0 %v4788
      %v4790 = vand.u32 %v4444, 4294901760
      %v4791 = vsub.f32 %v4444, %v4790
      %v4792 = vand.u32 %v4791, 4294901760
      %4793 = vmatpush.msra.mxu0 %v4792
      %v4794 = vand.u32 %v4442, 4294901760
      %v4795 = vsub.f32 %v4442, %v4794
      %v4796 = vand.u32 %v4795, 4294901760
      %4797 = vmatpush.msra.mxu0 %v4796
      %v4798 = vand.u32 %v4440, 4294901760
      %v4799 = vsub.f32 %v4440, %v4798
      %v4800 = vand.u32 %v4799, 4294901760
      %4801 = vmatpush.msra.mxu0 %v4800
      %v4802 = vand.u32 %v4438, 4294901760
      %v4803 = vsub.f32 %v4438, %v4802
      %v4804 = vand.u32 %v4803, 4294901760
      %4805 = vmatpush.msra.mxu0 %v4804
      %v4806 = vand.u32 %v4436, 4294901760
      %v4807 = vsub.f32 %v4436, %v4806
      %v4808 = vand.u32 %v4807, 4294901760
      %4809 = vmatpush.msra.mxu0 %v4808
      %v4810 = vand.u32 %v4434, 4294901760
      %v4811 = vsub.f32 %v4434, %v4810
      %v4812 = vand.u32 %v4811, 4294901760
      %4813 = vmatpush.msra.mxu0 %v4812
      %v4814 = vand.u32 %v4432, 4294901760
      %v4815 = vsub.f32 %v4432, %v4814
      %v4816 = vand.u32 %v4815, 4294901760
      %4817 = vmatpush.msra.mxu0 %v4816
      %v4818 = vand.u32 %v4430, 4294901760
      %v4819 = vsub.f32 %v4430, %v4818
      %v4820 = vand.u32 %v4819, 4294901760
      %4821 = vmatpush.msra.mxu0 %v4820
      %v4822 = vand.u32 %v4424, 4294901760
      %4823 = vmatmul.f32.gmra.mxu0 %v4822
      %v4824 = vpop.f32.mrf.mxu0
      %v4825 = vadd.f32 %v4750, %v4824
      %v4826 = vand.u32 %v4425, 4294901760
      %4827 = vmatmul.f32.gmra.mxu0 %v4826
      %v4828 = vpop.f32.mrf.mxu0
      %v4829 = vadd.f32 %v4756, %v4828
      %4830 = vdwg.mxu0
      %v4831 = vand.u32 %v4460, 4294901760
      %4832 = vmatpush.msra.mxu0 %v4831
      %v4833 = vand.u32 %v4458, 4294901760
      %4834 = vmatpush.msra.mxu0 %v4833
      %v4835 = vand.u32 %v4456, 4294901760
      %4836 = vmatpush.msra.mxu0 %v4835
      %v4837 = vand.u32 %v4454, 4294901760
      %4838 = vmatpush.msra.mxu0 %v4837
      %v4839 = vand.u32 %v4452, 4294901760
      %4840 = vmatpush.msra.mxu0 %v4839
      %v4841 = vand.u32 %v4450, 4294901760
      %4842 = vmatpush.msra.mxu0 %v4841
      %v4843 = vand.u32 %v4448, 4294901760
      %4844 = vmatpush.msra.mxu0 %v4843
      %v4845 = vand.u32 %v4446, 4294901760
      %4846 = vmatpush.msra.mxu0 %v4845
      %v4847 = vand.u32 %v4444, 4294901760
      %4848 = vmatpush.msra.mxu0 %v4847
      %v4849 = vand.u32 %v4442, 4294901760
      %4850 = vmatpush.msra.mxu0 %v4849
      %v4851 = vand.u32 %v4440, 4294901760
      %4852 = vmatpush.msra.mxu0 %v4851
      %v4853 = vand.u32 %v4438, 4294901760
      %4854 = vmatpush.msra.mxu0 %v4853
      %v4855 = vand.u32 %v4436, 4294901760
      %4856 = vmatpush.msra.mxu0 %v4855
      %v4857 = vand.u32 %v4434, 4294901760
      %4858 = vmatpush.msra.mxu0 %v4857
      %v4859 = vand.u32 %v4432, 4294901760
      %4860 = vmatpush.msra.mxu0 %v4859
      %v4861 = vand.u32 %v4430, 4294901760
      %4862 = vmatpush.msra.mxu0 %v4861
      %v4863 = vand.u32 %v4424, 4294901760
      %4864 = vmatmul.f32.gmra.mxu0 %v4863
      %v4865 = vpop.f32.mrf.mxu0
      %v4866 = vadd.f32 %v4825, %v4865
      %v4867 = vand.u32 %v4425, 4294901760
      %4868 = vmatmul.f32.gmra.mxu0 %v4867
      %v4869 = vpop.f32.mrf.mxu0
      %v4870 = vadd.f32 %v4829, %v4869
      %4871 = vdwg.mxu0
      %v4872 = vand.u32 %v4492, 4294901760
      %4873 = vmatpush.msra.mxu0 %v4872
      %v4874 = vand.u32 %v4490, 4294901760
      %4875 = vmatpush.msra.mxu0 %v4874
      %v4876 = vand.u32 %v4488, 4294901760
      %4877 = vmatpush.msra.mxu0 %v4876
      %v4878 = vand.u32 %v4486, 4294901760
      %4879 = vmatpush.msra.mxu0 %v4878
      %v4880 = vand.u32 %v4484, 4294901760
      %4881 = vmatpush.msra.mxu0 %v4880
      %v4882 = vand.u32 %v4482, 4294901760
      %4883 = vmatpush.msra.mxu0 %v4882
      %v4884 = vand.u32 %v4480, 4294901760
      %4885 = vmatpush.msra.mxu0 %v4884
      %v4886 = vand.u32 %v4478, 4294901760
      %4887 = vmatpush.msra.mxu0 %v4886
      %v4888 = vand.u32 %v4476, 4294901760
      %4889 = vmatpush.msra.mxu0 %v4888
      %v4890 = vand.u32 %v4474, 4294901760
      %4891 = vmatpush.msra.mxu0 %v4890
      %v4892 = vand.u32 %v4472, 4294901760
      %4893 = vmatpush.msra.mxu0 %v4892
      %v4894 = vand.u32 %v4470, 4294901760
      %4895 = vmatpush.msra.mxu0 %v4894
      %v4896 = vand.u32 %v4468, 4294901760
      %4897 = vmatpush.msra.mxu0 %v4896
      %v4898 = vand.u32 %v4466, 4294901760
      %4899 = vmatpush.msra.mxu0 %v4898
      %v4900 = vand.u32 %v4464, 4294901760
      %4901 = vmatpush.msra.mxu0 %v4900
      %v4902 = vand.u32 %v4462, 4294901760
      %4903 = vmatpush.msra.mxu0 %v4902
      %v4904 = vand.u32 %v4428, 4294901760
      %v4905 = vsub.f32 %v4428, %v4904
      %v4906 = vand.u32 %v4905, 4294901760
      %v4907 = vsub.f32 %v4905, %v4906
      %v4908 = vand.u32 %v4907, 4294901760
      %4909 = vmatmul.f32.gmra.mxu0 %v4908
      %v4910 = vpop.f32.mrf.mxu0
      %v4911 = vadd.f32 %v4866, %v4910
      %v4912 = vand.u32 %v4429, 4294901760
      %v4913 = vsub.f32 %v4429, %v4912
      %v4914 = vand.u32 %v4913, 4294901760
      %v4915 = vsub.f32 %v4913, %v4914
      %v4916 = vand.u32 %v4915, 4294901760
      %4917 = vmatmul.f32.gmra.mxu0 %v4916
      %v4918 = vpop.f32.mrf.mxu0
      %v4919 = vadd.f32 %v4870, %v4918
      %4920 = vdwg.mxu0
      %v4921 = vand.u32 %v4492, 4294901760
      %v4922 = vsub.f32 %v4492, %v4921
      %v4923 = vand.u32 %v4922, 4294901760
      %v4924 = vsub.f32 %v4922, %v4923
      %v4925 = vand.u32 %v4924, 4294901760
      %4926 = vmatpush.msra.mxu0 %v4925
      %v4927 = vand.u32 %v4490, 4294901760
      %v4928 = vsub.f32 %v4490, %v4927
      %v4929 = vand.u32 %v4928, 4294901760
      %v4930 = vsub.f32 %v4928, %v4929
      %v4931 = vand.u32 %v4930, 4294901760
      %4932 = vmatpush.msra.mxu0 %v4931
      %v4933 = vand.u32 %v4488, 4294901760
      %v4934 = vsub.f32 %v4488, %v4933
      %v4935 = vand.u32 %v4934, 4294901760
      %v4936 = vsub.f32 %v4934, %v4935
      %v4937 = vand.u32 %v4936, 4294901760
      %4938 = vmatpush.msra.mxu0 %v4937
      %v4939 = vand.u32 %v4486, 4294901760
      %v4940 = vsub.f32 %v4486, %v4939
      %v4941 = vand.u32 %v4940, 4294901760
      %v4942 = vsub.f32 %v4940, %v4941
      %v4943 = vand.u32 %v4942, 4294901760
      %4944 = vmatpush.msra.mxu0 %v4943
      %v4945 = vand.u32 %v4484, 4294901760
      %v4946 = vsub.f32 %v4484, %v4945
      %v4947 = vand.u32 %v4946, 4294901760
      %v4948 = vsub.f32 %v4946, %v4947
      %v4949 = vand.u32 %v4948, 4294901760
      %4950 = vmatpush.msra.mxu0 %v4949
      %v4951 = vand.u32 %v4482, 4294901760
      %v4952 = vsub.f32 %v4482, %v4951
      %v4953 = vand.u32 %v4952, 4294901760
      %v4954 = vsub.f32 %v4952, %v4953
      %v4955 = vand.u32 %v4954, 4294901760
      %4956 = vmatpush.msra.mxu0 %v4955
      %v4957 = vand.u32 %v4480, 4294901760
      %v4958 = vsub.f32 %v4480, %v4957
      %v4959 = vand.u32 %v4958, 4294901760
      %v4960 = vsub.f32 %v4958, %v4959
      %v4961 = vand.u32 %v4960, 4294901760
      %4962 = vmatpush.msra.mxu0 %v4961
      %v4963 = vand.u32 %v4478, 4294901760
      %v4964 = vsub.f32 %v4478, %v4963
      %v4965 = vand.u32 %v4964, 4294901760
      %v4966 = vsub.f32 %v4964, %v4965
      %v4967 = vand.u32 %v4966, 4294901760
      %4968 = vmatpush.msra.mxu0 %v4967
      %v4969 = vand.u32 %v4476, 4294901760
      %v4970 = vsub.f32 %v4476, %v4969
      %v4971 = vand.u32 %v4970, 4294901760
      %v4972 = vsub.f32 %v4970, %v4971
      %v4973 = vand.u32 %v4972, 4294901760
      %4974 = vmatpush.msra.mxu0 %v4973
      %v4975 = vand.u32 %v4474, 4294901760
      %v4976 = vsub.f32 %v4474, %v4975
      %v4977 = vand.u32 %v4976, 4294901760
      %v4978 = vsub.f32 %v4976, %v4977
      %v4979 = vand.u32 %v4978, 4294901760
      %4980 = vmatpush.msra.mxu0 %v4979
      %v4981 = vand.u32 %v4472, 4294901760
      %v4982 = vsub.f32 %v4472, %v4981
      %v4983 = vand.u32 %v4982, 4294901760
      %v4984 = vsub.f32 %v4982, %v4983
      %v4985 = vand.u32 %v4984, 4294901760
      %4986 = vmatpush.msra.mxu0 %v4985
      %v4987 = vand.u32 %v4470, 4294901760
      %v4988 = vsub.f32 %v4470, %v4987
      %v4989 = vand.u32 %v4988, 4294901760
      %v4990 = vsub.f32 %v4988, %v4989
      %v4991 = vand.u32 %v4990, 4294901760
      %4992 = vmatpush.msra.mxu0 %v4991
      %v4993 = vand.u32 %v4468, 4294901760
      %v4994 = vsub.f32 %v4468, %v4993
      %v4995 = vand.u32 %v4994, 4294901760
      %v4996 = vsub.f32 %v4994, %v4995
      %v4997 = vand.u32 %v4996, 4294901760
      %4998 = vmatpush.msra.mxu0 %v4997
      %v4999 = vand.u32 %v4466, 4294901760
      %v5000 = vsub.f32 %v4466, %v4999
      %v5001 = vand.u32 %v5000, 4294901760
      %v5002 = vsub.f32 %v5000, %v5001
      %v5003 = vand.u32 %v5002, 4294901760
      %5004 = vmatpush.msra.mxu0 %v5003
      %v5005 = vand.u32 %v4464, 4294901760
      %v5006 = vsub.f32 %v4464, %v5005
      %v5007 = vand.u32 %v5006, 4294901760
      %v5008 = vsub.f32 %v5006, %v5007
      %v5009 = vand.u32 %v5008, 4294901760
      %5010 = vmatpush.msra.mxu0 %v5009
      %v5011 = vand.u32 %v4462, 4294901760
      %v5012 = vsub.f32 %v4462, %v5011
      %v5013 = vand.u32 %v5012, 4294901760
      %v5014 = vsub.f32 %v5012, %v5013
      %v5015 = vand.u32 %v5014, 4294901760
      %5016 = vmatpush.msra.mxu0 %v5015
      %v5017 = vand.u32 %v4428, 4294901760
      %5018 = vmatmul.f32.gmra.mxu0 %v5017
      %v5019 = vpop.f32.mrf.mxu0
      %v5020 = vadd.f32 %v4911, %v5019
      %v5021 = vand.u32 %v4429, 4294901760
      %5022 = vmatmul.f32.gmra.mxu0 %v5021
      %v5023 = vpop.f32.mrf.mxu0
      %v5024 = vadd.f32 %v4919, %v5023
      %5025 = vdwg.mxu0
      %v5026 = vand.u32 %v4492, 4294901760
      %v5027 = vsub.f32 %v4492, %v5026
      %5028 = vmatpush.msra.mxu0 %v5027
      %v5029 = vand.u32 %v4490, 4294901760
      %v5030 = vsub.f32 %v4490, %v5029
      %5031 = vmatpush.msra.mxu0 %v5030
      %v5032 = vand.u32 %v4488, 4294901760
      %v5033 = vsub.f32 %v4488, %v5032
      %5034 = vmatpush.msra.mxu0 %v5033
      %v5035 = vand.u32 %v4486, 4294901760
      %v5036 = vsub.f32 %v4486, %v5035
      %5037 = vmatpush.msra.mxu0 %v5036
      %v5038 = vand.u32 %v4484, 4294901760
      %v5039 = vsub.f32 %v4484, %v5038
      %5040 = vmatpush.msra.mxu0 %v5039
      %v5041 = vand.u32 %v4482, 4294901760
      %v5042 = vsub.f32 %v4482, %v5041
      %5043 = vmatpush.msra.mxu0 %v5042
      %v5044 = vand.u32 %v4480, 4294901760
      %v5045 = vsub.f32 %v4480, %v5044
      %5046 = vmatpush.msra.mxu0 %v5045
      %v5047 = vand.u32 %v4478, 4294901760
      %v5048 = vsub.f32 %v4478, %v5047
      %5049 = vmatpush.msra.mxu0 %v5048
      %v5050 = vand.u32 %v4476, 4294901760
      %v5051 = vsub.f32 %v4476, %v5050
      %5052 = vmatpush.msra.mxu0 %v5051
      %v5053 = vand.u32 %v4474, 4294901760
      %v5054 = vsub.f32 %v4474, %v5053
      %5055 = vmatpush.msra.mxu0 %v5054
      %v5056 = vand.u32 %v4472, 4294901760
      %v5057 = vsub.f32 %v4472, %v5056
      %5058 = vmatpush.msra.mxu0 %v5057
      %v5059 = vand.u32 %v4470, 4294901760
      %v5060 = vsub.f32 %v4470, %v5059
      %5061 = vmatpush.msra.mxu0 %v5060
      %v5062 = vand.u32 %v4468, 4294901760
      %v5063 = vsub.f32 %v4468, %v5062
      %5064 = vmatpush.msra.mxu0 %v5063
      %v5065 = vand.u32 %v4466, 4294901760
      %v5066 = vsub.f32 %v4466, %v5065
      %5067 = vmatpush.msra.mxu0 %v5066
      %v5068 = vand.u32 %v4464, 4294901760
      %v5069 = vsub.f32 %v4464, %v5068
      %5070 = vmatpush.msra.mxu0 %v5069
      %v5071 = vand.u32 %v4462, 4294901760
      %v5072 = vsub.f32 %v4462, %v5071
      %5073 = vmatpush.msra.mxu0 %v5072
      %v5074 = vand.u32 %v4428, 4294901760
      %v5075 = vsub.f32 %v4428, %v5074
      %5076 = vmatmul.f32.gmra.mxu0 %v5075
      %v5077 = vpop.f32.mrf.mxu0
      %v5078 = vadd.f32 %v5020, %v5077
      %v5079 = vand.u32 %v4429, 4294901760
      %v5080 = vsub.f32 %v4429, %v5079
      %5081 = vmatmul.f32.gmra.mxu0 %v5080
      %v5082 = vpop.f32.mrf.mxu0
      %v5083 = vadd.f32 %v5024, %v5082
      %5084 = vdwg.mxu0
      %v5085 = vand.u32 %v4492, 4294901760
      %5086 = vmatpush.msra.mxu0 %v5085
      %v5087 = vand.u32 %v4490, 4294901760
      %5088 = vmatpush.msra.mxu0 %v5087
      %v5089 = vand.u32 %v4488, 4294901760
      %5090 = vmatpush.msra.mxu0 %v5089
      %v5091 = vand.u32 %v4486, 4294901760
      %5092 = vmatpush.msra.mxu0 %v5091
      %v5093 = vand.u32 %v4484, 4294901760
      %5094 = vmatpush.msra.mxu0 %v5093
      %v5095 = vand.u32 %v4482, 4294901760
      %5096 = vmatpush.msra.mxu0 %v5095
      %v5097 = vand.u32 %v4480, 4294901760
      %5098 = vmatpush.msra.mxu0 %v5097
      %v5099 = vand.u32 %v4478, 4294901760
      %5100 = vmatpush.msra.mxu0 %v5099
      %v5101 = vand.u32 %v4476, 4294901760
      %5102 = vmatpush.msra.mxu0 %v5101
      %v5103 = vand.u32 %v4474, 4294901760
      %5104 = vmatpush.msra.mxu0 %v5103
      %v5105 = vand.u32 %v4472, 4294901760
      %5106 = vmatpush.msra.mxu0 %v5105
      %v5107 = vand.u32 %v4470, 4294901760
      %5108 = vmatpush.msra.mxu0 %v5107
      %v5109 = vand.u32 %v4468, 4294901760
      %5110 = vmatpush.msra.mxu0 %v5109
      %v5111 = vand.u32 %v4466, 4294901760
      %5112 = vmatpush.msra.mxu0 %v5111
      %v5113 = vand.u32 %v4464, 4294901760
      %5114 = vmatpush.msra.mxu0 %v5113
      %v5115 = vand.u32 %v4462, 4294901760
      %5116 = vmatpush.msra.mxu0 %v5115
      %v5117 = vand.u32 %v4428, 4294901760
      %v5118 = vsub.f32 %v4428, %v5117
      %v5119 = vand.u32 %v5118, 4294901760
      %5120 = vmatmul.f32.gmra.mxu0 %v5119
      %v5121 = vpop.f32.mrf.mxu0
      %v5122 = vadd.f32 %v5078, %v5121
      %v5123 = vand.u32 %v4429, 4294901760
      %v5124 = vsub.f32 %v4429, %v5123
      %v5125 = vand.u32 %v5124, 4294901760
      %5126 = vmatmul.f32.gmra.mxu0 %v5125
      %v5127 = vpop.f32.mrf.mxu0
      %v5128 = vadd.f32 %v5083, %v5127
      %5129 = vdwg.mxu0
      %v5130 = vand.u32 %v4492, 4294901760
      %v5131 = vsub.f32 %v4492, %v5130
      %v5132 = vand.u32 %v5131, 4294901760
      %5133 = vmatpush.msra.mxu0 %v5132
      %v5134 = vand.u32 %v4490, 4294901760
      %v5135 = vsub.f32 %v4490, %v5134
      %v5136 = vand.u32 %v5135, 4294901760
      %5137 = vmatpush.msra.mxu0 %v5136
      %v5138 = vand.u32 %v4488, 4294901760
      %v5139 = vsub.f32 %v4488, %v5138
      %v5140 = vand.u32 %v5139, 4294901760
      %5141 = vmatpush.msra.mxu0 %v5140
      %v5142 = vand.u32 %v4486, 4294901760
      %v5143 = vsub.f32 %v4486, %v5142
      %v5144 = vand.u32 %v5143, 4294901760
      %5145 = vmatpush.msra.mxu0 %v5144
      %v5146 = vand.u32 %v4484, 4294901760
      %v5147 = vsub.f32 %v4484, %v5146
      %v5148 = vand.u32 %v5147, 4294901760
      %5149 = vmatpush.msra.mxu0 %v5148
      %v5150 = vand.u32 %v4482, 4294901760
      %v5151 = vsub.f32 %v4482, %v5150
      %v5152 = vand.u32 %v5151, 4294901760
      %5153 = vmatpush.msra.mxu0 %v5152
      %v5154 = vand.u32 %v4480, 4294901760
      %v5155 = vsub.f32 %v4480, %v5154
      %v5156 = vand.u32 %v5155, 4294901760
      %5157 = vmatpush.msra.mxu0 %v5156
      %v5158 = vand.u32 %v4478, 4294901760
      %v5159 = vsub.f32 %v4478, %v5158
      %v5160 = vand.u32 %v5159, 4294901760
      %5161 = vmatpush.msra.mxu0 %v5160
      %v5162 = vand.u32 %v4476, 4294901760
      %v5163 = vsub.f32 %v4476, %v5162
      %v5164 = vand.u32 %v5163, 4294901760
      %5165 = vmatpush.msra.mxu0 %v5164
      %v5166 = vand.u32 %v4474, 4294901760
      %v5167 = vsub.f32 %v4474, %v5166
      %v5168 = vand.u32 %v5167, 4294901760
      %5169 = vmatpush.msra.mxu0 %v5168
      %v5170 = vand.u32 %v4472, 4294901760
      %v5171 = vsub.f32 %v4472, %v5170
      %v5172 = vand.u32 %v5171, 4294901760
      %5173 = vmatpush.msra.mxu0 %v5172
      %v5174 = vand.u32 %v4470, 4294901760
      %v5175 = vsub.f32 %v4470, %v5174
      %v5176 = vand.u32 %v5175, 4294901760
      %5177 = vmatpush.msra.mxu0 %v5176
      %v5178 = vand.u32 %v4468, 4294901760
      %v5179 = vsub.f32 %v4468, %v5178
      %v5180 = vand.u32 %v5179, 4294901760
      %5181 = vmatpush.msra.mxu0 %v5180
      %v5182 = vand.u32 %v4466, 4294901760
      %v5183 = vsub.f32 %v4466, %v5182
      %v5184 = vand.u32 %v5183, 4294901760
      %5185 = vmatpush.msra.mxu0 %v5184
      %v5186 = vand.u32 %v4464, 4294901760
      %v5187 = vsub.f32 %v4464, %v5186
      %v5188 = vand.u32 %v5187, 4294901760
      %5189 = vmatpush.msra.mxu0 %v5188
      %v5190 = vand.u32 %v4462, 4294901760
      %v5191 = vsub.f32 %v4462, %v5190
      %v5192 = vand.u32 %v5191, 4294901760
      %5193 = vmatpush.msra.mxu0 %v5192
      %v5194 = vand.u32 %v4428, 4294901760
      %5195 = vmatmul.f32.gmra.mxu0 %v5194
      %v5196 = vpop.f32.mrf.mxu0
      %v5197 = vadd.f32 %v5122, %v5196
      %v5198 = vand.u32 %v4429, 4294901760
      %5199 = vmatmul.f32.gmra.mxu0 %v5198
      %v5200 = vpop.f32.mrf.mxu0
      %v5201 = vadd.f32 %v5128, %v5200
      %5202 = vdwg.mxu0
      %v5203 = vand.u32 %v4492, 4294901760
      %5204 = vmatpush.msra.mxu0 %v5203
      %v5205 = vand.u32 %v4490, 4294901760
      %5206 = vmatpush.msra.mxu0 %v5205
      %v5207 = vand.u32 %v4488, 4294901760
      %5208 = vmatpush.msra.mxu0 %v5207
      %v5209 = vand.u32 %v4486, 4294901760
      %5210 = vmatpush.msra.mxu0 %v5209
      %v5211 = vand.u32 %v4484, 4294901760
      %5212 = vmatpush.msra.mxu0 %v5211
      %v5213 = vand.u32 %v4482, 4294901760
      %5214 = vmatpush.msra.mxu0 %v5213
      %v5215 = vand.u32 %v4480, 4294901760
      %5216 = vmatpush.msra.mxu0 %v5215
      %v5217 = vand.u32 %v4478, 4294901760
      %5218 = vmatpush.msra.mxu0 %v5217
      %v5219 = vand.u32 %v4476, 4294901760
      %5220 = vmatpush.msra.mxu0 %v5219
      %v5221 = vand.u32 %v4474, 4294901760
      %5222 = vmatpush.msra.mxu0 %v5221
      %v5223 = vand.u32 %v4472, 4294901760
      %5224 = vmatpush.msra.mxu0 %v5223
      %v5225 = vand.u32 %v4470, 4294901760
      %5226 = vmatpush.msra.mxu0 %v5225
      %v5227 = vand.u32 %v4468, 4294901760
      %5228 = vmatpush.msra.mxu0 %v5227
      %v5229 = vand.u32 %v4466, 4294901760
      %5230 = vmatpush.msra.mxu0 %v5229
      %v5231 = vand.u32 %v4464, 4294901760
      %5232 = vmatpush.msra.mxu0 %v5231
      %v5233 = vand.u32 %v4462, 4294901760
      %5234 = vmatpush.msra.mxu0 %v5233
      %v5235 = vand.u32 %v4428, 4294901760
      %5236 = vmatmul.f32.gmra.mxu0 %v5235
      %v5237 = vpop.f32.mrf.mxu0
      %v5238 = vadd.f32 %v5197, %v5237
      %v5239 = vand.u32 %v4429, 4294901760
      %5240 = vmatmul.f32.gmra.mxu0 %v5239
      %v5241 = vpop.f32.mrf.mxu0
      %v5242 = vadd.f32 %v5201, %v5241
      %5243 = vdwg.mxu0
      %v5244 = vand.u32 %v4461, 4294901760
      %5245 = vmatpush.msra.mxu0 %v5244
      %v5246 = vand.u32 %v4459, 4294901760
      %5247 = vmatpush.msra.mxu0 %v5246
      %v5248 = vand.u32 %v4457, 4294901760
      %5249 = vmatpush.msra.mxu0 %v5248
      %v5250 = vand.u32 %v4455, 4294901760
      %5251 = vmatpush.msra.mxu0 %v5250
      %v5252 = vand.u32 %v4453, 4294901760
      %5253 = vmatpush.msra.mxu0 %v5252
      %v5254 = vand.u32 %v4451, 4294901760
      %5255 = vmatpush.msra.mxu0 %v5254
      %v5256 = vand.u32 %v4449, 4294901760
      %5257 = vmatpush.msra.mxu0 %v5256
      %v5258 = vand.u32 %v4447, 4294901760
      %5259 = vmatpush.msra.mxu0 %v5258
      %v5260 = vand.u32 %v4445, 4294901760
      %5261 = vmatpush.msra.mxu0 %v5260
      %v5262 = vand.u32 %v4443, 4294901760
      %5263 = vmatpush.msra.mxu0 %v5262
      %v5264 = vand.u32 %v4441, 4294901760
      %5265 = vmatpush.msra.mxu0 %v5264
      %v5266 = vand.u32 %v4439, 4294901760
      %5267 = vmatpush.msra.mxu0 %v5266
      %v5268 = vand.u32 %v4437, 4294901760
      %5269 = vmatpush.msra.mxu0 %v5268
      %v5270 = vand.u32 %v4435, 4294901760
      %5271 = vmatpush.msra.mxu0 %v5270
      %v5272 = vand.u32 %v4433, 4294901760
      %5273 = vmatpush.msra.mxu0 %v5272
      %v5274 = vand.u32 %v4431, 4294901760
      %5275 = vmatpush.msra.mxu0 %v5274
      %v5276 = vand.u32 %v4424, 4294901760
      %v5277 = vsub.f32 %v4424, %v5276
      %v5278 = vand.u32 %v5277, 4294901760
      %v5279 = vsub.f32 %v5277, %v5278
      %v5280 = vand.u32 %v5279, 4294901760
      %5281 = vmatmul.f32.gmra.mxu0 %v5280
      %v5282 = vpop.f32.mrf.mxu0
      %v5283 = vadd.f32 %v4497, %v5282
      %v5284 = vand.u32 %v4425, 4294901760
      %v5285 = vsub.f32 %v4425, %v5284
      %v5286 = vand.u32 %v5285, 4294901760
      %v5287 = vsub.f32 %v5285, %v5286
      %v5288 = vand.u32 %v5287, 4294901760
      %5289 = vmatmul.f32.gmra.mxu0 %v5288
      %v5290 = vpop.f32.mrf.mxu0
      %v5291 = vadd.f32 %v4497, %v5290
      %5292 = vdwg.mxu0
      %v5293 = vand.u32 %v4461, 4294901760
      %v5294 = vsub.f32 %v4461, %v5293
      %v5295 = vand.u32 %v5294, 4294901760
      %v5296 = vsub.f32 %v5294, %v5295
      %v5297 = vand.u32 %v5296, 4294901760
      %5298 = vmatpush.msra.mxu0 %v5297
      %v5299 = vand.u32 %v4459, 4294901760
      %v5300 = vsub.f32 %v4459, %v5299
      %v5301 = vand.u32 %v5300, 4294901760
      %v5302 = vsub.f32 %v5300, %v5301
      %v5303 = vand.u32 %v5302, 4294901760
      %5304 = vmatpush.msra.mxu0 %v5303
      %v5305 = vand.u32 %v4457, 4294901760
      %v5306 = vsub.f32 %v4457, %v5305
      %v5307 = vand.u32 %v5306, 4294901760
      %v5308 = vsub.f32 %v5306, %v5307
      %v5309 = vand.u32 %v5308, 4294901760
      %5310 = vmatpush.msra.mxu0 %v5309
      %v5311 = vand.u32 %v4455, 4294901760
      %v5312 = vsub.f32 %v4455, %v5311
      %v5313 = vand.u32 %v5312, 4294901760
      %v5314 = vsub.f32 %v5312, %v5313
      %v5315 = vand.u32 %v5314, 4294901760
      %5316 = vmatpush.msra.mxu0 %v5315
      %v5317 = vand.u32 %v4453, 4294901760
      %v5318 = vsub.f32 %v4453, %v5317
      %v5319 = vand.u32 %v5318, 4294901760
      %v5320 = vsub.f32 %v5318, %v5319
      %v5321 = vand.u32 %v5320, 4294901760
      %5322 = vmatpush.msra.mxu0 %v5321
      %v5323 = vand.u32 %v4451, 4294901760
      %v5324 = vsub.f32 %v4451, %v5323
      %v5325 = vand.u32 %v5324, 4294901760
      %v5326 = vsub.f32 %v5324, %v5325
      %v5327 = vand.u32 %v5326, 4294901760
      %5328 = vmatpush.msra.mxu0 %v5327
      %v5329 = vand.u32 %v4449, 4294901760
      %v5330 = vsub.f32 %v4449, %v5329
      %v5331 = vand.u32 %v5330, 4294901760
      %v5332 = vsub.f32 %v5330, %v5331
      %v5333 = vand.u32 %v5332, 4294901760
      %5334 = vmatpush.msra.mxu0 %v5333
      %v5335 = vand.u32 %v4447, 4294901760
      %v5336 = vsub.f32 %v4447, %v5335
      %v5337 = vand.u32 %v5336, 4294901760
      %v5338 = vsub.f32 %v5336, %v5337
      %v5339 = vand.u32 %v5338, 4294901760
      %5340 = vmatpush.msra.mxu0 %v5339
      %v5341 = vand.u32 %v4445, 4294901760
      %v5342 = vsub.f32 %v4445, %v5341
      %v5343 = vand.u32 %v5342, 4294901760
      %v5344 = vsub.f32 %v5342, %v5343
      %v5345 = vand.u32 %v5344, 4294901760
      %5346 = vmatpush.msra.mxu0 %v5345
      %v5347 = vand.u32 %v4443, 4294901760
      %v5348 = vsub.f32 %v4443, %v5347
      %v5349 = vand.u32 %v5348, 4294901760
      %v5350 = vsub.f32 %v5348, %v5349
      %v5351 = vand.u32 %v5350, 4294901760
      %5352 = vmatpush.msra.mxu0 %v5351
      %v5353 = vand.u32 %v4441, 4294901760
      %v5354 = vsub.f32 %v4441, %v5353
      %v5355 = vand.u32 %v5354, 4294901760
      %v5356 = vsub.f32 %v5354, %v5355
      %v5357 = vand.u32 %v5356, 4294901760
      %5358 = vmatpush.msra.mxu0 %v5357
      %v5359 = vand.u32 %v4439, 4294901760
      %v5360 = vsub.f32 %v4439, %v5359
      %v5361 = vand.u32 %v5360, 4294901760
      %v5362 = vsub.f32 %v5360, %v5361
      %v5363 = vand.u32 %v5362, 4294901760
      %5364 = vmatpush.msra.mxu0 %v5363
      %v5365 = vand.u32 %v4437, 4294901760
      %v5366 = vsub.f32 %v4437, %v5365
      %v5367 = vand.u32 %v5366, 4294901760
      %v5368 = vsub.f32 %v5366, %v5367
      %v5369 = vand.u32 %v5368, 4294901760
      %5370 = vmatpush.msra.mxu0 %v5369
      %v5371 = vand.u32 %v4435, 4294901760
      %v5372 = vsub.f32 %v4435, %v5371
      %v5373 = vand.u32 %v5372, 4294901760
      %v5374 = vsub.f32 %v5372, %v5373
      %v5375 = vand.u32 %v5374, 4294901760
      %5376 = vmatpush.msra.mxu0 %v5375
      %v5377 = vand.u32 %v4433, 4294901760
      %v5378 = vsub.f32 %v4433, %v5377
      %v5379 = vand.u32 %v5378, 4294901760
      %v5380 = vsub.f32 %v5378, %v5379
      %v5381 = vand.u32 %v5380, 4294901760
      %5382 = vmatpush.msra.mxu0 %v5381
      %v5383 = vand.u32 %v4431, 4294901760
      %v5384 = vsub.f32 %v4431, %v5383
      %v5385 = vand.u32 %v5384, 4294901760
      %v5386 = vsub.f32 %v5384, %v5385
      %v5387 = vand.u32 %v5386, 4294901760
      %5388 = vmatpush.msra.mxu0 %v5387
      %v5389 = vand.u32 %v4424, 4294901760
      %5390 = vmatmul.f32.gmra.mxu0 %v5389
      %v5391 = vpop.f32.mrf.mxu0
      %v5392 = vadd.f32 %v5283, %v5391
      %v5393 = vand.u32 %v4425, 4294901760
      %5394 = vmatmul.f32.gmra.mxu0 %v5393
      %v5395 = vpop.f32.mrf.mxu0
      %v5396 = vadd.f32 %v5291, %v5395
      %5397 = vdwg.mxu0
      %v5398 = vand.u32 %v4461, 4294901760
      %v5399 = vsub.f32 %v4461, %v5398
      %5400 = vmatpush.msra.mxu0 %v5399
      %v5401 = vand.u32 %v4459, 4294901760
      %v5402 = vsub.f32 %v4459, %v5401
      %5403 = vmatpush.msra.mxu0 %v5402
      %v5404 = vand.u32 %v4457, 4294901760
      %v5405 = vsub.f32 %v4457, %v5404
      %5406 = vmatpush.msra.mxu0 %v5405
      %v5407 = vand.u32 %v4455, 4294901760
      %v5408 = vsub.f32 %v4455, %v5407
      %5409 = vmatpush.msra.mxu0 %v5408
      %v5410 = vand.u32 %v4453, 4294901760
      %v5411 = vsub.f32 %v4453, %v5410
      %5412 = vmatpush.msra.mxu0 %v5411
      %v5413 = vand.u32 %v4451, 4294901760
      %v5414 = vsub.f32 %v4451, %v5413
      %5415 = vmatpush.msra.mxu0 %v5414
      %v5416 = vand.u32 %v4449, 4294901760
      %v5417 = vsub.f32 %v4449, %v5416
      %5418 = vmatpush.msra.mxu0 %v5417
      %v5419 = vand.u32 %v4447, 4294901760
      %v5420 = vsub.f32 %v4447, %v5419
      %5421 = vmatpush.msra.mxu0 %v5420
      %v5422 = vand.u32 %v4445, 4294901760
      %v5423 = vsub.f32 %v4445, %v5422
      %5424 = vmatpush.msra.mxu0 %v5423
      %v5425 = vand.u32 %v4443, 4294901760
      %v5426 = vsub.f32 %v4443, %v5425
      %5427 = vmatpush.msra.mxu0 %v5426
      %v5428 = vand.u32 %v4441, 4294901760
      %v5429 = vsub.f32 %v4441, %v5428
      %5430 = vmatpush.msra.mxu0 %v5429
      %v5431 = vand.u32 %v4439, 4294901760
      %v5432 = vsub.f32 %v4439, %v5431
      %5433 = vmatpush.msra.mxu0 %v5432
      %v5434 = vand.u32 %v4437, 4294901760
      %v5435 = vsub.f32 %v4437, %v5434
      %5436 = vmatpush.msra.mxu0 %v5435
      %v5437 = vand.u32 %v4435, 4294901760
      %v5438 = vsub.f32 %v4435, %v5437
      %5439 = vmatpush.msra.mxu0 %v5438
      %v5440 = vand.u32 %v4433, 4294901760
      %v5441 = vsub.f32 %v4433, %v5440
      %5442 = vmatpush.msra.mxu0 %v5441
      %v5443 = vand.u32 %v4431, 4294901760
      %v5444 = vsub.f32 %v4431, %v5443
      %5445 = vmatpush.msra.mxu0 %v5444
      %v5446 = vand.u32 %v4424, 4294901760
      %v5447 = vsub.f32 %v4424, %v5446
      %5448 = vmatmul.f32.gmra.mxu0 %v5447
      %v5449 = vpop.f32.mrf.mxu0
      %v5450 = vadd.f32 %v5392, %v5449
      %v5451 = vand.u32 %v4425, 4294901760
      %v5452 = vsub.f32 %v4425, %v5451
      %5453 = vmatmul.f32.gmra.mxu0 %v5452
      %v5454 = vpop.f32.mrf.mxu0
      %v5455 = vadd.f32 %v5396, %v5454
      %5456 = vdwg.mxu0
      %v5457 = vand.u32 %v4461, 4294901760
      %5458 = vmatpush.msra.mxu0 %v5457
      %v5459 = vand.u32 %v4459, 4294901760
      %5460 = vmatpush.msra.mxu0 %v5459
      %v5461 = vand.u32 %v4457, 4294901760
      %5462 = vmatpush.msra.mxu0 %v5461
      %v5463 = vand.u32 %v4455, 4294901760
      %5464 = vmatpush.msra.mxu0 %v5463
      %v5465 = vand.u32 %v4453, 4294901760
      %5466 = vmatpush.msra.mxu0 %v5465
      %v5467 = vand.u32 %v4451, 4294901760
      %5468 = vmatpush.msra.mxu0 %v5467
      %v5469 = vand.u32 %v4449, 4294901760
      %5470 = vmatpush.msra.mxu0 %v5469
      %v5471 = vand.u32 %v4447, 4294901760
      %5472 = vmatpush.msra.mxu0 %v5471
      %v5473 = vand.u32 %v4445, 4294901760
      %5474 = vmatpush.msra.mxu0 %v5473
      %v5475 = vand.u32 %v4443, 4294901760
      %5476 = vmatpush.msra.mxu0 %v5475
      %v5477 = vand.u32 %v4441, 4294901760
      %5478 = vmatpush.msra.mxu0 %v5477
      %v5479 = vand.u32 %v4439, 4294901760
      %5480 = vmatpush.msra.mxu0 %v5479
      %v5481 = vand.u32 %v4437, 4294901760
      %5482 = vmatpush.msra.mxu0 %v5481
      %v5483 = vand.u32 %v4435, 4294901760
      %5484 = vmatpush.msra.mxu0 %v5483
      %v5485 = vand.u32 %v4433, 4294901760
      %5486 = vmatpush.msra.mxu0 %v5485
      %v5487 = vand.u32 %v4431, 4294901760
      %5488 = vmatpush.msra.mxu0 %v5487
      %v5489 = vand.u32 %v4424, 4294901760
      %v5490 = vsub.f32 %v4424, %v5489
      %v5491 = vand.u32 %v5490, 4294901760
      %5492 = vmatmul.f32.gmra.mxu0 %v5491
      %v5493 = vpop.f32.mrf.mxu0
      %v5494 = vadd.f32 %v5450, %v5493
      %v5495 = vand.u32 %v4425, 4294901760
      %v5496 = vsub.f32 %v4425, %v5495
      %v5497 = vand.u32 %v5496, 4294901760
      %5498 = vmatmul.f32.gmra.mxu0 %v5497
      %v5499 = vpop.f32.mrf.mxu0
      %v5500 = vadd.f32 %v5455, %v5499
      %5501 = vdwg.mxu0
      %v5502 = vand.u32 %v4461, 4294901760
      %v5503 = vsub.f32 %v4461, %v5502
      %v5504 = vand.u32 %v5503, 4294901760
      %5505 = vmatpush.msra.mxu0 %v5504
      %v5506 = vand.u32 %v4459, 4294901760
      %v5507 = vsub.f32 %v4459, %v5506
      %v5508 = vand.u32 %v5507, 4294901760
      %5509 = vmatpush.msra.mxu0 %v5508
      %v5510 = vand.u32 %v4457, 4294901760
      %v5511 = vsub.f32 %v4457, %v5510
      %v5512 = vand.u32 %v5511, 4294901760
      %5513 = vmatpush.msra.mxu0 %v5512
      %v5514 = vand.u32 %v4455, 4294901760
      %v5515 = vsub.f32 %v4455, %v5514
      %v5516 = vand.u32 %v5515, 4294901760
      %5517 = vmatpush.msra.mxu0 %v5516
      %v5518 = vand.u32 %v4453, 4294901760
      %v5519 = vsub.f32 %v4453, %v5518
      %v5520 = vand.u32 %v5519, 4294901760
      %5521 = vmatpush.msra.mxu0 %v5520
      %v5522 = vand.u32 %v4451, 4294901760
      %v5523 = vsub.f32 %v4451, %v5522
      %v5524 = vand.u32 %v5523, 4294901760
      %5525 = vmatpush.msra.mxu0 %v5524
      %v5526 = vand.u32 %v4449, 4294901760
      %v5527 = vsub.f32 %v4449, %v5526
      %v5528 = vand.u32 %v5527, 4294901760
      %5529 = vmatpush.msra.mxu0 %v5528
      %v5530 = vand.u32 %v4447, 4294901760
      %v5531 = vsub.f32 %v4447, %v5530
      %v5532 = vand.u32 %v5531, 4294901760
      %5533 = vmatpush.msra.mxu0 %v5532
      %v5534 = vand.u32 %v4445, 4294901760
      %v5535 = vsub.f32 %v4445, %v5534
      %v5536 = vand.u32 %v5535, 4294901760
      %5537 = vmatpush.msra.mxu0 %v5536
      %v5538 = vand.u32 %v4443, 4294901760
      %v5539 = vsub.f32 %v4443, %v5538
      %v5540 = vand.u32 %v5539, 4294901760
      %5541 = vmatpush.msra.mxu0 %v5540
      %v5542 = vand.u32 %v4441, 4294901760
      %v5543 = vsub.f32 %v4441, %v5542
      %v5544 = vand.u32 %v5543, 4294901760
      %5545 = vmatpush.msra.mxu0 %v5544
      %v5546 = vand.u32 %v4439, 4294901760
      %v5547 = vsub.f32 %v4439, %v5546
      %v5548 = vand.u32 %v5547, 4294901760
      %5549 = vmatpush.msra.mxu0 %v5548
      %v5550 = vand.u32 %v4437, 4294901760
      %v5551 = vsub.f32 %v4437, %v5550
      %v5552 = vand.u32 %v5551, 4294901760
      %5553 = vmatpush.msra.mxu0 %v5552
      %v5554 = vand.u32 %v4435, 4294901760
      %v5555 = vsub.f32 %v4435, %v5554
      %v5556 = vand.u32 %v5555, 4294901760
      %5557 = vmatpush.msra.mxu0 %v5556
      %v5558 = vand.u32 %v4433, 4294901760
      %v5559 = vsub.f32 %v4433, %v5558
      %v5560 = vand.u32 %v5559, 4294901760
      %5561 = vmatpush.msra.mxu0 %v5560
      %v5562 = vand.u32 %v4431, 4294901760
      %v5563 = vsub.f32 %v4431, %v5562
      %v5564 = vand.u32 %v5563, 4294901760
      %5565 = vmatpush.msra.mxu0 %v5564
      %v5566 = vand.u32 %v4424, 4294901760
      %5567 = vmatmul.f32.gmra.mxu0 %v5566
      %v5568 = vpop.f32.mrf.mxu0
      %v5569 = vadd.f32 %v5494, %v5568
      %v5570 = vand.u32 %v4425, 4294901760
      %5571 = vmatmul.f32.gmra.mxu0 %v5570
      %v5572 = vpop.f32.mrf.mxu0
      %v5573 = vadd.f32 %v5500, %v5572
      %5574 = vdwg.mxu0
      %v5575 = vand.u32 %v4461, 4294901760
      %5576 = vmatpush.msra.mxu0 %v5575
      %v5577 = vand.u32 %v4459, 4294901760
      %5578 = vmatpush.msra.mxu0 %v5577
      %v5579 = vand.u32 %v4457, 4294901760
      %5580 = vmatpush.msra.mxu0 %v5579
      %v5581 = vand.u32 %v4455, 4294901760
      %5582 = vmatpush.msra.mxu0 %v5581
      %v5583 = vand.u32 %v4453, 4294901760
      %5584 = vmatpush.msra.mxu0 %v5583
      %v5585 = vand.u32 %v4451, 4294901760
      %5586 = vmatpush.msra.mxu0 %v5585
      %v5587 = vand.u32 %v4449, 4294901760
      %5588 = vmatpush.msra.mxu0 %v5587
      %v5589 = vand.u32 %v4447, 4294901760
      %5590 = vmatpush.msra.mxu0 %v5589
      %v5591 = vand.u32 %v4445, 4294901760
      %5592 = vmatpush.msra.mxu0 %v5591
      %v5593 = vand.u32 %v4443, 4294901760
      %5594 = vmatpush.msra.mxu0 %v5593
      %v5595 = vand.u32 %v4441, 4294901760
      %5596 = vmatpush.msra.mxu0 %v5595
      %v5597 = vand.u32 %v4439, 4294901760
      %5598 = vmatpush.msra.mxu0 %v5597
      %v5599 = vand.u32 %v4437, 4294901760
      %5600 = vmatpush.msra.mxu0 %v5599
      %v5601 = vand.u32 %v4435, 4294901760
      %5602 = vmatpush.msra.mxu0 %v5601
      %v5603 = vand.u32 %v4433, 4294901760
      %5604 = vmatpush.msra.mxu0 %v5603
      %v5605 = vand.u32 %v4431, 4294901760
      %5606 = vmatpush.msra.mxu0 %v5605
      %v5607 = vand.u32 %v4424, 4294901760
      %5608 = vmatmul.f32.gmra.mxu0 %v5607
      %v5609 = vpop.f32.mrf.mxu0
      %v5610 = vadd.f32 %v5569, %v5609
      %v5611 = vand.u32 %v4425, 4294901760
      %5612 = vmatmul.f32.gmra.mxu0 %v5611
      %v5613 = vpop.f32.mrf.mxu0
      %v5614 = vadd.f32 %v5573, %v5613
      %5615 = vdwg.mxu0
      %v5616 = vand.u32 %v4493, 4294901760
      %5617 = vmatpush.msra.mxu0 %v5616
      %v5618 = vand.u32 %v4491, 4294901760
      %5619 = vmatpush.msra.mxu0 %v5618
      %v5620 = vand.u32 %v4489, 4294901760
      %5621 = vmatpush.msra.mxu0 %v5620
      %v5622 = vand.u32 %v4487, 4294901760
      %5623 = vmatpush.msra.mxu0 %v5622
      %v5624 = vand.u32 %v4485, 4294901760
      %5625 = vmatpush.msra.mxu0 %v5624
      %v5626 = vand.u32 %v4483, 4294901760
      %5627 = vmatpush.msra.mxu0 %v5626
      %v5628 = vand.u32 %v4481, 4294901760
      %5629 = vmatpush.msra.mxu0 %v5628
      %v5630 = vand.u32 %v4479, 4294901760
      %5631 = vmatpush.msra.mxu0 %v5630
      %v5632 = vand.u32 %v4477, 4294901760
      %5633 = vmatpush.msra.mxu0 %v5632
      %v5634 = vand.u32 %v4475, 4294901760
      %5635 = vmatpush.msra.mxu0 %v5634
      %v5636 = vand.u32 %v4473, 4294901760
      %5637 = vmatpush.msra.mxu0 %v5636
      %v5638 = vand.u32 %v4471, 4294901760
      %5639 = vmatpush.msra.mxu0 %v5638
      %v5640 = vand.u32 %v4469, 4294901760
      %5641 = vmatpush.msra.mxu0 %v5640
      %v5642 = vand.u32 %v4467, 4294901760
      %5643 = vmatpush.msra.mxu0 %v5642
      %v5644 = vand.u32 %v4465, 4294901760
      %5645 = vmatpush.msra.mxu0 %v5644
      %v5646 = vand.u32 %v4463, 4294901760
      %5647 = vmatpush.msra.mxu0 %v5646
      %v5648 = vand.u32 %v4428, 4294901760
      %v5649 = vsub.f32 %v4428, %v5648
      %v5650 = vand.u32 %v5649, 4294901760
      %v5651 = vsub.f32 %v5649, %v5650
      %v5652 = vand.u32 %v5651, 4294901760
      %5653 = vmatmul.f32.gmra.mxu0 %v5652
      %v5654 = vpop.f32.mrf.mxu0
      %v5655 = vadd.f32 %v5610, %v5654
      %v5656 = vand.u32 %v4429, 4294901760
      %v5657 = vsub.f32 %v4429, %v5656
      %v5658 = vand.u32 %v5657, 4294901760
      %v5659 = vsub.f32 %v5657, %v5658
      %v5660 = vand.u32 %v5659, 4294901760
      %5661 = vmatmul.f32.gmra.mxu0 %v5660
      %v5662 = vpop.f32.mrf.mxu0
      %v5663 = vadd.f32 %v5614, %v5662
      %5664 = vdwg.mxu0
      %v5665 = vand.u32 %v4493, 4294901760
      %v5666 = vsub.f32 %v4493, %v5665
      %v5667 = vand.u32 %v5666, 4294901760
      %v5668 = vsub.f32 %v5666, %v5667
      %v5669 = vand.u32 %v5668, 4294901760
      %5670 = vmatpush.msra.mxu0 %v5669
      %v5671 = vand.u32 %v4491, 4294901760
      %v5672 = vsub.f32 %v4491, %v5671
      %v5673 = vand.u32 %v5672, 4294901760
      %v5674 = vsub.f32 %v5672, %v5673
      %v5675 = vand.u32 %v5674, 4294901760
      %5676 = vmatpush.msra.mxu0 %v5675
      %v5677 = vand.u32 %v4489, 4294901760
      %v5678 = vsub.f32 %v4489, %v5677
      %v5679 = vand.u32 %v5678, 4294901760
      %v5680 = vsub.f32 %v5678, %v5679
      %v5681 = vand.u32 %v5680, 4294901760
      %5682 = vmatpush.msra.mxu0 %v5681
      %v5683 = vand.u32 %v4487, 4294901760
      %v5684 = vsub.f32 %v4487, %v5683
      %v5685 = vand.u32 %v5684, 4294901760
      %v5686 = vsub.f32 %v5684, %v5685
      %v5687 = vand.u32 %v5686, 4294901760
      %5688 = vmatpush.msra.mxu0 %v5687
      %v5689 = vand.u32 %v4485, 4294901760
      %v5690 = vsub.f32 %v4485, %v5689
      %v5691 = vand.u32 %v5690, 4294901760
      %v5692 = vsub.f32 %v5690, %v5691
      %v5693 = vand.u32 %v5692, 4294901760
      %5694 = vmatpush.msra.mxu0 %v5693
      %v5695 = vand.u32 %v4483, 4294901760
      %v5696 = vsub.f32 %v4483, %v5695
      %v5697 = vand.u32 %v5696, 4294901760
      %v5698 = vsub.f32 %v5696, %v5697
      %v5699 = vand.u32 %v5698, 4294901760
      %5700 = vmatpush.msra.mxu0 %v5699
      %v5701 = vand.u32 %v4481, 4294901760
      %v5702 = vsub.f32 %v4481, %v5701
      %v5703 = vand.u32 %v5702, 4294901760
      %v5704 = vsub.f32 %v5702, %v5703
      %v5705 = vand.u32 %v5704, 4294901760
      %5706 = vmatpush.msra.mxu0 %v5705
      %v5707 = vand.u32 %v4479, 4294901760
      %v5708 = vsub.f32 %v4479, %v5707
      %v5709 = vand.u32 %v5708, 4294901760
      %v5710 = vsub.f32 %v5708, %v5709
      %v5711 = vand.u32 %v5710, 4294901760
      %5712 = vmatpush.msra.mxu0 %v5711
      %v5713 = vand.u32 %v4477, 4294901760
      %v5714 = vsub.f32 %v4477, %v5713
      %v5715 = vand.u32 %v5714, 4294901760
      %v5716 = vsub.f32 %v5714, %v5715
      %v5717 = vand.u32 %v5716, 4294901760
      %5718 = vmatpush.msra.mxu0 %v5717
      %v5719 = vand.u32 %v4475, 4294901760
      %v5720 = vsub.f32 %v4475, %v5719
      %v5721 = vand.u32 %v5720, 4294901760
      %v5722 = vsub.f32 %v5720, %v5721
      %v5723 = vand.u32 %v5722, 4294901760
      %5724 = vmatpush.msra.mxu0 %v5723
      %v5725 = vand.u32 %v4473, 4294901760
      %v5726 = vsub.f32 %v4473, %v5725
      %v5727 = vand.u32 %v5726, 4294901760
      %v5728 = vsub.f32 %v5726, %v5727
      %v5729 = vand.u32 %v5728, 4294901760
      %5730 = vmatpush.msra.mxu0 %v5729
      %v5731 = vand.u32 %v4471, 4294901760
      %v5732 = vsub.f32 %v4471, %v5731
      %v5733 = vand.u32 %v5732, 4294901760
      %v5734 = vsub.f32 %v5732, %v5733
      %v5735 = vand.u32 %v5734, 4294901760
      %5736 = vmatpush.msra.mxu0 %v5735
      %v5737 = vand.u32 %v4469, 4294901760
      %v5738 = vsub.f32 %v4469, %v5737
      %v5739 = vand.u32 %v5738, 4294901760
      %v5740 = vsub.f32 %v5738, %v5739
      %v5741 = vand.u32 %v5740, 4294901760
      %5742 = vmatpush.msra.mxu0 %v5741
      %v5743 = vand.u32 %v4467, 4294901760
      %v5744 = vsub.f32 %v4467, %v5743
      %v5745 = vand.u32 %v5744, 4294901760
      %v5746 = vsub.f32 %v5744, %v5745
      %v5747 = vand.u32 %v5746, 4294901760
      %5748 = vmatpush.msra.mxu0 %v5747
      %v5749 = vand.u32 %v4465, 4294901760
      %v5750 = vsub.f32 %v4465, %v5749
      %v5751 = vand.u32 %v5750, 4294901760
      %v5752 = vsub.f32 %v5750, %v5751
      %v5753 = vand.u32 %v5752, 4294901760
      %5754 = vmatpush.msra.mxu0 %v5753
      %v5755 = vand.u32 %v4463, 4294901760
      %v5756 = vsub.f32 %v4463, %v5755
      %v5757 = vand.u32 %v5756, 4294901760
      %v5758 = vsub.f32 %v5756, %v5757
      %v5759 = vand.u32 %v5758, 4294901760
      %5760 = vmatpush.msra.mxu0 %v5759
      %v5761 = vand.u32 %v4428, 4294901760
      %5762 = vmatmul.f32.gmra.mxu0 %v5761
      %v5763 = vpop.f32.mrf.mxu0
      %v5764 = vadd.f32 %v5655, %v5763
      %v5765 = vand.u32 %v4429, 4294901760
      %5766 = vmatmul.f32.gmra.mxu0 %v5765
      %v5767 = vpop.f32.mrf.mxu0
      %v5768 = vadd.f32 %v5663, %v5767
      %5769 = vdwg.mxu0
      %v5770 = vand.u32 %v4493, 4294901760
      %v5771 = vsub.f32 %v4493, %v5770
      %5772 = vmatpush.msra.mxu0 %v5771
      %v5773 = vand.u32 %v4491, 4294901760
      %v5774 = vsub.f32 %v4491, %v5773
      %5775 = vmatpush.msra.mxu0 %v5774
      %v5776 = vand.u32 %v4489, 4294901760
      %v5777 = vsub.f32 %v4489, %v5776
      %5778 = vmatpush.msra.mxu0 %v5777
      %v5779 = vand.u32 %v4487, 4294901760
      %v5780 = vsub.f32 %v4487, %v5779
      %5781 = vmatpush.msra.mxu0 %v5780
      %v5782 = vand.u32 %v4485, 4294901760
      %v5783 = vsub.f32 %v4485, %v5782
      %5784 = vmatpush.msra.mxu0 %v5783
      %v5785 = vand.u32 %v4483, 4294901760
      %v5786 = vsub.f32 %v4483, %v5785
      %5787 = vmatpush.msra.mxu0 %v5786
      %v5788 = vand.u32 %v4481, 4294901760
      %v5789 = vsub.f32 %v4481, %v5788
      %5790 = vmatpush.msra.mxu0 %v5789
      %v5791 = vand.u32 %v4479, 4294901760
      %v5792 = vsub.f32 %v4479, %v5791
      %5793 = vmatpush.msra.mxu0 %v5792
      %v5794 = vand.u32 %v4477, 4294901760
      %v5795 = vsub.f32 %v4477, %v5794
      %5796 = vmatpush.msra.mxu0 %v5795
      %v5797 = vand.u32 %v4475, 4294901760
      %v5798 = vsub.f32 %v4475, %v5797
      %5799 = vmatpush.msra.mxu0 %v5798
      %v5800 = vand.u32 %v4473, 4294901760
      %v5801 = vsub.f32 %v4473, %v5800
      %5802 = vmatpush.msra.mxu0 %v5801
      %v5803 = vand.u32 %v4471, 4294901760
      %v5804 = vsub.f32 %v4471, %v5803
      %5805 = vmatpush.msra.mxu0 %v5804
      %v5806 = vand.u32 %v4469, 4294901760
      %v5807 = vsub.f32 %v4469, %v5806
      %5808 = vmatpush.msra.mxu0 %v5807
      %v5809 = vand.u32 %v4467, 4294901760
      %v5810 = vsub.f32 %v4467, %v5809
      %5811 = vmatpush.msra.mxu0 %v5810
      %v5812 = vand.u32 %v4465, 4294901760
      %v5813 = vsub.f32 %v4465, %v5812
      %5814 = vmatpush.msra.mxu0 %v5813
      %v5815 = vand.u32 %v4463, 4294901760
      %v5816 = vsub.f32 %v4463, %v5815
      %5817 = vmatpush.msra.mxu0 %v5816
      %v5818 = vand.u32 %v4428, 4294901760
      %v5819 = vsub.f32 %v4428, %v5818
      %5820 = vmatmul.f32.gmra.mxu0 %v5819
      %v5821 = vpop.f32.mrf.mxu0
      %v5822 = vadd.f32 %v5764, %v5821
      %v5823 = vand.u32 %v4429, 4294901760
      %v5824 = vsub.f32 %v4429, %v5823
      %5825 = vmatmul.f32.gmra.mxu0 %v5824
      %v5826 = vpop.f32.mrf.mxu0
      %v5827 = vadd.f32 %v5768, %v5826
      %5828 = vdwg.mxu0
      %v5829 = vand.u32 %v4493, 4294901760
      %5830 = vmatpush.msra.mxu0 %v5829
      %v5831 = vand.u32 %v4491, 4294901760
      %5832 = vmatpush.msra.mxu0 %v5831
      %v5833 = vand.u32 %v4489, 4294901760
      %5834 = vmatpush.msra.mxu0 %v5833
      %v5835 = vand.u32 %v4487, 4294901760
      %5836 = vmatpush.msra.mxu0 %v5835
      %v5837 = vand.u32 %v4485, 4294901760
      %5838 = vmatpush.msra.mxu0 %v5837
      %v5839 = vand.u32 %v4483, 4294901760
      %5840 = vmatpush.msra.mxu0 %v5839
      %v5841 = vand.u32 %v4481, 4294901760
      %5842 = vmatpush.msra.mxu0 %v5841
      %v5843 = vand.u32 %v4479, 4294901760
      %5844 = vmatpush.msra.mxu0 %v5843
      %v5845 = vand.u32 %v4477, 4294901760
      %5846 = vmatpush.msra.mxu0 %v5845
      %v5847 = vand.u32 %v4475, 4294901760
      %5848 = vmatpush.msra.mxu0 %v5847
      %v5849 = vand.u32 %v4473, 4294901760
      %5850 = vmatpush.msra.mxu0 %v5849
      %v5851 = vand.u32 %v4471, 4294901760
      %5852 = vmatpush.msra.mxu0 %v5851
      %v5853 = vand.u32 %v4469, 4294901760
      %5854 = vmatpush.msra.mxu0 %v5853
      %v5855 = vand.u32 %v4467, 4294901760
      %5856 = vmatpush.msra.mxu0 %v5855
      %v5857 = vand.u32 %v4465, 4294901760
      %5858 = vmatpush.msra.mxu0 %v5857
      %v5859 = vand.u32 %v4463, 4294901760
      %5860 = vmatpush.msra.mxu0 %v5859
      %v5861 = vand.u32 %v4428, 4294901760
      %v5862 = vsub.f32 %v4428, %v5861
      %v5863 = vand.u32 %v5862, 4294901760
      %5864 = vmatmul.f32.gmra.mxu0 %v5863
      %v5865 = vpop.f32.mrf.mxu0
      %v5866 = vadd.f32 %v5822, %v5865
      %v5867 = vand.u32 %v4429, 4294901760
      %v5868 = vsub.f32 %v4429, %v5867
      %v5869 = vand.u32 %v5868, 4294901760
      %5870 = vmatmul.f32.gmra.mxu0 %v5869
      %v5871 = vpop.f32.mrf.mxu0
      %v5872 = vadd.f32 %v5827, %v5871
      %5873 = vdwg.mxu0
      %v5874 = vand.u32 %v4493, 4294901760
      %v5875 = vsub.f32 %v4493, %v5874
      %v5876 = vand.u32 %v5875, 4294901760
      %5877 = vmatpush.msra.mxu0 %v5876
      %v5878 = vand.u32 %v4491, 4294901760
      %v5879 = vsub.f32 %v4491, %v5878
      %v5880 = vand.u32 %v5879, 4294901760
      %5881 = vmatpush.msra.mxu0 %v5880
      %v5882 = vand.u32 %v4489, 4294901760
      %v5883 = vsub.f32 %v4489, %v5882
      %v5884 = vand.u32 %v5883, 4294901760
      %5885 = vmatpush.msra.mxu0 %v5884
      %v5886 = vand.u32 %v4487, 4294901760
      %v5887 = vsub.f32 %v4487, %v5886
      %v5888 = vand.u32 %v5887, 4294901760
      %5889 = vmatpush.msra.mxu0 %v5888
      %v5890 = vand.u32 %v4485, 4294901760
      %v5891 = vsub.f32 %v4485, %v5890
      %v5892 = vand.u32 %v5891, 4294901760
      %5893 = vmatpush.msra.mxu0 %v5892
      %v5894 = vand.u32 %v4483, 4294901760
      %v5895 = vsub.f32 %v4483, %v5894
      %v5896 = vand.u32 %v5895, 4294901760
      %5897 = vmatpush.msra.mxu0 %v5896
      %v5898 = vand.u32 %v4481, 4294901760
      %v5899 = vsub.f32 %v4481, %v5898
      %v5900 = vand.u32 %v5899, 4294901760
      %5901 = vmatpush.msra.mxu0 %v5900
      %v5902 = vand.u32 %v4479, 4294901760
      %v5903 = vsub.f32 %v4479, %v5902
      %v5904 = vand.u32 %v5903, 4294901760
      %5905 = vmatpush.msra.mxu0 %v5904
      %v5906 = vand.u32 %v4477, 4294901760
      %v5907 = vsub.f32 %v4477, %v5906
      %v5908 = vand.u32 %v5907, 4294901760
      %5909 = vmatpush.msra.mxu0 %v5908
      %v5910 = vand.u32 %v4475, 4294901760
      %v5911 = vsub.f32 %v4475, %v5910
      %v5912 = vand.u32 %v5911, 4294901760
      %5913 = vmatpush.msra.mxu0 %v5912
      %v5914 = vand.u32 %v4473, 4294901760
      %v5915 = vsub.f32 %v4473, %v5914
      %v5916 = vand.u32 %v5915, 4294901760
      %5917 = vmatpush.msra.mxu0 %v5916
      %v5918 = vand.u32 %v4471, 4294901760
      %v5919 = vsub.f32 %v4471, %v5918
      %v5920 = vand.u32 %v5919, 4294901760
      %5921 = vmatpush.msra.mxu0 %v5920
      %v5922 = vand.u32 %v4469, 4294901760
      %v5923 = vsub.f32 %v4469, %v5922
      %v5924 = vand.u32 %v5923, 4294901760
      %5925 = vmatpush.msra.mxu0 %v5924
      %v5926 = vand.u32 %v4467, 4294901760
      %v5927 = vsub.f32 %v4467, %v5926
      %v5928 = vand.u32 %v5927, 4294901760
      %5929 = vmatpush.msra.mxu0 %v5928
      %v5930 = vand.u32 %v4465, 4294901760
      %v5931 = vsub.f32 %v4465, %v5930
      %v5932 = vand.u32 %v5931, 4294901760
      %5933 = vmatpush.msra.mxu0 %v5932
      %v5934 = vand.u32 %v4463, 4294901760
      %v5935 = vsub.f32 %v4463, %v5934
      %v5936 = vand.u32 %v5935, 4294901760
      %5937 = vmatpush.msra.mxu0 %v5936
      %v5938 = vand.u32 %v4428, 4294901760
      %5939 = vmatmul.f32.gmra.mxu0 %v5938
      %v5940 = vpop.f32.mrf.mxu0
      %v5941 = vadd.f32 %v5866, %v5940
      %v5942 = vand.u32 %v4429, 4294901760
      %5943 = vmatmul.f32.gmra.mxu0 %v5942
      %v5944 = vpop.f32.mrf.mxu0
      %v5945 = vadd.f32 %v5872, %v5944
      %5946 = vdwg.mxu0
      %v5947 = vand.u32 %v4493, 4294901760
      %5948 = vmatpush.msra.mxu0 %v5947
      %v5949 = vand.u32 %v4491, 4294901760
      %5950 = vmatpush.msra.mxu0 %v5949
      %v5951 = vand.u32 %v4489, 4294901760
      %5952 = vmatpush.msra.mxu0 %v5951
      %v5953 = vand.u32 %v4487, 4294901760
      %5954 = vmatpush.msra.mxu0 %v5953
      %v5955 = vand.u32 %v4485, 4294901760
      %5956 = vmatpush.msra.mxu0 %v5955
      %v5957 = vand.u32 %v4483, 4294901760
      %5958 = vmatpush.msra.mxu0 %v5957
      %v5959 = vand.u32 %v4481, 4294901760
      %5960 = vmatpush.msra.mxu0 %v5959
      %v5961 = vand.u32 %v4479, 4294901760
      %5962 = vmatpush.msra.mxu0 %v5961
      %v5963 = vand.u32 %v4477, 4294901760
      %5964 = vmatpush.msra.mxu0 %v5963
      %v5965 = vand.u32 %v4475, 4294901760
      %5966 = vmatpush.msra.mxu0 %v5965
      %v5967 = vand.u32 %v4473, 4294901760
      %5968 = vmatpush.msra.mxu0 %v5967
      %v5969 = vand.u32 %v4471, 4294901760
      %5970 = vmatpush.msra.mxu0 %v5969
      %v5971 = vand.u32 %v4469, 4294901760
      %5972 = vmatpush.msra.mxu0 %v5971
      %v5973 = vand.u32 %v4467, 4294901760
      %5974 = vmatpush.msra.mxu0 %v5973
      %v5975 = vand.u32 %v4465, 4294901760
      %5976 = vmatpush.msra.mxu0 %v5975
      %v5977 = vand.u32 %v4463, 4294901760
      %5978 = vmatpush.msra.mxu0 %v5977
      %v5979 = vand.u32 %v4428, 4294901760
      %5980 = vmatmul.f32.gmra.mxu0 %v5979
      %v5981 = vpop.f32.mrf.mxu0
      %v5982 = vadd.f32 %v5941, %v5981
      %v5983 = vand.u32 %v4429, 4294901760
      %5984 = vmatmul.f32.gmra.mxu0 %v5983
      %v5985 = vpop.f32.mrf.mxu0
      %v5986 = vadd.f32 %v5945, %v5985
      %5987 = vdwg.mxu0
      %v5988 = vmax.f32 %v5238, 0.0
      %v5989 = vmax.f32 %v5242, 0.0
      %5990 = vst [vmem:[#allocation7 + $0x8] sm:$0xff] %v5988
      %5991 = vst [vmem:[#allocation7 + $0x10] sm:$0xff] %v5989
      %v5992 = vld [vmem:[#allocation7 + $0x4] sm:$0xff]
      %v5993 = vld [vmem:[#allocation7 + $0xc] sm:$0xff]
      %v5994 = vld [vmem:[%s11] sm:$0xff]
      %v5995 = vld [vmem:[%s11 + $0x8] sm:$0xff]
      %v5996 = vld [vmem:[%s11 + $0x10] sm:$0xff]
      %v5997 = vld [vmem:[%s11 + $0x18] sm:$0xff]
      %v5998 = vld [vmem:[%s11 + $0x20] sm:$0xff]
      %v5999 = vld [vmem:[%s11 + $0x28] sm:$0xff]
      %v6000 = vld [vmem:[%s11 + $0x30] sm:$0xff]
      %v6001 = vld [vmem:[%s11 + $0x38] sm:$0xff]
      %v6002 = vld [vmem:[%s11 + $0x40] sm:$0xff]
      %v6003 = vld [vmem:[%s11 + $0x48] sm:$0xff]
      %v6004 = vld [vmem:[%s11 + $0x50] sm:$0xff]
      %v6005 = vld [vmem:[%s11 + $0x58] sm:$0xff]
      %v6006 = vld [vmem:[%s11 + $0x60] sm:$0xff]
      %v6007 = vld [vmem:[%s11 + $0x68] sm:$0xff]
      %v6008 = vld [vmem:[%s11 + $0x70] sm:$0xff]
      %v6009 = vld [vmem:[%s11 + $0x78] sm:$0xff]
      %v6010 = vld [vmem:[%s11 + $0x80] sm:$0xff]
      %v6011 = vld [vmem:[%s11 + $0x88] sm:$0xff]
      %v6012 = vld [vmem:[%s11 + $0x90] sm:$0xff]
      %v6013 = vld [vmem:[%s11 + $0x98] sm:$0xff]
      %v6014 = vld [vmem:[%s11 + $0xa0] sm:$0xff]
      %v6015 = vld [vmem:[%s11 + $0xa8] sm:$0xff]
      %v6016 = vld [vmem:[%s11 + $0xb0] sm:$0xff]
      %v6017 = vld [vmem:[%s11 + $0xb8] sm:$0xff]
      %v6018 = vld [vmem:[%s11 + $0xc0] sm:$0xff]
      %v6019 = vld [vmem:[%s11 + $0xc8] sm:$0xff]
      %v6020 = vld [vmem:[%s11 + $0xd0] sm:$0xff]
      %v6021 = vld [vmem:[%s11 + $0xd8] sm:$0xff]
      %v6022 = vld [vmem:[%s11 + $0xe0] sm:$0xff]
      %v6023 = vld [vmem:[%s11 + $0xe8] sm:$0xff]
      %v6024 = vld [vmem:[%s11 + $0xf0] sm:$0xff]
      %v6025 = vld [vmem:[%s11 + $0xf8] sm:$0xff]
      %v6026 = vld [vmem:[%s12] sm:$0x1]
      %v6028 = vperm.slane %v6026, 0
      %v6030 = vand.u32 %v6009, 4294901760
      %6031 = vmatpush.msra.mxu0 %v6030
      %v6032 = vand.u32 %v6008, 4294901760
      %6033 = vmatpush.msra.mxu0 %v6032
      %v6034 = vand.u32 %v6007, 4294901760
      %6035 = vmatpush.msra.mxu0 %v6034
      %v6036 = vand.u32 %v6006, 4294901760
      %6037 = vmatpush.msra.mxu0 %v6036
      %v6038 = vand.u32 %v6005, 4294901760
      %6039 = vmatpush.msra.mxu0 %v6038
      %v6040 = vand.u32 %v6004, 4294901760
      %6041 = vmatpush.msra.mxu0 %v6040
      %v6042 = vand.u32 %v6003, 4294901760
      %6043 = vmatpush.msra.mxu0 %v6042
      %v6044 = vand.u32 %v6002, 4294901760
      %6045 = vmatpush.msra.mxu0 %v6044
      %v6046 = vand.u32 %v6001, 4294901760
      %6047 = vmatpush.msra.mxu0 %v6046
      %v6048 = vand.u32 %v6000, 4294901760
      %6049 = vmatpush.msra.mxu0 %v6048
      %v6050 = vand.u32 %v5999, 4294901760
      %6051 = vmatpush.msra.mxu0 %v6050
      %v6052 = vand.u32 %v5998, 4294901760
      %6053 = vmatpush.msra.mxu0 %v6052
      %v6054 = vand.u32 %v5997, 4294901760
      %6055 = vmatpush.msra.mxu0 %v6054
      %v6056 = vand.u32 %v5996, 4294901760
      %6057 = vmatpush.msra.mxu0 %v6056
      %v6058 = vand.u32 %v5995, 4294901760
      %6059 = vmatpush.msra.mxu0 %v6058
      %v6060 = vand.u32 %v5994, 4294901760
      %6061 = vmatpush.msra.mxu0 %v6060
      %v6062 = vand.u32 %v5988, 4294901760
      %v6063 = vsub.f32 %v5988, %v6062
      %v6064 = vand.u32 %v6063, 4294901760
      %v6065 = vsub.f32 %v6063, %v6064
      %v6066 = vand.u32 %v6065, 4294901760
      %6067 = vmatmul.f32.gmra.mxu0 %v6066
      %v6068 = vpop.f32.mrf.mxu0
      %v6069 = vadd.f32 %v6028, %v6068
      %v6070 = vand.u32 %v5989, 4294901760
      %v6071 = vsub.f32 %v5989, %v6070
      %v6072 = vand.u32 %v6071, 4294901760
      %v6073 = vsub.f32 %v6071, %v6072
      %v6074 = vand.u32 %v6073, 4294901760
      %6075 = vmatmul.f32.gmra.mxu0 %v6074
      %v6076 = vpop.f32.mrf.mxu0
      %v6077 = vadd.f32 %v6028, %v6076
      %6078 = vdwg.mxu0
      %v6079 = vand.u32 %v6009, 4294901760
      %v6080 = vsub.f32 %v6009, %v6079
      %v6081 = vand.u32 %v6080, 4294901760
      %v6082 = vsub.f32 %v6080, %v6081
      %v6083 = vand.u32 %v6082, 4294901760
      %6084 = vmatpush.msra.mxu0 %v6083
      %v6085 = vand.u32 %v6008, 4294901760
      %v6086 = vsub.f32 %v6008, %v6085
      %v6087 = vand.u32 %v6086, 4294901760
      %v6088 = vsub.f32 %v6086, %v6087
      %v6089 = vand.u32 %v6088, 4294901760
      %6090 = vmatpush.msra.mxu0 %v6089
      %v6091 = vand.u32 %v6007, 4294901760
      %v6092 = vsub.f32 %v6007, %v6091
      %v6093 = vand.u32 %v6092, 4294901760
      %v6094 = vsub.f32 %v6092, %v6093
      %v6095 = vand.u32 %v6094, 4294901760
      %6096 = vmatpush.msra.mxu0 %v6095
      %v6097 = vand.u32 %v6006, 4294901760
      %v6098 = vsub.f32 %v6006, %v6097
      %v6099 = vand.u32 %v6098, 4294901760
      %v6100 = vsub.f32 %v6098, %v6099
      %v6101 = vand.u32 %v6100, 4294901760
      %6102 = vmatpush.msra.mxu0 %v6101
      %v6103 = vand.u32 %v6005, 4294901760
      %v6104 = vsub.f32 %v6005, %v6103
      %v6105 = vand.u32 %v6104, 4294901760
      %v6106 = vsub.f32 %v6104, %v6105
      %v6107 = vand.u32 %v6106, 4294901760
      %6108 = vmatpush.msra.mxu0 %v6107
      %v6109 = vand.u32 %v6004, 4294901760
      %v6110 = vsub.f32 %v6004, %v6109
      %v6111 = vand.u32 %v6110, 4294901760
      %v6112 = vsub.f32 %v6110, %v6111
      %v6113 = vand.u32 %v6112, 4294901760
      %6114 = vmatpush.msra.mxu0 %v6113
      %v6115 = vand.u32 %v6003, 4294901760
      %v6116 = vsub.f32 %v6003, %v6115
      %v6117 = vand.u32 %v6116, 4294901760
      %v6118 = vsub.f32 %v6116, %v6117
      %v6119 = vand.u32 %v6118, 4294901760
      %6120 = vmatpush.msra.mxu0 %v6119
      %v6121 = vand.u32 %v6002, 4294901760
      %v6122 = vsub.f32 %v6002, %v6121
      %v6123 = vand.u32 %v6122, 4294901760
      %v6124 = vsub.f32 %v6122, %v6123
      %v6125 = vand.u32 %v6124, 4294901760
      %6126 = vmatpush.msra.mxu0 %v6125
      %v6127 = vand.u32 %v6001, 4294901760
      %v6128 = vsub.f32 %v6001, %v6127
      %v6129 = vand.u32 %v6128, 4294901760
      %v6130 = vsub.f32 %v6128, %v6129
      %v6131 = vand.u32 %v6130, 4294901760
      %6132 = vmatpush.msra.mxu0 %v6131
      %v6133 = vand.u32 %v6000, 4294901760
      %v6134 = vsub.f32 %v6000, %v6133
      %v6135 = vand.u32 %v6134, 4294901760
      %v6136 = vsub.f32 %v6134, %v6135
      %v6137 = vand.u32 %v6136, 4294901760
      %6138 = vmatpush.msra.mxu0 %v6137
      %v6139 = vand.u32 %v5999, 4294901760
      %v6140 = vsub.f32 %v5999, %v6139
      %v6141 = vand.u32 %v6140, 4294901760
      %v6142 = vsub.f32 %v6140, %v6141
      %v6143 = vand.u32 %v6142, 4294901760
      %6144 = vmatpush.msra.mxu0 %v6143
      %v6145 = vand.u32 %v5998, 4294901760
      %v6146 = vsub.f32 %v5998, %v6145
      %v6147 = vand.u32 %v6146, 4294901760
      %v6148 = vsub.f32 %v6146, %v6147
      %v6149 = vand.u32 %v6148, 4294901760
      %6150 = vmatpush.msra.mxu0 %v6149
      %v6151 = vand.u32 %v5997, 4294901760
      %v6152 = vsub.f32 %v5997, %v6151
      %v6153 = vand.u32 %v6152, 4294901760
      %v6154 = vsub.f32 %v6152, %v6153
      %v6155 = vand.u32 %v6154, 4294901760
      %6156 = vmatpush.msra.mxu0 %v6155
      %v6157 = vand.u32 %v5996, 4294901760
      %v6158 = vsub.f32 %v5996, %v6157
      %v6159 = vand.u32 %v6158, 4294901760
      %v6160 = vsub.f32 %v6158, %v6159
      %v6161 = vand.u32 %v6160, 4294901760
      %6162 = vmatpush.msra.mxu0 %v6161
      %v6163 = vand.u32 %v5995, 4294901760
      %v6164 = vsub.f32 %v5995, %v6163
      %v6165 = vand.u32 %v6164, 4294901760
      %v6166 = vsub.f32 %v6164, %v6165
      %v6167 = vand.u32 %v6166, 4294901760
      %6168 = vmatpush.msra.mxu0 %v6167
      %v6169 = vand.u32 %v5994, 4294901760
      %v6170 = vsub.f32 %v5994, %v6169
      %v6171 = vand.u32 %v6170, 4294901760
      %v6172 = vsub.f32 %v6170, %v6171
      %v6173 = vand.u32 %v6172, 4294901760
      %6174 = vmatpush.msra.mxu0 %v6173
      %v6175 = vand.u32 %v5988, 4294901760
      %6176 = vmatmul.f32.gmra.mxu0 %v6175
      %v6177 = vpop.f32.mrf.mxu0
      %v6178 = vadd.f32 %v6069, %v6177
      %v6179 = vand.u32 %v5989, 4294901760
      %6180 = vmatmul.f32.gmra.mxu0 %v6179
      %v6181 = vpop.f32.mrf.mxu0
      %v6182 = vadd.f32 %v6077, %v6181
      %6183 = vdwg.mxu0
      %v6184 = vand.u32 %v6009, 4294901760
      %v6185 = vsub.f32 %v6009, %v6184
      %6186 = vmatpush.msra.mxu0 %v6185
      %v6187 = vand.u32 %v6008, 4294901760
      %v6188 = vsub.f32 %v6008, %v6187
      %6189 = vmatpush.msra.mxu0 %v6188
      %v6190 = vand.u32 %v6007, 4294901760
      %v6191 = vsub.f32 %v6007, %v6190
      %6192 = vmatpush.msra.mxu0 %v6191
      %v6193 = vand.u32 %v6006, 4294901760
      %v6194 = vsub.f32 %v6006, %v6193
      %6195 = vmatpush.msra.mxu0 %v6194
      %v6196 = vand.u32 %v6005, 4294901760
      %v6197 = vsub.f32 %v6005, %v6196
      %6198 = vmatpush.msra.mxu0 %v6197
      %v6199 = vand.u32 %v6004, 4294901760
      %v6200 = vsub.f32 %v6004, %v6199
      %6201 = vmatpush.msra.mxu0 %v6200
      %v6202 = vand.u32 %v6003, 4294901760
      %v6203 = vsub.f32 %v6003, %v6202
      %6204 = vmatpush.msra.mxu0 %v6203
      %v6205 = vand.u32 %v6002, 4294901760
      %v6206 = vsub.f32 %v6002, %v6205
      %6207 = vmatpush.msra.mxu0 %v6206
      %v6208 = vand.u32 %v6001, 4294901760
      %v6209 = vsub.f32 %v6001, %v6208
      %6210 = vmatpush.msra.mxu0 %v6209
      %v6211 = vand.u32 %v6000, 4294901760
      %v6212 = vsub.f32 %v6000, %v6211
      %6213 = vmatpush.msra.mxu0 %v6212
      %v6214 = vand.u32 %v5999, 4294901760
      %v6215 = vsub.f32 %v5999, %v6214
      %6216 = vmatpush.msra.mxu0 %v6215
      %v6217 = vand.u32 %v5998, 4294901760
      %v6218 = vsub.f32 %v5998, %v6217
      %6219 = vmatpush.msra.mxu0 %v6218
      %v6220 = vand.u32 %v5997, 4294901760
      %v6221 = vsub.f32 %v5997, %v6220
      %6222 = vmatpush.msra.mxu0 %v6221
      %v6223 = vand.u32 %v5996, 4294901760
      %v6224 = vsub.f32 %v5996, %v6223
      %6225 = vmatpush.msra.mxu0 %v6224
      %v6226 = vand.u32 %v5995, 4294901760
      %v6227 = vsub.f32 %v5995, %v6226
      %6228 = vmatpush.msra.mxu0 %v6227
      %v6229 = vand.u32 %v5994, 4294901760
      %v6230 = vsub.f32 %v5994, %v6229
      %6231 = vmatpush.msra.mxu0 %v6230
      %v6232 = vand.u32 %v5988, 4294901760
      %v6233 = vsub.f32 %v5988, %v6232
      %6234 = vmatmul.f32.gmra.mxu0 %v6233
      %v6235 = vpop.f32.mrf.mxu0
      %v6236 = vadd.f32 %v6178, %v6235
      %v6237 = vand.u32 %v5989, 4294901760
      %v6238 = vsub.f32 %v5989, %v6237
      %6239 = vmatmul.f32.gmra.mxu0 %v6238
      %v6240 = vpop.f32.mrf.mxu0
      %v6241 = vadd.f32 %v6182, %v6240
      %6242 = vdwg.mxu0
      %v6243 = vand.u32 %v6009, 4294901760
      %6244 = vmatpush.msra.mxu0 %v6243
      %v6245 = vand.u32 %v6008, 4294901760
      %6246 = vmatpush.msra.mxu0 %v6245
      %v6247 = vand.u32 %v6007, 4294901760
      %6248 = vmatpush.msra.mxu0 %v6247
      %v6249 = vand.u32 %v6006, 4294901760
      %6250 = vmatpush.msra.mxu0 %v6249
      %v6251 = vand.u32 %v6005, 4294901760
      %6252 = vmatpush.msra.mxu0 %v6251
      %v6253 = vand.u32 %v6004, 4294901760
      %6254 = vmatpush.msra.mxu0 %v6253
      %v6255 = vand.u32 %v6003, 4294901760
      %6256 = vmatpush.msra.mxu0 %v6255
      %v6257 = vand.u32 %v6002, 4294901760
      %6258 = vmatpush.msra.mxu0 %v6257
      %v6259 = vand.u32 %v6001, 4294901760
      %6260 = vmatpush.msra.mxu0 %v6259
      %v6261 = vand.u32 %v6000, 4294901760
      %6262 = vmatpush.msra.mxu0 %v6261
      %v6263 = vand.u32 %v5999, 4294901760
      %6264 = vmatpush.msra.mxu0 %v6263
      %v6265 = vand.u32 %v5998, 4294901760
      %6266 = vmatpush.msra.mxu0 %v6265
      %v6267 = vand.u32 %v5997, 4294901760
      %6268 = vmatpush.msra.mxu0 %v6267
      %v6269 = vand.u32 %v5996, 4294901760
      %6270 = vmatpush.msra.mxu0 %v6269
      %v6271 = vand.u32 %v5995, 4294901760
      %6272 = vmatpush.msra.mxu0 %v6271
      %v6273 = vand.u32 %v5994, 4294901760
      %6274 = vmatpush.msra.mxu0 %v6273
      %v6275 = vand.u32 %v5988, 4294901760
      %v6276 = vsub.f32 %v5988, %v6275
      %v6277 = vand.u32 %v6276, 4294901760
      %6278 = vmatmul.f32.gmra.mxu0 %v6277
      %v6279 = vpop.f32.mrf.mxu0
      %v6280 = vadd.f32 %v6236, %v6279
      %v6281 = vand.u32 %v5989, 4294901760
      %v6282 = vsub.f32 %v5989, %v6281
      %v6283 = vand.u32 %v6282, 4294901760
      %6284 = vmatmul.f32.gmra.mxu0 %v6283
      %v6285 = vpop.f32.mrf.mxu0
      %v6286 = vadd.f32 %v6241, %v6285
      %6287 = vdwg.mxu0
      %v6288 = vand.u32 %v6009, 4294901760
      %v6289 = vsub.f32 %v6009, %v6288
      %v6290 = vand.u32 %v6289, 4294901760
      %6291 = vmatpush.msra.mxu0 %v6290
      %v6292 = vand.u32 %v6008, 4294901760
      %v6293 = vsub.f32 %v6008, %v6292
      %v6294 = vand.u32 %v6293, 4294901760
      %6295 = vmatpush.msra.mxu0 %v6294
      %v6296 = vand.u32 %v6007, 4294901760
      %v6297 = vsub.f32 %v6007, %v6296
      %v6298 = vand.u32 %v6297, 4294901760
      %6299 = vmatpush.msra.mxu0 %v6298
      %v6300 = vand.u32 %v6006, 4294901760
      %v6301 = vsub.f32 %v6006, %v6300
      %v6302 = vand.u32 %v6301, 4294901760
      %6303 = vmatpush.msra.mxu0 %v6302
      %v6304 = vand.u32 %v6005, 4294901760
      %v6305 = vsub.f32 %v6005, %v6304
      %v6306 = vand.u32 %v6305, 4294901760
      %6307 = vmatpush.msra.mxu0 %v6306
      %v6308 = vand.u32 %v6004, 4294901760
      %v6309 = vsub.f32 %v6004, %v6308
      %v6310 = vand.u32 %v6309, 4294901760
      %6311 = vmatpush.msra.mxu0 %v6310
      %v6312 = vand.u32 %v6003, 4294901760
      %v6313 = vsub.f32 %v6003, %v6312
      %v6314 = vand.u32 %v6313, 4294901760
      %6315 = vmatpush.msra.mxu0 %v6314
      %v6316 = vand.u32 %v6002, 4294901760
      %v6317 = vsub.f32 %v6002, %v6316
      %v6318 = vand.u32 %v6317, 4294901760
      %6319 = vmatpush.msra.mxu0 %v6318
      %v6320 = vand.u32 %v6001, 4294901760
      %v6321 = vsub.f32 %v6001, %v6320
      %v6322 = vand.u32 %v6321, 4294901760
      %6323 = vmatpush.msra.mxu0 %v6322
      %v6324 = vand.u32 %v6000, 4294901760
      %v6325 = vsub.f32 %v6000, %v6324
      %v6326 = vand.u32 %v6325, 4294901760
      %6327 = vmatpush.msra.mxu0 %v6326
      %v6328 = vand.u32 %v5999, 4294901760
      %v6329 = vsub.f32 %v5999, %v6328
      %v6330 = vand.u32 %v6329, 4294901760
      %6331 = vmatpush.msra.mxu0 %v6330
      %v6332 = vand.u32 %v5998, 4294901760
      %v6333 = vsub.f32 %v5998, %v6332
      %v6334 = vand.u32 %v6333, 4294901760
      %6335 = vmatpush.msra.mxu0 %v6334
      %v6336 = vand.u32 %v5997, 4294901760
      %v6337 = vsub.f32 %v5997, %v6336
      %v6338 = vand.u32 %v6337, 4294901760
      %6339 = vmatpush.msra.mxu0 %v6338
      %v6340 = vand.u32 %v5996, 4294901760
      %v6341 = vsub.f32 %v5996, %v6340
      %v6342 = vand.u32 %v6341, 4294901760
      %6343 = vmatpush.msra.mxu0 %v6342
      %v6344 = vand.u32 %v5995, 4294901760
      %v6345 = vsub.f32 %v5995, %v6344
      %v6346 = vand.u32 %v6345, 4294901760
      %6347 = vmatpush.msra.mxu0 %v6346
      %v6348 = vand.u32 %v5994, 4294901760
      %v6349 = vsub.f32 %v5994, %v6348
      %v6350 = vand.u32 %v6349, 4294901760
      %6351 = vmatpush.msra.mxu0 %v6350
      %v6352 = vand.u32 %v5988, 4294901760
      %6353 = vmatmul.f32.gmra.mxu0 %v6352
      %v6354 = vpop.f32.mrf.mxu0
      %v6355 = vadd.f32 %v6280, %v6354
      %v6356 = vand.u32 %v5989, 4294901760
      %6357 = vmatmul.f32.gmra.mxu0 %v6356
      %v6358 = vpop.f32.mrf.mxu0
      %v6359 = vadd.f32 %v6286, %v6358
      %6360 = vdwg.mxu0
      %v6361 = vand.u32 %v6009, 4294901760
      %6362 = vmatpush.msra.mxu0 %v6361
      %v6363 = vand.u32 %v6008, 4294901760
      %6364 = vmatpush.msra.mxu0 %v6363
      %v6365 = vand.u32 %v6007, 4294901760
      %6366 = vmatpush.msra.mxu0 %v6365
      %v6367 = vand.u32 %v6006, 4294901760
      %6368 = vmatpush.msra.mxu0 %v6367
      %v6369 = vand.u32 %v6005, 4294901760
      %6370 = vmatpush.msra.mxu0 %v6369
      %v6371 = vand.u32 %v6004, 4294901760
      %6372 = vmatpush.msra.mxu0 %v6371
      %v6373 = vand.u32 %v6003, 4294901760
      %6374 = vmatpush.msra.mxu0 %v6373
      %v6375 = vand.u32 %v6002, 4294901760
      %6376 = vmatpush.msra.mxu0 %v6375
      %v6377 = vand.u32 %v6001, 4294901760
      %6378 = vmatpush.msra.mxu0 %v6377
      %v6379 = vand.u32 %v6000, 4294901760
      %6380 = vmatpush.msra.mxu0 %v6379
      %v6381 = vand.u32 %v5999, 4294901760
      %6382 = vmatpush.msra.mxu0 %v6381
      %v6383 = vand.u32 %v5998, 4294901760
      %6384 = vmatpush.msra.mxu0 %v6383
      %v6385 = vand.u32 %v5997, 4294901760
      %6386 = vmatpush.msra.mxu0 %v6385
      %v6387 = vand.u32 %v5996, 4294901760
      %6388 = vmatpush.msra.mxu0 %v6387
      %v6389 = vand.u32 %v5995, 4294901760
      %6390 = vmatpush.msra.mxu0 %v6389
      %v6391 = vand.u32 %v5994, 4294901760
      %6392 = vmatpush.msra.mxu0 %v6391
      %v6393 = vand.u32 %v5988, 4294901760
      %6394 = vmatmul.f32.gmra.mxu0 %v6393
      %v6395 = vpop.f32.mrf.mxu0
      %v6396 = vadd.f32 %v6355, %v6395
      %v6397 = vand.u32 %v5989, 4294901760
      %6398 = vmatmul.f32.gmra.mxu0 %v6397
      %v6399 = vpop.f32.mrf.mxu0
      %v6400 = vadd.f32 %v6359, %v6399
      %6401 = vdwg.mxu0
      %v6402 = vand.u32 %v6025, 4294901760
      %6403 = vmatpush.msra.mxu0 %v6402
      %v6404 = vand.u32 %v6024, 4294901760
      %6405 = vmatpush.msra.mxu0 %v6404
      %v6406 = vand.u32 %v6023, 4294901760
      %6407 = vmatpush.msra.mxu0 %v6406
      %v6408 = vand.u32 %v6022, 4294901760
      %6409 = vmatpush.msra.mxu0 %v6408
      %v6410 = vand.u32 %v6021, 4294901760
      %6411 = vmatpush.msra.mxu0 %v6410
      %v6412 = vand.u32 %v6020, 4294901760
      %6413 = vmatpush.msra.mxu0 %v6412
      %v6414 = vand.u32 %v6019, 4294901760
      %6415 = vmatpush.msra.mxu0 %v6414
      %v6416 = vand.u32 %v6018, 4294901760
      %6417 = vmatpush.msra.mxu0 %v6416
      %v6418 = vand.u32 %v6017, 4294901760
      %6419 = vmatpush.msra.mxu0 %v6418
      %v6420 = vand.u32 %v6016, 4294901760
      %6421 = vmatpush.msra.mxu0 %v6420
      %v6422 = vand.u32 %v6015, 4294901760
      %6423 = vmatpush.msra.mxu0 %v6422
      %v6424 = vand.u32 %v6014, 4294901760
      %6425 = vmatpush.msra.mxu0 %v6424
      %v6426 = vand.u32 %v6013, 4294901760
      %6427 = vmatpush.msra.mxu0 %v6426
      %v6428 = vand.u32 %v6012, 4294901760
      %6429 = vmatpush.msra.mxu0 %v6428
      %v6430 = vand.u32 %v6011, 4294901760
      %6431 = vmatpush.msra.mxu0 %v6430
      %v6432 = vand.u32 %v6010, 4294901760
      %6433 = vmatpush.msra.mxu0 %v6432
      %v6434 = vand.u32 %v5992, 4294901760
      %v6435 = vsub.f32 %v5992, %v6434
      %v6436 = vand.u32 %v6435, 4294901760
      %v6437 = vsub.f32 %v6435, %v6436
      %v6438 = vand.u32 %v6437, 4294901760
      %6439 = vmatmul.f32.gmra.mxu0 %v6438
      %v6440 = vpop.f32.mrf.mxu0
      %v6441 = vadd.f32 %v6396, %v6440
      %v6442 = vand.u32 %v5993, 4294901760
      %v6443 = vsub.f32 %v5993, %v6442
      %v6444 = vand.u32 %v6443, 4294901760
      %v6445 = vsub.f32 %v6443, %v6444
      %v6446 = vand.u32 %v6445, 4294901760
      %6447 = vmatmul.f32.gmra.mxu0 %v6446
      %v6448 = vpop.f32.mrf.mxu0
      %v6449 = vadd.f32 %v6400, %v6448
      %6450 = vdwg.mxu0
      %v6451 = vand.u32 %v6025, 4294901760
      %v6452 = vsub.f32 %v6025, %v6451
      %v6453 = vand.u32 %v6452, 4294901760
      %v6454 = vsub.f32 %v6452, %v6453
      %v6455 = vand.u32 %v6454, 4294901760
      %6456 = vmatpush.msra.mxu0 %v6455
      %v6457 = vand.u32 %v6024, 4294901760
      %v6458 = vsub.f32 %v6024, %v6457
      %v6459 = vand.u32 %v6458, 4294901760
      %v6460 = vsub.f32 %v6458, %v6459
      %v6461 = vand.u32 %v6460, 4294901760
      %6462 = vmatpush.msra.mxu0 %v6461
      %v6463 = vand.u32 %v6023, 4294901760
      %v6464 = vsub.f32 %v6023, %v6463
      %v6465 = vand.u32 %v6464, 4294901760
      %v6466 = vsub.f32 %v6464, %v6465
      %v6467 = vand.u32 %v6466, 4294901760
      %6468 = vmatpush.msra.mxu0 %v6467
      %v6469 = vand.u32 %v6022, 4294901760
      %v6470 = vsub.f32 %v6022, %v6469
      %v6471 = vand.u32 %v6470, 4294901760
      %v6472 = vsub.f32 %v6470, %v6471
      %v6473 = vand.u32 %v6472, 4294901760
      %6474 = vmatpush.msra.mxu0 %v6473
      %v6475 = vand.u32 %v6021, 4294901760
      %v6476 = vsub.f32 %v6021, %v6475
      %v6477 = vand.u32 %v6476, 4294901760
      %v6478 = vsub.f32 %v6476, %v6477
      %v6479 = vand.u32 %v6478, 4294901760
      %6480 = vmatpush.msra.mxu0 %v6479
      %v6481 = vand.u32 %v6020, 4294901760
      %v6482 = vsub.f32 %v6020, %v6481
      %v6483 = vand.u32 %v6482, 4294901760
      %v6484 = vsub.f32 %v6482, %v6483
      %v6485 = vand.u32 %v6484, 4294901760
      %6486 = vmatpush.msra.mxu0 %v6485
      %v6487 = vand.u32 %v6019, 4294901760
      %v6488 = vsub.f32 %v6019, %v6487
      %v6489 = vand.u32 %v6488, 4294901760
      %v6490 = vsub.f32 %v6488, %v6489
      %v6491 = vand.u32 %v6490, 4294901760
      %6492 = vmatpush.msra.mxu0 %v6491
      %v6493 = vand.u32 %v6018, 4294901760
      %v6494 = vsub.f32 %v6018, %v6493
      %v6495 = vand.u32 %v6494, 4294901760
      %v6496 = vsub.f32 %v6494, %v6495
      %v6497 = vand.u32 %v6496, 4294901760
      %6498 = vmatpush.msra.mxu0 %v6497
      %v6499 = vand.u32 %v6017, 4294901760
      %v6500 = vsub.f32 %v6017, %v6499
      %v6501 = vand.u32 %v6500, 4294901760
      %v6502 = vsub.f32 %v6500, %v6501
      %v6503 = vand.u32 %v6502, 4294901760
      %6504 = vmatpush.msra.mxu0 %v6503
      %v6505 = vand.u32 %v6016, 4294901760
      %v6506 = vsub.f32 %v6016, %v6505
      %v6507 = vand.u32 %v6506, 4294901760
      %v6508 = vsub.f32 %v6506, %v6507
      %v6509 = vand.u32 %v6508, 4294901760
      %6510 = vmatpush.msra.mxu0 %v6509
      %v6511 = vand.u32 %v6015, 4294901760
      %v6512 = vsub.f32 %v6015, %v6511
      %v6513 = vand.u32 %v6512, 4294901760
      %v6514 = vsub.f32 %v6512, %v6513
      %v6515 = vand.u32 %v6514, 4294901760
      %6516 = vmatpush.msra.mxu0 %v6515
      %v6517 = vand.u32 %v6014, 4294901760
      %v6518 = vsub.f32 %v6014, %v6517
      %v6519 = vand.u32 %v6518, 4294901760
      %v6520 = vsub.f32 %v6518, %v6519
      %v6521 = vand.u32 %v6520, 4294901760
      %6522 = vmatpush.msra.mxu0 %v6521
      %v6523 = vand.u32 %v6013, 4294901760
      %v6524 = vsub.f32 %v6013, %v6523
      %v6525 = vand.u32 %v6524, 4294901760
      %v6526 = vsub.f32 %v6524, %v6525
      %v6527 = vand.u32 %v6526, 4294901760
      %6528 = vmatpush.msra.mxu0 %v6527
      %v6529 = vand.u32 %v6012, 4294901760
      %v6530 = vsub.f32 %v6012, %v6529
      %v6531 = vand.u32 %v6530, 4294901760
      %v6532 = vsub.f32 %v6530, %v6531
      %v6533 = vand.u32 %v6532, 4294901760
      %6534 = vmatpush.msra.mxu0 %v6533
      %v6535 = vand.u32 %v6011, 4294901760
      %v6536 = vsub.f32 %v6011, %v6535
      %v6537 = vand.u32 %v6536, 4294901760
      %v6538 = vsub.f32 %v6536, %v6537
      %v6539 = vand.u32 %v6538, 4294901760
      %6540 = vmatpush.msra.mxu0 %v6539
      %v6541 = vand.u32 %v6010, 4294901760
      %v6542 = vsub.f32 %v6010, %v6541
      %v6543 = vand.u32 %v6542, 4294901760
      %v6544 = vsub.f32 %v6542, %v6543
      %v6545 = vand.u32 %v6544, 4294901760
      %6546 = vmatpush.msra.mxu0 %v6545
      %v6547 = vand.u32 %v5992, 4294901760
      %6548 = vmatmul.f32.gmra.mxu0 %v6547
      %v6549 = vpop.f32.mrf.mxu0
      %v6550 = vadd.f32 %v6441, %v6549
      %v6551 = vand.u32 %v5993, 4294901760
      %6552 = vmatmul.f32.gmra.mxu0 %v6551
      %v6553 = vpop.f32.mrf.mxu0
      %v6554 = vadd.f32 %v6449, %v6553
      %6555 = vdwg.mxu0
      %v6556 = vand.u32 %v6025, 4294901760
      %v6557 = vsub.f32 %v6025, %v6556
      %6558 = vmatpush.msra.mxu0 %v6557
      %v6559 = vand.u32 %v6024, 4294901760
      %v6560 = vsub.f32 %v6024, %v6559
      %6561 = vmatpush.msra.mxu0 %v6560
      %v6562 = vand.u32 %v6023, 4294901760
      %v6563 = vsub.f32 %v6023, %v6562
      %6564 = vmatpush.msra.mxu0 %v6563
      %v6565 = vand.u32 %v6022, 4294901760
      %v6566 = vsub.f32 %v6022, %v6565
      %6567 = vmatpush.msra.mxu0 %v6566
      %v6568 = vand.u32 %v6021, 4294901760
      %v6569 = vsub.f32 %v6021, %v6568
      %6570 = vmatpush.msra.mxu0 %v6569
      %v6571 = vand.u32 %v6020, 4294901760
      %v6572 = vsub.f32 %v6020, %v6571
      %6573 = vmatpush.msra.mxu0 %v6572
      %v6574 = vand.u32 %v6019, 4294901760
      %v6575 = vsub.f32 %v6019, %v6574
      %6576 = vmatpush.msra.mxu0 %v6575
      %v6577 = vand.u32 %v6018, 4294901760
      %v6578 = vsub.f32 %v6018, %v6577
      %6579 = vmatpush.msra.mxu0 %v6578
      %v6580 = vand.u32 %v6017, 4294901760
      %v6581 = vsub.f32 %v6017, %v6580
      %6582 = vmatpush.msra.mxu0 %v6581
      %v6583 = vand.u32 %v6016, 4294901760
      %v6584 = vsub.f32 %v6016, %v6583
      %6585 = vmatpush.msra.mxu0 %v6584
      %v6586 = vand.u32 %v6015, 4294901760
      %v6587 = vsub.f32 %v6015, %v6586
      %6588 = vmatpush.msra.mxu0 %v6587
      %v6589 = vand.u32 %v6014, 4294901760
      %v6590 = vsub.f32 %v6014, %v6589
      %6591 = vmatpush.msra.mxu0 %v6590
      %v6592 = vand.u32 %v6013, 4294901760
      %v6593 = vsub.f32 %v6013, %v6592
      %6594 = vmatpush.msra.mxu0 %v6593
      %v6595 = vand.u32 %v6012, 4294901760
      %v6596 = vsub.f32 %v6012, %v6595
      %6597 = vmatpush.msra.mxu0 %v6596
      %v6598 = vand.u32 %v6011, 4294901760
      %v6599 = vsub.f32 %v6011, %v6598
      %6600 = vmatpush.msra.mxu0 %v6599
      %v6601 = vand.u32 %v6010, 4294901760
      %v6602 = vsub.f32 %v6010, %v6601
      %6603 = vmatpush.msra.mxu0 %v6602
      %v6604 = vand.u32 %v5992, 4294901760
      %v6605 = vsub.f32 %v5992, %v6604
      %6606 = vmatmul.f32.gmra.mxu0 %v6605
      %v6607 = vpop.f32.mrf.mxu0
      %v6608 = vadd.f32 %v6550, %v6607
      %v6609 = vand.u32 %v5993, 4294901760
      %v6610 = vsub.f32 %v5993, %v6609
      %6611 = vmatmul.f32.gmra.mxu0 %v6610
      %v6612 = vpop.f32.mrf.mxu0
      %v6613 = vadd.f32 %v6554, %v6612
      %6614 = vdwg.mxu0
      %v6615 = vand.u32 %v6025, 4294901760
      %6616 = vmatpush.msra.mxu0 %v6615
      %v6617 = vand.u32 %v6024, 4294901760
      %6618 = vmatpush.msra.mxu0 %v6617
      %v6619 = vand.u32 %v6023, 4294901760
      %6620 = vmatpush.msra.mxu0 %v6619
      %v6621 = vand.u32 %v6022, 4294901760
      %6622 = vmatpush.msra.mxu0 %v6621
      %v6623 = vand.u32 %v6021, 4294901760
      %6624 = vmatpush.msra.mxu0 %v6623
      %v6625 = vand.u32 %v6020, 4294901760
      %6626 = vmatpush.msra.mxu0 %v6625
      %v6627 = vand.u32 %v6019, 4294901760
      %6628 = vmatpush.msra.mxu0 %v6627
      %v6629 = vand.u32 %v6018, 4294901760
      %6630 = vmatpush.msra.mxu0 %v6629
      %v6631 = vand.u32 %v6017, 4294901760
      %6632 = vmatpush.msra.mxu0 %v6631
      %v6633 = vand.u32 %v6016, 4294901760
      %6634 = vmatpush.msra.mxu0 %v6633
      %v6635 = vand.u32 %v6015, 4294901760
      %6636 = vmatpush.msra.mxu0 %v6635
      %v6637 = vand.u32 %v6014, 4294901760
      %6638 = vmatpush.msra.mxu0 %v6637
      %v6639 = vand.u32 %v6013, 4294901760
      %6640 = vmatpush.msra.mxu0 %v6639
      %v6641 = vand.u32 %v6012, 4294901760
      %6642 = vmatpush.msra.mxu0 %v6641
      %v6643 = vand.u32 %v6011, 4294901760
      %6644 = vmatpush.msra.mxu0 %v6643
      %v6645 = vand.u32 %v6010, 4294901760
      %6646 = vmatpush.msra.mxu0 %v6645
      %v6647 = vand.u32 %v5992, 4294901760
      %v6648 = vsub.f32 %v5992, %v6647
      %v6649 = vand.u32 %v6648, 4294901760
      %6650 = vmatmul.f32.gmra.mxu0 %v6649
      %v6651 = vpop.f32.mrf.mxu0
      %v6652 = vadd.f32 %v6608, %v6651
      %v6653 = vand.u32 %v5993, 4294901760
      %v6654 = vsub.f32 %v5993, %v6653
      %v6655 = vand.u32 %v6654, 4294901760
      %6656 = vmatmul.f32.gmra.mxu0 %v6655
      %v6657 = vpop.f32.mrf.mxu0
      %v6658 = vadd.f32 %v6613, %v6657
      %6659 = vdwg.mxu0
      %v6660 = vand.u32 %v6025, 4294901760
      %v6661 = vsub.f32 %v6025, %v6660
      %v6662 = vand.u32 %v6661, 4294901760
      %6663 = vmatpush.msra.mxu0 %v6662
      %v6664 = vand.u32 %v6024, 4294901760
      %v6665 = vsub.f32 %v6024, %v6664
      %v6666 = vand.u32 %v6665, 4294901760
      %6667 = vmatpush.msra.mxu0 %v6666
      %v6668 = vand.u32 %v6023, 4294901760
      %v6669 = vsub.f32 %v6023, %v6668
      %v6670 = vand.u32 %v6669, 4294901760
      %6671 = vmatpush.msra.mxu0 %v6670
      %v6672 = vand.u32 %v6022, 4294901760
      %v6673 = vsub.f32 %v6022, %v6672
      %v6674 = vand.u32 %v6673, 4294901760
      %6675 = vmatpush.msra.mxu0 %v6674
      %v6676 = vand.u32 %v6021, 4294901760
      %v6677 = vsub.f32 %v6021, %v6676
      %v6678 = vand.u32 %v6677, 4294901760
      %6679 = vmatpush.msra.mxu0 %v6678
      %v6680 = vand.u32 %v6020, 4294901760
      %v6681 = vsub.f32 %v6020, %v6680
      %v6682 = vand.u32 %v6681, 4294901760
      %6683 = vmatpush.msra.mxu0 %v6682
      %v6684 = vand.u32 %v6019, 4294901760
      %v6685 = vsub.f32 %v6019, %v6684
      %v6686 = vand.u32 %v6685, 4294901760
      %6687 = vmatpush.msra.mxu0 %v6686
      %v6688 = vand.u32 %v6018, 4294901760
      %v6689 = vsub.f32 %v6018, %v6688
      %v6690 = vand.u32 %v6689, 4294901760
      %6691 = vmatpush.msra.mxu0 %v6690
      %v6692 = vand.u32 %v6017, 4294901760
      %v6693 = vsub.f32 %v6017, %v6692
      %v6694 = vand.u32 %v6693, 4294901760
      %6695 = vmatpush.msra.mxu0 %v6694
      %v6696 = vand.u32 %v6016, 4294901760
      %v6697 = vsub.f32 %v6016, %v6696
      %v6698 = vand.u32 %v6697, 4294901760
      %6699 = vmatpush.msra.mxu0 %v6698
      %v6700 = vand.u32 %v6015, 4294901760
      %v6701 = vsub.f32 %v6015, %v6700
      %v6702 = vand.u32 %v6701, 4294901760
      %6703 = vmatpush.msra.mxu0 %v6702
      %v6704 = vand.u32 %v6014, 4294901760
      %v6705 = vsub.f32 %v6014, %v6704
      %v6706 = vand.u32 %v6705, 4294901760
      %6707 = vmatpush.msra.mxu0 %v6706
      %v6708 = vand.u32 %v6013, 4294901760
      %v6709 = vsub.f32 %v6013, %v6708
      %v6710 = vand.u32 %v6709, 4294901760
      %6711 = vmatpush.msra.mxu0 %v6710
      %v6712 = vand.u32 %v6012, 4294901760
      %v6713 = vsub.f32 %v6012, %v6712
      %v6714 = vand.u32 %v6713, 4294901760
      %6715 = vmatpush.msra.mxu0 %v6714
      %v6716 = vand.u32 %v6011, 4294901760
      %v6717 = vsub.f32 %v6011, %v6716
      %v6718 = vand.u32 %v6717, 4294901760
      %6719 = vmatpush.msra.mxu0 %v6718
      %v6720 = vand.u32 %v6010, 4294901760
      %v6721 = vsub.f32 %v6010, %v6720
      %v6722 = vand.u32 %v6721, 4294901760
      %6723 = vmatpush.msra.mxu0 %v6722
      %v6724 = vand.u32 %v5992, 4294901760
      %6725 = vmatmul.f32.gmra.mxu0 %v6724
      %v6726 = vpop.f32.mrf.mxu0
      %v6727 = vadd.f32 %v6652, %v6726
      %v6728 = vand.u32 %v5993, 4294901760
      %6729 = vmatmul.f32.gmra.mxu0 %v6728
      %v6730 = vpop.f32.mrf.mxu0
      %v6731 = vadd.f32 %v6658, %v6730
      %6732 = vdwg.mxu0
      %v6733 = vand.u32 %v6025, 4294901760
      %6734 = vmatpush.msra.mxu0 %v6733
      %v6735 = vand.u32 %v6024, 4294901760
      %6736 = vmatpush.msra.mxu0 %v6735
      %v6737 = vand.u32 %v6023, 4294901760
      %6738 = vmatpush.msra.mxu0 %v6737
      %v6739 = vand.u32 %v6022, 4294901760
      %6740 = vmatpush.msra.mxu0 %v6739
      %v6741 = vand.u32 %v6021, 4294901760
      %6742 = vmatpush.msra.mxu0 %v6741
      %v6743 = vand.u32 %v6020, 4294901760
      %6744 = vmatpush.msra.mxu0 %v6743
      %v6745 = vand.u32 %v6019, 4294901760
      %6746 = vmatpush.msra.mxu0 %v6745
      %v6747 = vand.u32 %v6018, 4294901760
      %6748 = vmatpush.msra.mxu0 %v6747
      %v6749 = vand.u32 %v6017, 4294901760
      %6750 = vmatpush.msra.mxu0 %v6749
      %v6751 = vand.u32 %v6016, 4294901760
      %6752 = vmatpush.msra.mxu0 %v6751
      %v6753 = vand.u32 %v6015, 4294901760
      %6754 = vmatpush.msra.mxu0 %v6753
      %v6755 = vand.u32 %v6014, 4294901760
      %6756 = vmatpush.msra.mxu0 %v6755
      %v6757 = vand.u32 %v6013, 4294901760
      %6758 = vmatpush.msra.mxu0 %v6757
      %v6759 = vand.u32 %v6012, 4294901760
      %6760 = vmatpush.msra.mxu0 %v6759
      %v6761 = vand.u32 %v6011, 4294901760
      %6762 = vmatpush.msra.mxu0 %v6761
      %v6763 = vand.u32 %v6010, 4294901760
      %6764 = vmatpush.msra.mxu0 %v6763
      %v6765 = vand.u32 %v5992, 4294901760
      %6766 = vmatmul.f32.gmra.mxu0 %v6765
      %v6767 = vpop.f32.mrf.mxu0
      %v6768 = vadd.f32 %v6727, %v6767
      %v6769 = vand.u32 %v5993, 4294901760
      %6770 = vmatmul.f32.gmra.mxu0 %v6769
      %v6771 = vpop.f32.mrf.mxu0
      %v6772 = vadd.f32 %v6731, %v6771
      %6773 = vdwg.mxu0
      %v6774 = vmax.f32 %v6768, 0.0
      %v6775 = vmax.f32 %v6772, 0.0
      %6776 = vst [vmem:[#allocation6] sm:$0xff] %v4425
      %6777 = vst [vmem:[#allocation7] sm:$0xff] %v5989
      %v6778 = vadd.f32 %v6774, %v5982
      %v6779 = vadd.f32 %v6775, %v5986
      %v6780 = vmax.f32 %v6778, 0.0
      %v6781 = vmax.f32 %v6779, 0.0
      %6782 = vst [vmem:[%s478] sm:$0xff] %v6780
      %6783 = vst [vmem:[%s478 + $0x8] sm:$0xff] %v6781
      %s6784 = smul.u32 2, %s29
      %p6785 = scmp.lt.s32.totalorder %s28, 1
      %s6786 = scalar_select %p6785, %s28, 1
      %p6787 = scmp.lt.s32.totalorder %s6784, 3
      %s6788 = scalar_select %p6787, %s6784, 3
      %s6789 = smul.addr %s6786, 4
      %s6790 = sadd.s32 %s6788, %s6789
      %s6791 = smul.addr %s6790, 8
      %s6792 = scalar_lea.vmem %s13, %s6791
      // Predicated region
      $region77: #{_lambda_.1} parent=71 // pred_check
        %p6793 = pneg %p336
      $region78: #{_lambda_.1} parent=71 // pred_check_branch
        %6795 = sbr.rel (%p6793) target = $region80
      $region79: #{_lambda_.1} parent=71 // pred_region
        %s6796 = smul.u32 2, %s29
      $region80: #{_lambda_.1} parent=71 // pred_fallthru
        _
    $region72: #{_lambda_.1} parent=5 // pred_fallthru
      _
    %p6797 = scmp.le.s32.totalorder 2, %s19
    // Predicated region
    $region81: #{_lambda_.1} parent=5 // pred_check
      %p6798 = pneg %p6797
    $region82: #{_lambda_.1} parent=5 // pred_check_branch
      %6800 = sbr.rel (%p6798) target = $region84
    $region83: #{_lambda_.1} parent=5 // pred_region
      %s6801 = ssub.s32 %s19, 2
      // Predicated region
      $region85: #{_lambda_.1} parent=83 // pred_check
        %p6802 = pneg %p342
      $region86: #{_lambda_.1} parent=83 // pred_check_branch
        %6804 = sbr.rel (%p6802) target = $region88
      $region87: #{_lambda_.1} parent=83 // pred_region
        %s6805 = smul.u32 2, %s31
        %p6806 = scmp.lt.s32.totalorder %s30, 1
        %s6807 = scalar_select %p6806, %s30, 1
        %p6808 = scmp.lt.s32.totalorder %s6805, 3
        %s6809 = scalar_select %p6808, %s6805, 3
        %s6810 = smul.addr %s6807, 4
        %s6811 = sadd.s32 %s6809, %s6810
        %s6812 = smul.addr %s6811, 8
        %s6813 = scalar_lea.vmem %s13, %s6812
      $region88: #{_lambda_.1} parent=83 // pred_fallthru
        _
    $region84: #{_lambda_.1} parent=5 // pred_fallthru
      _
  $region6: #{_lambda_.1} parent=0 // loop_footer
    %s23 = sadd.s32 1, %s19
  $region7: #{_lambda_.1} parent=0 // loop_footer_branch
    %18 = sbr.rel target = $region3
  $region8: #{_lambda_.1} parent=0 // loop_exit
    _

</llo_original>
